<compile_context>
chip_gen: v5e
topology: v5e:2x2
jax: 0.10.0
libtpu: 0.0.40
codegen_flags: <defaults>
</compile_context>

<pallas_src>
import functools
import math

import numpy as np
import jax
import jax.numpy as jnp
from jax import lax
from jax.experimental import pallas as pl
from jax.experimental.pallas import tpu as pltpu

LRELU_SLOPE = 0.2
INV_SQRT2 = 1.0 / math.sqrt(2.0)


def _leaky(x):
    return jnp.where(x >= 0, x, LRELU_SLOPE * x)


# ---------------------------------------------------------------------------
# Host-side precompute (numpy, done once at module-build time)
# ---------------------------------------------------------------------------
def _bilinear_1d(in_size, out_size):
    """PyTorch F.interpolate(mode='bilinear', align_corners=False) 1-D weights."""
    dst = np.arange(out_size, dtype=np.float64)
    src = (dst + 0.5) * (in_size / out_size) - 0.5
    src = np.maximum(src, 0.0)
    i0 = np.minimum(np.floor(src).astype(np.int64), in_size - 1)
    i1 = np.minimum(i0 + 1, in_size - 1)
    frac = src - i0
    m = np.zeros((out_size, in_size), np.float64)
    np.add.at(m, (np.arange(out_size), i0), 1.0 - frac)
    np.add.at(m, (np.arange(out_size), i1), frac)
    return m


def _upsample_matrix_t(h_in, w_in, h_out, w_out):
    """M^T mapping a P-form grid (h_in+2)x(w_in+2) (zero border, data in the
    interior) to the flat bilinear-upsampled (h_out*w_out) output."""
    mh = _bilinear_1d(h_in, h_out)                    # (h_out, h_in)
    mw = _bilinear_1d(w_in, w_out)                    # (w_out, w_in)
    m = np.kron(mh, mw)                               # (h_out*w_out, h_in*w_in)
    gh, gw = h_in + 2, w_in + 2
    mp = np.zeros((h_out * w_out, gh * gw), np.float64)
    cols = ((np.arange(h_in)[:, None] + 1) * gw
            + (np.arange(w_in)[None, :] + 1)).reshape(-1)
    mp[:, cols] = m
    return mp.T.astype(np.float32)                    # (gh*gw, h_out*w_out)


def _interior_mask(gh, gw):
    m = np.zeros((gh, gw), np.float32)
    m[1:gh - 1, 1:gw - 1] = 1.0
    return m.reshape(1, gh * gw)


def _conv_taps(w_oihw):
    """(Cout, Cin, 3, 3) torch-layout weight -> (9, Cout, Cin), tap-major."""
    w = np.asarray(w_oihw, np.float32)
    cout, cin, kh, kw = w.shape
    return np.transpose(w, (2, 3, 0, 1)).reshape(kh * kw, cout, cin)


def _bias_col(b):
    return np.asarray(b, np.float32).reshape(-1, 1)


# ---------------------------------------------------------------------------
# In-kernel helpers (traced)
# ---------------------------------------------------------------------------
def _conv3x3_p(parts, w_refs, b_ref, gw, mask, act_out):
    """3x3 conv over a flattened (C, Gh*Gw) grid -> P-form output on same grid.

    parts : list of (C_p, G) f32 arrays (channel groups of the conv input).
    w_refs: matching list of (9, Cout, C_p) tap-major weight refs.
    Output position (a, b) on the grid holds conv(a-1, b-1); border rows/cols
    are zeroed by `mask` (shape (1, G))."""
    g = parts[0].shape[1]
    cout = w_refs[0].shape[1]
    pad = gw + 1
    padded = []
    for xp in parts:
        z = jnp.zeros((xp.shape[0], pad), jnp.float32)
        padded.append(jnp.concatenate([z, xp, z], axis=1))
    acc = jnp.zeros((cout, g), jnp.float32)
    for i in range(3):
        for j in range(3):
            s = (i - 1) * gw + (j - 1)
            t = i * 3 + j
            for xp, wr in zip(padded, w_refs):
                acc = acc + jnp.dot(wr[t], xp[:, pad + s:pad + s + g],
                                    preferred_element_type=jnp.float32)
    acc = acc + b_ref[...]
    if act_out:
        acc = _leaky(acc)
    return acc * mask


def _depth_pred_kernel(
        x16_ref, x32_ref, x64_ref,
        m1_ref, m2_ref, m3_ref,
        c1w_ref, c1b_ref,
        b1aw_ref, b1ab_ref, b1bw_ref, b1bb_ref,
        up1_ref,
        c2wa_ref, c2wb_ref, c2b_ref,
        b2aw_ref, b2ab_ref, b2bw_ref, b2bb_ref,
        up2_ref,
        c3wa_ref, c3wb_ref, c3b_ref,
        b3aw_ref, b3ab_ref, b3bw_ref, b3bb_ref,
        cfw_ref, cfb_ref,
        upf_ref,
        o_ref,
        *, gw1, gw2, gw3):
    x16 = x16_ref[0]
    x32 = x32_ref[0]
    x64 = x64_ref[0]
    m1, m2, m3 = m1_ref[...], m2_ref[...], m3_ref[...]

    # ---- stage 1: conv1 (valid 3x3) + LeakyReLU, then ResBlk(block1) ----
    h = _conv3x3_p([x16], [c1w_ref], c1b_ref, gw1, m1, act_out=True)
    t = _conv3x3_p([_leaky(h)], [b1aw_ref], b1ab_ref, gw1, m1, act_out=False)
    t = _conv3x3_p([_leaky(t)], [b1bw_ref], b1bb_ref, gw1, m1, act_out=False)
    h = (h + t) * INV_SQRT2

    # bilinear x2 upsample (P-form -> raw flat grid of stage 2)
    u = jnp.dot(h, up1_ref[...], preferred_element_type=jnp.float32)

    # ---- stage 2: conv2 over concat([up, x32]) (concat folded as 2 groups) ----
    h = _conv3x3_p([u, x32], [c2wa_ref, c2wb_ref], c2b_ref, gw2, m2, act_out=True)
    t = _conv3x3_p([_leaky(h)], [b2aw_ref], b2ab_ref, gw2, m2, act_out=False)
    t = _conv3x3_p([_leaky(t)], [b2bw_ref], b2bb_ref, gw2, m2, act_out=False)
    h = (h + t) * INV_SQRT2

    u = jnp.dot(h, up2_ref[...], preferred_element_type=jnp.float32)

    # ---- stage 3 ----
    h = _conv3x3_p([u, x64], [c3wa_ref, c3wb_ref], c3b_ref, gw3, m3, act_out=True)
    t = _conv3x3_p([_leaky(h)], [b3aw_ref], b3ab_ref, gw3, m3, act_out=False)
    t = _conv3x3_p([_leaky(t)], [b3bw_ref], b3bb_ref, gw3, m3, act_out=False)
    h = (h + t) * INV_SQRT2

    # ---- convf (1x1) fused with the final bilinear upsample ----
    z = jnp.dot(cfw_ref[...], h, preferred_element_type=jnp.float32) + cfb_ref[...]
    o_ref[0] = jnp.dot(z, upf_ref[...], preferred_element_type=jnp.float32)


# ---------------------------------------------------------------------------
# Module builder: precomputes constants and returns a jitted forward fn
# ---------------------------------------------------------------------------
def make_depth_pred_fn(params, hw16, hw32, hw64, scale_factor=4):
    h16, w16 = hw16
    h32, w32 = hw32
    h64, w64 = hw64
    s1h, s1w = h16 - 2, w16 - 2
    assert (2 * s1h, 2 * s1w) == (h32, w32)
    s2h, s2w = h32 - 2, w32 - 2
    assert (2 * s2h, 2 * s2w) == (h64, w64)
    s3h, s3w = h64 - 2, w64 - 2
    ofh, ofw = s3h * scale_factor, s3w * scale_factor

    g1, g2, g3 = h16 * w16, h32 * w32, h64 * w64

    c16h = params["conv1_w"].shape[0]
    c16 = params["conv1_w"].shape[1]
    c32h = params["conv2_w"].shape[0]
    c32 = params["conv2_w"].shape[1] - c16h
    c64h = params["conv3_w"].shape[0]
    c64 = params["conv3_w"].shape[1] - c32h
    cout = params["convf_w"].shape[0]

    # --- host precompute: masks, upsample matrices, tap-major weights -------
    w2 = np.asarray(params["conv2_w"], np.float32)
    w3 = np.asarray(params["conv3_w"], np.float32)
    consts = [
        _interior_mask(h16, w16),
        _interior_mask(h32, w32),
        _interior_mask(h64, w64),
        _conv_taps(params["conv1_w"]), _bias_col(params["conv1_b"]),
        _conv_taps(params["block1"]["conv1_w"]), _bias_col(params["block1"]["conv1_b"]),
        _conv_taps(params["block1"]["conv2_w"]), _bias_col(params["block1"]["conv2_b"]),
        _upsample_matrix_t(s1h, s1w, 2 * s1h, 2 * s1w),
        _conv_taps(w2[:, :c16h]), _conv_taps(w2[:, c16h:]), _bias_col(params["conv2_b"]),
        _conv_taps(params["block2"]["conv1_w"]), _bias_col(params["block2"]["conv1_b"]),
        _conv_taps(params["block2"]["conv2_w"]), _bias_col(params["block2"]["conv2_b"]),
        _upsample_matrix_t(s2h, s2w, 2 * s2h, 2 * s2w),
        _conv_taps(w3[:, :c32h]), _conv_taps(w3[:, c32h:]), _bias_col(params["conv3_b"]),
        _conv_taps(params["block3"]["conv1_w"]), _bias_col(params["block3"]["conv1_b"]),
        _conv_taps(params["block3"]["conv2_w"]), _bias_col(params["block3"]["conv2_b"]),
        np.asarray(params["convf_w"], np.float32).reshape(cout, c64h),
        _bias_col(params["convf_b"]),
        _upsample_matrix_t(s3h, s3w, ofh, ofw),
    ]
    consts_dev = [jnp.asarray(a) for a in consts]

    def _const_idx(i, nd):
        return (0,) * nd

    const_specs = [pl.BlockSpec(a.shape, functools.partial(_const_idx, nd=a.ndim))
                   for a in consts_dev]

    kernel = functools.partial(_depth_pred_kernel, gw1=w16, gw2=w32, gw3=w64)

    def forward(x64_in, x32_in, x16_in):
        n = x16_in.shape[0]
        x16f = x16_in.astype(jnp.float32).reshape(n, c16, g1)
        x32f = x32_in.astype(jnp.float32).reshape(n, c32, g2)
        x64f = x64_in.astype(jnp.float32).reshape(n, c64, g3)
        data_specs = [
            pl.BlockSpec((1, c16, g1), lambda i: (i, 0, 0)),
            pl.BlockSpec((1, c32, g2), lambda i: (i, 0, 0)),
            pl.BlockSpec((1, c64, g3), lambda i: (i, 0, 0)),
        ]
        out = pl.pallas_call(
            kernel,
            out_shape=jax.ShapeDtypeStruct((n, cout, ofh * ofw), jnp.float32),
            grid=(n,),
            in_specs=data_specs + const_specs,
            out_specs=pl.BlockSpec((1, cout, ofh * ofw), lambda i: (i, 0, 0)),
            compiler_params=pltpu.CompilerParams(
                dimension_semantics=("parallel",)),
        )(x16f, x32f, x64f, *consts_dev)
        return out.reshape(n, cout, ofh, ofw)

    return jax.jit(forward)


# ---------------------------------------------------------------------------
# Pure-JAX (XLA) reference for correctness checking
# ---------------------------------------------------------------------------
def _ref_forward(params, x64, x32, x16, scale_factor):
    prec = lax.Precision.HIGHEST

    def conv(x, w, b, pad):
        y = lax.conv_general_dilated(
            x.astype(jnp.float32), jnp.asarray(w, jnp.float32),
            window_strides=(1, 1), padding=[(pad, pad), (pad, pad)],
            dimension_numbers=("NCHW", "OIHW", "NCHW"), precision=prec)
        return y + jnp.asarray(b, jnp.float32)[None, :, None, None]

    def up(x, scale):
        _, _, h, w = x.shape
        mh = jnp.asarray(_bilinear_1d(h, h * scale), jnp.float32)
        mw = jnp.asarray(_bilinear_1d(w, w * scale), jnp.float32)
        return jnp.einsum("nchw,Hh,Ww->ncHW", x, mh, mw, precision=prec)

    def resblk(x, p):
        t = conv(_leaky(x), p["conv1_w"], p["conv1_b"], 1)
        t = conv(_leaky(t), p["conv2_w"], p["conv2_b"], 1)
        return (x + t) * INV_SQRT2

    x = _leaky(conv(x16, params["conv1_w"], params["conv1_b"], 0))
    x = resblk(x, params["block1"])
    x = up(x, 2)
    x = jnp.concatenate([x, x32.astype(jnp.float32)], axis=1)
    x = _leaky(conv(x, params["conv2_w"], params["conv2_b"], 0))
    x = resblk(x, params["block2"])
    x = up(x, 2)
    x = jnp.concatenate([x, x64.astype(jnp.float32)], axis=1)
    x = _leaky(conv(x, params["conv3_w"], params["conv3_b"], 0))
    x = resblk(x, params["block3"])
    x = conv(x, params["convf_w"], params["convf_b"], 0)
    return up(x, scale_factor)


# ---------------------------------------------------------------------------
# Deterministic parameter init (PyTorch OIHW layout) + demo
# ---------------------------------------------------------------------------
def make_params(key, in_ch_64, in_ch_32, in_ch_16, out_channels):
    c16h, c32h, c64h = in_ch_16 // 2, in_ch_32 // 2, in_ch_64 // 2
    keys = iter(jax.random.split(key, 20))

    def conv_p(co, ci, k):
        w = 0.1 * jax.random.normal(next(keys), (co, ci, k, k), jnp.float32)
        b = 0.1 * jax.random.normal(next(keys), (co,), jnp.float32)
        return w, b

    def blk(dim):
        return dict(zip(["conv1_w", "conv1_b", "conv2_w", "conv2_b"],
                        conv_p(dim, dim, 3) + conv_p(dim, dim, 3)))

    p = {}
    p["conv1_w"], p["conv1_b"] = conv_p(c16h, in_ch_16, 3)
    p["block1"] = blk(c16h)
    p["conv2_w"], p["conv2_b"] = conv_p(c32h, c16h + in_ch_32, 3)
    p["block2"] = blk(c32h)
    p["conv3_w"], p["conv3_b"] = conv_p(c64h, c32h + in_ch_64, 3)
    p["block3"] = blk(c64h)
    p["convf_w"], p["convf_b"] = conv_p(out_channels, c64h, 1)
    return p


if __name__ == "__main__":
    key = jax.random.PRNGKey(0)
    in_ch_64, in_ch_32, in_ch_16 = 8, 8, 8
    out_channels, scale_factor = 10, 4
    kp, k16, k32, k64 = jax.random.split(key, 4)

    params = make_params(kp, in_ch_64, in_ch_32, in_ch_16, out_channels)

    # Spatial sizes consistent with the no-padding convs + x2 upsamples:
    # x16: 6 -> conv1 4 -> x2 = 8 (x32) -> conv2 6 -> x2 = 12 (x64)
    # -> conv3 10 -> convf 10 -> x4 = 40
    x16 = jax.random.normal(k16, (2, in_ch_16, 6, 6), jnp.float32)
    x32 = jax.random.normal(k32, (2, in_ch_32, 8, 8), jnp.float32)
    x64 = jax.random.normal(k64, (2, in_ch_64, 12, 12), jnp.float32)

    fwd = make_depth_pred_fn(params, (6, 6), (8, 8), (12, 12), scale_factor)
    out = jax.block_until_ready(fwd(x64, x32, x16))

    assert out.shape == (2, out_channels, 40, 40), out.shape
    assert bool(jnp.all(jnp.isfinite(out)))

    ref = jax.block_until_ready(_ref_forward(params, x64, x32, x16, scale_factor))
    np.testing.assert_allclose(np.asarray(out), np.asarray(ref), rtol=2e-2, atol=2e-2)
    print("KERNEL_OK")
</pallas_src>

<mosaic_0001>
module attributes {stable_mosaic.version = 11 : i64} {
  func.func @_depth_pred_kernel(%arg0: i32, %arg1: memref<1x8x36xf32, #tpu.memory_space<vmem>>, %arg2: memref<1x8x64xf32, #tpu.memory_space<vmem>>, %arg3: memref<1x8x144xf32, #tpu.memory_space<vmem>>, %arg4: memref<1x36xf32, #tpu.memory_space<vmem>>, %arg5: memref<1x64xf32, #tpu.memory_space<vmem>>, %arg6: memref<1x144xf32, #tpu.memory_space<vmem>>, %arg7: memref<9x4x8xf32, #tpu.memory_space<vmem>>, %arg8: memref<4x1xf32, #tpu.memory_space<vmem>>, %arg9: memref<9x4x4xf32, #tpu.memory_space<vmem>>, %arg10: memref<4x1xf32, #tpu.memory_space<vmem>>, %arg11: memref<9x4x4xf32, #tpu.memory_space<vmem>>, %arg12: memref<4x1xf32, #tpu.memory_space<vmem>>, %arg13: memref<36x64xf32, #tpu.memory_space<vmem>>, %arg14: memref<9x4x4xf32, #tpu.memory_space<vmem>>, %arg15: memref<9x4x8xf32, #tpu.memory_space<vmem>>, %arg16: memref<4x1xf32, #tpu.memory_space<vmem>>, %arg17: memref<9x4x4xf32, #tpu.memory_space<vmem>>, %arg18: memref<4x1xf32, #tpu.memory_space<vmem>>, %arg19: memref<9x4x4xf32, #tpu.memory_space<vmem>>, %arg20: memref<4x1xf32, #tpu.memory_space<vmem>>, %arg21: memref<64x144xf32, #tpu.memory_space<vmem>>, %arg22: memref<9x4x4xf32, #tpu.memory_space<vmem>>, %arg23: memref<9x4x8xf32, #tpu.memory_space<vmem>>, %arg24: memref<4x1xf32, #tpu.memory_space<vmem>>, %arg25: memref<9x4x4xf32, #tpu.memory_space<vmem>>, %arg26: memref<4x1xf32, #tpu.memory_space<vmem>>, %arg27: memref<9x4x4xf32, #tpu.memory_space<vmem>>, %arg28: memref<4x1xf32, #tpu.memory_space<vmem>>, %arg29: memref<10x4xf32, #tpu.memory_space<vmem>>, %arg30: memref<10x1xf32, #tpu.memory_space<vmem>>, %arg31: memref<144x1600xf32, #tpu.memory_space<vmem>>, %arg32: memref<1x10x1600xf32, #tpu.memory_space<vmem>>) attributes {dimension_semantics = [#tpu.dimension_semantics<parallel>], iteration_bounds = array<i64: 2>, scalar_prefetch = 0 : i64, scratch_operands = 0 : i64, tpu.core_type = #tpu.core_type<tc>, window_params = [{transform_indices = @transform_0, window_bounds = array<i64: 1, 8, 36>}, {transform_indices = @transform_1, window_bounds = array<i64: 1, 8, 64>}, {transform_indices = @transform_2, window_bounds = array<i64: 1, 8, 144>}, {pipeline_mode = #tpu.pipeline_mode<synchronous>, transform_indices = @transform_3, window_bounds = array<i64: 1, 36>}, {pipeline_mode = #tpu.pipeline_mode<synchronous>, transform_indices = @transform_4, window_bounds = array<i64: 1, 64>}, {pipeline_mode = #tpu.pipeline_mode<synchronous>, transform_indices = @transform_5, window_bounds = array<i64: 1, 144>}, {pipeline_mode = #tpu.pipeline_mode<synchronous>, transform_indices = @transform_6, window_bounds = array<i64: 9, 4, 8>}, {pipeline_mode = #tpu.pipeline_mode<synchronous>, transform_indices = @transform_7, window_bounds = array<i64: 4, 1>}, {pipeline_mode = #tpu.pipeline_mode<synchronous>, transform_indices = @transform_8, window_bounds = array<i64: 9, 4, 4>}, {pipeline_mode = #tpu.pipeline_mode<synchronous>, transform_indices = @transform_9, window_bounds = array<i64: 4, 1>}, {pipeline_mode = #tpu.pipeline_mode<synchronous>, transform_indices = @transform_10, window_bounds = array<i64: 9, 4, 4>}, {pipeline_mode = #tpu.pipeline_mode<synchronous>, transform_indices = @transform_11, window_bounds = array<i64: 4, 1>}, {pipeline_mode = #tpu.pipeline_mode<synchronous>, transform_indices = @transform_12, window_bounds = array<i64: 36, 64>}, {pipeline_mode = #tpu.pipeline_mode<synchronous>, transform_indices = @transform_13, window_bounds = array<i64: 9, 4, 4>}, {pipeline_mode = #tpu.pipeline_mode<synchronous>, transform_indices = @transform_14, window_bounds = array<i64: 9, 4, 8>}, {pipeline_mode = #tpu.pipeline_mode<synchronous>, transform_indices = @transform_15, window_bounds = array<i64: 4, 1>}, {pipeline_mode = #tpu.pipeline_mode<synchronous>, transform_indices = @transform_16, window_bounds = array<i64: 9, 4, 4>}, {pipeline_mode = #tpu.pipeline_mode<synchronous>, transform_indices = @transform_17, window_bounds = array<i64: 4, 1>}, {pipeline_mode = #tpu.pipeline_mode<synchronous>, transform_indices = @transform_18, window_bounds = array<i64: 9, 4, 4>}, {pipeline_mode = #tpu.pipeline_mode<synchronous>, transform_indices = @transform_19, window_bounds = array<i64: 4, 1>}, {pipeline_mode = #tpu.pipeline_mode<synchronous>, transform_indices = @transform_20, window_bounds = array<i64: 64, 144>}, {pipeline_mode = #tpu.pipeline_mode<synchronous>, transform_indices = @transform_21, window_bounds = array<i64: 9, 4, 4>}, {pipeline_mode = #tpu.pipeline_mode<synchronous>, transform_indices = @transform_22, window_bounds = array<i64: 9, 4, 8>}, {pipeline_mode = #tpu.pipeline_mode<synchronous>, transform_indices = @transform_23, window_bounds = array<i64: 4, 1>}, {pipeline_mode = #tpu.pipeline_mode<synchronous>, transform_indices = @transform_24, window_bounds = array<i64: 9, 4, 4>}, {pipeline_mode = #tpu.pipeline_mode<synchronous>, transform_indices = @transform_25, window_bounds = array<i64: 4, 1>}, {pipeline_mode = #tpu.pipeline_mode<synchronous>, transform_indices = @transform_26, window_bounds = array<i64: 9, 4, 4>}, {pipeline_mode = #tpu.pipeline_mode<synchronous>, transform_indices = @transform_27, window_bounds = array<i64: 4, 1>}, {pipeline_mode = #tpu.pipeline_mode<synchronous>, transform_indices = @transform_28, window_bounds = array<i64: 10, 4>}, {pipeline_mode = #tpu.pipeline_mode<synchronous>, transform_indices = @transform_29, window_bounds = array<i64: 10, 1>}, {pipeline_mode = #tpu.pipeline_mode<synchronous>, transform_indices = @transform_30, window_bounds = array<i64: 144, 1600>}, {transform_indices = @transform_31, window_bounds = array<i64: 1, 10, 1600>}]} {
    %c0 = arith.constant 0 : index
    %c0_0 = arith.constant 0 : index
    %c0_1 = arith.constant 0 : index
    %0 = vector.load %arg1[%c0, %c0_0, %c0_1] : memref<1x8x36xf32, #tpu.memory_space<vmem>>, vector<1x8x36xf32>
    %1 = vector.shape_cast %0 : vector<1x8x36xf32> to vector<8x36xf32>
    %c0_2 = arith.constant 0 : index
    %c0_3 = arith.constant 0 : index
    %c0_4 = arith.constant 0 : index
    %2 = vector.load %arg2[%c0_2, %c0_3, %c0_4] : memref<1x8x64xf32, #tpu.memory_space<vmem>>, vector<1x8x64xf32>
    %3 = vector.shape_cast %2 : vector<1x8x64xf32> to vector<8x64xf32>
    %c0_5 = arith.constant 0 : index
    %c0_6 = arith.constant 0 : index
    %c0_7 = arith.constant 0 : index
    %4 = vector.load %arg3[%c0_5, %c0_6, %c0_7] : memref<1x8x144xf32, #tpu.memory_space<vmem>>, vector<1x8x144xf32>
    %5 = vector.shape_cast %4 : vector<1x8x144xf32> to vector<8x144xf32>
    %c0_8 = arith.constant 0 : index
    %c0_9 = arith.constant 0 : index
    %6 = vector.load %arg4[%c0_8, %c0_9] : memref<1x36xf32, #tpu.memory_space<vmem>>, vector<1x36xf32>
    %c0_10 = arith.constant 0 : index
    %c0_11 = arith.constant 0 : index
    %7 = vector.load %arg5[%c0_10, %c0_11] : memref<1x64xf32, #tpu.memory_space<vmem>>, vector<1x64xf32>
    %c0_12 = arith.constant 0 : index
    %c0_13 = arith.constant 0 : index
    %8 = vector.load %arg6[%c0_12, %c0_13] : memref<1x144xf32, #tpu.memory_space<vmem>>, vector<1x144xf32>
    %cst = arith.constant 0.000000e+00 : f32
    %9 = vector.broadcast %cst : f32 to vector<8x7xf32>
    %10 = tpu.concatenate %9, %1, %9 in 1 : vector<8x7xf32>, vector<8x36xf32>, vector<8x7xf32> -> vector<8x50xf32>
    %cst_14 = arith.constant 0.000000e+00 : f32
    %11 = vector.broadcast %cst_14 : f32 to vector<4x36xf32>
    %c0_15 = arith.constant 0 : index
    %c0_16 = arith.constant 0 : index
    %c0_17 = arith.constant 0 : index
    %12 = vector.load %arg7[%c0_15, %c0_16, %c0_17] : memref<9x4x8xf32, #tpu.memory_space<vmem>>, vector<1x4x8xf32>
    %13 = vector.shape_cast %12 : vector<1x4x8xf32> to vector<4x8xf32>
    %14 = vector.extract_strided_slice %10 {offsets = [0, 0], sizes = [8, 36], strides = [1, 1]} : vector<8x50xf32> to vector<8x36xf32>
    %cst_18 = arith.constant dense<0.000000e+00> : vector<4x36xf32>
    %15 = tpu.matmul %13, %14, %cst_18 {dimension_numbers = #tpu.dot_dimension_numbers<[1], [0], [0], [1], [0, 0, 1, 1], [], []>} : vector<4x8xf32>, vector<8x36xf32>, vector<4x36xf32> -> vector<4x36xf32>
    %16 = arith.addf %11, %15 : vector<4x36xf32>
    %c1 = arith.constant 1 : index
    %c0_19 = arith.constant 0 : index
    %c0_20 = arith.constant 0 : index
    %17 = vector.load %arg7[%c1, %c0_19, %c0_20] : memref<9x4x8xf32, #tpu.memory_space<vmem>>, vector<1x4x8xf32>
    %18 = vector.shape_cast %17 : vector<1x4x8xf32> to vector<4x8xf32>
    %19 = vector.extract_strided_slice %10 {offsets = [0, 1], sizes = [8, 36], strides = [1, 1]} : vector<8x50xf32> to vector<8x36xf32>
    %cst_21 = arith.constant dense<0.000000e+00> : vector<4x36xf32>
    %20 = tpu.matmul %18, %19, %cst_21 {dimension_numbers = #tpu.dot_dimension_numbers<[1], [0], [0], [1], [0, 0, 1, 1], [], []>} : vector<4x8xf32>, vector<8x36xf32>, vector<4x36xf32> -> vector<4x36xf32>
    %21 = arith.addf %16, %20 : vector<4x36xf32>
    %c2 = arith.constant 2 : index
    %c0_22 = arith.constant 0 : index
    %c0_23 = arith.constant 0 : index
    %22 = vector.load %arg7[%c2, %c0_22, %c0_23] : memref<9x4x8xf32, #tpu.memory_space<vmem>>, vector<1x4x8xf32>
    %23 = vector.shape_cast %22 : vector<1x4x8xf32> to vector<4x8xf32>
    %24 = vector.extract_strided_slice %10 {offsets = [0, 2], sizes = [8, 36], strides = [1, 1]} : vector<8x50xf32> to vector<8x36xf32>
    %cst_24 = arith.constant dense<0.000000e+00> : vector<4x36xf32>
    %25 = tpu.matmul %23, %24, %cst_24 {dimension_numbers = #tpu.dot_dimension_numbers<[1], [0], [0], [1], [0, 0, 1, 1], [], []>} : vector<4x8xf32>, vector<8x36xf32>, vector<4x36xf32> -> vector<4x36xf32>
    %26 = arith.addf %21, %25 : vector<4x36xf32>
    %c3 = arith.constant 3 : index
    %c0_25 = arith.constant 0 : index
    %c0_26 = arith.constant 0 : index
    %27 = vector.load %arg7[%c3, %c0_25, %c0_26] : memref<9x4x8xf32, #tpu.memory_space<vmem>>, vector<1x4x8xf32>
    %28 = vector.shape_cast %27 : vector<1x4x8xf32> to vector<4x8xf32>
    %29 = vector.extract_strided_slice %10 {offsets = [0, 6], sizes = [8, 36], strides = [1, 1]} : vector<8x50xf32> to vector<8x36xf32>
    %cst_27 = arith.constant dense<0.000000e+00> : vector<4x36xf32>
    %30 = tpu.matmul %28, %29, %cst_27 {dimension_numbers = #tpu.dot_dimension_numbers<[1], [0], [0], [1], [0, 0, 1, 1], [], []>} : vector<4x8xf32>, vector<8x36xf32>, vector<4x36xf32> -> vector<4x36xf32>
    %31 = arith.addf %26, %30 : vector<4x36xf32>
    %c4 = arith.constant 4 : index
    %c0_28 = arith.constant 0 : index
    %c0_29 = arith.constant 0 : index
    %32 = vector.load %arg7[%c4, %c0_28, %c0_29] : memref<9x4x8xf32, #tpu.memory_space<vmem>>, vector<1x4x8xf32>
    %33 = vector.shape_cast %32 : vector<1x4x8xf32> to vector<4x8xf32>
    %34 = vector.extract_strided_slice %10 {offsets = [0, 7], sizes = [8, 36], strides = [1, 1]} : vector<8x50xf32> to vector<8x36xf32>
    %cst_30 = arith.constant dense<0.000000e+00> : vector<4x36xf32>
    %35 = tpu.matmul %33, %34, %cst_30 {dimension_numbers = #tpu.dot_dimension_numbers<[1], [0], [0], [1], [0, 0, 1, 1], [], []>} : vector<4x8xf32>, vector<8x36xf32>, vector<4x36xf32> -> vector<4x36xf32>
    %36 = arith.addf %31, %35 : vector<4x36xf32>
    %c5 = arith.constant 5 : index
    %c0_31 = arith.constant 0 : index
    %c0_32 = arith.constant 0 : index
    %37 = vector.load %arg7[%c5, %c0_31, %c0_32] : memref<9x4x8xf32, #tpu.memory_space<vmem>>, vector<1x4x8xf32>
    %38 = vector.shape_cast %37 : vector<1x4x8xf32> to vector<4x8xf32>
    %39 = vector.extract_strided_slice %10 {offsets = [0, 8], sizes = [8, 36], strides = [1, 1]} : vector<8x50xf32> to vector<8x36xf32>
    %cst_33 = arith.constant dense<0.000000e+00> : vector<4x36xf32>
    %40 = tpu.matmul %38, %39, %cst_33 {dimension_numbers = #tpu.dot_dimension_numbers<[1], [0], [0], [1], [0, 0, 1, 1], [], []>} : vector<4x8xf32>, vector<8x36xf32>, vector<4x36xf32> -> vector<4x36xf32>
    %41 = arith.addf %36, %40 : vector<4x36xf32>
    %c6 = arith.constant 6 : index
    %c0_34 = arith.constant 0 : index
    %c0_35 = arith.constant 0 : index
    %42 = vector.load %arg7[%c6, %c0_34, %c0_35] : memref<9x4x8xf32, #tpu.memory_space<vmem>>, vector<1x4x8xf32>
    %43 = vector.shape_cast %42 : vector<1x4x8xf32> to vector<4x8xf32>
    %44 = vector.extract_strided_slice %10 {offsets = [0, 12], sizes = [8, 36], strides = [1, 1]} : vector<8x50xf32> to vector<8x36xf32>
    %cst_36 = arith.constant dense<0.000000e+00> : vector<4x36xf32>
    %45 = tpu.matmul %43, %44, %cst_36 {dimension_numbers = #tpu.dot_dimension_numbers<[1], [0], [0], [1], [0, 0, 1, 1], [], []>} : vector<4x8xf32>, vector<8x36xf32>, vector<4x36xf32> -> vector<4x36xf32>
    %46 = arith.addf %41, %45 : vector<4x36xf32>
    %c7 = arith.constant 7 : index
    %c0_37 = arith.constant 0 : index
    %c0_38 = arith.constant 0 : index
    %47 = vector.load %arg7[%c7, %c0_37, %c0_38] : memref<9x4x8xf32, #tpu.memory_space<vmem>>, vector<1x4x8xf32>
    %48 = vector.shape_cast %47 : vector<1x4x8xf32> to vector<4x8xf32>
    %49 = vector.extract_strided_slice %10 {offsets = [0, 13], sizes = [8, 36], strides = [1, 1]} : vector<8x50xf32> to vector<8x36xf32>
    %cst_39 = arith.constant dense<0.000000e+00> : vector<4x36xf32>
    %50 = tpu.matmul %48, %49, %cst_39 {dimension_numbers = #tpu.dot_dimension_numbers<[1], [0], [0], [1], [0, 0, 1, 1], [], []>} : vector<4x8xf32>, vector<8x36xf32>, vector<4x36xf32> -> vector<4x36xf32>
    %51 = arith.addf %46, %50 : vector<4x36xf32>
    %c8 = arith.constant 8 : index
    %c0_40 = arith.constant 0 : index
    %c0_41 = arith.constant 0 : index
    %52 = vector.load %arg7[%c8, %c0_40, %c0_41] : memref<9x4x8xf32, #tpu.memory_space<vmem>>, vector<1x4x8xf32>
    %53 = vector.shape_cast %52 : vector<1x4x8xf32> to vector<4x8xf32>
    %54 = vector.extract_strided_slice %10 {offsets = [0, 14], sizes = [8, 36], strides = [1, 1]} : vector<8x50xf32> to vector<8x36xf32>
    %cst_42 = arith.constant dense<0.000000e+00> : vector<4x36xf32>
    %55 = tpu.matmul %53, %54, %cst_42 {dimension_numbers = #tpu.dot_dimension_numbers<[1], [0], [0], [1], [0, 0, 1, 1], [], []>} : vector<4x8xf32>, vector<8x36xf32>, vector<4x36xf32> -> vector<4x36xf32>
    %56 = arith.addf %51, %55 : vector<4x36xf32>
    %c0_43 = arith.constant 0 : index
    %c0_44 = arith.constant 0 : index
    %57 = vector.load %arg8[%c0_43, %c0_44] : memref<4x1xf32, #tpu.memory_space<vmem>>, vector<4x1xf32>
    %58 = vector.broadcast %57 : vector<4x1xf32> to vector<4x36xf32>
    %59 = arith.addf %56, %58 : vector<4x36xf32>
    %cst_45 = arith.constant 0.000000e+00 : f32
    %60 = vector.broadcast %cst_45 : f32 to vector<4x36xf32>
    %61 = arith.cmpf oge, %59, %60 : vector<4x36xf32>
    %cst_46 = arith.constant 2.000000e-01 : f32
    %62 = vector.broadcast %cst_46 : f32 to vector<4x36xf32>
    %63 = arith.mulf %62, %59 : vector<4x36xf32>
    %64 = arith.select %61, %59, %63 : vector<4x36xi1>, vector<4x36xf32>
    %65 = vector.broadcast %6 : vector<1x36xf32> to vector<4x36xf32>
    %66 = arith.mulf %64, %65 : vector<4x36xf32>
    %cst_47 = arith.constant 0.000000e+00 : f32
    %67 = vector.broadcast %cst_47 : f32 to vector<4x36xf32>
    %68 = arith.cmpf oge, %66, %67 : vector<4x36xf32>
    %cst_48 = arith.constant 2.000000e-01 : f32
    %69 = vector.broadcast %cst_48 : f32 to vector<4x36xf32>
    %70 = arith.mulf %69, %66 : vector<4x36xf32>
    %71 = arith.select %68, %66, %70 : vector<4x36xi1>, vector<4x36xf32>
    %cst_49 = arith.constant 0.000000e+00 : f32
    %72 = vector.broadcast %cst_49 : f32 to vector<4x7xf32>
    %73 = tpu.concatenate %72, %71, %72 in 1 : vector<4x7xf32>, vector<4x36xf32>, vector<4x7xf32> -> vector<4x50xf32>
    %cst_50 = arith.constant 0.000000e+00 : f32
    %74 = vector.broadcast %cst_50 : f32 to vector<4x36xf32>
    %c0_51 = arith.constant 0 : index
    %c0_52 = arith.constant 0 : index
    %c0_53 = arith.constant 0 : index
    %75 = vector.load %arg9[%c0_51, %c0_52, %c0_53] : memref<9x4x4xf32, #tpu.memory_space<vmem>>, vector<1x4x4xf32>
    %76 = vector.shape_cast %75 : vector<1x4x4xf32> to vector<4x4xf32>
    %77 = vector.extract_strided_slice %73 {offsets = [0, 0], sizes = [4, 36], strides = [1, 1]} : vector<4x50xf32> to vector<4x36xf32>
    %cst_54 = arith.constant dense<0.000000e+00> : vector<4x36xf32>
    %78 = tpu.matmul %76, %77, %cst_54 {dimension_numbers = #tpu.dot_dimension_numbers<[1], [0], [0], [1], [0, 0, 1, 1], [], []>} : vector<4x4xf32>, vector<4x36xf32>, vector<4x36xf32> -> vector<4x36xf32>
    %79 = arith.addf %74, %78 : vector<4x36xf32>
    %c1_55 = arith.constant 1 : index
    %c0_56 = arith.constant 0 : index
    %c0_57 = arith.constant 0 : index
    %80 = vector.load %arg9[%c1_55, %c0_56, %c0_57] : memref<9x4x4xf32, #tpu.memory_space<vmem>>, vector<1x4x4xf32>
    %81 = vector.shape_cast %80 : vector<1x4x4xf32> to vector<4x4xf32>
    %82 = vector.extract_strided_slice %73 {offsets = [0, 1], sizes = [4, 36], strides = [1, 1]} : vector<4x50xf32> to vector<4x36xf32>
    %cst_58 = arith.constant dense<0.000000e+00> : vector<4x36xf32>
    %83 = tpu.matmul %81, %82, %cst_58 {dimension_numbers = #tpu.dot_dimension_numbers<[1], [0], [0], [1], [0, 0, 1, 1], [], []>} : vector<4x4xf32>, vector<4x36xf32>, vector<4x36xf32> -> vector<4x36xf32>
    %84 = arith.addf %79, %83 : vector<4x36xf32>
    %c2_59 = arith.constant 2 : index
    %c0_60 = arith.constant 0 : index
    %c0_61 = arith.constant 0 : index
    %85 = vector.load %arg9[%c2_59, %c0_60, %c0_61] : memref<9x4x4xf32, #tpu.memory_space<vmem>>, vector<1x4x4xf32>
    %86 = vector.shape_cast %85 : vector<1x4x4xf32> to vector<4x4xf32>
    %87 = vector.extract_strided_slice %73 {offsets = [0, 2], sizes = [4, 36], strides = [1, 1]} : vector<4x50xf32> to vector<4x36xf32>
    %cst_62 = arith.constant dense<0.000000e+00> : vector<4x36xf32>
    %88 = tpu.matmul %86, %87, %cst_62 {dimension_numbers = #tpu.dot_dimension_numbers<[1], [0], [0], [1], [0, 0, 1, 1], [], []>} : vector<4x4xf32>, vector<4x36xf32>, vector<4x36xf32> -> vector<4x36xf32>
    %89 = arith.addf %84, %88 : vector<4x36xf32>
    %c3_63 = arith.constant 3 : index
    %c0_64 = arith.constant 0 : index
    %c0_65 = arith.constant 0 : index
    %90 = vector.load %arg9[%c3_63, %c0_64, %c0_65] : memref<9x4x4xf32, #tpu.memory_space<vmem>>, vector<1x4x4xf32>
    %91 = vector.shape_cast %90 : vector<1x4x4xf32> to vector<4x4xf32>
    %92 = vector.extract_strided_slice %73 {offsets = [0, 6], sizes = [4, 36], strides = [1, 1]} : vector<4x50xf32> to vector<4x36xf32>
    %cst_66 = arith.constant dense<0.000000e+00> : vector<4x36xf32>
    %93 = tpu.matmul %91, %92, %cst_66 {dimension_numbers = #tpu.dot_dimension_numbers<[1], [0], [0], [1], [0, 0, 1, 1], [], []>} : vector<4x4xf32>, vector<4x36xf32>, vector<4x36xf32> -> vector<4x36xf32>
    %94 = arith.addf %89, %93 : vector<4x36xf32>
    %c4_67 = arith.constant 4 : index
    %c0_68 = arith.constant 0 : index
    %c0_69 = arith.constant 0 : index
    %95 = vector.load %arg9[%c4_67, %c0_68, %c0_69] : memref<9x4x4xf32, #tpu.memory_space<vmem>>, vector<1x4x4xf32>
    %96 = vector.shape_cast %95 : vector<1x4x4xf32> to vector<4x4xf32>
    %97 = vector.extract_strided_slice %73 {offsets = [0, 7], sizes = [4, 36], strides = [1, 1]} : vector<4x50xf32> to vector<4x36xf32>
    %cst_70 = arith.constant dense<0.000000e+00> : vector<4x36xf32>
    %98 = tpu.matmul %96, %97, %cst_70 {dimension_numbers = #tpu.dot_dimension_numbers<[1], [0], [0], [1], [0, 0, 1, 1], [], []>} : vector<4x4xf32>, vector<4x36xf32>, vector<4x36xf32> -> vector<4x36xf32>
    %99 = arith.addf %94, %98 : vector<4x36xf32>
    %c5_71 = arith.constant 5 : index
    %c0_72 = arith.constant 0 : index
    %c0_73 = arith.constant 0 : index
    %100 = vector.load %arg9[%c5_71, %c0_72, %c0_73] : memref<9x4x4xf32, #tpu.memory_space<vmem>>, vector<1x4x4xf32>
    %101 = vector.shape_cast %100 : vector<1x4x4xf32> to vector<4x4xf32>
    %102 = vector.extract_strided_slice %73 {offsets = [0, 8], sizes = [4, 36], strides = [1, 1]} : vector<4x50xf32> to vector<4x36xf32>
    %cst_74 = arith.constant dense<0.000000e+00> : vector<4x36xf32>
    %103 = tpu.matmul %101, %102, %cst_74 {dimension_numbers = #tpu.dot_dimension_numbers<[1], [0], [0], [1], [0, 0, 1, 1], [], []>} : vector<4x4xf32>, vector<4x36xf32>, vector<4x36xf32> -> vector<4x36xf32>
    %104 = arith.addf %99, %103 : vector<4x36xf32>
    %c6_75 = arith.constant 6 : index
    %c0_76 = arith.constant 0 : index
    %c0_77 = arith.constant 0 : index
    %105 = vector.load %arg9[%c6_75, %c0_76, %c0_77] : memref<9x4x4xf32, #tpu.memory_space<vmem>>, vector<1x4x4xf32>
    %106 = vector.shape_cast %105 : vector<1x4x4xf32> to vector<4x4xf32>
    %107 = vector.extract_strided_slice %73 {offsets = [0, 12], sizes = [4, 36], strides = [1, 1]} : vector<4x50xf32> to vector<4x36xf32>
    %cst_78 = arith.constant dense<0.000000e+00> : vector<4x36xf32>
    %108 = tpu.matmul %106, %107, %cst_78 {dimension_numbers = #tpu.dot_dimension_numbers<[1], [0], [0], [1], [0, 0, 1, 1], [], []>} : vector<4x4xf32>, vector<4x36xf32>, vector<4x36xf32> -> vector<4x36xf32>
    %109 = arith.addf %104, %108 : vector<4x36xf32>
    %c7_79 = arith.constant 7 : index
    %c0_80 = arith.constant 0 : index
    %c0_81 = arith.constant 0 : index
    %110 = vector.load %arg9[%c7_79, %c0_80, %c0_81] : memref<9x4x4xf32, #tpu.memory_space<vmem>>, vector<1x4x4xf32>
    %111 = vector.shape_cast %110 : vector<1x4x4xf32> to vector<4x4xf32>
    %112 = vector.extract_strided_slice %73 {offsets = [0, 13], sizes = [4, 36], strides = [1, 1]} : vector<4x50xf32> to vector<4x36xf32>
    %cst_82 = arith.constant dense<0.000000e+00> : vector<4x36xf32>
    %113 = tpu.matmul %111, %112, %cst_82 {dimension_numbers = #tpu.dot_dimension_numbers<[1], [0], [0], [1], [0, 0, 1, 1], [], []>} : vector<4x4xf32>, vector<4x36xf32>, vector<4x36xf32> -> vector<4x36xf32>
    %114 = arith.addf %109, %113 : vector<4x36xf32>
    %c8_83 = arith.constant 8 : index
    %c0_84 = arith.constant 0 : index
    %c0_85 = arith.constant 0 : index
    %115 = vector.load %arg9[%c8_83, %c0_84, %c0_85] : memref<9x4x4xf32, #tpu.memory_space<vmem>>, vector<1x4x4xf32>
    %116 = vector.shape_cast %115 : vector<1x4x4xf32> to vector<4x4xf32>
    %117 = vector.extract_strided_slice %73 {offsets = [0, 14], sizes = [4, 36], strides = [1, 1]} : vector<4x50xf32> to vector<4x36xf32>
    %cst_86 = arith.constant dense<0.000000e+00> : vector<4x36xf32>
    %118 = tpu.matmul %116, %117, %cst_86 {dimension_numbers = #tpu.dot_dimension_numbers<[1], [0], [0], [1], [0, 0, 1, 1], [], []>} : vector<4x4xf32>, vector<4x36xf32>, vector<4x36xf32> -> vector<4x36xf32>
    %119 = arith.addf %114, %118 : vector<4x36xf32>
    %c0_87 = arith.constant 0 : index
    %c0_88 = arith.constant 0 : index
    %120 = vector.load %arg10[%c0_87, %c0_88] : memref<4x1xf32, #tpu.memory_space<vmem>>, vector<4x1xf32>
    %121 = vector.broadcast %120 : vector<4x1xf32> to vector<4x36xf32>
    %122 = arith.addf %119, %121 : vector<4x36xf32>
    %123 = vector.broadcast %6 : vector<1x36xf32> to vector<4x36xf32>
    %124 = arith.mulf %122, %123 : vector<4x36xf32>
    %cst_89 = arith.constant 0.000000e+00 : f32
    %125 = vector.broadcast %cst_89 : f32 to vector<4x36xf32>
    %126 = arith.cmpf oge, %124, %125 : vector<4x36xf32>
    %cst_90 = arith.constant 2.000000e-01 : f32
    %127 = vector.broadcast %cst_90 : f32 to vector<4x36xf32>
    %128 = arith.mulf %127, %124 : vector<4x36xf32>
    %129 = arith.select %126, %124, %128 : vector<4x36xi1>, vector<4x36xf32>
    %cst_91 = arith.constant 0.000000e+00 : f32
    %130 = vector.broadcast %cst_91 : f32 to vector<4x7xf32>
    %131 = tpu.concatenate %130, %129, %130 in 1 : vector<4x7xf32>, vector<4x36xf32>, vector<4x7xf32> -> vector<4x50xf32>
    %cst_92 = arith.constant 0.000000e+00 : f32
    %132 = vector.broadcast %cst_92 : f32 to vector<4x36xf32>
    %c0_93 = arith.constant 0 : index
    %c0_94 = arith.constant 0 : index
    %c0_95 = arith.constant 0 : index
    %133 = vector.load %arg11[%c0_93, %c0_94, %c0_95] : memref<9x4x4xf32, #tpu.memory_space<vmem>>, vector<1x4x4xf32>
    %134 = vector.shape_cast %133 : vector<1x4x4xf32> to vector<4x4xf32>
    %135 = vector.extract_strided_slice %131 {offsets = [0, 0], sizes = [4, 36], strides = [1, 1]} : vector<4x50xf32> to vector<4x36xf32>
    %cst_96 = arith.constant dense<0.000000e+00> : vector<4x36xf32>
    %136 = tpu.matmul %134, %135, %cst_96 {dimension_numbers = #tpu.dot_dimension_numbers<[1], [0], [0], [1], [0, 0, 1, 1], [], []>} : vector<4x4xf32>, vector<4x36xf32>, vector<4x36xf32> -> vector<4x36xf32>
    %137 = arith.addf %132, %136 : vector<4x36xf32>
    %c1_97 = arith.constant 1 : index
    %c0_98 = arith.constant 0 : index
    %c0_99 = arith.constant 0 : index
    %138 = vector.load %arg11[%c1_97, %c0_98, %c0_99] : memref<9x4x4xf32, #tpu.memory_space<vmem>>, vector<1x4x4xf32>
    %139 = vector.shape_cast %138 : vector<1x4x4xf32> to vector<4x4xf32>
    %140 = vector.extract_strided_slice %131 {offsets = [0, 1], sizes = [4, 36], strides = [1, 1]} : vector<4x50xf32> to vector<4x36xf32>
    %cst_100 = arith.constant dense<0.000000e+00> : vector<4x36xf32>
    %141 = tpu.matmul %139, %140, %cst_100 {dimension_numbers = #tpu.dot_dimension_numbers<[1], [0], [0], [1], [0, 0, 1, 1], [], []>} : vector<4x4xf32>, vector<4x36xf32>, vector<4x36xf32> -> vector<4x36xf32>
    %142 = arith.addf %137, %141 : vector<4x36xf32>
    %c2_101 = arith.constant 2 : index
    %c0_102 = arith.constant 0 : index
    %c0_103 = arith.constant 0 : index
    %143 = vector.load %arg11[%c2_101, %c0_102, %c0_103] : memref<9x4x4xf32, #tpu.memory_space<vmem>>, vector<1x4x4xf32>
    %144 = vector.shape_cast %143 : vector<1x4x4xf32> to vector<4x4xf32>
    %145 = vector.extract_strided_slice %131 {offsets = [0, 2], sizes = [4, 36], strides = [1, 1]} : vector<4x50xf32> to vector<4x36xf32>
    %cst_104 = arith.constant dense<0.000000e+00> : vector<4x36xf32>
    %146 = tpu.matmul %144, %145, %cst_104 {dimension_numbers = #tpu.dot_dimension_numbers<[1], [0], [0], [1], [0, 0, 1, 1], [], []>} : vector<4x4xf32>, vector<4x36xf32>, vector<4x36xf32> -> vector<4x36xf32>
    %147 = arith.addf %142, %146 : vector<4x36xf32>
    %c3_105 = arith.constant 3 : index
    %c0_106 = arith.constant 0 : index
    %c0_107 = arith.constant 0 : index
    %148 = vector.load %arg11[%c3_105, %c0_106, %c0_107] : memref<9x4x4xf32, #tpu.memory_space<vmem>>, vector<1x4x4xf32>
    %149 = vector.shape_cast %148 : vector<1x4x4xf32> to vector<4x4xf32>
    %150 = vector.extract_strided_slice %131 {offsets = [0, 6], sizes = [4, 36], strides = [1, 1]} : vector<4x50xf32> to vector<4x36xf32>
    %cst_108 = arith.constant dense<0.000000e+00> : vector<4x36xf32>
    %151 = tpu.matmul %149, %150, %cst_108 {dimension_numbers = #tpu.dot_dimension_numbers<[1], [0], [0], [1], [0, 0, 1, 1], [], []>} : vector<4x4xf32>, vector<4x36xf32>, vector<4x36xf32> -> vector<4x36xf32>
    %152 = arith.addf %147, %151 : vector<4x36xf32>
    %c4_109 = arith.constant 4 : index
    %c0_110 = arith.constant 0 : index
    %c0_111 = arith.constant 0 : index
    %153 = vector.load %arg11[%c4_109, %c0_110, %c0_111] : memref<9x4x4xf32, #tpu.memory_space<vmem>>, vector<1x4x4xf32>
    %154 = vector.shape_cast %153 : vector<1x4x4xf32> to vector<4x4xf32>
    %155 = vector.extract_strided_slice %131 {offsets = [0, 7], sizes = [4, 36], strides = [1, 1]} : vector<4x50xf32> to vector<4x36xf32>
    %cst_112 = arith.constant dense<0.000000e+00> : vector<4x36xf32>
    %156 = tpu.matmul %154, %155, %cst_112 {dimension_numbers = #tpu.dot_dimension_numbers<[1], [0], [0], [1], [0, 0, 1, 1], [], []>} : vector<4x4xf32>, vector<4x36xf32>, vector<4x36xf32> -> vector<4x36xf32>
    %157 = arith.addf %152, %156 : vector<4x36xf32>
    %c5_113 = arith.constant 5 : index
    %c0_114 = arith.constant 0 : index
    %c0_115 = arith.constant 0 : index
    %158 = vector.load %arg11[%c5_113, %c0_114, %c0_115] : memref<9x4x4xf32, #tpu.memory_space<vmem>>, vector<1x4x4xf32>
    %159 = vector.shape_cast %158 : vector<1x4x4xf32> to vector<4x4xf32>
    %160 = vector.extract_strided_slice %131 {offsets = [0, 8], sizes = [4, 36], strides = [1, 1]} : vector<4x50xf32> to vector<4x36xf32>
    %cst_116 = arith.constant dense<0.000000e+00> : vector<4x36xf32>
    %161 = tpu.matmul %159, %160, %cst_116 {dimension_numbers = #tpu.dot_dimension_numbers<[1], [0], [0], [1], [0, 0, 1, 1], [], []>} : vector<4x4xf32>, vector<4x36xf32>, vector<4x36xf32> -> vector<4x36xf32>
    %162 = arith.addf %157, %161 : vector<4x36xf32>
    %c6_117 = arith.constant 6 : index
    %c0_118 = arith.constant 0 : index
    %c0_119 = arith.constant 0 : index
    %163 = vector.load %arg11[%c6_117, %c0_118, %c0_119] : memref<9x4x4xf32, #tpu.memory_space<vmem>>, vector<1x4x4xf32>
    %164 = vector.shape_cast %163 : vector<1x4x4xf32> to vector<4x4xf32>
    %165 = vector.extract_strided_slice %131 {offsets = [0, 12], sizes = [4, 36], strides = [1, 1]} : vector<4x50xf32> to vector<4x36xf32>
    %cst_120 = arith.constant dense<0.000000e+00> : vector<4x36xf32>
    %166 = tpu.matmul %164, %165, %cst_120 {dimension_numbers = #tpu.dot_dimension_numbers<[1], [0], [0], [1], [0, 0, 1, 1], [], []>} : vector<4x4xf32>, vector<4x36xf32>, vector<4x36xf32> -> vector<4x36xf32>
    %167 = arith.addf %162, %166 : vector<4x36xf32>
    %c7_121 = arith.constant 7 : index
    %c0_122 = arith.constant 0 : index
    %c0_123 = arith.constant 0 : index
    %168 = vector.load %arg11[%c7_121, %c0_122, %c0_123] : memref<9x4x4xf32, #tpu.memory_space<vmem>>, vector<1x4x4xf32>
    %169 = vector.shape_cast %168 : vector<1x4x4xf32> to vector<4x4xf32>
    %170 = vector.extract_strided_slice %131 {offsets = [0, 13], sizes = [4, 36], strides = [1, 1]} : vector<4x50xf32> to vector<4x36xf32>
    %cst_124 = arith.constant dense<0.000000e+00> : vector<4x36xf32>
    %171 = tpu.matmul %169, %170, %cst_124 {dimension_numbers = #tpu.dot_dimension_numbers<[1], [0], [0], [1], [0, 0, 1, 1], [], []>} : vector<4x4xf32>, vector<4x36xf32>, vector<4x36xf32> -> vector<4x36xf32>
    %172 = arith.addf %167, %171 : vector<4x36xf32>
    %c8_125 = arith.constant 8 : index
    %c0_126 = arith.constant 0 : index
    %c0_127 = arith.constant 0 : index
    %173 = vector.load %arg11[%c8_125, %c0_126, %c0_127] : memref<9x4x4xf32, #tpu.memory_space<vmem>>, vector<1x4x4xf32>
    %174 = vector.shape_cast %173 : vector<1x4x4xf32> to vector<4x4xf32>
    %175 = vector.extract_strided_slice %131 {offsets = [0, 14], sizes = [4, 36], strides = [1, 1]} : vector<4x50xf32> to vector<4x36xf32>
    %cst_128 = arith.constant dense<0.000000e+00> : vector<4x36xf32>
    %176 = tpu.matmul %174, %175, %cst_128 {dimension_numbers = #tpu.dot_dimension_numbers<[1], [0], [0], [1], [0, 0, 1, 1], [], []>} : vector<4x4xf32>, vector<4x36xf32>, vector<4x36xf32> -> vector<4x36xf32>
    %177 = arith.addf %172, %176 : vector<4x36xf32>
    %c0_129 = arith.constant 0 : index
    %c0_130 = arith.constant 0 : index
    %178 = vector.load %arg12[%c0_129, %c0_130] : memref<4x1xf32, #tpu.memory_space<vmem>>, vector<4x1xf32>
    %179 = vector.broadcast %178 : vector<4x1xf32> to vector<4x36xf32>
    %180 = arith.addf %177, %179 : vector<4x36xf32>
    %181 = vector.broadcast %6 : vector<1x36xf32> to vector<4x36xf32>
    %182 = arith.mulf %180, %181 : vector<4x36xf32>
    %183 = arith.addf %66, %182 : vector<4x36xf32>
    %cst_131 = arith.constant 0.707106769 : f32
    %184 = vector.broadcast %cst_131 : f32 to vector<4x36xf32>
    %185 = arith.mulf %183, %184 : vector<4x36xf32>
    %c0_132 = arith.constant 0 : index
    %c0_133 = arith.constant 0 : index
    %186 = vector.load %arg13[%c0_132, %c0_133] : memref<36x64xf32, #tpu.memory_space<vmem>>, vector<36x64xf32>
    %cst_134 = arith.constant dense<0.000000e+00> : vector<4x64xf32>
    %187 = tpu.matmul %185, %186, %cst_134 {dimension_numbers = #tpu.dot_dimension_numbers<[1], [0], [0], [1], [0, 0, 1, 1], [], []>} : vector<4x36xf32>, vector<36x64xf32>, vector<4x64xf32> -> vector<4x64xf32>
    %cst_135 = arith.constant 0.000000e+00 : f32
    %188 = vector.broadcast %cst_135 : f32 to vector<4x9xf32>
    %189 = tpu.concatenate %188, %187, %188 in 1 : vector<4x9xf32>, vector<4x64xf32>, vector<4x9xf32> -> vector<4x82xf32>
    %cst_136 = arith.constant 0.000000e+00 : f32
    %190 = vector.broadcast %cst_136 : f32 to vector<8x9xf32>
    %191 = tpu.concatenate %190, %3, %190 in 1 : vector<8x9xf32>, vector<8x64xf32>, vector<8x9xf32> -> vector<8x82xf32>
    %cst_137 = arith.constant 0.000000e+00 : f32
    %192 = vector.broadcast %cst_137 : f32 to vector<4x64xf32>
    %c0_138 = arith.constant 0 : index
    %c0_139 = arith.constant 0 : index
    %c0_140 = arith.constant 0 : index
    %193 = vector.load %arg14[%c0_138, %c0_139, %c0_140] : memref<9x4x4xf32, #tpu.memory_space<vmem>>, vector<1x4x4xf32>
    %194 = vector.shape_cast %193 : vector<1x4x4xf32> to vector<4x4xf32>
    %195 = vector.extract_strided_slice %189 {offsets = [0, 0], sizes = [4, 64], strides = [1, 1]} : vector<4x82xf32> to vector<4x64xf32>
    %cst_141 = arith.constant dense<0.000000e+00> : vector<4x64xf32>
    %196 = tpu.matmul %194, %195, %cst_141 {dimension_numbers = #tpu.dot_dimension_numbers<[1], [0], [0], [1], [0, 0, 1, 1], [], []>} : vector<4x4xf32>, vector<4x64xf32>, vector<4x64xf32> -> vector<4x64xf32>
    %197 = arith.addf %192, %196 : vector<4x64xf32>
    %c0_142 = arith.constant 0 : index
    %c0_143 = arith.constant 0 : index
    %c0_144 = arith.constant 0 : index
    %198 = vector.load %arg15[%c0_142, %c0_143, %c0_144] : memref<9x4x8xf32, #tpu.memory_space<vmem>>, vector<1x4x8xf32>
    %199 = vector.shape_cast %198 : vector<1x4x8xf32> to vector<4x8xf32>
    %200 = vector.extract_strided_slice %191 {offsets = [0, 0], sizes = [8, 64], strides = [1, 1]} : vector<8x82xf32> to vector<8x64xf32>
    %cst_145 = arith.constant dense<0.000000e+00> : vector<4x64xf32>
    %201 = tpu.matmul %199, %200, %cst_145 {dimension_numbers = #tpu.dot_dimension_numbers<[1], [0], [0], [1], [0, 0, 1, 1], [], []>} : vector<4x8xf32>, vector<8x64xf32>, vector<4x64xf32> -> vector<4x64xf32>
    %202 = arith.addf %197, %201 : vector<4x64xf32>
    %c1_146 = arith.constant 1 : index
    %c0_147 = arith.constant 0 : index
    %c0_148 = arith.constant 0 : index
    %203 = vector.load %arg14[%c1_146, %c0_147, %c0_148] : memref<9x4x4xf32, #tpu.memory_space<vmem>>, vector<1x4x4xf32>
    %204 = vector.shape_cast %203 : vector<1x4x4xf32> to vector<4x4xf32>
    %205 = vector.extract_strided_slice %189 {offsets = [0, 1], sizes = [4, 64], strides = [1, 1]} : vector<4x82xf32> to vector<4x64xf32>
    %cst_149 = arith.constant dense<0.000000e+00> : vector<4x64xf32>
    %206 = tpu.matmul %204, %205, %cst_149 {dimension_numbers = #tpu.dot_dimension_numbers<[1], [0], [0], [1], [0, 0, 1, 1], [], []>} : vector<4x4xf32>, vector<4x64xf32>, vector<4x64xf32> -> vector<4x64xf32>
    %207 = arith.addf %202, %206 : vector<4x64xf32>
    %c1_150 = arith.constant 1 : index
    %c0_151 = arith.constant 0 : index
    %c0_152 = arith.constant 0 : index
    %208 = vector.load %arg15[%c1_150, %c0_151, %c0_152] : memref<9x4x8xf32, #tpu.memory_space<vmem>>, vector<1x4x8xf32>
    %209 = vector.shape_cast %208 : vector<1x4x8xf32> to vector<4x8xf32>
    %210 = vector.extract_strided_slice %191 {offsets = [0, 1], sizes = [8, 64], strides = [1, 1]} : vector<8x82xf32> to vector<8x64xf32>
    %cst_153 = arith.constant dense<0.000000e+00> : vector<4x64xf32>
    %211 = tpu.matmul %209, %210, %cst_153 {dimension_numbers = #tpu.dot_dimension_numbers<[1], [0], [0], [1], [0, 0, 1, 1], [], []>} : vector<4x8xf32>, vector<8x64xf32>, vector<4x64xf32> -> vector<4x64xf32>
    %212 = arith.addf %207, %211 : vector<4x64xf32>
    %c2_154 = arith.constant 2 : index
    %c0_155 = arith.constant 0 : index
    %c0_156 = arith.constant 0 : index
    %213 = vector.load %arg14[%c2_154, %c0_155, %c0_156] : memref<9x4x4xf32, #tpu.memory_space<vmem>>, vector<1x4x4xf32>
    %214 = vector.shape_cast %213 : vector<1x4x4xf32> to vector<4x4xf32>
    %215 = vector.extract_strided_slice %189 {offsets = [0, 2], sizes = [4, 64], strides = [1, 1]} : vector<4x82xf32> to vector<4x64xf32>
    %cst_157 = arith.constant dense<0.000000e+00> : vector<4x64xf32>
    %216 = tpu.matmul %214, %215, %cst_157 {dimension_numbers = #tpu.dot_dimension_numbers<[1], [0], [0], [1], [0, 0, 1, 1], [], []>} : vector<4x4xf32>, vector<4x64xf32>, vector<4x64xf32> -> vector<4x64xf32>
    %217 = arith.addf %212, %216 : vector<4x64xf32>
    %c2_158 = arith.constant 2 : index
    %c0_159 = arith.constant 0 : index
    %c0_160 = arith.constant 0 : index
    %218 = vector.load %arg15[%c2_158, %c0_159, %c0_160] : memref<9x4x8xf32, #tpu.memory_space<vmem>>, vector<1x4x8xf32>
    %219 = vector.shape_cast %218 : vector<1x4x8xf32> to vector<4x8xf32>
    %220 = vector.extract_strided_slice %191 {offsets = [0, 2], sizes = [8, 64], strides = [1, 1]} : vector<8x82xf32> to vector<8x64xf32>
    %cst_161 = arith.constant dense<0.000000e+00> : vector<4x64xf32>
    %221 = tpu.matmul %219, %220, %cst_161 {dimension_numbers = #tpu.dot_dimension_numbers<[1], [0], [0], [1], [0, 0, 1, 1], [], []>} : vector<4x8xf32>, vector<8x64xf32>, vector<4x64xf32> -> vector<4x64xf32>
    %222 = arith.addf %217, %221 : vector<4x64xf32>
    %c3_162 = arith.constant 3 : index
    %c0_163 = arith.constant 0 : index
    %c0_164 = arith.constant 0 : index
    %223 = vector.load %arg14[%c3_162, %c0_163, %c0_164] : memref<9x4x4xf32, #tpu.memory_space<vmem>>, vector<1x4x4xf32>
    %224 = vector.shape_cast %223 : vector<1x4x4xf32> to vector<4x4xf32>
    %225 = vector.extract_strided_slice %189 {offsets = [0, 8], sizes = [4, 64], strides = [1, 1]} : vector<4x82xf32> to vector<4x64xf32>
    %cst_165 = arith.constant dense<0.000000e+00> : vector<4x64xf32>
    %226 = tpu.matmul %224, %225, %cst_165 {dimension_numbers = #tpu.dot_dimension_numbers<[1], [0], [0], [1], [0, 0, 1, 1], [], []>} : vector<4x4xf32>, vector<4x64xf32>, vector<4x64xf32> -> vector<4x64xf32>
    %227 = arith.addf %222, %226 : vector<4x64xf32>
    %c3_166 = arith.constant 3 : index
    %c0_167 = arith.constant 0 : index
    %c0_168 = arith.constant 0 : index
    %228 = vector.load %arg15[%c3_166, %c0_167, %c0_168] : memref<9x4x8xf32, #tpu.memory_space<vmem>>, vector<1x4x8xf32>
    %229 = vector.shape_cast %228 : vector<1x4x8xf32> to vector<4x8xf32>
    %230 = vector.extract_strided_slice %191 {offsets = [0, 8], sizes = [8, 64], strides = [1, 1]} : vector<8x82xf32> to vector<8x64xf32>
    %cst_169 = arith.constant dense<0.000000e+00> : vector<4x64xf32>
    %231 = tpu.matmul %229, %230, %cst_169 {dimension_numbers = #tpu.dot_dimension_numbers<[1], [0], [0], [1], [0, 0, 1, 1], [], []>} : vector<4x8xf32>, vector<8x64xf32>, vector<4x64xf32> -> vector<4x64xf32>
    %232 = arith.addf %227, %231 : vector<4x64xf32>
    %c4_170 = arith.constant 4 : index
    %c0_171 = arith.constant 0 : index
    %c0_172 = arith.constant 0 : index
    %233 = vector.load %arg14[%c4_170, %c0_171, %c0_172] : memref<9x4x4xf32, #tpu.memory_space<vmem>>, vector<1x4x4xf32>
    %234 = vector.shape_cast %233 : vector<1x4x4xf32> to vector<4x4xf32>
    %235 = vector.extract_strided_slice %189 {offsets = [0, 9], sizes = [4, 64], strides = [1, 1]} : vector<4x82xf32> to vector<4x64xf32>
    %cst_173 = arith.constant dense<0.000000e+00> : vector<4x64xf32>
    %236 = tpu.matmul %234, %235, %cst_173 {dimension_numbers = #tpu.dot_dimension_numbers<[1], [0], [0], [1], [0, 0, 1, 1], [], []>} : vector<4x4xf32>, vector<4x64xf32>, vector<4x64xf32> -> vector<4x64xf32>
    %237 = arith.addf %232, %236 : vector<4x64xf32>
    %c4_174 = arith.constant 4 : index
    %c0_175 = arith.constant 0 : index
    %c0_176 = arith.constant 0 : index
    %238 = vector.load %arg15[%c4_174, %c0_175, %c0_176] : memref<9x4x8xf32, #tpu.memory_space<vmem>>, vector<1x4x8xf32>
    %239 = vector.shape_cast %238 : vector<1x4x8xf32> to vector<4x8xf32>
    %240 = vector.extract_strided_slice %191 {offsets = [0, 9], sizes = [8, 64], strides = [1, 1]} : vector<8x82xf32> to vector<8x64xf32>
    %cst_177 = arith.constant dense<0.000000e+00> : vector<4x64xf32>
    %241 = tpu.matmul %239, %240, %cst_177 {dimension_numbers = #tpu.dot_dimension_numbers<[1], [0], [0], [1], [0, 0, 1, 1], [], []>} : vector<4x8xf32>, vector<8x64xf32>, vector<4x64xf32> -> vector<4x64xf32>
    %242 = arith.addf %237, %241 : vector<4x64xf32>
    %c5_178 = arith.constant 5 : index
    %c0_179 = arith.constant 0 : index
    %c0_180 = arith.constant 0 : index
    %243 = vector.load %arg14[%c5_178, %c0_179, %c0_180] : memref<9x4x4xf32, #tpu.memory_space<vmem>>, vector<1x4x4xf32>
    %244 = vector.shape_cast %243 : vector<1x4x4xf32> to vector<4x4xf32>
    %245 = vector.extract_strided_slice %189 {offsets = [0, 10], sizes = [4, 64], strides = [1, 1]} : vector<4x82xf32> to vector<4x64xf32>
    %cst_181 = arith.constant dense<0.000000e+00> : vector<4x64xf32>
    %246 = tpu.matmul %244, %245, %cst_181 {dimension_numbers = #tpu.dot_dimension_numbers<[1], [0], [0], [1], [0, 0, 1, 1], [], []>} : vector<4x4xf32>, vector<4x64xf32>, vector<4x64xf32> -> vector<4x64xf32>
    %247 = arith.addf %242, %246 : vector<4x64xf32>
    %c5_182 = arith.constant 5 : index
    %c0_183 = arith.constant 0 : index
    %c0_184 = arith.constant 0 : index
    %248 = vector.load %arg15[%c5_182, %c0_183, %c0_184] : memref<9x4x8xf32, #tpu.memory_space<vmem>>, vector<1x4x8xf32>
    %249 = vector.shape_cast %248 : vector<1x4x8xf32> to vector<4x8xf32>
    %250 = vector.extract_strided_slice %191 {offsets = [0, 10], sizes = [8, 64], strides = [1, 1]} : vector<8x82xf32> to vector<8x64xf32>
    %cst_185 = arith.constant dense<0.000000e+00> : vector<4x64xf32>
    %251 = tpu.matmul %249, %250, %cst_185 {dimension_numbers = #tpu.dot_dimension_numbers<[1], [0], [0], [1], [0, 0, 1, 1], [], []>} : vector<4x8xf32>, vector<8x64xf32>, vector<4x64xf32> -> vector<4x64xf32>
    %252 = arith.addf %247, %251 : vector<4x64xf32>
    %c6_186 = arith.constant 6 : index
    %c0_187 = arith.constant 0 : index
    %c0_188 = arith.constant 0 : index
    %253 = vector.load %arg14[%c6_186, %c0_187, %c0_188] : memref<9x4x4xf32, #tpu.memory_space<vmem>>, vector<1x4x4xf32>
    %254 = vector.shape_cast %253 : vector<1x4x4xf32> to vector<4x4xf32>
    %255 = vector.extract_strided_slice %189 {offsets = [0, 16], sizes = [4, 64], strides = [1, 1]} : vector<4x82xf32> to vector<4x64xf32>
    %cst_189 = arith.constant dense<0.000000e+00> : vector<4x64xf32>
    %256 = tpu.matmul %254, %255, %cst_189 {dimension_numbers = #tpu.dot_dimension_numbers<[1], [0], [0], [1], [0, 0, 1, 1], [], []>} : vector<4x4xf32>, vector<4x64xf32>, vector<4x64xf32> -> vector<4x64xf32>
    %257 = arith.addf %252, %256 : vector<4x64xf32>
    %c6_190 = arith.constant 6 : index
    %c0_191 = arith.constant 0 : index
    %c0_192 = arith.constant 0 : index
    %258 = vector.load %arg15[%c6_190, %c0_191, %c0_192] : memref<9x4x8xf32, #tpu.memory_space<vmem>>, vector<1x4x8xf32>
    %259 = vector.shape_cast %258 : vector<1x4x8xf32> to vector<4x8xf32>
    %260 = vector.extract_strided_slice %191 {offsets = [0, 16], sizes = [8, 64], strides = [1, 1]} : vector<8x82xf32> to vector<8x64xf32>
    %cst_193 = arith.constant dense<0.000000e+00> : vector<4x64xf32>
    %261 = tpu.matmul %259, %260, %cst_193 {dimension_numbers = #tpu.dot_dimension_numbers<[1], [0], [0], [1], [0, 0, 1, 1], [], []>} : vector<4x8xf32>, vector<8x64xf32>, vector<4x64xf32> -> vector<4x64xf32>
    %262 = arith.addf %257, %261 : vector<4x64xf32>
    %c7_194 = arith.constant 7 : index
    %c0_195 = arith.constant 0 : index
    %c0_196 = arith.constant 0 : index
    %263 = vector.load %arg14[%c7_194, %c0_195, %c0_196] : memref<9x4x4xf32, #tpu.memory_space<vmem>>, vector<1x4x4xf32>
    %264 = vector.shape_cast %263 : vector<1x4x4xf32> to vector<4x4xf32>
    %265 = vector.extract_strided_slice %189 {offsets = [0, 17], sizes = [4, 64], strides = [1, 1]} : vector<4x82xf32> to vector<4x64xf32>
    %cst_197 = arith.constant dense<0.000000e+00> : vector<4x64xf32>
    %266 = tpu.matmul %264, %265, %cst_197 {dimension_numbers = #tpu.dot_dimension_numbers<[1], [0], [0], [1], [0, 0, 1, 1], [], []>} : vector<4x4xf32>, vector<4x64xf32>, vector<4x64xf32> -> vector<4x64xf32>
    %267 = arith.addf %262, %266 : vector<4x64xf32>
    %c7_198 = arith.constant 7 : index
    %c0_199 = arith.constant 0 : index
    %c0_200 = arith.constant 0 : index
    %268 = vector.load %arg15[%c7_198, %c0_199, %c0_200] : memref<9x4x8xf32, #tpu.memory_space<vmem>>, vector<1x4x8xf32>
    %269 = vector.shape_cast %268 : vector<1x4x8xf32> to vector<4x8xf32>
    %270 = vector.extract_strided_slice %191 {offsets = [0, 17], sizes = [8, 64], strides = [1, 1]} : vector<8x82xf32> to vector<8x64xf32>
    %cst_201 = arith.constant dense<0.000000e+00> : vector<4x64xf32>
    %271 = tpu.matmul %269, %270, %cst_201 {dimension_numbers = #tpu.dot_dimension_numbers<[1], [0], [0], [1], [0, 0, 1, 1], [], []>} : vector<4x8xf32>, vector<8x64xf32>, vector<4x64xf32> -> vector<4x64xf32>
    %272 = arith.addf %267, %271 : vector<4x64xf32>
    %c8_202 = arith.constant 8 : index
    %c0_203 = arith.constant 0 : index
    %c0_204 = arith.constant 0 : index
    %273 = vector.load %arg14[%c8_202, %c0_203, %c0_204] : memref<9x4x4xf32, #tpu.memory_space<vmem>>, vector<1x4x4xf32>
    %274 = vector.shape_cast %273 : vector<1x4x4xf32> to vector<4x4xf32>
    %275 = vector.extract_strided_slice %189 {offsets = [0, 18], sizes = [4, 64], strides = [1, 1]} : vector<4x82xf32> to vector<4x64xf32>
    %cst_205 = arith.constant dense<0.000000e+00> : vector<4x64xf32>
    %276 = tpu.matmul %274, %275, %cst_205 {dimension_numbers = #tpu.dot_dimension_numbers<[1], [0], [0], [1], [0, 0, 1, 1], [], []>} : vector<4x4xf32>, vector<4x64xf32>, vector<4x64xf32> -> vector<4x64xf32>
    %277 = arith.addf %272, %276 : vector<4x64xf32>
    %c8_206 = arith.constant 8 : index
    %c0_207 = arith.constant 0 : index
    %c0_208 = arith.constant 0 : index
    %278 = vector.load %arg15[%c8_206, %c0_207, %c0_208] : memref<9x4x8xf32, #tpu.memory_space<vmem>>, vector<1x4x8xf32>
    %279 = vector.shape_cast %278 : vector<1x4x8xf32> to vector<4x8xf32>
    %280 = vector.extract_strided_slice %191 {offsets = [0, 18], sizes = [8, 64], strides = [1, 1]} : vector<8x82xf32> to vector<8x64xf32>
    %cst_209 = arith.constant dense<0.000000e+00> : vector<4x64xf32>
    %281 = tpu.matmul %279, %280, %cst_209 {dimension_numbers = #tpu.dot_dimension_numbers<[1], [0], [0], [1], [0, 0, 1, 1], [], []>} : vector<4x8xf32>, vector<8x64xf32>, vector<4x64xf32> -> vector<4x64xf32>
    %282 = arith.addf %277, %281 : vector<4x64xf32>
    %c0_210 = arith.constant 0 : index
    %c0_211 = arith.constant 0 : index
    %283 = vector.load %arg16[%c0_210, %c0_211] : memref<4x1xf32, #tpu.memory_space<vmem>>, vector<4x1xf32>
    %284 = vector.broadcast %283 : vector<4x1xf32> to vector<4x64xf32>
    %285 = arith.addf %282, %284 : vector<4x64xf32>
    %cst_212 = arith.constant 0.000000e+00 : f32
    %286 = vector.broadcast %cst_212 : f32 to vector<4x64xf32>
    %287 = arith.cmpf oge, %285, %286 : vector<4x64xf32>
    %cst_213 = arith.constant 2.000000e-01 : f32
    %288 = vector.broadcast %cst_213 : f32 to vector<4x64xf32>
    %289 = arith.mulf %288, %285 : vector<4x64xf32>
    %290 = arith.select %287, %285, %289 : vector<4x64xi1>, vector<4x64xf32>
    %291 = vector.broadcast %7 : vector<1x64xf32> to vector<4x64xf32>
    %292 = arith.mulf %290, %291 : vector<4x64xf32>
    %cst_214 = arith.constant 0.000000e+00 : f32
    %293 = vector.broadcast %cst_214 : f32 to vector<4x64xf32>
    %294 = arith.cmpf oge, %292, %293 : vector<4x64xf32>
    %cst_215 = arith.constant 2.000000e-01 : f32
    %295 = vector.broadcast %cst_215 : f32 to vector<4x64xf32>
    %296 = arith.mulf %295, %292 : vector<4x64xf32>
    %297 = arith.select %294, %292, %296 : vector<4x64xi1>, vector<4x64xf32>
    %cst_216 = arith.constant 0.000000e+00 : f32
    %298 = vector.broadcast %cst_216 : f32 to vector<4x9xf32>
    %299 = tpu.concatenate %298, %297, %298 in 1 : vector<4x9xf32>, vector<4x64xf32>, vector<4x9xf32> -> vector<4x82xf32>
    %cst_217 = arith.constant 0.000000e+00 : f32
    %300 = vector.broadcast %cst_217 : f32 to vector<4x64xf32>
    %c0_218 = arith.constant 0 : index
    %c0_219 = arith.constant 0 : index
    %c0_220 = arith.constant 0 : index
    %301 = vector.load %arg17[%c0_218, %c0_219, %c0_220] : memref<9x4x4xf32, #tpu.memory_space<vmem>>, vector<1x4x4xf32>
    %302 = vector.shape_cast %301 : vector<1x4x4xf32> to vector<4x4xf32>
    %303 = vector.extract_strided_slice %299 {offsets = [0, 0], sizes = [4, 64], strides = [1, 1]} : vector<4x82xf32> to vector<4x64xf32>
    %cst_221 = arith.constant dense<0.000000e+00> : vector<4x64xf32>
    %304 = tpu.matmul %302, %303, %cst_221 {dimension_numbers = #tpu.dot_dimension_numbers<[1], [0], [0], [1], [0, 0, 1, 1], [], []>} : vector<4x4xf32>, vector<4x64xf32>, vector<4x64xf32> -> vector<4x64xf32>
    %305 = arith.addf %300, %304 : vector<4x64xf32>
    %c1_222 = arith.constant 1 : index
    %c0_223 = arith.constant 0 : index
    %c0_224 = arith.constant 0 : index
    %306 = vector.load %arg17[%c1_222, %c0_223, %c0_224] : memref<9x4x4xf32, #tpu.memory_space<vmem>>, vector<1x4x4xf32>
    %307 = vector.shape_cast %306 : vector<1x4x4xf32> to vector<4x4xf32>
    %308 = vector.extract_strided_slice %299 {offsets = [0, 1], sizes = [4, 64], strides = [1, 1]} : vector<4x82xf32> to vector<4x64xf32>
    %cst_225 = arith.constant dense<0.000000e+00> : vector<4x64xf32>
    %309 = tpu.matmul %307, %308, %cst_225 {dimension_numbers = #tpu.dot_dimension_numbers<[1], [0], [0], [1], [0, 0, 1, 1], [], []>} : vector<4x4xf32>, vector<4x64xf32>, vector<4x64xf32> -> vector<4x64xf32>
    %310 = arith.addf %305, %309 : vector<4x64xf32>
    %c2_226 = arith.constant 2 : index
    %c0_227 = arith.constant 0 : index
    %c0_228 = arith.constant 0 : index
    %311 = vector.load %arg17[%c2_226, %c0_227, %c0_228] : memref<9x4x4xf32, #tpu.memory_space<vmem>>, vector<1x4x4xf32>
    %312 = vector.shape_cast %311 : vector<1x4x4xf32> to vector<4x4xf32>
    %313 = vector.extract_strided_slice %299 {offsets = [0, 2], sizes = [4, 64], strides = [1, 1]} : vector<4x82xf32> to vector<4x64xf32>
    %cst_229 = arith.constant dense<0.000000e+00> : vector<4x64xf32>
    %314 = tpu.matmul %312, %313, %cst_229 {dimension_numbers = #tpu.dot_dimension_numbers<[1], [0], [0], [1], [0, 0, 1, 1], [], []>} : vector<4x4xf32>, vector<4x64xf32>, vector<4x64xf32> -> vector<4x64xf32>
    %315 = arith.addf %310, %314 : vector<4x64xf32>
    %c3_230 = arith.constant 3 : index
    %c0_231 = arith.constant 0 : index
    %c0_232 = arith.constant 0 : index
    %316 = vector.load %arg17[%c3_230, %c0_231, %c0_232] : memref<9x4x4xf32, #tpu.memory_space<vmem>>, vector<1x4x4xf32>
    %317 = vector.shape_cast %316 : vector<1x4x4xf32> to vector<4x4xf32>
    %318 = vector.extract_strided_slice %299 {offsets = [0, 8], sizes = [4, 64], strides = [1, 1]} : vector<4x82xf32> to vector<4x64xf32>
    %cst_233 = arith.constant dense<0.000000e+00> : vector<4x64xf32>
    %319 = tpu.matmul %317, %318, %cst_233 {dimension_numbers = #tpu.dot_dimension_numbers<[1], [0], [0], [1], [0, 0, 1, 1], [], []>} : vector<4x4xf32>, vector<4x64xf32>, vector<4x64xf32> -> vector<4x64xf32>
    %320 = arith.addf %315, %319 : vector<4x64xf32>
    %c4_234 = arith.constant 4 : index
    %c0_235 = arith.constant 0 : index
    %c0_236 = arith.constant 0 : index
    %321 = vector.load %arg17[%c4_234, %c0_235, %c0_236] : memref<9x4x4xf32, #tpu.memory_space<vmem>>, vector<1x4x4xf32>
    %322 = vector.shape_cast %321 : vector<1x4x4xf32> to vector<4x4xf32>
    %323 = vector.extract_strided_slice %299 {offsets = [0, 9], sizes = [4, 64], strides = [1, 1]} : vector<4x82xf32> to vector<4x64xf32>
    %cst_237 = arith.constant dense<0.000000e+00> : vector<4x64xf32>
    %324 = tpu.matmul %322, %323, %cst_237 {dimension_numbers = #tpu.dot_dimension_numbers<[1], [0], [0], [1], [0, 0, 1, 1], [], []>} : vector<4x4xf32>, vector<4x64xf32>, vector<4x64xf32> -> vector<4x64xf32>
    %325 = arith.addf %320, %324 : vector<4x64xf32>
    %c5_238 = arith.constant 5 : index
    %c0_239 = arith.constant 0 : index
    %c0_240 = arith.constant 0 : index
    %326 = vector.load %arg17[%c5_238, %c0_239, %c0_240] : memref<9x4x4xf32, #tpu.memory_space<vmem>>, vector<1x4x4xf32>
    %327 = vector.shape_cast %326 : vector<1x4x4xf32> to vector<4x4xf32>
    %328 = vector.extract_strided_slice %299 {offsets = [0, 10], sizes = [4, 64], strides = [1, 1]} : vector<4x82xf32> to vector<4x64xf32>
    %cst_241 = arith.constant dense<0.000000e+00> : vector<4x64xf32>
    %329 = tpu.matmul %327, %328, %cst_241 {dimension_numbers = #tpu.dot_dimension_numbers<[1], [0], [0], [1], [0, 0, 1, 1], [], []>} : vector<4x4xf32>, vector<4x64xf32>, vector<4x64xf32> -> vector<4x64xf32>
    %330 = arith.addf %325, %329 : vector<4x64xf32>
    %c6_242 = arith.constant 6 : index
    %c0_243 = arith.constant 0 : index
    %c0_244 = arith.constant 0 : index
    %331 = vector.load %arg17[%c6_242, %c0_243, %c0_244] : memref<9x4x4xf32, #tpu.memory_space<vmem>>, vector<1x4x4xf32>
    %332 = vector.shape_cast %331 : vector<1x4x4xf32> to vector<4x4xf32>
    %333 = vector.extract_strided_slice %299 {offsets = [0, 16], sizes = [4, 64], strides = [1, 1]} : vector<4x82xf32> to vector<4x64xf32>
    %cst_245 = arith.constant dense<0.000000e+00> : vector<4x64xf32>
    %334 = tpu.matmul %332, %333, %cst_245 {dimension_numbers = #tpu.dot_dimension_numbers<[1], [0], [0], [1], [0, 0, 1, 1], [], []>} : vector<4x4xf32>, vector<4x64xf32>, vector<4x64xf32> -> vector<4x64xf32>
    %335 = arith.addf %330, %334 : vector<4x64xf32>
    %c7_246 = arith.constant 7 : index
    %c0_247 = arith.constant 0 : index
    %c0_248 = arith.constant 0 : index
    %336 = vector.load %arg17[%c7_246, %c0_247, %c0_248] : memref<9x4x4xf32, #tpu.memory_space<vmem>>, vector<1x4x4xf32>
    %337 = vector.shape_cast %336 : vector<1x4x4xf32> to vector<4x4xf32>
    %338 = vector.extract_strided_slice %299 {offsets = [0, 17], sizes = [4, 64], strides = [1, 1]} : vector<4x82xf32> to vector<4x64xf32>
    %cst_249 = arith.constant dense<0.000000e+00> : vector<4x64xf32>
    %339 = tpu.matmul %337, %338, %cst_249 {dimension_numbers = #tpu.dot_dimension_numbers<[1], [0], [0], [1], [0, 0, 1, 1], [], []>} : vector<4x4xf32>, vector<4x64xf32>, vector<4x64xf32> -> vector<4x64xf32>
    %340 = arith.addf %335, %339 : vector<4x64xf32>
    %c8_250 = arith.constant 8 : index
    %c0_251 = arith.constant 0 : index
    %c0_252 = arith.constant 0 : index
    %341 = vector.load %arg17[%c8_250, %c0_251, %c0_252] : memref<9x4x4xf32, #tpu.memory_space<vmem>>, vector<1x4x4xf32>
    %342 = vector.shape_cast %341 : vector<1x4x4xf32> to vector<4x4xf32>
    %343 = vector.extract_strided_slice %299 {offsets = [0, 18], sizes = [4, 64], strides = [1, 1]} : vector<4x82xf32> to vector<4x64xf32>
    %cst_253 = arith.constant dense<0.000000e+00> : vector<4x64xf32>
    %344 = tpu.matmul %342, %343, %cst_253 {dimension_numbers = #tpu.dot_dimension_numbers<[1], [0], [0], [1], [0, 0, 1, 1], [], []>} : vector<4x4xf32>, vector<4x64xf32>, vector<4x64xf32> -> vector<4x64xf32>
    %345 = arith.addf %340, %344 : vector<4x64xf32>
    %c0_254 = arith.constant 0 : index
    %c0_255 = arith.constant 0 : index
    %346 = vector.load %arg18[%c0_254, %c0_255] : memref<4x1xf32, #tpu.memory_space<vmem>>, vector<4x1xf32>
    %347 = vector.broadcast %346 : vector<4x1xf32> to vector<4x64xf32>
    %348 = arith.addf %345, %347 : vector<4x64xf32>
    %349 = vector.broadcast %7 : vector<1x64xf32> to vector<4x64xf32>
    %350 = arith.mulf %348, %349 : vector<4x64xf32>
    %cst_256 = arith.constant 0.000000e+00 : f32
    %351 = vector.broadcast %cst_256 : f32 to vector<4x64xf32>
    %352 = arith.cmpf oge, %350, %351 : vector<4x64xf32>
    %cst_257 = arith.constant 2.000000e-01 : f32
    %353 = vector.broadcast %cst_257 : f32 to vector<4x64xf32>
    %354 = arith.mulf %353, %350 : vector<4x64xf32>
    %355 = arith.select %352, %350, %354 : vector<4x64xi1>, vector<4x64xf32>
    %cst_258 = arith.constant 0.000000e+00 : f32
    %356 = vector.broadcast %cst_258 : f32 to vector<4x9xf32>
    %357 = tpu.concatenate %356, %355, %356 in 1 : vector<4x9xf32>, vector<4x64xf32>, vector<4x9xf32> -> vector<4x82xf32>
    %cst_259 = arith.constant 0.000000e+00 : f32
    %358 = vector.broadcast %cst_259 : f32 to vector<4x64xf32>
    %c0_260 = arith.constant 0 : index
    %c0_261 = arith.constant 0 : index
    %c0_262 = arith.constant 0 : index
    %359 = vector.load %arg19[%c0_260, %c0_261, %c0_262] : memref<9x4x4xf32, #tpu.memory_space<vmem>>, vector<1x4x4xf32>
    %360 = vector.shape_cast %359 : vector<1x4x4xf32> to vector<4x4xf32>
    %361 = vector.extract_strided_slice %357 {offsets = [0, 0], sizes = [4, 64], strides = [1, 1]} : vector<4x82xf32> to vector<4x64xf32>
    %cst_263 = arith.constant dense<0.000000e+00> : vector<4x64xf32>
    %362 = tpu.matmul %360, %361, %cst_263 {dimension_numbers = #tpu.dot_dimension_numbers<[1], [0], [0], [1], [0, 0, 1, 1], [], []>} : vector<4x4xf32>, vector<4x64xf32>, vector<4x64xf32> -> vector<4x64xf32>
    %363 = arith.addf %358, %362 : vector<4x64xf32>
    %c1_264 = arith.constant 1 : index
    %c0_265 = arith.constant 0 : index
    %c0_266 = arith.constant 0 : index
    %364 = vector.load %arg19[%c1_264, %c0_265, %c0_266] : memref<9x4x4xf32, #tpu.memory_space<vmem>>, vector<1x4x4xf32>
    %365 = vector.shape_cast %364 : vector<1x4x4xf32> to vector<4x4xf32>
    %366 = vector.extract_strided_slice %357 {offsets = [0, 1], sizes = [4, 64], strides = [1, 1]} : vector<4x82xf32> to vector<4x64xf32>
    %cst_267 = arith.constant dense<0.000000e+00> : vector<4x64xf32>
    %367 = tpu.matmul %365, %366, %cst_267 {dimension_numbers = #tpu.dot_dimension_numbers<[1], [0], [0], [1], [0, 0, 1, 1], [], []>} : vector<4x4xf32>, vector<4x64xf32>, vector<4x64xf32> -> vector<4x64xf32>
    %368 = arith.addf %363, %367 : vector<4x64xf32>
    %c2_268 = arith.constant 2 : index
    %c0_269 = arith.constant 0 : index
    %c0_270 = arith.constant 0 : index
    %369 = vector.load %arg19[%c2_268, %c0_269, %c0_270] : memref<9x4x4xf32, #tpu.memory_space<vmem>>, vector<1x4x4xf32>
    %370 = vector.shape_cast %369 : vector<1x4x4xf32> to vector<4x4xf32>
    %371 = vector.extract_strided_slice %357 {offsets = [0, 2], sizes = [4, 64], strides = [1, 1]} : vector<4x82xf32> to vector<4x64xf32>
    %cst_271 = arith.constant dense<0.000000e+00> : vector<4x64xf32>
    %372 = tpu.matmul %370, %371, %cst_271 {dimension_numbers = #tpu.dot_dimension_numbers<[1], [0], [0], [1], [0, 0, 1, 1], [], []>} : vector<4x4xf32>, vector<4x64xf32>, vector<4x64xf32> -> vector<4x64xf32>
    %373 = arith.addf %368, %372 : vector<4x64xf32>
    %c3_272 = arith.constant 3 : index
    %c0_273 = arith.constant 0 : index
    %c0_274 = arith.constant 0 : index
    %374 = vector.load %arg19[%c3_272, %c0_273, %c0_274] : memref<9x4x4xf32, #tpu.memory_space<vmem>>, vector<1x4x4xf32>
    %375 = vector.shape_cast %374 : vector<1x4x4xf32> to vector<4x4xf32>
    %376 = vector.extract_strided_slice %357 {offsets = [0, 8], sizes = [4, 64], strides = [1, 1]} : vector<4x82xf32> to vector<4x64xf32>
    %cst_275 = arith.constant dense<0.000000e+00> : vector<4x64xf32>
    %377 = tpu.matmul %375, %376, %cst_275 {dimension_numbers = #tpu.dot_dimension_numbers<[1], [0], [0], [1], [0, 0, 1, 1], [], []>} : vector<4x4xf32>, vector<4x64xf32>, vector<4x64xf32> -> vector<4x64xf32>
    %378 = arith.addf %373, %377 : vector<4x64xf32>
    %c4_276 = arith.constant 4 : index
    %c0_277 = arith.constant 0 : index
    %c0_278 = arith.constant 0 : index
    %379 = vector.load %arg19[%c4_276, %c0_277, %c0_278] : memref<9x4x4xf32, #tpu.memory_space<vmem>>, vector<1x4x4xf32>
    %380 = vector.shape_cast %379 : vector<1x4x4xf32> to vector<4x4xf32>
    %381 = vector.extract_strided_slice %357 {offsets = [0, 9], sizes = [4, 64], strides = [1, 1]} : vector<4x82xf32> to vector<4x64xf32>
    %cst_279 = arith.constant dense<0.000000e+00> : vector<4x64xf32>
    %382 = tpu.matmul %380, %381, %cst_279 {dimension_numbers = #tpu.dot_dimension_numbers<[1], [0], [0], [1], [0, 0, 1, 1], [], []>} : vector<4x4xf32>, vector<4x64xf32>, vector<4x64xf32> -> vector<4x64xf32>
    %383 = arith.addf %378, %382 : vector<4x64xf32>
    %c5_280 = arith.constant 5 : index
    %c0_281 = arith.constant 0 : index
    %c0_282 = arith.constant 0 : index
    %384 = vector.load %arg19[%c5_280, %c0_281, %c0_282] : memref<9x4x4xf32, #tpu.memory_space<vmem>>, vector<1x4x4xf32>
    %385 = vector.shape_cast %384 : vector<1x4x4xf32> to vector<4x4xf32>
    %386 = vector.extract_strided_slice %357 {offsets = [0, 10], sizes = [4, 64], strides = [1, 1]} : vector<4x82xf32> to vector<4x64xf32>
    %cst_283 = arith.constant dense<0.000000e+00> : vector<4x64xf32>
    %387 = tpu.matmul %385, %386, %cst_283 {dimension_numbers = #tpu.dot_dimension_numbers<[1], [0], [0], [1], [0, 0, 1, 1], [], []>} : vector<4x4xf32>, vector<4x64xf32>, vector<4x64xf32> -> vector<4x64xf32>
    %388 = arith.addf %383, %387 : vector<4x64xf32>
    %c6_284 = arith.constant 6 : index
    %c0_285 = arith.constant 0 : index
    %c0_286 = arith.constant 0 : index
    %389 = vector.load %arg19[%c6_284, %c0_285, %c0_286] : memref<9x4x4xf32, #tpu.memory_space<vmem>>, vector<1x4x4xf32>
    %390 = vector.shape_cast %389 : vector<1x4x4xf32> to vector<4x4xf32>
    %391 = vector.extract_strided_slice %357 {offsets = [0, 16], sizes = [4, 64], strides = [1, 1]} : vector<4x82xf32> to vector<4x64xf32>
    %cst_287 = arith.constant dense<0.000000e+00> : vector<4x64xf32>
    %392 = tpu.matmul %390, %391, %cst_287 {dimension_numbers = #tpu.dot_dimension_numbers<[1], [0], [0], [1], [0, 0, 1, 1], [], []>} : vector<4x4xf32>, vector<4x64xf32>, vector<4x64xf32> -> vector<4x64xf32>
    %393 = arith.addf %388, %392 : vector<4x64xf32>
    %c7_288 = arith.constant 7 : index
    %c0_289 = arith.constant 0 : index
    %c0_290 = arith.constant 0 : index
    %394 = vector.load %arg19[%c7_288, %c0_289, %c0_290] : memref<9x4x4xf32, #tpu.memory_space<vmem>>, vector<1x4x4xf32>
    %395 = vector.shape_cast %394 : vector<1x4x4xf32> to vector<4x4xf32>
    %396 = vector.extract_strided_slice %357 {offsets = [0, 17], sizes = [4, 64], strides = [1, 1]} : vector<4x82xf32> to vector<4x64xf32>
    %cst_291 = arith.constant dense<0.000000e+00> : vector<4x64xf32>
    %397 = tpu.matmul %395, %396, %cst_291 {dimension_numbers = #tpu.dot_dimension_numbers<[1], [0], [0], [1], [0, 0, 1, 1], [], []>} : vector<4x4xf32>, vector<4x64xf32>, vector<4x64xf32> -> vector<4x64xf32>
    %398 = arith.addf %393, %397 : vector<4x64xf32>
    %c8_292 = arith.constant 8 : index
    %c0_293 = arith.constant 0 : index
    %c0_294 = arith.constant 0 : index
    %399 = vector.load %arg19[%c8_292, %c0_293, %c0_294] : memref<9x4x4xf32, #tpu.memory_space<vmem>>, vector<1x4x4xf32>
    %400 = vector.shape_cast %399 : vector<1x4x4xf32> to vector<4x4xf32>
    %401 = vector.extract_strided_slice %357 {offsets = [0, 18], sizes = [4, 64], strides = [1, 1]} : vector<4x82xf32> to vector<4x64xf32>
    %cst_295 = arith.constant dense<0.000000e+00> : vector<4x64xf32>
    %402 = tpu.matmul %400, %401, %cst_295 {dimension_numbers = #tpu.dot_dimension_numbers<[1], [0], [0], [1], [0, 0, 1, 1], [], []>} : vector<4x4xf32>, vector<4x64xf32>, vector<4x64xf32> -> vector<4x64xf32>
    %403 = arith.addf %398, %402 : vector<4x64xf32>
    %c0_296 = arith.constant 0 : index
    %c0_297 = arith.constant 0 : index
    %404 = vector.load %arg20[%c0_296, %c0_297] : memref<4x1xf32, #tpu.memory_space<vmem>>, vector<4x1xf32>
    %405 = vector.broadcast %404 : vector<4x1xf32> to vector<4x64xf32>
    %406 = arith.addf %403, %405 : vector<4x64xf32>
    %407 = vector.broadcast %7 : vector<1x64xf32> to vector<4x64xf32>
    %408 = arith.mulf %406, %407 : vector<4x64xf32>
    %409 = arith.addf %292, %408 : vector<4x64xf32>
    %cst_298 = arith.constant 0.707106769 : f32
    %410 = vector.broadcast %cst_298 : f32 to vector<4x64xf32>
    %411 = arith.mulf %409, %410 : vector<4x64xf32>
    %c0_299 = arith.constant 0 : index
    %c0_300 = arith.constant 0 : index
    %412 = vector.load %arg21[%c0_299, %c0_300] : memref<64x144xf32, #tpu.memory_space<vmem>>, vector<64x144xf32>
    %cst_301 = arith.constant dense<0.000000e+00> : vector<4x144xf32>
    %413 = tpu.matmul %411, %412, %cst_301 {dimension_numbers = #tpu.dot_dimension_numbers<[1], [0], [0], [1], [0, 0, 1, 1], [], []>} : vector<4x64xf32>, vector<64x144xf32>, vector<4x144xf32> -> vector<4x144xf32>
    %cst_302 = arith.constant 0.000000e+00 : f32
    %414 = vector.broadcast %cst_302 : f32 to vector<4x13xf32>
    %415 = tpu.concatenate %414, %413, %414 in 1 : vector<4x13xf32>, vector<4x144xf32>, vector<4x13xf32> -> vector<4x170xf32>
    %cst_303 = arith.constant 0.000000e+00 : f32
    %416 = vector.broadcast %cst_303 : f32 to vector<8x13xf32>
    %417 = tpu.concatenate %416, %5, %416 in 1 : vector<8x13xf32>, vector<8x144xf32>, vector<8x13xf32> -> vector<8x170xf32>
    %cst_304 = arith.constant 0.000000e+00 : f32
    %418 = vector.broadcast %cst_304 : f32 to vector<4x144xf32>
    %c0_305 = arith.constant 0 : index
    %c0_306 = arith.constant 0 : index
    %c0_307 = arith.constant 0 : index
    %419 = vector.load %arg22[%c0_305, %c0_306, %c0_307] : memref<9x4x4xf32, #tpu.memory_space<vmem>>, vector<1x4x4xf32>
    %420 = vector.shape_cast %419 : vector<1x4x4xf32> to vector<4x4xf32>
    %421 = vector.extract_strided_slice %415 {offsets = [0, 0], sizes = [4, 144], strides = [1, 1]} : vector<4x170xf32> to vector<4x144xf32>
    %cst_308 = arith.constant dense<0.000000e+00> : vector<4x144xf32>
    %422 = tpu.matmul %420, %421, %cst_308 {dimension_numbers = #tpu.dot_dimension_numbers<[1], [0], [0], [1], [0, 0, 1, 1], [], []>} : vector<4x4xf32>, vector<4x144xf32>, vector<4x144xf32> -> vector<4x144xf32>
    %423 = arith.addf %418, %422 : vector<4x144xf32>
    %c0_309 = arith.constant 0 : index
    %c0_310 = arith.constant 0 : index
    %c0_311 = arith.constant 0 : index
    %424 = vector.load %arg23[%c0_309, %c0_310, %c0_311] : memref<9x4x8xf32, #tpu.memory_space<vmem>>, vector<1x4x8xf32>
    %425 = vector.shape_cast %424 : vector<1x4x8xf32> to vector<4x8xf32>
    %426 = vector.extract_strided_slice %417 {offsets = [0, 0], sizes = [8, 144], strides = [1, 1]} : vector<8x170xf32> to vector<8x144xf32>
    %cst_312 = arith.constant dense<0.000000e+00> : vector<4x144xf32>
    %427 = tpu.matmul %425, %426, %cst_312 {dimension_numbers = #tpu.dot_dimension_numbers<[1], [0], [0], [1], [0, 0, 1, 1], [], []>} : vector<4x8xf32>, vector<8x144xf32>, vector<4x144xf32> -> vector<4x144xf32>
    %428 = arith.addf %423, %427 : vector<4x144xf32>
    %c1_313 = arith.constant 1 : index
    %c0_314 = arith.constant 0 : index
    %c0_315 = arith.constant 0 : index
    %429 = vector.load %arg22[%c1_313, %c0_314, %c0_315] : memref<9x4x4xf32, #tpu.memory_space<vmem>>, vector<1x4x4xf32>
    %430 = vector.shape_cast %429 : vector<1x4x4xf32> to vector<4x4xf32>
    %431 = vector.extract_strided_slice %415 {offsets = [0, 1], sizes = [4, 144], strides = [1, 1]} : vector<4x170xf32> to vector<4x144xf32>
    %cst_316 = arith.constant dense<0.000000e+00> : vector<4x144xf32>
    %432 = tpu.matmul %430, %431, %cst_316 {dimension_numbers = #tpu.dot_dimension_numbers<[1], [0], [0], [1], [0, 0, 1, 1], [], []>} : vector<4x4xf32>, vector<4x144xf32>, vector<4x144xf32> -> vector<4x144xf32>
    %433 = arith.addf %428, %432 : vector<4x144xf32>
    %c1_317 = arith.constant 1 : index
    %c0_318 = arith.constant 0 : index
    %c0_319 = arith.constant 0 : index
    %434 = vector.load %arg23[%c1_317, %c0_318, %c0_319] : memref<9x4x8xf32, #tpu.memory_space<vmem>>, vector<1x4x8xf32>
    %435 = vector.shape_cast %434 : vector<1x4x8xf32> to vector<4x8xf32>
    %436 = vector.extract_strided_slice %417 {offsets = [0, 1], sizes = [8, 144], strides = [1, 1]} : vector<8x170xf32> to vector<8x144xf32>
    %cst_320 = arith.constant dense<0.000000e+00> : vector<4x144xf32>
    %437 = tpu.matmul %435, %436, %cst_320 {dimension_numbers = #tpu.dot_dimension_numbers<[1], [0], [0], [1], [0, 0, 1, 1], [], []>} : vector<4x8xf32>, vector<8x144xf32>, vector<4x144xf32> -> vector<4x144xf32>
    %438 = arith.addf %433, %437 : vector<4x144xf32>
    %c2_321 = arith.constant 2 : index
    %c0_322 = arith.constant 0 : index
    %c0_323 = arith.constant 0 : index
    %439 = vector.load %arg22[%c2_321, %c0_322, %c0_323] : memref<9x4x4xf32, #tpu.memory_space<vmem>>, vector<1x4x4xf32>
    %440 = vector.shape_cast %439 : vector<1x4x4xf32> to vector<4x4xf32>
    %441 = vector.extract_strided_slice %415 {offsets = [0, 2], sizes = [4, 144], strides = [1, 1]} : vector<4x170xf32> to vector<4x144xf32>
    %cst_324 = arith.constant dense<0.000000e+00> : vector<4x144xf32>
    %442 = tpu.matmul %440, %441, %cst_324 {dimension_numbers = #tpu.dot_dimension_numbers<[1], [0], [0], [1], [0, 0, 1, 1], [], []>} : vector<4x4xf32>, vector<4x144xf32>, vector<4x144xf32> -> vector<4x144xf32>
    %443 = arith.addf %438, %442 : vector<4x144xf32>
    %c2_325 = arith.constant 2 : index
    %c0_326 = arith.constant 0 : index
    %c0_327 = arith.constant 0 : index
    %444 = vector.load %arg23[%c2_325, %c0_326, %c0_327] : memref<9x4x8xf32, #tpu.memory_space<vmem>>, vector<1x4x8xf32>
    %445 = vector.shape_cast %444 : vector<1x4x8xf32> to vector<4x8xf32>
    %446 = vector.extract_strided_slice %417 {offsets = [0, 2], sizes = [8, 144], strides = [1, 1]} : vector<8x170xf32> to vector<8x144xf32>
    %cst_328 = arith.constant dense<0.000000e+00> : vector<4x144xf32>
    %447 = tpu.matmul %445, %446, %cst_328 {dimension_numbers = #tpu.dot_dimension_numbers<[1], [0], [0], [1], [0, 0, 1, 1], [], []>} : vector<4x8xf32>, vector<8x144xf32>, vector<4x144xf32> -> vector<4x144xf32>
    %448 = arith.addf %443, %447 : vector<4x144xf32>
    %c3_329 = arith.constant 3 : index
    %c0_330 = arith.constant 0 : index
    %c0_331 = arith.constant 0 : index
    %449 = vector.load %arg22[%c3_329, %c0_330, %c0_331] : memref<9x4x4xf32, #tpu.memory_space<vmem>>, vector<1x4x4xf32>
    %450 = vector.shape_cast %449 : vector<1x4x4xf32> to vector<4x4xf32>
    %451 = vector.extract_strided_slice %415 {offsets = [0, 12], sizes = [4, 144], strides = [1, 1]} : vector<4x170xf32> to vector<4x144xf32>
    %cst_332 = arith.constant dense<0.000000e+00> : vector<4x144xf32>
    %452 = tpu.matmul %450, %451, %cst_332 {dimension_numbers = #tpu.dot_dimension_numbers<[1], [0], [0], [1], [0, 0, 1, 1], [], []>} : vector<4x4xf32>, vector<4x144xf32>, vector<4x144xf32> -> vector<4x144xf32>
    %453 = arith.addf %448, %452 : vector<4x144xf32>
    %c3_333 = arith.constant 3 : index
    %c0_334 = arith.constant 0 : index
    %c0_335 = arith.constant 0 : index
    %454 = vector.load %arg23[%c3_333, %c0_334, %c0_335] : memref<9x4x8xf32, #tpu.memory_space<vmem>>, vector<1x4x8xf32>
    %455 = vector.shape_cast %454 : vector<1x4x8xf32> to vector<4x8xf32>
    %456 = vector.extract_strided_slice %417 {offsets = [0, 12], sizes = [8, 144], strides = [1, 1]} : vector<8x170xf32> to vector<8x144xf32>
    %cst_336 = arith.constant dense<0.000000e+00> : vector<4x144xf32>
    %457 = tpu.matmul %455, %456, %cst_336 {dimension_numbers = #tpu.dot_dimension_numbers<[1], [0], [0], [1], [0, 0, 1, 1], [], []>} : vector<4x8xf32>, vector<8x144xf32>, vector<4x144xf32> -> vector<4x144xf32>
    %458 = arith.addf %453, %457 : vector<4x144xf32>
    %c4_337 = arith.constant 4 : index
    %c0_338 = arith.constant 0 : index
    %c0_339 = arith.constant 0 : index
    %459 = vector.load %arg22[%c4_337, %c0_338, %c0_339] : memref<9x4x4xf32, #tpu.memory_space<vmem>>, vector<1x4x4xf32>
    %460 = vector.shape_cast %459 : vector<1x4x4xf32> to vector<4x4xf32>
    %461 = vector.extract_strided_slice %415 {offsets = [0, 13], sizes = [4, 144], strides = [1, 1]} : vector<4x170xf32> to vector<4x144xf32>
    %cst_340 = arith.constant dense<0.000000e+00> : vector<4x144xf32>
    %462 = tpu.matmul %460, %461, %cst_340 {dimension_numbers = #tpu.dot_dimension_numbers<[1], [0], [0], [1], [0, 0, 1, 1], [], []>} : vector<4x4xf32>, vector<4x144xf32>, vector<4x144xf32> -> vector<4x144xf32>
    %463 = arith.addf %458, %462 : vector<4x144xf32>
    %c4_341 = arith.constant 4 : index
    %c0_342 = arith.constant 0 : index
    %c0_343 = arith.constant 0 : index
    %464 = vector.load %arg23[%c4_341, %c0_342, %c0_343] : memref<9x4x8xf32, #tpu.memory_space<vmem>>, vector<1x4x8xf32>
    %465 = vector.shape_cast %464 : vector<1x4x8xf32> to vector<4x8xf32>
    %466 = vector.extract_strided_slice %417 {offsets = [0, 13], sizes = [8, 144], strides = [1, 1]} : vector<8x170xf32> to vector<8x144xf32>
    %cst_344 = arith.constant dense<0.000000e+00> : vector<4x144xf32>
    %467 = tpu.matmul %465, %466, %cst_344 {dimension_numbers = #tpu.dot_dimension_numbers<[1], [0], [0], [1], [0, 0, 1, 1], [], []>} : vector<4x8xf32>, vector<8x144xf32>, vector<4x144xf32> -> vector<4x144xf32>
    %468 = arith.addf %463, %467 : vector<4x144xf32>
    %c5_345 = arith.constant 5 : index
    %c0_346 = arith.constant 0 : index
    %c0_347 = arith.constant 0 : index
    %469 = vector.load %arg22[%c5_345, %c0_346, %c0_347] : memref<9x4x4xf32, #tpu.memory_space<vmem>>, vector<1x4x4xf32>
    %470 = vector.shape_cast %469 : vector<1x4x4xf32> to vector<4x4xf32>
    %471 = vector.extract_strided_slice %415 {offsets = [0, 14], sizes = [4, 144], strides = [1, 1]} : vector<4x170xf32> to vector<4x144xf32>
    %cst_348 = arith.constant dense<0.000000e+00> : vector<4x144xf32>
    %472 = tpu.matmul %470, %471, %cst_348 {dimension_numbers = #tpu.dot_dimension_numbers<[1], [0], [0], [1], [0, 0, 1, 1], [], []>} : vector<4x4xf32>, vector<4x144xf32>, vector<4x144xf32> -> vector<4x144xf32>
    %473 = arith.addf %468, %472 : vector<4x144xf32>
    %c5_349 = arith.constant 5 : index
    %c0_350 = arith.constant 0 : index
    %c0_351 = arith.constant 0 : index
    %474 = vector.load %arg23[%c5_349, %c0_350, %c0_351] : memref<9x4x8xf32, #tpu.memory_space<vmem>>, vector<1x4x8xf32>
    %475 = vector.shape_cast %474 : vector<1x4x8xf32> to vector<4x8xf32>
    %476 = vector.extract_strided_slice %417 {offsets = [0, 14], sizes = [8, 144], strides = [1, 1]} : vector<8x170xf32> to vector<8x144xf32>
    %cst_352 = arith.constant dense<0.000000e+00> : vector<4x144xf32>
    %477 = tpu.matmul %475, %476, %cst_352 {dimension_numbers = #tpu.dot_dimension_numbers<[1], [0], [0], [1], [0, 0, 1, 1], [], []>} : vector<4x8xf32>, vector<8x144xf32>, vector<4x144xf32> -> vector<4x144xf32>
    %478 = arith.addf %473, %477 : vector<4x144xf32>
    %c6_353 = arith.constant 6 : index
    %c0_354 = arith.constant 0 : index
    %c0_355 = arith.constant 0 : index
    %479 = vector.load %arg22[%c6_353, %c0_354, %c0_355] : memref<9x4x4xf32, #tpu.memory_space<vmem>>, vector<1x4x4xf32>
    %480 = vector.shape_cast %479 : vector<1x4x4xf32> to vector<4x4xf32>
    %481 = vector.extract_strided_slice %415 {offsets = [0, 24], sizes = [4, 144], strides = [1, 1]} : vector<4x170xf32> to vector<4x144xf32>
    %cst_356 = arith.constant dense<0.000000e+00> : vector<4x144xf32>
    %482 = tpu.matmul %480, %481, %cst_356 {dimension_numbers = #tpu.dot_dimension_numbers<[1], [0], [0], [1], [0, 0, 1, 1], [], []>} : vector<4x4xf32>, vector<4x144xf32>, vector<4x144xf32> -> vector<4x144xf32>
    %483 = arith.addf %478, %482 : vector<4x144xf32>
    %c6_357 = arith.constant 6 : index
    %c0_358 = arith.constant 0 : index
    %c0_359 = arith.constant 0 : index
    %484 = vector.load %arg23[%c6_357, %c0_358, %c0_359] : memref<9x4x8xf32, #tpu.memory_space<vmem>>, vector<1x4x8xf32>
    %485 = vector.shape_cast %484 : vector<1x4x8xf32> to vector<4x8xf32>
    %486 = vector.extract_strided_slice %417 {offsets = [0, 24], sizes = [8, 144], strides = [1, 1]} : vector<8x170xf32> to vector<8x144xf32>
    %cst_360 = arith.constant dense<0.000000e+00> : vector<4x144xf32>
    %487 = tpu.matmul %485, %486, %cst_360 {dimension_numbers = #tpu.dot_dimension_numbers<[1], [0], [0], [1], [0, 0, 1, 1], [], []>} : vector<4x8xf32>, vector<8x144xf32>, vector<4x144xf32> -> vector<4x144xf32>
    %488 = arith.addf %483, %487 : vector<4x144xf32>
    %c7_361 = arith.constant 7 : index
    %c0_362 = arith.constant 0 : index
    %c0_363 = arith.constant 0 : index
    %489 = vector.load %arg22[%c7_361, %c0_362, %c0_363] : memref<9x4x4xf32, #tpu.memory_space<vmem>>, vector<1x4x4xf32>
    %490 = vector.shape_cast %489 : vector<1x4x4xf32> to vector<4x4xf32>
    %491 = vector.extract_strided_slice %415 {offsets = [0, 25], sizes = [4, 144], strides = [1, 1]} : vector<4x170xf32> to vector<4x144xf32>
    %cst_364 = arith.constant dense<0.000000e+00> : vector<4x144xf32>
    %492 = tpu.matmul %490, %491, %cst_364 {dimension_numbers = #tpu.dot_dimension_numbers<[1], [0], [0], [1], [0, 0, 1, 1], [], []>} : vector<4x4xf32>, vector<4x144xf32>, vector<4x144xf32> -> vector<4x144xf32>
    %493 = arith.addf %488, %492 : vector<4x144xf32>
    %c7_365 = arith.constant 7 : index
    %c0_366 = arith.constant 0 : index
    %c0_367 = arith.constant 0 : index
    %494 = vector.load %arg23[%c7_365, %c0_366, %c0_367] : memref<9x4x8xf32, #tpu.memory_space<vmem>>, vector<1x4x8xf32>
    %495 = vector.shape_cast %494 : vector<1x4x8xf32> to vector<4x8xf32>
    %496 = vector.extract_strided_slice %417 {offsets = [0, 25], sizes = [8, 144], strides = [1, 1]} : vector<8x170xf32> to vector<8x144xf32>
    %cst_368 = arith.constant dense<0.000000e+00> : vector<4x144xf32>
    %497 = tpu.matmul %495, %496, %cst_368 {dimension_numbers = #tpu.dot_dimension_numbers<[1], [0], [0], [1], [0, 0, 1, 1], [], []>} : vector<4x8xf32>, vector<8x144xf32>, vector<4x144xf32> -> vector<4x144xf32>
    %498 = arith.addf %493, %497 : vector<4x144xf32>
    %c8_369 = arith.constant 8 : index
    %c0_370 = arith.constant 0 : index
    %c0_371 = arith.constant 0 : index
    %499 = vector.load %arg22[%c8_369, %c0_370, %c0_371] : memref<9x4x4xf32, #tpu.memory_space<vmem>>, vector<1x4x4xf32>
    %500 = vector.shape_cast %499 : vector<1x4x4xf32> to vector<4x4xf32>
    %501 = vector.extract_strided_slice %415 {offsets = [0, 26], sizes = [4, 144], strides = [1, 1]} : vector<4x170xf32> to vector<4x144xf32>
    %cst_372 = arith.constant dense<0.000000e+00> : vector<4x144xf32>
    %502 = tpu.matmul %500, %501, %cst_372 {dimension_numbers = #tpu.dot_dimension_numbers<[1], [0], [0], [1], [0, 0, 1, 1], [], []>} : vector<4x4xf32>, vector<4x144xf32>, vector<4x144xf32> -> vector<4x144xf32>
    %503 = arith.addf %498, %502 : vector<4x144xf32>
    %c8_373 = arith.constant 8 : index
    %c0_374 = arith.constant 0 : index
    %c0_375 = arith.constant 0 : index
    %504 = vector.load %arg23[%c8_373, %c0_374, %c0_375] : memref<9x4x8xf32, #tpu.memory_space<vmem>>, vector<1x4x8xf32>
    %505 = vector.shape_cast %504 : vector<1x4x8xf32> to vector<4x8xf32>
    %506 = vector.extract_strided_slice %417 {offsets = [0, 26], sizes = [8, 144], strides = [1, 1]} : vector<8x170xf32> to vector<8x144xf32>
    %cst_376 = arith.constant dense<0.000000e+00> : vector<4x144xf32>
    %507 = tpu.matmul %505, %506, %cst_376 {dimension_numbers = #tpu.dot_dimension_numbers<[1], [0], [0], [1], [0, 0, 1, 1], [], []>} : vector<4x8xf32>, vector<8x144xf32>, vector<4x144xf32> -> vector<4x144xf32>
    %508 = arith.addf %503, %507 : vector<4x144xf32>
    %c0_377 = arith.constant 0 : index
    %c0_378 = arith.constant 0 : index
    %509 = vector.load %arg24[%c0_377, %c0_378] : memref<4x1xf32, #tpu.memory_space<vmem>>, vector<4x1xf32>
    %510 = vector.broadcast %509 : vector<4x1xf32> to vector<4x144xf32>
    %511 = arith.addf %508, %510 : vector<4x144xf32>
    %cst_379 = arith.constant 0.000000e+00 : f32
    %512 = vector.broadcast %cst_379 : f32 to vector<4x144xf32>
    %513 = arith.cmpf oge, %511, %512 : vector<4x144xf32>
    %cst_380 = arith.constant 2.000000e-01 : f32
    %514 = vector.broadcast %cst_380 : f32 to vector<4x144xf32>
    %515 = arith.mulf %514, %511 : vector<4x144xf32>
    %516 = arith.select %513, %511, %515 : vector<4x144xi1>, vector<4x144xf32>
    %517 = vector.broadcast %8 : vector<1x144xf32> to vector<4x144xf32>
    %518 = arith.mulf %516, %517 : vector<4x144xf32>
    %cst_381 = arith.constant 0.000000e+00 : f32
    %519 = vector.broadcast %cst_381 : f32 to vector<4x144xf32>
    %520 = arith.cmpf oge, %518, %519 : vector<4x144xf32>
    %cst_382 = arith.constant 2.000000e-01 : f32
    %521 = vector.broadcast %cst_382 : f32 to vector<4x144xf32>
    %522 = arith.mulf %521, %518 : vector<4x144xf32>
    %523 = arith.select %520, %518, %522 : vector<4x144xi1>, vector<4x144xf32>
    %cst_383 = arith.constant 0.000000e+00 : f32
    %524 = vector.broadcast %cst_383 : f32 to vector<4x13xf32>
    %525 = tpu.concatenate %524, %523, %524 in 1 : vector<4x13xf32>, vector<4x144xf32>, vector<4x13xf32> -> vector<4x170xf32>
    %cst_384 = arith.constant 0.000000e+00 : f32
    %526 = vector.broadcast %cst_384 : f32 to vector<4x144xf32>
    %c0_385 = arith.constant 0 : index
    %c0_386 = arith.constant 0 : index
    %c0_387 = arith.constant 0 : index
    %527 = vector.load %arg25[%c0_385, %c0_386, %c0_387] : memref<9x4x4xf32, #tpu.memory_space<vmem>>, vector<1x4x4xf32>
    %528 = vector.shape_cast %527 : vector<1x4x4xf32> to vector<4x4xf32>
    %529 = vector.extract_strided_slice %525 {offsets = [0, 0], sizes = [4, 144], strides = [1, 1]} : vector<4x170xf32> to vector<4x144xf32>
    %cst_388 = arith.constant dense<0.000000e+00> : vector<4x144xf32>
    %530 = tpu.matmul %528, %529, %cst_388 {dimension_numbers = #tpu.dot_dimension_numbers<[1], [0], [0], [1], [0, 0, 1, 1], [], []>} : vector<4x4xf32>, vector<4x144xf32>, vector<4x144xf32> -> vector<4x144xf32>
    %531 = arith.addf %526, %530 : vector<4x144xf32>
    %c1_389 = arith.constant 1 : index
    %c0_390 = arith.constant 0 : index
    %c0_391 = arith.constant 0 : index
    %532 = vector.load %arg25[%c1_389, %c0_390, %c0_391] : memref<9x4x4xf32, #tpu.memory_space<vmem>>, vector<1x4x4xf32>
    %533 = vector.shape_cast %532 : vector<1x4x4xf32> to vector<4x4xf32>
    %534 = vector.extract_strided_slice %525 {offsets = [0, 1], sizes = [4, 144], strides = [1, 1]} : vector<4x170xf32> to vector<4x144xf32>
    %cst_392 = arith.constant dense<0.000000e+00> : vector<4x144xf32>
    %535 = tpu.matmul %533, %534, %cst_392 {dimension_numbers = #tpu.dot_dimension_numbers<[1], [0], [0], [1], [0, 0, 1, 1], [], []>} : vector<4x4xf32>, vector<4x144xf32>, vector<4x144xf32> -> vector<4x144xf32>
    %536 = arith.addf %531, %535 : vector<4x144xf32>
    %c2_393 = arith.constant 2 : index
    %c0_394 = arith.constant 0 : index
    %c0_395 = arith.constant 0 : index
    %537 = vector.load %arg25[%c2_393, %c0_394, %c0_395] : memref<9x4x4xf32, #tpu.memory_space<vmem>>, vector<1x4x4xf32>
    %538 = vector.shape_cast %537 : vector<1x4x4xf32> to vector<4x4xf32>
    %539 = vector.extract_strided_slice %525 {offsets = [0, 2], sizes = [4, 144], strides = [1, 1]} : vector<4x170xf32> to vector<4x144xf32>
    %cst_396 = arith.constant dense<0.000000e+00> : vector<4x144xf32>
    %540 = tpu.matmul %538, %539, %cst_396 {dimension_numbers = #tpu.dot_dimension_numbers<[1], [0], [0], [1], [0, 0, 1, 1], [], []>} : vector<4x4xf32>, vector<4x144xf32>, vector<4x144xf32> -> vector<4x144xf32>
    %541 = arith.addf %536, %540 : vector<4x144xf32>
    %c3_397 = arith.constant 3 : index
    %c0_398 = arith.constant 0 : index
    %c0_399 = arith.constant 0 : index
    %542 = vector.load %arg25[%c3_397, %c0_398, %c0_399] : memref<9x4x4xf32, #tpu.memory_space<vmem>>, vector<1x4x4xf32>
    %543 = vector.shape_cast %542 : vector<1x4x4xf32> to vector<4x4xf32>
    %544 = vector.extract_strided_slice %525 {offsets = [0, 12], sizes = [4, 144], strides = [1, 1]} : vector<4x170xf32> to vector<4x144xf32>
    %cst_400 = arith.constant dense<0.000000e+00> : vector<4x144xf32>
    %545 = tpu.matmul %543, %544, %cst_400 {dimension_numbers = #tpu.dot_dimension_numbers<[1], [0], [0], [1], [0, 0, 1, 1], [], []>} : vector<4x4xf32>, vector<4x144xf32>, vector<4x144xf32> -> vector<4x144xf32>
    %546 = arith.addf %541, %545 : vector<4x144xf32>
    %c4_401 = arith.constant 4 : index
    %c0_402 = arith.constant 0 : index
    %c0_403 = arith.constant 0 : index
    %547 = vector.load %arg25[%c4_401, %c0_402, %c0_403] : memref<9x4x4xf32, #tpu.memory_space<vmem>>, vector<1x4x4xf32>
    %548 = vector.shape_cast %547 : vector<1x4x4xf32> to vector<4x4xf32>
    %549 = vector.extract_strided_slice %525 {offsets = [0, 13], sizes = [4, 144], strides = [1, 1]} : vector<4x170xf32> to vector<4x144xf32>
    %cst_404 = arith.constant dense<0.000000e+00> : vector<4x144xf32>
    %550 = tpu.matmul %548, %549, %cst_404 {dimension_numbers = #tpu.dot_dimension_numbers<[1], [0], [0], [1], [0, 0, 1, 1], [], []>} : vector<4x4xf32>, vector<4x144xf32>, vector<4x144xf32> -> vector<4x144xf32>
    %551 = arith.addf %546, %550 : vector<4x144xf32>
    %c5_405 = arith.constant 5 : index
    %c0_406 = arith.constant 0 : index
    %c0_407 = arith.constant 0 : index
    %552 = vector.load %arg25[%c5_405, %c0_406, %c0_407] : memref<9x4x4xf32, #tpu.memory_space<vmem>>, vector<1x4x4xf32>
    %553 = vector.shape_cast %552 : vector<1x4x4xf32> to vector<4x4xf32>
    %554 = vector.extract_strided_slice %525 {offsets = [0, 14], sizes = [4, 144], strides = [1, 1]} : vector<4x170xf32> to vector<4x144xf32>
    %cst_408 = arith.constant dense<0.000000e+00> : vector<4x144xf32>
    %555 = tpu.matmul %553, %554, %cst_408 {dimension_numbers = #tpu.dot_dimension_numbers<[1], [0], [0], [1], [0, 0, 1, 1], [], []>} : vector<4x4xf32>, vector<4x144xf32>, vector<4x144xf32> -> vector<4x144xf32>
    %556 = arith.addf %551, %555 : vector<4x144xf32>
    %c6_409 = arith.constant 6 : index
    %c0_410 = arith.constant 0 : index
    %c0_411 = arith.constant 0 : index
    %557 = vector.load %arg25[%c6_409, %c0_410, %c0_411] : memref<9x4x4xf32, #tpu.memory_space<vmem>>, vector<1x4x4xf32>
    %558 = vector.shape_cast %557 : vector<1x4x4xf32> to vector<4x4xf32>
    %559 = vector.extract_strided_slice %525 {offsets = [0, 24], sizes = [4, 144], strides = [1, 1]} : vector<4x170xf32> to vector<4x144xf32>
    %cst_412 = arith.constant dense<0.000000e+00> : vector<4x144xf32>
    %560 = tpu.matmul %558, %559, %cst_412 {dimension_numbers = #tpu.dot_dimension_numbers<[1], [0], [0], [1], [0, 0, 1, 1], [], []>} : vector<4x4xf32>, vector<4x144xf32>, vector<4x144xf32> -> vector<4x144xf32>
    %561 = arith.addf %556, %560 : vector<4x144xf32>
    %c7_413 = arith.constant 7 : index
    %c0_414 = arith.constant 0 : index
    %c0_415 = arith.constant 0 : index
    %562 = vector.load %arg25[%c7_413, %c0_414, %c0_415] : memref<9x4x4xf32, #tpu.memory_space<vmem>>, vector<1x4x4xf32>
    %563 = vector.shape_cast %562 : vector<1x4x4xf32> to vector<4x4xf32>
    %564 = vector.extract_strided_slice %525 {offsets = [0, 25], sizes = [4, 144], strides = [1, 1]} : vector<4x170xf32> to vector<4x144xf32>
    %cst_416 = arith.constant dense<0.000000e+00> : vector<4x144xf32>
    %565 = tpu.matmul %563, %564, %cst_416 {dimension_numbers = #tpu.dot_dimension_numbers<[1], [0], [0], [1], [0, 0, 1, 1], [], []>} : vector<4x4xf32>, vector<4x144xf32>, vector<4x144xf32> -> vector<4x144xf32>
    %566 = arith.addf %561, %565 : vector<4x144xf32>
    %c8_417 = arith.constant 8 : index
    %c0_418 = arith.constant 0 : index
    %c0_419 = arith.constant 0 : index
    %567 = vector.load %arg25[%c8_417, %c0_418, %c0_419] : memref<9x4x4xf32, #tpu.memory_space<vmem>>, vector<1x4x4xf32>
    %568 = vector.shape_cast %567 : vector<1x4x4xf32> to vector<4x4xf32>
    %569 = vector.extract_strided_slice %525 {offsets = [0, 26], sizes = [4, 144], strides = [1, 1]} : vector<4x170xf32> to vector<4x144xf32>
    %cst_420 = arith.constant dense<0.000000e+00> : vector<4x144xf32>
    %570 = tpu.matmul %568, %569, %cst_420 {dimension_numbers = #tpu.dot_dimension_numbers<[1], [0], [0], [1], [0, 0, 1, 1], [], []>} : vector<4x4xf32>, vector<4x144xf32>, vector<4x144xf32> -> vector<4x144xf32>
    %571 = arith.addf %566, %570 : vector<4x144xf32>
    %c0_421 = arith.constant 0 : index
    %c0_422 = arith.constant 0 : index
    %572 = vector.load %arg26[%c0_421, %c0_422] : memref<4x1xf32, #tpu.memory_space<vmem>>, vector<4x1xf32>
    %573 = vector.broadcast %572 : vector<4x1xf32> to vector<4x144xf32>
    %574 = arith.addf %571, %573 : vector<4x144xf32>
    %575 = vector.broadcast %8 : vector<1x144xf32> to vector<4x144xf32>
    %576 = arith.mulf %574, %575 : vector<4x144xf32>
    %cst_423 = arith.constant 0.000000e+00 : f32
    %577 = vector.broadcast %cst_423 : f32 to vector<4x144xf32>
    %578 = arith.cmpf oge, %576, %577 : vector<4x144xf32>
    %cst_424 = arith.constant 2.000000e-01 : f32
    %579 = vector.broadcast %cst_424 : f32 to vector<4x144xf32>
    %580 = arith.mulf %579, %576 : vector<4x144xf32>
    %581 = arith.select %578, %576, %580 : vector<4x144xi1>, vector<4x144xf32>
    %cst_425 = arith.constant 0.000000e+00 : f32
    %582 = vector.broadcast %cst_425 : f32 to vector<4x13xf32>
    %583 = tpu.concatenate %582, %581, %582 in 1 : vector<4x13xf32>, vector<4x144xf32>, vector<4x13xf32> -> vector<4x170xf32>
    %cst_426 = arith.constant 0.000000e+00 : f32
    %584 = vector.broadcast %cst_426 : f32 to vector<4x144xf32>
    %c0_427 = arith.constant 0 : index
    %c0_428 = arith.constant 0 : index
    %c0_429 = arith.constant 0 : index
    %585 = vector.load %arg27[%c0_427, %c0_428, %c0_429] : memref<9x4x4xf32, #tpu.memory_space<vmem>>, vector<1x4x4xf32>
    %586 = vector.shape_cast %585 : vector<1x4x4xf32> to vector<4x4xf32>
    %587 = vector.extract_strided_slice %583 {offsets = [0, 0], sizes = [4, 144], strides = [1, 1]} : vector<4x170xf32> to vector<4x144xf32>
    %cst_430 = arith.constant dense<0.000000e+00> : vector<4x144xf32>
    %588 = tpu.matmul %586, %587, %cst_430 {dimension_numbers = #tpu.dot_dimension_numbers<[1], [0], [0], [1], [0, 0, 1, 1], [], []>} : vector<4x4xf32>, vector<4x144xf32>, vector<4x144xf32> -> vector<4x144xf32>
    %589 = arith.addf %584, %588 : vector<4x144xf32>
    %c1_431 = arith.constant 1 : index
    %c0_432 = arith.constant 0 : index
    %c0_433 = arith.constant 0 : index
    %590 = vector.load %arg27[%c1_431, %c0_432, %c0_433] : memref<9x4x4xf32, #tpu.memory_space<vmem>>, vector<1x4x4xf32>
    %591 = vector.shape_cast %590 : vector<1x4x4xf32> to vector<4x4xf32>
    %592 = vector.extract_strided_slice %583 {offsets = [0, 1], sizes = [4, 144], strides = [1, 1]} : vector<4x170xf32> to vector<4x144xf32>
    %cst_434 = arith.constant dense<0.000000e+00> : vector<4x144xf32>
    %593 = tpu.matmul %591, %592, %cst_434 {dimension_numbers = #tpu.dot_dimension_numbers<[1], [0], [0], [1], [0, 0, 1, 1], [], []>} : vector<4x4xf32>, vector<4x144xf32>, vector<4x144xf32> -> vector<4x144xf32>
    %594 = arith.addf %589, %593 : vector<4x144xf32>
    %c2_435 = arith.constant 2 : index
    %c0_436 = arith.constant 0 : index
    %c0_437 = arith.constant 0 : index
    %595 = vector.load %arg27[%c2_435, %c0_436, %c0_437] : memref<9x4x4xf32, #tpu.memory_space<vmem>>, vector<1x4x4xf32>
    %596 = vector.shape_cast %595 : vector<1x4x4xf32> to vector<4x4xf32>
    %597 = vector.extract_strided_slice %583 {offsets = [0, 2], sizes = [4, 144], strides = [1, 1]} : vector<4x170xf32> to vector<4x144xf32>
    %cst_438 = arith.constant dense<0.000000e+00> : vector<4x144xf32>
    %598 = tpu.matmul %596, %597, %cst_438 {dimension_numbers = #tpu.dot_dimension_numbers<[1], [0], [0], [1], [0, 0, 1, 1], [], []>} : vector<4x4xf32>, vector<4x144xf32>, vector<4x144xf32> -> vector<4x144xf32>
    %599 = arith.addf %594, %598 : vector<4x144xf32>
    %c3_439 = arith.constant 3 : index
    %c0_440 = arith.constant 0 : index
    %c0_441 = arith.constant 0 : index
    %600 = vector.load %arg27[%c3_439, %c0_440, %c0_441] : memref<9x4x4xf32, #tpu.memory_space<vmem>>, vector<1x4x4xf32>
    %601 = vector.shape_cast %600 : vector<1x4x4xf32> to vector<4x4xf32>
    %602 = vector.extract_strided_slice %583 {offsets = [0, 12], sizes = [4, 144], strides = [1, 1]} : vector<4x170xf32> to vector<4x144xf32>
    %cst_442 = arith.constant dense<0.000000e+00> : vector<4x144xf32>
    %603 = tpu.matmul %601, %602, %cst_442 {dimension_numbers = #tpu.dot_dimension_numbers<[1], [0], [0], [1], [0, 0, 1, 1], [], []>} : vector<4x4xf32>, vector<4x144xf32>, vector<4x144xf32> -> vector<4x144xf32>
    %604 = arith.addf %599, %603 : vector<4x144xf32>
    %c4_443 = arith.constant 4 : index
    %c0_444 = arith.constant 0 : index
    %c0_445 = arith.constant 0 : index
    %605 = vector.load %arg27[%c4_443, %c0_444, %c0_445] : memref<9x4x4xf32, #tpu.memory_space<vmem>>, vector<1x4x4xf32>
    %606 = vector.shape_cast %605 : vector<1x4x4xf32> to vector<4x4xf32>
    %607 = vector.extract_strided_slice %583 {offsets = [0, 13], sizes = [4, 144], strides = [1, 1]} : vector<4x170xf32> to vector<4x144xf32>
    %cst_446 = arith.constant dense<0.000000e+00> : vector<4x144xf32>
    %608 = tpu.matmul %606, %607, %cst_446 {dimension_numbers = #tpu.dot_dimension_numbers<[1], [0], [0], [1], [0, 0, 1, 1], [], []>} : vector<4x4xf32>, vector<4x144xf32>, vector<4x144xf32> -> vector<4x144xf32>
    %609 = arith.addf %604, %608 : vector<4x144xf32>
    %c5_447 = arith.constant 5 : index
    %c0_448 = arith.constant 0 : index
    %c0_449 = arith.constant 0 : index
    %610 = vector.load %arg27[%c5_447, %c0_448, %c0_449] : memref<9x4x4xf32, #tpu.memory_space<vmem>>, vector<1x4x4xf32>
    %611 = vector.shape_cast %610 : vector<1x4x4xf32> to vector<4x4xf32>
    %612 = vector.extract_strided_slice %583 {offsets = [0, 14], sizes = [4, 144], strides = [1, 1]} : vector<4x170xf32> to vector<4x144xf32>
    %cst_450 = arith.constant dense<0.000000e+00> : vector<4x144xf32>
    %613 = tpu.matmul %611, %612, %cst_450 {dimension_numbers = #tpu.dot_dimension_numbers<[1], [0], [0], [1], [0, 0, 1, 1], [], []>} : vector<4x4xf32>, vector<4x144xf32>, vector<4x144xf32> -> vector<4x144xf32>
    %614 = arith.addf %609, %613 : vector<4x144xf32>
    %c6_451 = arith.constant 6 : index
    %c0_452 = arith.constant 0 : index
    %c0_453 = arith.constant 0 : index
    %615 = vector.load %arg27[%c6_451, %c0_452, %c0_453] : memref<9x4x4xf32, #tpu.memory_space<vmem>>, vector<1x4x4xf32>
    %616 = vector.shape_cast %615 : vector<1x4x4xf32> to vector<4x4xf32>
    %617 = vector.extract_strided_slice %583 {offsets = [0, 24], sizes = [4, 144], strides = [1, 1]} : vector<4x170xf32> to vector<4x144xf32>
    %cst_454 = arith.constant dense<0.000000e+00> : vector<4x144xf32>
    %618 = tpu.matmul %616, %617, %cst_454 {dimension_numbers = #tpu.dot_dimension_numbers<[1], [0], [0], [1], [0, 0, 1, 1], [], []>} : vector<4x4xf32>, vector<4x144xf32>, vector<4x144xf32> -> vector<4x144xf32>
    %619 = arith.addf %614, %618 : vector<4x144xf32>
    %c7_455 = arith.constant 7 : index
    %c0_456 = arith.constant 0 : index
    %c0_457 = arith.constant 0 : index
    %620 = vector.load %arg27[%c7_455, %c0_456, %c0_457] : memref<9x4x4xf32, #tpu.memory_space<vmem>>, vector<1x4x4xf32>
    %621 = vector.shape_cast %620 : vector<1x4x4xf32> to vector<4x4xf32>
    %622 = vector.extract_strided_slice %583 {offsets = [0, 25], sizes = [4, 144], strides = [1, 1]} : vector<4x170xf32> to vector<4x144xf32>
    %cst_458 = arith.constant dense<0.000000e+00> : vector<4x144xf32>
    %623 = tpu.matmul %621, %622, %cst_458 {dimension_numbers = #tpu.dot_dimension_numbers<[1], [0], [0], [1], [0, 0, 1, 1], [], []>} : vector<4x4xf32>, vector<4x144xf32>, vector<4x144xf32> -> vector<4x144xf32>
    %624 = arith.addf %619, %623 : vector<4x144xf32>
    %c8_459 = arith.constant 8 : index
    %c0_460 = arith.constant 0 : index
    %c0_461 = arith.constant 0 : index
    %625 = vector.load %arg27[%c8_459, %c0_460, %c0_461] : memref<9x4x4xf32, #tpu.memory_space<vmem>>, vector<1x4x4xf32>
    %626 = vector.shape_cast %625 : vector<1x4x4xf32> to vector<4x4xf32>
    %627 = vector.extract_strided_slice %583 {offsets = [0, 26], sizes = [4, 144], strides = [1, 1]} : vector<4x170xf32> to vector<4x144xf32>
    %cst_462 = arith.constant dense<0.000000e+00> : vector<4x144xf32>
    %628 = tpu.matmul %626, %627, %cst_462 {dimension_numbers = #tpu.dot_dimension_numbers<[1], [0], [0], [1], [0, 0, 1, 1], [], []>} : vector<4x4xf32>, vector<4x144xf32>, vector<4x144xf32> -> vector<4x144xf32>
    %629 = arith.addf %624, %628 : vector<4x144xf32>
    %c0_463 = arith.constant 0 : index
    %c0_464 = arith.constant 0 : index
    %630 = vector.load %arg28[%c0_463, %c0_464] : memref<4x1xf32, #tpu.memory_space<vmem>>, vector<4x1xf32>
    %631 = vector.broadcast %630 : vector<4x1xf32> to vector<4x144xf32>
    %632 = arith.addf %629, %631 : vector<4x144xf32>
    %633 = vector.broadcast %8 : vector<1x144xf32> to vector<4x144xf32>
    %634 = arith.mulf %632, %633 : vector<4x144xf32>
    %635 = arith.addf %518, %634 : vector<4x144xf32>
    %cst_465 = arith.constant 0.707106769 : f32
    %636 = vector.broadcast %cst_465 : f32 to vector<4x144xf32>
    %637 = arith.mulf %635, %636 : vector<4x144xf32>
    %c0_466 = arith.constant 0 : index
    %c0_467 = arith.constant 0 : index
    %638 = vector.load %arg29[%c0_466, %c0_467] : memref<10x4xf32, #tpu.memory_space<vmem>>, vector<10x4xf32>
    %cst_468 = arith.constant dense<0.000000e+00> : vector<10x144xf32>
    %639 = tpu.matmul %638, %637, %cst_468 {dimension_numbers = #tpu.dot_dimension_numbers<[1], [0], [0], [1], [0, 0, 1, 1], [], []>} : vector<10x4xf32>, vector<4x144xf32>, vector<10x144xf32> -> vector<10x144xf32>
    %c0_469 = arith.constant 0 : index
    %c0_470 = arith.constant 0 : index
    %640 = vector.load %arg30[%c0_469, %c0_470] : memref<10x1xf32, #tpu.memory_space<vmem>>, vector<10x1xf32>
    %641 = vector.broadcast %640 : vector<10x1xf32> to vector<10x144xf32>
    %642 = arith.addf %639, %641 : vector<10x144xf32>
    %c0_471 = arith.constant 0 : index
    %c0_472 = arith.constant 0 : index
    %643 = vector.load %arg31[%c0_471, %c0_472] : memref<144x1600xf32, #tpu.memory_space<vmem>>, vector<144x1600xf32>
    %cst_473 = arith.constant dense<0.000000e+00> : vector<10x1600xf32>
    %644 = tpu.matmul %642, %643, %cst_473 {dimension_numbers = #tpu.dot_dimension_numbers<[1], [0], [0], [1], [0, 0, 1, 1], [], []>} : vector<10x144xf32>, vector<144x1600xf32>, vector<10x1600xf32> -> vector<10x1600xf32>
    %c0_474 = arith.constant 0 : index
    %c0_475 = arith.constant 0 : index
    %c0_476 = arith.constant 0 : index
    %645 = vector.load %arg32[%c0_474, %c0_475, %c0_476] : memref<1x10x1600xf32, #tpu.memory_space<vmem>>, vector<1x10x1600xf32>
    %646 = vector.shape_cast %645 : vector<1x10x1600xf32> to vector<10x1600xf32>
    %647 = vector.shape_cast %644 : vector<10x1600xf32> to vector<1x10x1600xf32>
    tpu.vector_store %arg32[%c0_474, %c0_475, %c0_476], %647 {strides = array<i32>} : memref<1x10x1600xf32, #tpu.memory_space<vmem>>, vector<1x10x1600xf32>,
    return
  }
  func.func @transform_0(%arg0: i32) -> (i32, i32, i32) {
    %c0_i32 = arith.constant 0 : i32
    %c0_i32_0 = arith.constant 0 : i32
    %c0_i32_1 = arith.constant 0 : i32
    return %arg0, %c0_i32, %c0_i32_0 : i32, i32, i32
  }
  func.func @transform_1(%arg0: i32) -> (i32, i32, i32) {
    %c0_i32 = arith.constant 0 : i32
    %c0_i32_0 = arith.constant 0 : i32
    %c0_i32_1 = arith.constant 0 : i32
    return %arg0, %c0_i32, %c0_i32_0 : i32, i32, i32
  }
  func.func @transform_2(%arg0: i32) -> (i32, i32, i32) {
    %c0_i32 = arith.constant 0 : i32
    %c0_i32_0 = arith.constant 0 : i32
    %c0_i32_1 = arith.constant 0 : i32
    return %arg0, %c0_i32, %c0_i32_0 : i32, i32, i32
  }
  func.func @transform_3(%arg0: i32) -> (i32, i32) {
    %c0_i32 = arith.constant 0 : i32
    %c0_i32_0 = arith.constant 0 : i32
    %c0_i32_1 = arith.constant 0 : i32
    return %c0_i32, %c0_i32_0 : i32, i32
  }
  func.func @transform_4(%arg0: i32) -> (i32, i32) {
    %c0_i32 = arith.constant 0 : i32
    %c0_i32_0 = arith.constant 0 : i32
    %c0_i32_1 = arith.constant 0 : i32
    return %c0_i32, %c0_i32_0 : i32, i32
  }
  func.func @transform_5(%arg0: i32) -> (i32, i32) {
    %c0_i32 = arith.constant 0 : i32
    %c0_i32_0 = arith.constant 0 : i32
    %c0_i32_1 = arith.constant 0 : i32
    return %c0_i32, %c0_i32_0 : i32, i32
  }
  func.func @transform_6(%arg0: i32) -> (i32, i32, i32) {
    %c0_i32 = arith.constant 0 : i32
    %c0_i32_0 = arith.constant 0 : i32
    %c0_i32_1 = arith.constant 0 : i32
    %c0_i32_2 = arith.constant 0 : i32
    return %c0_i32, %c0_i32_0, %c0_i32_1 : i32, i32, i32
  }
  func.func @transform_7(%arg0: i32) -> (i32, i32) {
    %c0_i32 = arith.constant 0 : i32
    %c0_i32_0 = arith.constant 0 : i32
    %c0_i32_1 = arith.constant 0 : i32
    return %c0_i32, %c0_i32_0 : i32, i32
  }
  func.func @transform_8(%arg0: i32) -> (i32, i32, i32) {
    %c0_i32 = arith.constant 0 : i32
    %c0_i32_0 = arith.constant 0 : i32
    %c0_i32_1 = arith.constant 0 : i32
    %c0_i32_2 = arith.constant 0 : i32
    return %c0_i32, %c0_i32_0, %c0_i32_1 : i32, i32, i32
  }
  func.func @transform_9(%arg0: i32) -> (i32, i32) {
    %c0_i32 = arith.constant 0 : i32
    %c0_i32_0 = arith.constant 0 : i32
    %c0_i32_1 = arith.constant 0 : i32
    return %c0_i32, %c0_i32_0 : i32, i32
  }
  func.func @transform_10(%arg0: i32) -> (i32, i32, i32) {
    %c0_i32 = arith.constant 0 : i32
    %c0_i32_0 = arith.constant 0 : i32
    %c0_i32_1 = arith.constant 0 : i32
    %c0_i32_2 = arith.constant 0 : i32
    return %c0_i32, %c0_i32_0, %c0_i32_1 : i32, i32, i32
  }
  func.func @transform_11(%arg0: i32) -> (i32, i32) {
    %c0_i32 = arith.constant 0 : i32
    %c0_i32_0 = arith.constant 0 : i32
    %c0_i32_1 = arith.constant 0 : i32
    return %c0_i32, %c0_i32_0 : i32, i32
  }
  func.func @transform_12(%arg0: i32) -> (i32, i32) {
    %c0_i32 = arith.constant 0 : i32
    %c0_i32_0 = arith.constant 0 : i32
    %c0_i32_1 = arith.constant 0 : i32
    return %c0_i32, %c0_i32_0 : i32, i32
  }
  func.func @transform_13(%arg0: i32) -> (i32, i32, i32) {
    %c0_i32 = arith.constant 0 : i32
    %c0_i32_0 = arith.constant 0 : i32
    %c0_i32_1 = arith.constant 0 : i32
    %c0_i32_2 = arith.constant 0 : i32
    return %c0_i32, %c0_i32_0, %c0_i32_1 : i32, i32, i32
  }
  func.func @transform_14(%arg0: i32) -> (i32, i32, i32) {
    %c0_i32 = arith.constant 0 : i32
    %c0_i32_0 = arith.constant 0 : i32
    %c0_i32_1 = arith.constant 0 : i32
    %c0_i32_2 = arith.constant 0 : i32
    return %c0_i32, %c0_i32_0, %c0_i32_1 : i32, i32, i32
  }
  func.func @transform_15(%arg0: i32) -> (i32, i32) {
    %c0_i32 = arith.constant 0 : i32
    %c0_i32_0 = arith.constant 0 : i32
    %c0_i32_1 = arith.constant 0 : i32
    return %c0_i32, %c0_i32_0 : i32, i32
  }
  func.func @transform_16(%arg0: i32) -> (i32, i32, i32) {
    %c0_i32 = arith.constant 0 : i32
    %c0_i32_0 = arith.constant 0 : i32
    %c0_i32_1 = arith.constant 0 : i32
    %c0_i32_2 = arith.constant 0 : i32
    return %c0_i32, %c0_i32_0, %c0_i32_1 : i32, i32, i32
  }
  func.func @transform_17(%arg0: i32) -> (i32, i32) {
    %c0_i32 = arith.constant 0 : i32
    %c0_i32_0 = arith.constant 0 : i32
    %c0_i32_1 = arith.constant 0 : i32
    return %c0_i32, %c0_i32_0 : i32, i32
  }
  func.func @transform_18(%arg0: i32) -> (i32, i32, i32) {
    %c0_i32 = arith.constant 0 : i32
    %c0_i32_0 = arith.constant 0 : i32
    %c0_i32_1 = arith.constant 0 : i32
    %c0_i32_2 = arith.constant 0 : i32
    return %c0_i32, %c0_i32_0, %c0_i32_1 : i32, i32, i32
  }
  func.func @transform_19(%arg0: i32) -> (i32, i32) {
    %c0_i32 = arith.constant 0 : i32
    %c0_i32_0 = arith.constant 0 : i32
    %c0_i32_1 = arith.constant 0 : i32
    return %c0_i32, %c0_i32_0 : i32, i32
  }
  func.func @transform_20(%arg0: i32) -> (i32, i32) {
    %c0_i32 = arith.constant 0 : i32
    %c0_i32_0 = arith.constant 0 : i32
    %c0_i32_1 = arith.constant 0 : i32
    return %c0_i32, %c0_i32_0 : i32, i32
  }
  func.func @transform_21(%arg0: i32) -> (i32, i32, i32) {
    %c0_i32 = arith.constant 0 : i32
    %c0_i32_0 = arith.constant 0 : i32
    %c0_i32_1 = arith.constant 0 : i32
    %c0_i32_2 = arith.constant 0 : i32
    return %c0_i32, %c0_i32_0, %c0_i32_1 : i32, i32, i32
  }
  func.func @transform_22(%arg0: i32) -> (i32, i32, i32) {
    %c0_i32 = arith.constant 0 : i32
    %c0_i32_0 = arith.constant 0 : i32
    %c0_i32_1 = arith.constant 0 : i32
    %c0_i32_2 = arith.constant 0 : i32
    return %c0_i32, %c0_i32_0, %c0_i32_1 : i32, i32, i32
  }
  func.func @transform_23(%arg0: i32) -> (i32, i32) {
    %c0_i32 = arith.constant 0 : i32
    %c0_i32_0 = arith.constant 0 : i32
    %c0_i32_1 = arith.constant 0 : i32
    return %c0_i32, %c0_i32_0 : i32, i32
  }
  func.func @transform_24(%arg0: i32) -> (i32, i32, i32) {
    %c0_i32 = arith.constant 0 : i32
    %c0_i32_0 = arith.constant 0 : i32
    %c0_i32_1 = arith.constant 0 : i32
    %c0_i32_2 = arith.constant 0 : i32
    return %c0_i32, %c0_i32_0, %c0_i32_1 : i32, i32, i32
  }
  func.func @transform_25(%arg0: i32) -> (i32, i32) {
    %c0_i32 = arith.constant 0 : i32
    %c0_i32_0 = arith.constant 0 : i32
    %c0_i32_1 = arith.constant 0 : i32
    return %c0_i32, %c0_i32_0 : i32, i32
  }
  func.func @transform_26(%arg0: i32) -> (i32, i32, i32) {
    %c0_i32 = arith.constant 0 : i32
    %c0_i32_0 = arith.constant 0 : i32
    %c0_i32_1 = arith.constant 0 : i32
    %c0_i32_2 = arith.constant 0 : i32
    return %c0_i32, %c0_i32_0, %c0_i32_1 : i32, i32, i32
  }
  func.func @transform_27(%arg0: i32) -> (i32, i32) {
    %c0_i32 = arith.constant 0 : i32
    %c0_i32_0 = arith.constant 0 : i32
    %c0_i32_1 = arith.constant 0 : i32
    return %c0_i32, %c0_i32_0 : i32, i32
  }
  func.func @transform_28(%arg0: i32) -> (i32, i32) {
    %c0_i32 = arith.constant 0 : i32
    %c0_i32_0 = arith.constant 0 : i32
    %c0_i32_1 = arith.constant 0 : i32
    return %c0_i32, %c0_i32_0 : i32, i32
  }
  func.func @transform_29(%arg0: i32) -> (i32, i32) {
    %c0_i32 = arith.constant 0 : i32
    %c0_i32_0 = arith.constant 0 : i32
    %c0_i32_1 = arith.constant 0 : i32
    return %c0_i32, %c0_i32_0 : i32, i32
  }
  func.func @transform_30(%arg0: i32) -> (i32, i32) {
    %c0_i32 = arith.constant 0 : i32
    %c0_i32_0 = arith.constant 0 : i32
    %c0_i32_1 = arith.constant 0 : i32
    return %c0_i32, %c0_i32_0 : i32, i32
  }
  func.func @transform_31(%arg0: i32) -> (i32, i32, i32) {
    %c0_i32 = arith.constant 0 : i32
    %c0_i32_0 = arith.constant 0 : i32
    %c0_i32_1 = arith.constant 0 : i32
    return %arg0, %c0_i32, %c0_i32_0 : i32, i32, i32
  }
}

</mosaic_0001>

<llo_original>
// kernel: forward.1
$region0: #{forward.1}
  #allocation0 [shape = 'u32[]', space=smem, size = 0x4, offset = 0x4, fixed_abs, tag = 'smem constant byte address 0x4 - core index']
  #allocation1 [shape = 'u32[72,128]{1,0:T(1,128)}', space=vmem, size = 0x9000, scoped, tag = 'internal scratch']
  %s0 = inlined_call_operand.smem [shape: u32[32], index: -1, kind: input, shape index: {}]
  %s1 = sld [smem:[%s0]]
  %s2 = scalar_lea.smem %s0, 1
  %s3 = sld [smem:[%s2]]
  %s4 = scalar_lea.smem %s0, 2
  %s5 = sld [smem:[%s4]]
  %s6 = scalar_lea.smem %s0, 3
  %s7 = sld [smem:[%s6]]
  %s8 = scalar_lea.smem %s0, 4
  %s9 = sld [smem:[%s8]]
  %s10 = scalar_lea.smem %s0, 5
  %s11 = sld [smem:[%s10]]
  %s12 = scalar_lea.smem %s0, 6
  %s13 = sld [smem:[%s12]]
  %s14 = scalar_lea.smem %s0, 7
  %s15 = sld [smem:[%s14]]
  %s16 = scalar_lea.smem %s0, 8
  %s17 = sld [smem:[%s16]]
  %s18 = scalar_lea.smem %s0, 9
  %s19 = sld [smem:[%s18]]
  %s20 = scalar_lea.smem %s0, 10
  %s21 = sld [smem:[%s20]]
  %s22 = scalar_lea.smem %s0, 11
  %s23 = sld [smem:[%s22]]
  %s24 = scalar_lea.smem %s0, 12
  %s25 = sld [smem:[%s24]]
  %s26 = scalar_lea.smem %s0, 13
  %s27 = sld [smem:[%s26]]
  %s28 = scalar_lea.smem %s0, 14
  %s29 = sld [smem:[%s28]]
  %s30 = scalar_lea.smem %s0, 15
  %s31 = sld [smem:[%s30]]
  %s32 = scalar_lea.smem %s0, 16
  %s33 = sld [smem:[%s32]]
  %s34 = scalar_lea.smem %s0, 17
  %s35 = sld [smem:[%s34]]
  %s36 = scalar_lea.smem %s0, 18
  %s37 = sld [smem:[%s36]]
  %s38 = scalar_lea.smem %s0, 19
  %s39 = sld [smem:[%s38]]
  %s40 = scalar_lea.smem %s0, 20
  %s41 = sld [smem:[%s40]]
  %s42 = scalar_lea.smem %s0, 21
  %s43 = sld [smem:[%s42]]
  %s44 = scalar_lea.smem %s0, 22
  %s45 = sld [smem:[%s44]]
  %s46 = scalar_lea.smem %s0, 23
  %s47 = sld [smem:[%s46]]
  %s48 = scalar_lea.smem %s0, 24
  %s49 = sld [smem:[%s48]]
  %s50 = scalar_lea.smem %s0, 25
  %s51 = sld [smem:[%s50]]
  %s52 = scalar_lea.smem %s0, 26
  %s53 = sld [smem:[%s52]]
  %s54 = scalar_lea.smem %s0, 27
  %s55 = sld [smem:[%s54]]
  %s56 = scalar_lea.smem %s0, 28
  %s57 = sld [smem:[%s56]]
  %s58 = scalar_lea.smem %s0, 29
  %s59 = sld [smem:[%s58]]
  %s60 = scalar_lea.smem %s0, 30
  %s61 = sld [smem:[%s60]]
  %s62 = scalar_lea.smem %s0, 31
  %s63 = sld [smem:[%s62]]
  %s64 = sld [smem:[#allocation0]]
  $region161: #{forward.1} parent=0
    _
  %s66 = ssub.s32 1, %s64
  %s67 = scalar_select 0, %s66, %s64
  $region1: #{forward.1} parent=0
    #allocation2 [shape = 'u8[958464]{0}', space=vmem, size = 0xea000, scoped, tag = 'input window, operand 30, single buffered']
    #allocation3 [shape = 's32[2]{0}', space=sflag, size = 0x8, scoped, tag = 'scoped memory for forward.1']
    %68 = vsyncpa [#allocation3], 0
    loop: start=0, step=1, limit=4
    $region2: #{forward.1} parent=1 // loop_pre_header
      _
    $region3: #{forward.1} parent=1 // loop_header
      %s70 = sphi 0, %s74
      %p71 = scmp.ge.s32.totalorder %s70, 4
      %s80 = sphi 0, %s82
      %s83 = sphi 0, %s80
      %s84 = sphi 0, %s83
      %s100 = sphi 0, %s84
      %s106 = sphi 0, %s108
      %s109 = sphi 0, %s106
      %s110 = sphi 0, %s109
      %s126 = sphi 0, %s110
      %s132 = sphi 0, %s134
      %s135 = sphi 0, %s132
      %s136 = sphi 0, %s135
      %s152 = sphi 0, %s136
      %s156 = sphi 0, %s156
      %s158 = sphi 0, %s156
      %s159 = sphi 0, %s158
      %s173 = sphi 0, %s159
      %s177 = sphi 0, %s177
      %s179 = sphi 0, %s177
      %s180 = sphi 0, %s179
      %s194 = sphi 0, %s180
      %s198 = sphi 0, %s198
      %s200 = sphi 0, %s198
      %s201 = sphi 0, %s200
      %s215 = sphi 0, %s201
      %s219 = sphi 0, %s219
      %s221 = sphi 0, %s219
      %s222 = sphi 0, %s221
      %s236 = sphi 0, %s222
      %s240 = sphi 0, %s240
      %s242 = sphi 0, %s240
      %s243 = sphi 0, %s242
      %s257 = sphi 0, %s243
      %s261 = sphi 0, %s261
      %s263 = sphi 0, %s261
      %s264 = sphi 0, %s263
      %s278 = sphi 0, %s264
      %s282 = sphi 0, %s282
      %s284 = sphi 0, %s282
      %s285 = sphi 0, %s284
      %s299 = sphi 0, %s285
      %s303 = sphi 0, %s303
      %s305 = sphi 0, %s303
      %s306 = sphi 0, %s305
      %s320 = sphi 0, %s306
      %s324 = sphi 0, %s324
      %s326 = sphi 0, %s324
      %s327 = sphi 0, %s326
      %s341 = sphi 0, %s327
      %s345 = sphi 0, %s345
      %s347 = sphi 0, %s345
      %s348 = sphi 0, %s347
      %s362 = sphi 0, %s348
      %s366 = sphi 0, %s366
      %s368 = sphi 0, %s366
      %s369 = sphi 0, %s368
      %s383 = sphi 0, %s369
      %s387 = sphi 0, %s387
      %s389 = sphi 0, %s387
      %s390 = sphi 0, %s389
      %s404 = sphi 0, %s390
      %s408 = sphi 0, %s408
      %s410 = sphi 0, %s408
      %s411 = sphi 0, %s410
      %s425 = sphi 0, %s411
      %s429 = sphi 0, %s429
      %s431 = sphi 0, %s429
      %s432 = sphi 0, %s431
      %s446 = sphi 0, %s432
      %s450 = sphi 0, %s450
      %s452 = sphi 0, %s450
      %s453 = sphi 0, %s452
      %s467 = sphi 0, %s453
      %s471 = sphi 0, %s471
      %s473 = sphi 0, %s471
      %s474 = sphi 0, %s473
      %s488 = sphi 0, %s474
      %s492 = sphi 0, %s492
      %s494 = sphi 0, %s492
      %s495 = sphi 0, %s494
      %s509 = sphi 0, %s495
      %s513 = sphi 0, %s513
      %s515 = sphi 0, %s513
      %s516 = sphi 0, %s515
      %s530 = sphi 0, %s516
      %s534 = sphi 0, %s534
      %s536 = sphi 0, %s534
      %s537 = sphi 0, %s536
      %s551 = sphi 0, %s537
      %s555 = sphi 0, %s555
      %s557 = sphi 0, %s555
      %s558 = sphi 0, %s557
      %s572 = sphi 0, %s558
      %s576 = sphi 0, %s576
      %s578 = sphi 0, %s576
      %s579 = sphi 0, %s578
      %s593 = sphi 0, %s579
      %s597 = sphi 0, %s597
      %s599 = sphi 0, %s597
      %s600 = sphi 0, %s599
      %s614 = sphi 0, %s600
      %s618 = sphi 0, %s618
      %s620 = sphi 0, %s618
      %s621 = sphi 0, %s620
      %s635 = sphi 0, %s621
      %s639 = sphi 0, %s639
      %s641 = sphi 0, %s639
      %s642 = sphi 0, %s641
      %s656 = sphi 0, %s642
      %s660 = sphi 0, %s660
      %s662 = sphi 0, %s660
      %s663 = sphi 0, %s662
      %s677 = sphi 0, %s663
      %s681 = sphi 0, %s681
      %s683 = sphi 0, %s681
      %s684 = sphi 0, %s683
      %s698 = sphi 0, %s684
      %s702 = sphi 0, %s702
      %s704 = sphi 0, %s702
      %s705 = sphi 0, %s704
      %s719 = sphi 0, %s705
      %s723 = sphi 0, %s723
      %s725 = sphi 0, %s723
      %s726 = sphi 0, %s725
      %s740 = sphi 0, %s726
      %s746 = sphi 0, %s748
      %s749 = sphi 0, %s746
      %s750 = sphi 0, %s749
      %s766 = sphi 0, %s750
    $region4: #{forward.1} parent=1 // loop_header_branch
      %73 = sbr.rel (%p71) target = $region8
    $region5: #{forward.1} parent=1 // loop_body
      %s75 = ssub.s32 %s70, 1
      %s76 = ssub.s32 %s70, 2
      %s77 = sadd.s32 %s70, 1
      %s78 = ssub.s32 %s70, %s77
      %p79 = scmp.eq.s32.totalorder %s78, 0
      %s81 = sadd.s32 %s80, 1
      %s82 = scalar_select %p79, %s80, %s81
      %p85 = pneg %p79
      %p86 = scmp.eq.s32.totalorder %s70, 1
      %p87 = por %p85, %p86
      %p88 = scmp.ne.s32.totalorder %s80, %s83
      %p89 = scmp.eq.s32.totalorder %s70, 0
      %p90 = por %p88, %p89
      %p91 = scmp.ne.s32.totalorder %s80, %s83
      %p92 = scmp.eq.s32.totalorder %s75, 1
      %p93 = por %p91, %p92
      %p94 = scmp.ne.s32.totalorder %s83, %s84
      %p95 = scmp.eq.s32.totalorder %s75, 0
      %p96 = por %p94, %p95
      %p97 = scmp.ne.s32.totalorder %s83, %s84
      %p98 = scmp.eq.s32.totalorder %s76, 1
      %p99 = por %p97, %p98
      %p101 = scmp.ne.s32.totalorder %s84, %s100
      %p102 = scmp.eq.s32.totalorder %s76, 0
      %p103 = por %p101, %p102
      %s104 = ssub.s32 %s70, %s77
      %p105 = scmp.eq.s32.totalorder %s104, 0
      %s107 = sadd.s32 %s106, 1
      %s108 = scalar_select %p105, %s106, %s107
      %p111 = pneg %p105
      %p112 = scmp.eq.s32.totalorder %s70, 1
      %p113 = por %p111, %p112
      %p114 = scmp.ne.s32.totalorder %s106, %s109
      %p115 = scmp.eq.s32.totalorder %s70, 0
      %p116 = por %p114, %p115
      %p117 = scmp.ne.s32.totalorder %s106, %s109
      %p118 = scmp.eq.s32.totalorder %s75, 1
      %p119 = por %p117, %p118
      %p120 = scmp.ne.s32.totalorder %s109, %s110
      %p121 = scmp.eq.s32.totalorder %s75, 0
      %p122 = por %p120, %p121
      %p123 = scmp.ne.s32.totalorder %s109, %s110
      %p124 = scmp.eq.s32.totalorder %s76, 1
      %p125 = por %p123, %p124
      %p127 = scmp.ne.s32.totalorder %s110, %s126
      %p128 = scmp.eq.s32.totalorder %s76, 0
      %p129 = por %p127, %p128
      %s130 = ssub.s32 %s70, %s77
      %p131 = scmp.eq.s32.totalorder %s130, 0
      %s133 = sadd.s32 %s132, 1
      %s134 = scalar_select %p131, %s132, %s133
      %p137 = pneg %p131
      %p138 = scmp.eq.s32.totalorder %s70, 1
      %p139 = por %p137, %p138
      %p140 = scmp.ne.s32.totalorder %s132, %s135
      %p141 = scmp.eq.s32.totalorder %s70, 0
      %p142 = por %p140, %p141
      %p143 = scmp.ne.s32.totalorder %s132, %s135
      %p144 = scmp.eq.s32.totalorder %s75, 1
      %p145 = por %p143, %p144
      %p146 = scmp.ne.s32.totalorder %s135, %s136
      %p147 = scmp.eq.s32.totalorder %s75, 0
      %p148 = por %p146, %p147
      %p149 = scmp.ne.s32.totalorder %s135, %s136
      %p150 = scmp.eq.s32.totalorder %s76, 1
      %p151 = por %p149, %p150
      %p153 = scmp.ne.s32.totalorder %s136, %s152
      %p154 = scmp.eq.s32.totalorder %s76, 0
      %p155 = por %p153, %p154
      %s157 = sadd.s32 %s156, 1
      %p160 = scmp.eq.s32.totalorder %s70, 1
      %p161 = scmp.ne.s32.totalorder %s156, %s158
      %p162 = scmp.eq.s32.totalorder %s70, 0
      %p163 = por %p161, %p162
      %p164 = scmp.ne.s32.totalorder %s156, %s158
      %p165 = scmp.eq.s32.totalorder %s75, 1
      %p166 = por %p164, %p165
      %p167 = scmp.ne.s32.totalorder %s158, %s159
      %p168 = scmp.eq.s32.totalorder %s75, 0
      %p169 = por %p167, %p168
      %p170 = scmp.ne.s32.totalorder %s158, %s159
      %p171 = scmp.eq.s32.totalorder %s76, 1
      %p172 = por %p170, %p171
      %p174 = scmp.ne.s32.totalorder %s159, %s173
      %p175 = scmp.eq.s32.totalorder %s76, 0
      %p176 = por %p174, %p175
      %s178 = sadd.s32 %s177, 1
      %p181 = scmp.eq.s32.totalorder %s70, 1
      %p182 = scmp.ne.s32.totalorder %s177, %s179
      %p183 = scmp.eq.s32.totalorder %s70, 0
      %p184 = por %p182, %p183
      %p185 = scmp.ne.s32.totalorder %s177, %s179
      %p186 = scmp.eq.s32.totalorder %s75, 1
      %p187 = por %p185, %p186
      %p188 = scmp.ne.s32.totalorder %s179, %s180
      %p189 = scmp.eq.s32.totalorder %s75, 0
      %p190 = por %p188, %p189
      %p191 = scmp.ne.s32.totalorder %s179, %s180
      %p192 = scmp.eq.s32.totalorder %s76, 1
      %p193 = por %p191, %p192
      %p195 = scmp.ne.s32.totalorder %s180, %s194
      %p196 = scmp.eq.s32.totalorder %s76, 0
      %p197 = por %p195, %p196
      %s199 = sadd.s32 %s198, 1
      %p202 = scmp.eq.s32.totalorder %s70, 1
      %p203 = scmp.ne.s32.totalorder %s198, %s200
      %p204 = scmp.eq.s32.totalorder %s70, 0
      %p205 = por %p203, %p204
      %p206 = scmp.ne.s32.totalorder %s198, %s200
      %p207 = scmp.eq.s32.totalorder %s75, 1
      %p208 = por %p206, %p207
      %p209 = scmp.ne.s32.totalorder %s200, %s201
      %p210 = scmp.eq.s32.totalorder %s75, 0
      %p211 = por %p209, %p210
      %p212 = scmp.ne.s32.totalorder %s200, %s201
      %p213 = scmp.eq.s32.totalorder %s76, 1
      %p214 = por %p212, %p213
      %p216 = scmp.ne.s32.totalorder %s201, %s215
      %p217 = scmp.eq.s32.totalorder %s76, 0
      %p218 = por %p216, %p217
      %s220 = sadd.s32 %s219, 1
      %p223 = scmp.eq.s32.totalorder %s70, 1
      %p224 = scmp.ne.s32.totalorder %s219, %s221
      %p225 = scmp.eq.s32.totalorder %s70, 0
      %p226 = por %p224, %p225
      %p227 = scmp.ne.s32.totalorder %s219, %s221
      %p228 = scmp.eq.s32.totalorder %s75, 1
      %p229 = por %p227, %p228
      %p230 = scmp.ne.s32.totalorder %s221, %s222
      %p231 = scmp.eq.s32.totalorder %s75, 0
      %p232 = por %p230, %p231
      %p233 = scmp.ne.s32.totalorder %s221, %s222
      %p234 = scmp.eq.s32.totalorder %s76, 1
      %p235 = por %p233, %p234
      %p237 = scmp.ne.s32.totalorder %s222, %s236
      %p238 = scmp.eq.s32.totalorder %s76, 0
      %p239 = por %p237, %p238
      %s241 = sadd.s32 %s240, 1
      %p244 = scmp.eq.s32.totalorder %s70, 1
      %p245 = scmp.ne.s32.totalorder %s240, %s242
      %p246 = scmp.eq.s32.totalorder %s70, 0
      %p247 = por %p245, %p246
      %p248 = scmp.ne.s32.totalorder %s240, %s242
      %p249 = scmp.eq.s32.totalorder %s75, 1
      %p250 = por %p248, %p249
      %p251 = scmp.ne.s32.totalorder %s242, %s243
      %p252 = scmp.eq.s32.totalorder %s75, 0
      %p253 = por %p251, %p252
      %p254 = scmp.ne.s32.totalorder %s242, %s243
      %p255 = scmp.eq.s32.totalorder %s76, 1
      %p256 = por %p254, %p255
      %p258 = scmp.ne.s32.totalorder %s243, %s257
      %p259 = scmp.eq.s32.totalorder %s76, 0
      %p260 = por %p258, %p259
      %s262 = sadd.s32 %s261, 1
      %p265 = scmp.eq.s32.totalorder %s70, 1
      %p266 = scmp.ne.s32.totalorder %s261, %s263
      %p267 = scmp.eq.s32.totalorder %s70, 0
      %p268 = por %p266, %p267
      %p269 = scmp.ne.s32.totalorder %s261, %s263
      %p270 = scmp.eq.s32.totalorder %s75, 1
      %p271 = por %p269, %p270
      %p272 = scmp.ne.s32.totalorder %s263, %s264
      %p273 = scmp.eq.s32.totalorder %s75, 0
      %p274 = por %p272, %p273
      %p275 = scmp.ne.s32.totalorder %s263, %s264
      %p276 = scmp.eq.s32.totalorder %s76, 1
      %p277 = por %p275, %p276
      %p279 = scmp.ne.s32.totalorder %s264, %s278
      %p280 = scmp.eq.s32.totalorder %s76, 0
      %p281 = por %p279, %p280
      %s283 = sadd.s32 %s282, 1
      %p286 = scmp.eq.s32.totalorder %s70, 1
      %p287 = scmp.ne.s32.totalorder %s282, %s284
      %p288 = scmp.eq.s32.totalorder %s70, 0
      %p289 = por %p287, %p288
      %p290 = scmp.ne.s32.totalorder %s282, %s284
      %p291 = scmp.eq.s32.totalorder %s75, 1
      %p292 = por %p290, %p291
      %p293 = scmp.ne.s32.totalorder %s284, %s285
      %p294 = scmp.eq.s32.totalorder %s75, 0
      %p295 = por %p293, %p294
      %p296 = scmp.ne.s32.totalorder %s284, %s285
      %p297 = scmp.eq.s32.totalorder %s76, 1
      %p298 = por %p296, %p297
      %p300 = scmp.ne.s32.totalorder %s285, %s299
      %p301 = scmp.eq.s32.totalorder %s76, 0
      %p302 = por %p300, %p301
      %s304 = sadd.s32 %s303, 1
      %p307 = scmp.eq.s32.totalorder %s70, 1
      %p308 = scmp.ne.s32.totalorder %s303, %s305
      %p309 = scmp.eq.s32.totalorder %s70, 0
      %p310 = por %p308, %p309
      %p311 = scmp.ne.s32.totalorder %s303, %s305
      %p312 = scmp.eq.s32.totalorder %s75, 1
      %p313 = por %p311, %p312
      %p314 = scmp.ne.s32.totalorder %s305, %s306
      %p315 = scmp.eq.s32.totalorder %s75, 0
      %p316 = por %p314, %p315
      %p317 = scmp.ne.s32.totalorder %s305, %s306
      %p318 = scmp.eq.s32.totalorder %s76, 1
      %p319 = por %p317, %p318
      %p321 = scmp.ne.s32.totalorder %s306, %s320
      %p322 = scmp.eq.s32.totalorder %s76, 0
      %p323 = por %p321, %p322
      %s325 = sadd.s32 %s324, 1
      %p328 = scmp.eq.s32.totalorder %s70, 1
      %p329 = scmp.ne.s32.totalorder %s324, %s326
      %p330 = scmp.eq.s32.totalorder %s70, 0
      %p331 = por %p329, %p330
      %p332 = scmp.ne.s32.totalorder %s324, %s326
      %p333 = scmp.eq.s32.totalorder %s75, 1
      %p334 = por %p332, %p333
      %p335 = scmp.ne.s32.totalorder %s326, %s327
      %p336 = scmp.eq.s32.totalorder %s75, 0
      %p337 = por %p335, %p336
      %p338 = scmp.ne.s32.totalorder %s326, %s327
      %p339 = scmp.eq.s32.totalorder %s76, 1
      %p340 = por %p338, %p339
      %p342 = scmp.ne.s32.totalorder %s327, %s341
      %p343 = scmp.eq.s32.totalorder %s76, 0
      %p344 = por %p342, %p343
      %s346 = sadd.s32 %s345, 1
      %p349 = scmp.eq.s32.totalorder %s70, 1
      %p350 = scmp.ne.s32.totalorder %s345, %s347
      %p351 = scmp.eq.s32.totalorder %s70, 0
      %p352 = por %p350, %p351
      %p353 = scmp.ne.s32.totalorder %s345, %s347
      %p354 = scmp.eq.s32.totalorder %s75, 1
      %p355 = por %p353, %p354
      %p356 = scmp.ne.s32.totalorder %s347, %s348
      %p357 = scmp.eq.s32.totalorder %s75, 0
      %p358 = por %p356, %p357
      %p359 = scmp.ne.s32.totalorder %s347, %s348
      %p360 = scmp.eq.s32.totalorder %s76, 1
      %p361 = por %p359, %p360
      %p363 = scmp.ne.s32.totalorder %s348, %s362
      %p364 = scmp.eq.s32.totalorder %s76, 0
      %p365 = por %p363, %p364
      %s367 = sadd.s32 %s366, 1
      %p370 = scmp.eq.s32.totalorder %s70, 1
      %p371 = scmp.ne.s32.totalorder %s366, %s368
      %p372 = scmp.eq.s32.totalorder %s70, 0
      %p373 = por %p371, %p372
      %p374 = scmp.ne.s32.totalorder %s366, %s368
      %p375 = scmp.eq.s32.totalorder %s75, 1
      %p376 = por %p374, %p375
      %p377 = scmp.ne.s32.totalorder %s368, %s369
      %p378 = scmp.eq.s32.totalorder %s75, 0
      %p379 = por %p377, %p378
      %p380 = scmp.ne.s32.totalorder %s368, %s369
      %p381 = scmp.eq.s32.totalorder %s76, 1
      %p382 = por %p380, %p381
      %p384 = scmp.ne.s32.totalorder %s369, %s383
      %p385 = scmp.eq.s32.totalorder %s76, 0
      %p386 = por %p384, %p385
      %s388 = sadd.s32 %s387, 1
      %p391 = scmp.eq.s32.totalorder %s70, 1
      %p392 = scmp.ne.s32.totalorder %s387, %s389
      %p393 = scmp.eq.s32.totalorder %s70, 0
      %p394 = por %p392, %p393
      %p395 = scmp.ne.s32.totalorder %s387, %s389
      %p396 = scmp.eq.s32.totalorder %s75, 1
      %p397 = por %p395, %p396
      %p398 = scmp.ne.s32.totalorder %s389, %s390
      %p399 = scmp.eq.s32.totalorder %s75, 0
      %p400 = por %p398, %p399
      %p401 = scmp.ne.s32.totalorder %s389, %s390
      %p402 = scmp.eq.s32.totalorder %s76, 1
      %p403 = por %p401, %p402
      %p405 = scmp.ne.s32.totalorder %s390, %s404
      %p406 = scmp.eq.s32.totalorder %s76, 0
      %p407 = por %p405, %p406
      %s409 = sadd.s32 %s408, 1
      %p412 = scmp.eq.s32.totalorder %s70, 1
      %p413 = scmp.ne.s32.totalorder %s408, %s410
      %p414 = scmp.eq.s32.totalorder %s70, 0
      %p415 = por %p413, %p414
      %p416 = scmp.ne.s32.totalorder %s408, %s410
      %p417 = scmp.eq.s32.totalorder %s75, 1
      %p418 = por %p416, %p417
      %p419 = scmp.ne.s32.totalorder %s410, %s411
      %p420 = scmp.eq.s32.totalorder %s75, 0
      %p421 = por %p419, %p420
      %p422 = scmp.ne.s32.totalorder %s410, %s411
      %p423 = scmp.eq.s32.totalorder %s76, 1
      %p424 = por %p422, %p423
      %p426 = scmp.ne.s32.totalorder %s411, %s425
      %p427 = scmp.eq.s32.totalorder %s76, 0
      %p428 = por %p426, %p427
      %s430 = sadd.s32 %s429, 1
      %p433 = scmp.eq.s32.totalorder %s70, 1
      %p434 = scmp.ne.s32.totalorder %s429, %s431
      %p435 = scmp.eq.s32.totalorder %s70, 0
      %p436 = por %p434, %p435
      %p437 = scmp.ne.s32.totalorder %s429, %s431
      %p438 = scmp.eq.s32.totalorder %s75, 1
      %p439 = por %p437, %p438
      %p440 = scmp.ne.s32.totalorder %s431, %s432
      %p441 = scmp.eq.s32.totalorder %s75, 0
      %p442 = por %p440, %p441
      %p443 = scmp.ne.s32.totalorder %s431, %s432
      %p444 = scmp.eq.s32.totalorder %s76, 1
      %p445 = por %p443, %p444
      %p447 = scmp.ne.s32.totalorder %s432, %s446
      %p448 = scmp.eq.s32.totalorder %s76, 0
      %p449 = por %p447, %p448
      %s451 = sadd.s32 %s450, 1
      %p454 = scmp.eq.s32.totalorder %s70, 1
      %p455 = scmp.ne.s32.totalorder %s450, %s452
      %p456 = scmp.eq.s32.totalorder %s70, 0
      %p457 = por %p455, %p456
      %p458 = scmp.ne.s32.totalorder %s450, %s452
      %p459 = scmp.eq.s32.totalorder %s75, 1
      %p460 = por %p458, %p459
      %p461 = scmp.ne.s32.totalorder %s452, %s453
      %p462 = scmp.eq.s32.totalorder %s75, 0
      %p463 = por %p461, %p462
      %p464 = scmp.ne.s32.totalorder %s452, %s453
      %p465 = scmp.eq.s32.totalorder %s76, 1
      %p466 = por %p464, %p465
      %p468 = scmp.ne.s32.totalorder %s453, %s467
      %p469 = scmp.eq.s32.totalorder %s76, 0
      %p470 = por %p468, %p469
      %s472 = sadd.s32 %s471, 1
      %p475 = scmp.eq.s32.totalorder %s70, 1
      %p476 = scmp.ne.s32.totalorder %s471, %s473
      %p477 = scmp.eq.s32.totalorder %s70, 0
      %p478 = por %p476, %p477
      %p479 = scmp.ne.s32.totalorder %s471, %s473
      %p480 = scmp.eq.s32.totalorder %s75, 1
      %p481 = por %p479, %p480
      %p482 = scmp.ne.s32.totalorder %s473, %s474
      %p483 = scmp.eq.s32.totalorder %s75, 0
      %p484 = por %p482, %p483
      %p485 = scmp.ne.s32.totalorder %s473, %s474
      %p486 = scmp.eq.s32.totalorder %s76, 1
      %p487 = por %p485, %p486
      %p489 = scmp.ne.s32.totalorder %s474, %s488
      %p490 = scmp.eq.s32.totalorder %s76, 0
      %p491 = por %p489, %p490
      %s493 = sadd.s32 %s492, 1
      %p496 = scmp.eq.s32.totalorder %s70, 1
      %p497 = scmp.ne.s32.totalorder %s492, %s494
      %p498 = scmp.eq.s32.totalorder %s70, 0
      %p499 = por %p497, %p498
      %p500 = scmp.ne.s32.totalorder %s492, %s494
      %p501 = scmp.eq.s32.totalorder %s75, 1
      %p502 = por %p500, %p501
      %p503 = scmp.ne.s32.totalorder %s494, %s495
      %p504 = scmp.eq.s32.totalorder %s75, 0
      %p505 = por %p503, %p504
      %p506 = scmp.ne.s32.totalorder %s494, %s495
      %p507 = scmp.eq.s32.totalorder %s76, 1
      %p508 = por %p506, %p507
      %p510 = scmp.ne.s32.totalorder %s495, %s509
      %p511 = scmp.eq.s32.totalorder %s76, 0
      %p512 = por %p510, %p511
      %s514 = sadd.s32 %s513, 1
      %p517 = scmp.eq.s32.totalorder %s70, 1
      %p518 = scmp.ne.s32.totalorder %s513, %s515
      %p519 = scmp.eq.s32.totalorder %s70, 0
      %p520 = por %p518, %p519
      %p521 = scmp.ne.s32.totalorder %s513, %s515
      %p522 = scmp.eq.s32.totalorder %s75, 1
      %p523 = por %p521, %p522
      %p524 = scmp.ne.s32.totalorder %s515, %s516
      %p525 = scmp.eq.s32.totalorder %s75, 0
      %p526 = por %p524, %p525
      %p527 = scmp.ne.s32.totalorder %s515, %s516
      %p528 = scmp.eq.s32.totalorder %s76, 1
      %p529 = por %p527, %p528
      %p531 = scmp.ne.s32.totalorder %s516, %s530
      %p532 = scmp.eq.s32.totalorder %s76, 0
      %p533 = por %p531, %p532
      %s535 = sadd.s32 %s534, 1
      %p538 = scmp.eq.s32.totalorder %s70, 1
      %p539 = scmp.ne.s32.totalorder %s534, %s536
      %p540 = scmp.eq.s32.totalorder %s70, 0
      %p541 = por %p539, %p540
      %p542 = scmp.ne.s32.totalorder %s534, %s536
      %p543 = scmp.eq.s32.totalorder %s75, 1
      %p544 = por %p542, %p543
      %p545 = scmp.ne.s32.totalorder %s536, %s537
      %p546 = scmp.eq.s32.totalorder %s75, 0
      %p547 = por %p545, %p546
      %p548 = scmp.ne.s32.totalorder %s536, %s537
      %p549 = scmp.eq.s32.totalorder %s76, 1
      %p550 = por %p548, %p549
      %p552 = scmp.ne.s32.totalorder %s537, %s551
      %p553 = scmp.eq.s32.totalorder %s76, 0
      %p554 = por %p552, %p553
      %s556 = sadd.s32 %s555, 1
      %p559 = scmp.eq.s32.totalorder %s70, 1
      %p560 = scmp.ne.s32.totalorder %s555, %s557
      %p561 = scmp.eq.s32.totalorder %s70, 0
      %p562 = por %p560, %p561
      %p563 = scmp.ne.s32.totalorder %s555, %s557
      %p564 = scmp.eq.s32.totalorder %s75, 1
      %p565 = por %p563, %p564
      %p566 = scmp.ne.s32.totalorder %s557, %s558
      %p567 = scmp.eq.s32.totalorder %s75, 0
      %p568 = por %p566, %p567
      %p569 = scmp.ne.s32.totalorder %s557, %s558
      %p570 = scmp.eq.s32.totalorder %s76, 1
      %p571 = por %p569, %p570
      %p573 = scmp.ne.s32.totalorder %s558, %s572
      %p574 = scmp.eq.s32.totalorder %s76, 0
      %p575 = por %p573, %p574
      %s577 = sadd.s32 %s576, 1
      %p580 = scmp.eq.s32.totalorder %s70, 1
      %p581 = scmp.ne.s32.totalorder %s576, %s578
      %p582 = scmp.eq.s32.totalorder %s70, 0
      %p583 = por %p581, %p582
      %p584 = scmp.ne.s32.totalorder %s576, %s578
      %p585 = scmp.eq.s32.totalorder %s75, 1
      %p586 = por %p584, %p585
      %p587 = scmp.ne.s32.totalorder %s578, %s579
      %p588 = scmp.eq.s32.totalorder %s75, 0
      %p589 = por %p587, %p588
      %p590 = scmp.ne.s32.totalorder %s578, %s579
      %p591 = scmp.eq.s32.totalorder %s76, 1
      %p592 = por %p590, %p591
      %p594 = scmp.ne.s32.totalorder %s579, %s593
      %p595 = scmp.eq.s32.totalorder %s76, 0
      %p596 = por %p594, %p595
      %s598 = sadd.s32 %s597, 1
      %p601 = scmp.eq.s32.totalorder %s70, 1
      %p602 = scmp.ne.s32.totalorder %s597, %s599
      %p603 = scmp.eq.s32.totalorder %s70, 0
      %p604 = por %p602, %p603
      %p605 = scmp.ne.s32.totalorder %s597, %s599
      %p606 = scmp.eq.s32.totalorder %s75, 1
      %p607 = por %p605, %p606
      %p608 = scmp.ne.s32.totalorder %s599, %s600
      %p609 = scmp.eq.s32.totalorder %s75, 0
      %p610 = por %p608, %p609
      %p611 = scmp.ne.s32.totalorder %s599, %s600
      %p612 = scmp.eq.s32.totalorder %s76, 1
      %p613 = por %p611, %p612
      %p615 = scmp.ne.s32.totalorder %s600, %s614
      %p616 = scmp.eq.s32.totalorder %s76, 0
      %p617 = por %p615, %p616
      %s619 = sadd.s32 %s618, 1
      %p622 = scmp.eq.s32.totalorder %s70, 1
      %p623 = scmp.ne.s32.totalorder %s618, %s620
      %p624 = scmp.eq.s32.totalorder %s70, 0
      %p625 = por %p623, %p624
      %p626 = scmp.ne.s32.totalorder %s618, %s620
      %p627 = scmp.eq.s32.totalorder %s75, 1
      %p628 = por %p626, %p627
      %p629 = scmp.ne.s32.totalorder %s620, %s621
      %p630 = scmp.eq.s32.totalorder %s75, 0
      %p631 = por %p629, %p630
      %p632 = scmp.ne.s32.totalorder %s620, %s621
      %p633 = scmp.eq.s32.totalorder %s76, 1
      %p634 = por %p632, %p633
      %p636 = scmp.ne.s32.totalorder %s621, %s635
      %p637 = scmp.eq.s32.totalorder %s76, 0
      %p638 = por %p636, %p637
      %s640 = sadd.s32 %s639, 1
      %p643 = scmp.eq.s32.totalorder %s70, 1
      %p644 = scmp.ne.s32.totalorder %s639, %s641
      %p645 = scmp.eq.s32.totalorder %s70, 0
      %p646 = por %p644, %p645
      %p647 = scmp.ne.s32.totalorder %s639, %s641
      %p648 = scmp.eq.s32.totalorder %s75, 1
      %p649 = por %p647, %p648
      %p650 = scmp.ne.s32.totalorder %s641, %s642
      %p651 = scmp.eq.s32.totalorder %s75, 0
      %p652 = por %p650, %p651
      %p653 = scmp.ne.s32.totalorder %s641, %s642
      %p654 = scmp.eq.s32.totalorder %s76, 1
      %p655 = por %p653, %p654
      %p657 = scmp.ne.s32.totalorder %s642, %s656
      %p658 = scmp.eq.s32.totalorder %s76, 0
      %p659 = por %p657, %p658
      %s661 = sadd.s32 %s660, 1
      %p664 = scmp.eq.s32.totalorder %s70, 1
      %p665 = scmp.ne.s32.totalorder %s660, %s662
      %p666 = scmp.eq.s32.totalorder %s70, 0
      %p667 = por %p665, %p666
      %p668 = scmp.ne.s32.totalorder %s660, %s662
      %p669 = scmp.eq.s32.totalorder %s75, 1
      %p670 = por %p668, %p669
      %p671 = scmp.ne.s32.totalorder %s662, %s663
      %p672 = scmp.eq.s32.totalorder %s75, 0
      %p673 = por %p671, %p672
      %p674 = scmp.ne.s32.totalorder %s662, %s663
      %p675 = scmp.eq.s32.totalorder %s76, 1
      %p676 = por %p674, %p675
      %p678 = scmp.ne.s32.totalorder %s663, %s677
      %p679 = scmp.eq.s32.totalorder %s76, 0
      %p680 = por %p678, %p679
      %s682 = sadd.s32 %s681, 1
      %p685 = scmp.eq.s32.totalorder %s70, 1
      %p686 = scmp.ne.s32.totalorder %s681, %s683
      %p687 = scmp.eq.s32.totalorder %s70, 0
      %p688 = por %p686, %p687
      %p689 = scmp.ne.s32.totalorder %s681, %s683
      %p690 = scmp.eq.s32.totalorder %s75, 1
      %p691 = por %p689, %p690
      %p692 = scmp.ne.s32.totalorder %s683, %s684
      %p693 = scmp.eq.s32.totalorder %s75, 0
      %p694 = por %p692, %p693
      %p695 = scmp.ne.s32.totalorder %s683, %s684
      %p696 = scmp.eq.s32.totalorder %s76, 1
      %p697 = por %p695, %p696
      %p699 = scmp.ne.s32.totalorder %s684, %s698
      %p700 = scmp.eq.s32.totalorder %s76, 0
      %p701 = por %p699, %p700
      %s703 = sadd.s32 %s702, 1
      %p706 = scmp.eq.s32.totalorder %s70, 1
      %p707 = scmp.ne.s32.totalorder %s702, %s704
      %p708 = scmp.eq.s32.totalorder %s70, 0
      %p709 = por %p707, %p708
      %p710 = scmp.ne.s32.totalorder %s702, %s704
      %p711 = scmp.eq.s32.totalorder %s75, 1
      %p712 = por %p710, %p711
      %p713 = scmp.ne.s32.totalorder %s704, %s705
      %p714 = scmp.eq.s32.totalorder %s75, 0
      %p715 = por %p713, %p714
      %p716 = scmp.ne.s32.totalorder %s704, %s705
      %p717 = scmp.eq.s32.totalorder %s76, 1
      %p718 = por %p716, %p717
      %p720 = scmp.ne.s32.totalorder %s705, %s719
      %p721 = scmp.eq.s32.totalorder %s76, 0
      %p722 = por %p720, %p721
      %s724 = sadd.s32 %s723, 1
      %p727 = scmp.eq.s32.totalorder %s70, 1
      %p728 = scmp.ne.s32.totalorder %s723, %s725
      %p729 = scmp.eq.s32.totalorder %s70, 0
      %p730 = por %p728, %p729
      %p731 = scmp.ne.s32.totalorder %s723, %s725
      %p732 = scmp.eq.s32.totalorder %s75, 1
      %p733 = por %p731, %p732
      %p734 = scmp.ne.s32.totalorder %s725, %s726
      %p735 = scmp.eq.s32.totalorder %s75, 0
      %p736 = por %p734, %p735
      %p737 = scmp.ne.s32.totalorder %s725, %s726
      %p738 = scmp.eq.s32.totalorder %s76, 1
      %p739 = por %p737, %p738
      %p741 = scmp.ne.s32.totalorder %s726, %s740
      %p742 = scmp.eq.s32.totalorder %s76, 0
      %p743 = por %p741, %p742
      %s744 = ssub.s32 %s70, %s77
      %p745 = scmp.eq.s32.totalorder %s744, 0
      %s747 = sadd.s32 %s746, 1
      %s748 = scalar_select %p745, %s746, %s747
      %p751 = pneg %p745
      %p752 = scmp.eq.s32.totalorder %s70, 1
      %p753 = por %p751, %p752
      %p754 = scmp.ne.s32.totalorder %s746, %s749
      %p755 = scmp.eq.s32.totalorder %s70, 0
      %p756 = por %p754, %p755
      %p757 = scmp.ne.s32.totalorder %s746, %s749
      %p758 = scmp.eq.s32.totalorder %s75, 1
      %p759 = por %p757, %p758
      %p760 = scmp.ne.s32.totalorder %s749, %s750
      %p761 = scmp.eq.s32.totalorder %s75, 0
      %p762 = por %p760, %p761
      %p763 = scmp.ne.s32.totalorder %s749, %s750
      %p764 = scmp.eq.s32.totalorder %s76, 1
      %p765 = por %p763, %p764
      %p767 = scmp.ne.s32.totalorder %s750, %s766
      %p768 = scmp.eq.s32.totalorder %s76, 0
      %p769 = por %p767, %p768
      %p770 = scmp.le.s32.totalorder 1, %s70
      %p771 = scmp.lt.s32.totalorder %s70, 3
      %p772 = pnand %p770, %p771
      %p773 = pneg %p772
      // Predicated region
      $region9: #{forward.1} parent=5 // pred_check
        _
      $region10: #{forward.1} parent=5 // pred_check_branch
        %775 = sbr.rel (%p772) target = $region12
      $region11: #{forward.1} parent=5 // pred_region
        %s776 = ssub.s32 %s70, 1
        // Predicated region
        $region13: #{forward.1} parent=11 // pred_check
          %p777 = pneg %p169
        $region14: #{forward.1} parent=11 // pred_check_branch
          %779 = sbr.rel (%p777) target = $region16
        $region15: #{forward.1} parent=11 // pred_region
          _
        $region16: #{forward.1} parent=11 // pred_fallthru
          _
        // Predicated region
        $region17: #{forward.1} parent=11 // pred_check
          %p780 = pneg %p190
        $region18: #{forward.1} parent=11 // pred_check_branch
          %782 = sbr.rel (%p780) target = $region20
        $region19: #{forward.1} parent=11 // pred_region
          _
        $region20: #{forward.1} parent=11 // pred_fallthru
          _
        // Predicated region
        $region21: #{forward.1} parent=11 // pred_check
          %p783 = pneg %p211
        $region22: #{forward.1} parent=11 // pred_check_branch
          %785 = sbr.rel (%p783) target = $region24
        $region23: #{forward.1} parent=11 // pred_region
          _
        $region24: #{forward.1} parent=11 // pred_fallthru
          _
        // Predicated region
        $region25: #{forward.1} parent=11 // pred_check
          %p786 = pneg %p232
        $region26: #{forward.1} parent=11 // pred_check_branch
          %788 = sbr.rel (%p786) target = $region28
        $region27: #{forward.1} parent=11 // pred_region
          _
        $region28: #{forward.1} parent=11 // pred_fallthru
          _
        // Predicated region
        $region29: #{forward.1} parent=11 // pred_check
          %p789 = pneg %p253
        $region30: #{forward.1} parent=11 // pred_check_branch
          %791 = sbr.rel (%p789) target = $region32
        $region31: #{forward.1} parent=11 // pred_region
          _
        $region32: #{forward.1} parent=11 // pred_fallthru
          _
        // Predicated region
        $region33: #{forward.1} parent=11 // pred_check
          %p792 = pneg %p274
        $region34: #{forward.1} parent=11 // pred_check_branch
          %794 = sbr.rel (%p792) target = $region36
        $region35: #{forward.1} parent=11 // pred_region
          _
        $region36: #{forward.1} parent=11 // pred_fallthru
          _
        // Predicated region
        $region37: #{forward.1} parent=11 // pred_check
          %p795 = pneg %p295
        $region38: #{forward.1} parent=11 // pred_check_branch
          %797 = sbr.rel (%p795) target = $region40
        $region39: #{forward.1} parent=11 // pred_region
          _
        $region40: #{forward.1} parent=11 // pred_fallthru
          _
        // Predicated region
        $region41: #{forward.1} parent=11 // pred_check
          %p798 = pneg %p316
        $region42: #{forward.1} parent=11 // pred_check_branch
          %800 = sbr.rel (%p798) target = $region44
        $region43: #{forward.1} parent=11 // pred_region
          _
        $region44: #{forward.1} parent=11 // pred_fallthru
          _
        // Predicated region
        $region45: #{forward.1} parent=11 // pred_check
          %p801 = pneg %p337
        $region46: #{forward.1} parent=11 // pred_check_branch
          %803 = sbr.rel (%p801) target = $region48
        $region47: #{forward.1} parent=11 // pred_region
          _
        $region48: #{forward.1} parent=11 // pred_fallthru
          _
        // Predicated region
        $region49: #{forward.1} parent=11 // pred_check
          %p804 = pneg %p358
        $region50: #{forward.1} parent=11 // pred_check_branch
          %806 = sbr.rel (%p804) target = $region52
        $region51: #{forward.1} parent=11 // pred_region
          _
        $region52: #{forward.1} parent=11 // pred_fallthru
          _
        // Predicated region
        $region53: #{forward.1} parent=11 // pred_check
          %p807 = pneg %p379
        $region54: #{forward.1} parent=11 // pred_check_branch
          %809 = sbr.rel (%p807) target = $region56
        $region55: #{forward.1} parent=11 // pred_region
          _
        $region56: #{forward.1} parent=11 // pred_fallthru
          _
        // Predicated region
        $region57: #{forward.1} parent=11 // pred_check
          %p810 = pneg %p400
        $region58: #{forward.1} parent=11 // pred_check_branch
          %812 = sbr.rel (%p810) target = $region60
        $region59: #{forward.1} parent=11 // pred_region
          _
        $region60: #{forward.1} parent=11 // pred_fallthru
          _
        // Predicated region
        $region61: #{forward.1} parent=11 // pred_check
          %p813 = pneg %p421
        $region62: #{forward.1} parent=11 // pred_check_branch
          %815 = sbr.rel (%p813) target = $region64
        $region63: #{forward.1} parent=11 // pred_region
          _
        $region64: #{forward.1} parent=11 // pred_fallthru
          _
        // Predicated region
        $region65: #{forward.1} parent=11 // pred_check
          %p816 = pneg %p442
        $region66: #{forward.1} parent=11 // pred_check_branch
          %818 = sbr.rel (%p816) target = $region68
        $region67: #{forward.1} parent=11 // pred_region
          _
        $region68: #{forward.1} parent=11 // pred_fallthru
          _
        // Predicated region
        $region69: #{forward.1} parent=11 // pred_check
          %p819 = pneg %p463
        $region70: #{forward.1} parent=11 // pred_check_branch
          %821 = sbr.rel (%p819) target = $region72
        $region71: #{forward.1} parent=11 // pred_region
          _
        $region72: #{forward.1} parent=11 // pred_fallthru
          _
        // Predicated region
        $region73: #{forward.1} parent=11 // pred_check
          %p822 = pneg %p484
        $region74: #{forward.1} parent=11 // pred_check_branch
          %824 = sbr.rel (%p822) target = $region76
        $region75: #{forward.1} parent=11 // pred_region
          _
        $region76: #{forward.1} parent=11 // pred_fallthru
          _
        // Predicated region
        $region77: #{forward.1} parent=11 // pred_check
          %p825 = pneg %p505
        $region78: #{forward.1} parent=11 // pred_check_branch
          %827 = sbr.rel (%p825) target = $region80
        $region79: #{forward.1} parent=11 // pred_region
          _
        $region80: #{forward.1} parent=11 // pred_fallthru
          _
        // Predicated region
        $region81: #{forward.1} parent=11 // pred_check
          %p828 = pneg %p526
        $region82: #{forward.1} parent=11 // pred_check_branch
          %830 = sbr.rel (%p828) target = $region84
        $region83: #{forward.1} parent=11 // pred_region
          _
        $region84: #{forward.1} parent=11 // pred_fallthru
          _
        // Predicated region
        $region85: #{forward.1} parent=11 // pred_check
          %p831 = pneg %p547
        $region86: #{forward.1} parent=11 // pred_check_branch
          %833 = sbr.rel (%p831) target = $region88
        $region87: #{forward.1} parent=11 // pred_region
          _
        $region88: #{forward.1} parent=11 // pred_fallthru
          _
        // Predicated region
        $region89: #{forward.1} parent=11 // pred_check
          %p834 = pneg %p568
        $region90: #{forward.1} parent=11 // pred_check_branch
          %836 = sbr.rel (%p834) target = $region92
        $region91: #{forward.1} parent=11 // pred_region
          _
        $region92: #{forward.1} parent=11 // pred_fallthru
          _
        // Predicated region
        $region93: #{forward.1} parent=11 // pred_check
          %p837 = pneg %p589
        $region94: #{forward.1} parent=11 // pred_check_branch
          %839 = sbr.rel (%p837) target = $region96
        $region95: #{forward.1} parent=11 // pred_region
          _
        $region96: #{forward.1} parent=11 // pred_fallthru
          _
        // Predicated region
        $region97: #{forward.1} parent=11 // pred_check
          %p840 = pneg %p610
        $region98: #{forward.1} parent=11 // pred_check_branch
          %842 = sbr.rel (%p840) target = $region100
        $region99: #{forward.1} parent=11 // pred_region
          _
        $region100: #{forward.1} parent=11 // pred_fallthru
          _
        // Predicated region
        $region101: #{forward.1} parent=11 // pred_check
          %p843 = pneg %p631
        $region102: #{forward.1} parent=11 // pred_check_branch
          %845 = sbr.rel (%p843) target = $region104
        $region103: #{forward.1} parent=11 // pred_region
          _
        $region104: #{forward.1} parent=11 // pred_fallthru
          _
        // Predicated region
        $region105: #{forward.1} parent=11 // pred_check
          %p846 = pneg %p652
        $region106: #{forward.1} parent=11 // pred_check_branch
          %848 = sbr.rel (%p846) target = $region108
        $region107: #{forward.1} parent=11 // pred_region
          _
        $region108: #{forward.1} parent=11 // pred_fallthru
          _
        // Predicated region
        $region109: #{forward.1} parent=11 // pred_check
          %p849 = pneg %p673
        $region110: #{forward.1} parent=11 // pred_check_branch
          %851 = sbr.rel (%p849) target = $region112
        $region111: #{forward.1} parent=11 // pred_region
          _
        $region112: #{forward.1} parent=11 // pred_fallthru
          _
        // Predicated region
        $region113: #{forward.1} parent=11 // pred_check
          %p852 = pneg %p694
        $region114: #{forward.1} parent=11 // pred_check_branch
          %854 = sbr.rel (%p852) target = $region116
        $region115: #{forward.1} parent=11 // pred_region
          _
        $region116: #{forward.1} parent=11 // pred_fallthru
          _
        // Predicated region
        $region117: #{forward.1} parent=11 // pred_check
          %p855 = pneg %p715
        $region118: #{forward.1} parent=11 // pred_check_branch
          %857 = sbr.rel (%p855) target = $region120
        $region119: #{forward.1} parent=11 // pred_region
          _
        $region120: #{forward.1} parent=11 // pred_fallthru
          _
        // Predicated region
        $region121: #{forward.1} parent=11 // pred_check
          %p858 = pneg %p736
        $region122: #{forward.1} parent=11 // pred_check_branch
          %860 = sbr.rel (%p858) target = $region124
        $region123: #{forward.1} parent=11 // pred_region
          %862 = vsyncadd [#allocation3], 0
          %s863 = sshll.u32 %s61, 4
          %s864 = int_to_ptr.hbm [resolvable:$true] %s863
          %s865 = sshll.u32 [#allocation2], 4
          %s866 = int_to_ptr.vmem [resolvable:$true] %s865
          %871 = dma.hbm_to_vmem [thread:$0]  %s864, 29952, %s866, [#allocation3], 1664, 1664, 104
        $region124: #{forward.1} parent=11 // pred_fallthru
          _
      $region12: #{forward.1} parent=5 // pred_fallthru
        _
      %p872 = scmp.lt.s32.totalorder %s70, 2
      // Predicated region
      $region125: #{forward.1} parent=5 // pred_check
        %p873 = pneg %p872
      $region126: #{forward.1} parent=5 // pred_check_branch
        %875 = sbr.rel (%p873) target = $region128
      $region127: #{forward.1} parent=5 // pred_region
        // Predicated region
        $region129: #{forward.1} parent=127 // pred_check
          %p876 = pneg %p90
        $region130: #{forward.1} parent=127 // pred_check_branch
          %878 = sbr.rel (%p876) target = $region132
        $region131: #{forward.1} parent=127 // pred_region
          %p879 = scmp.lt.s32.totalorder %s70, 1
          %s880 = scalar_select %p879, %s70, 1
          %s881 = smul.addr %s880, 8
          %s882 = scalar_lea.vmem %s1, %s881
        $region132: #{forward.1} parent=127 // pred_fallthru
          _
        // Predicated region
        $region133: #{forward.1} parent=127 // pred_check
          %p883 = pneg %p116
        $region134: #{forward.1} parent=127 // pred_check_branch
          %885 = sbr.rel (%p883) target = $region136
        $region135: #{forward.1} parent=127 // pred_region
          %p886 = scmp.lt.s32.totalorder %s70, 1
          %s887 = scalar_select %p886, %s70, 1
          %s888 = smul.addr %s887, 8
          %s889 = scalar_lea.vmem %s3, %s888
        $region136: #{forward.1} parent=127 // pred_fallthru
          _
        // Predicated region
        $region137: #{forward.1} parent=127 // pred_check
          %p890 = pneg %p142
        $region138: #{forward.1} parent=127 // pred_check_branch
          %892 = sbr.rel (%p890) target = $region140
        $region139: #{forward.1} parent=127 // pred_region
          %p893 = scmp.lt.s32.totalorder %s70, 1
          %s894 = scalar_select %p893, %s70, 1
          %s895 = smul.addr %s894, 2
          %s896 = smul.addr %s895, 8
          %s897 = scalar_lea.vmem %s5, %s896
        $region140: #{forward.1} parent=127 // pred_fallthru
          _
      $region128: #{forward.1} parent=5 // pred_fallthru
        _
      %p898 = scmp.le.s32.totalorder 1, %s70
      %p899 = scmp.lt.s32.totalorder %s70, 3
      %p900 = pnand %p898, %p899
      %p901 = pneg %p900
      // Predicated region
      $region141: #{forward.1} parent=5 // pred_check
        _
      $region142: #{forward.1} parent=5 // pred_check_branch
        %903 = sbr.rel (%p900) target = $region144
      $region143: #{forward.1} parent=5 // pred_region
        %s904 = ssub.s32 %s70, 1
        // Predicated region
        $region145: #{forward.1} parent=143 // pred_check
          %p905 = pneg %p736
        $region146: #{forward.1} parent=143 // pred_check_branch
          %907 = sbr.rel (%p905) target = $region148
        $region147: #{forward.1} parent=143 // pred_region
          %909 = dma.done [#allocation3], 29952
        $region148: #{forward.1} parent=143 // pred_fallthru
          _
        %p910 = scmp.lt.s32.totalorder %s75, 1
        %s911 = scalar_select %p910, %s75, 1
        %s912 = smul.addr %s911, 8
        %s913 = scalar_lea.vmem %s1, %s912
        %p914 = pneg %p96
        %p915 = pneg %p93
        %p916 = scmp.lt.s32.totalorder %s75, 1
        %s917 = scalar_select %p916, %s75, 1
        %s918 = smul.addr %s917, 8
        %s919 = scalar_lea.vmem %s3, %s918
        %p920 = pneg %p122
        %p921 = pneg %p119
        %p922 = scmp.lt.s32.totalorder %s75, 1
        %s923 = scalar_select %p922, %s75, 1
        %s924 = smul.addr %s923, 2
        %s925 = smul.addr %s924, 8
        %s926 = scalar_lea.vmem %s5, %s925
        %p927 = pneg %p148
        %p928 = pneg %p145
        %p929 = pneg %p169
        %p930 = pneg %p166
        %p931 = pneg %p190
        %p932 = pneg %p187
        %p933 = pneg %p211
        %p934 = pneg %p208
        %p935 = pneg %p232
        %p936 = pneg %p229
        %p937 = pneg %p253
        %p938 = pneg %p250
        %p939 = pneg %p274
        %p940 = pneg %p271
        %p941 = pneg %p295
        %p942 = pneg %p292
        %p943 = pneg %p316
        %p944 = pneg %p313
        %p945 = pneg %p337
        %p946 = pneg %p334
        %p947 = pneg %p358
        %p948 = pneg %p355
        %p949 = pneg %p379
        %p950 = pneg %p376
        %p951 = pneg %p400
        %p952 = pneg %p397
        %p953 = pneg %p421
        %p954 = pneg %p418
        %p955 = pneg %p442
        %p956 = pneg %p439
        %p957 = pneg %p463
        %p958 = pneg %p460
        %p959 = pneg %p484
        %p960 = pneg %p481
        %p961 = pneg %p505
        %p962 = pneg %p502
        %p963 = pneg %p526
        %p964 = pneg %p523
        %p965 = pneg %p547
        %p966 = pneg %p544
        %p967 = pneg %p568
        %p968 = pneg %p565
        %p969 = pneg %p589
        %p970 = pneg %p586
        %p971 = pneg %p610
        %p972 = pneg %p607
        %p973 = pneg %p631
        %p974 = pneg %p628
        %p975 = pneg %p652
        %p976 = pneg %p649
        %p977 = pneg %p673
        %p978 = pneg %p670
        %p979 = pneg %p694
        %p980 = pneg %p691
        %p981 = pneg %p715
        %p982 = pneg %p712
        %p983 = pneg %p736
        %p984 = pneg %p733
        %p985 = pneg %p762
        %p986 = pneg %p759
        %p987 = scmp.lt.s32.totalorder %s75, 1
        %s988 = scalar_select %p987, %s75, 1
        %s989 = smul.addr %s988, 26
        %s990 = smul.addr %s989, 8
        %s991 = scalar_lea.vmem %s63, %s990
        %p992 = scmp.lt.s32.totalorder %s75, 1
        %s993 = scalar_select %p992, %s75, 1
        %s994 = smul.addr %s993, 8
        %s995 = scalar_lea.vmem %s1, %s994
        %p996 = scmp.lt.s32.totalorder %s75, 1
        %s997 = scalar_select %p996, %s75, 1
        %s998 = smul.addr %s997, 8
        %s999 = scalar_lea.vmem %s3, %s998
        %p1000 = scmp.lt.s32.totalorder %s75, 1
        %s1001 = scalar_select %p1000, %s75, 1
        %s1002 = smul.addr %s1001, 2
        %s1003 = smul.addr %s1002, 8
        %s1004 = scalar_lea.vmem %s5, %s1003
        %p1005 = scmp.lt.s32.totalorder %s75, 1
        %s1006 = scalar_select %p1005, %s75, 1
        %s1007 = smul.addr %s1006, 26
        %s1008 = smul.addr %s1007, 8
        %s1009 = scalar_lea.vmem %s63, %s1008
        %v1010 = vld [vmem:[%s995] sm:$0xff]
        %v1011 = vld [vmem:[%s999] sm:$0xff]
        %v1012 = vld [vmem:[%s1004] sm:$0xff]
        %v1013 = vld [vmem:[%s1004 + $0x8] sm:$0xff]
        %v1014 = vld [vmem:[%s7] sm:$0x1]
        %v1015 = vld [vmem:[%s9] sm:$0x1]
        %v1016 = vld [vmem:[%s11] sm:$0x3]
        %1018 = vrot.lane.b32.xlu0 %v1010, 7
        %v1019 = vpop.permute.xlu0 %1018
        %vm1021 = vcmask 56320
        %v1022 = vsel %vm1021, 0.0, %v1019
        %vm1023 = vcmask 351232
        %v1024 = vsel %vm1023, %v1022, 0.0
        %v1025 = vld [vmem:[%s13] sm:$0xf]
        %s1026 = scalar_lea.vmem %s13, 4
        %v1027 = vld [vmem:[%s1026] sm:$0xf]
        %1029 = vrot.lane.b32.xlu0 %v1024, 127
        %v1030 = vpop.permute.xlu0 %1029
        %vm1032 = vcmask 64512
        %v1034 = vsel %vm1032, %v1027, 0
        %1036 = vmatpush.msra.mxu0 0.0
        %1037 = vmatpush.msra.mxu0 0.0
        %1038 = vmatpush.msra.mxu0 0.0
        %1039 = vmatpush.msra.mxu0 0.0
        %1040 = vmatpush.msra.mxu0 0.0
        %1041 = vmatpush.msra.mxu0 0.0
        %1042 = vmatpush.msra.mxu0 0.0
        %1043 = vmatpush.msra.mxu0 0.0
        %1044 = vmatpush.msra.mxu0 0.0
        %1045 = vmatpush.msra.mxu0 0.0
        %1046 = vmatpush.msra.mxu0 0.0
        %1047 = vmatpush.msra.mxu0 0.0
        %1048 = vmatpush.msra.mxu0 0.0
        %1049 = vmatpush.msra.mxu0 0.0
        %1050 = vmatpush.msra.mxu0 0.0
        %1051 = vmatpush.msra.mxu0 %v1030
        %1052 = vmatmul.f32.gmra.mxu0 %v1034
        %v1053 = vpop.f32.mrf.mxu0
        %v1054 = vadd.f32 0.0, %v1053
        %1055 = vdwg.mxu0
        %v1057 = vsel %vm1032, %v1025, 0
        %1059 = vmatpush.msra.mxu0 0.0
        %1060 = vmatpush.msra.mxu0 0.0
        %1061 = vmatpush.msra.mxu0 0.0
        %1062 = vmatpush.msra.mxu0 0.0
        %1063 = vmatpush.msra.mxu0 0.0
        %1064 = vmatpush.msra.mxu0 0.0
        %1065 = vmatpush.msra.mxu0 0.0
        %1066 = vmatpush.msra.mxu0 0.0
        %1067 = vmatpush.msra.mxu0 0.0
        %1068 = vmatpush.msra.mxu0 0.0
        %1069 = vmatpush.msra.mxu0 0.0
        %1070 = vmatpush.msra.mxu0 0.0
        %1071 = vmatpush.msra.mxu0 0.0
        %1072 = vmatpush.msra.mxu0 0.0
        %1073 = vmatpush.msra.mxu0 0.0
        %1074 = vmatpush.msra.mxu0 %v1024
        %1075 = vmatmul.f32.gmra.mxu0 %v1057
        %v1076 = vpop.f32.mrf.mxu0
        %v1077 = vadd.f32 %v1054, %v1076
        %1078 = vdwg.mxu0
        %s1079 = scalar_lea.vmem %s13, 8
        %v1080 = vld [vmem:[%s1079] sm:$0xf]
        %1081 = vrot.lane.b32.xlu0 %v1024, 126
        %v1082 = vpop.permute.xlu0 %1081
        %v1085 = vsel %vm1032, %v1080, 0
        %1087 = vmatpush.msra.mxu0 0.0
        %1088 = vmatpush.msra.mxu0 0.0
        %1089 = vmatpush.msra.mxu0 0.0
        %1090 = vmatpush.msra.mxu0 0.0
        %1091 = vmatpush.msra.mxu0 0.0
        %1092 = vmatpush.msra.mxu0 0.0
        %1093 = vmatpush.msra.mxu0 0.0
        %1094 = vmatpush.msra.mxu0 0.0
        %1095 = vmatpush.msra.mxu0 0.0
        %1096 = vmatpush.msra.mxu0 0.0
        %1097 = vmatpush.msra.mxu0 0.0
        %1098 = vmatpush.msra.mxu0 0.0
        %1099 = vmatpush.msra.mxu0 0.0
        %1100 = vmatpush.msra.mxu0 0.0
        %1101 = vmatpush.msra.mxu0 0.0
        %1102 = vmatpush.msra.mxu0 %v1082
        %1103 = vmatmul.f32.gmra.mxu0 %v1085
        %v1104 = vpop.f32.mrf.mxu0
        %v1105 = vadd.f32 0.0, %v1104
        %1106 = vdwg.mxu0
        %v1107 = vadd.f32 %v1077, %v1105
        %s1108 = scalar_lea.vmem %s13, 12
        %v1109 = vld [vmem:[%s1108] sm:$0xf]
        %1110 = vrot.lane.b32.xlu0 %v1024, 122
        %v1111 = vpop.permute.xlu0 %1110
        %v1114 = vsel %vm1032, %v1109, 0
        %1116 = vmatpush.msra.mxu0 0.0
        %1117 = vmatpush.msra.mxu0 0.0
        %1118 = vmatpush.msra.mxu0 0.0
        %1119 = vmatpush.msra.mxu0 0.0
        %1120 = vmatpush.msra.mxu0 0.0
        %1121 = vmatpush.msra.mxu0 0.0
        %1122 = vmatpush.msra.mxu0 0.0
        %1123 = vmatpush.msra.mxu0 0.0
        %1124 = vmatpush.msra.mxu0 0.0
        %1125 = vmatpush.msra.mxu0 0.0
        %1126 = vmatpush.msra.mxu0 0.0
        %1127 = vmatpush.msra.mxu0 0.0
        %1128 = vmatpush.msra.mxu0 0.0
        %1129 = vmatpush.msra.mxu0 0.0
        %1130 = vmatpush.msra.mxu0 0.0
        %1131 = vmatpush.msra.mxu0 %v1111
        %1132 = vmatmul.f32.gmra.mxu0 %v1114
        %v1133 = vpop.f32.mrf.mxu0
        %v1134 = vadd.f32 0.0, %v1133
        %1135 = vdwg.mxu0
        %v1136 = vadd.f32 %v1107, %v1134
        %s1137 = scalar_lea.vmem %s13, 16
        %v1138 = vld [vmem:[%s1137] sm:$0xf]
        %1139 = vrot.lane.b32.xlu0 %v1024, 121
        %v1140 = vpop.permute.xlu0 %1139
        %v1143 = vsel %vm1032, %v1138, 0
        %1145 = vmatpush.msra.mxu0 0.0
        %1146 = vmatpush.msra.mxu0 0.0
        %1147 = vmatpush.msra.mxu0 0.0
        %1148 = vmatpush.msra.mxu0 0.0
        %1149 = vmatpush.msra.mxu0 0.0
        %1150 = vmatpush.msra.mxu0 0.0
        %1151 = vmatpush.msra.mxu0 0.0
        %1152 = vmatpush.msra.mxu0 0.0
        %1153 = vmatpush.msra.mxu0 0.0
        %1154 = vmatpush.msra.mxu0 0.0
        %1155 = vmatpush.msra.mxu0 0.0
        %1156 = vmatpush.msra.mxu0 0.0
        %1157 = vmatpush.msra.mxu0 0.0
        %1158 = vmatpush.msra.mxu0 0.0
        %1159 = vmatpush.msra.mxu0 0.0
        %1160 = vmatpush.msra.mxu0 %v1140
        %1161 = vmatmul.f32.gmra.mxu0 %v1143
        %v1162 = vpop.f32.mrf.mxu0
        %v1163 = vadd.f32 0.0, %v1162
        %1164 = vdwg.mxu0
        %v1165 = vadd.f32 %v1136, %v1163
        %s1166 = scalar_lea.vmem %s13, 20
        %v1167 = vld [vmem:[%s1166] sm:$0xf]
        %1168 = vrot.lane.b32.xlu0 %v1024, 120
        %v1169 = vpop.permute.xlu0 %1168
        %v1172 = vsel %vm1032, %v1167, 0
        %1174 = vmatpush.msra.mxu0 0.0
        %1175 = vmatpush.msra.mxu0 0.0
        %1176 = vmatpush.msra.mxu0 0.0
        %1177 = vmatpush.msra.mxu0 0.0
        %1178 = vmatpush.msra.mxu0 0.0
        %1179 = vmatpush.msra.mxu0 0.0
        %1180 = vmatpush.msra.mxu0 0.0
        %1181 = vmatpush.msra.mxu0 0.0
        %1182 = vmatpush.msra.mxu0 0.0
        %1183 = vmatpush.msra.mxu0 0.0
        %1184 = vmatpush.msra.mxu0 0.0
        %1185 = vmatpush.msra.mxu0 0.0
        %1186 = vmatpush.msra.mxu0 0.0
        %1187 = vmatpush.msra.mxu0 0.0
        %1188 = vmatpush.msra.mxu0 0.0
        %1189 = vmatpush.msra.mxu0 %v1169
        %1190 = vmatmul.f32.gmra.mxu0 %v1172
        %v1191 = vpop.f32.mrf.mxu0
        %v1192 = vadd.f32 0.0, %v1191
        %1193 = vdwg.mxu0
        %v1194 = vadd.f32 %v1165, %v1192
        %s1195 = scalar_lea.vmem %s13, 24
        %v1196 = vld [vmem:[%s1195] sm:$0xf]
        %1197 = vrot.lane.b32.xlu0 %v1024, 116
        %v1198 = vpop.permute.xlu0 %1197
        %v1201 = vsel %vm1032, %v1196, 0
        %1203 = vmatpush.msra.mxu0 0.0
        %1204 = vmatpush.msra.mxu0 0.0
        %1205 = vmatpush.msra.mxu0 0.0
        %1206 = vmatpush.msra.mxu0 0.0
        %1207 = vmatpush.msra.mxu0 0.0
        %1208 = vmatpush.msra.mxu0 0.0
        %1209 = vmatpush.msra.mxu0 0.0
        %1210 = vmatpush.msra.mxu0 0.0
        %1211 = vmatpush.msra.mxu0 0.0
        %1212 = vmatpush.msra.mxu0 0.0
        %1213 = vmatpush.msra.mxu0 0.0
        %1214 = vmatpush.msra.mxu0 0.0
        %1215 = vmatpush.msra.mxu0 0.0
        %1216 = vmatpush.msra.mxu0 0.0
        %1217 = vmatpush.msra.mxu0 0.0
        %1218 = vmatpush.msra.mxu0 %v1198
        %1219 = vmatmul.f32.gmra.mxu0 %v1201
        %v1220 = vpop.f32.mrf.mxu0
        %v1221 = vadd.f32 0.0, %v1220
        %1222 = vdwg.mxu0
        %v1223 = vadd.f32 %v1194, %v1221
        %s1224 = scalar_lea.vmem %s13, 28
        %v1225 = vld [vmem:[%s1224] sm:$0xf]
        %1226 = vrot.lane.b32.xlu0 %v1024, 115
        %v1227 = vpop.permute.xlu0 %1226
        %v1230 = vsel %vm1032, %v1225, 0
        %1232 = vmatpush.msra.mxu0 0.0
        %1233 = vmatpush.msra.mxu0 0.0
        %1234 = vmatpush.msra.mxu0 0.0
        %1235 = vmatpush.msra.mxu0 0.0
        %1236 = vmatpush.msra.mxu0 0.0
        %1237 = vmatpush.msra.mxu0 0.0
        %1238 = vmatpush.msra.mxu0 0.0
        %1239 = vmatpush.msra.mxu0 0.0
        %1240 = vmatpush.msra.mxu0 0.0
        %1241 = vmatpush.msra.mxu0 0.0
        %1242 = vmatpush.msra.mxu0 0.0
        %1243 = vmatpush.msra.mxu0 0.0
        %1244 = vmatpush.msra.mxu0 0.0
        %1245 = vmatpush.msra.mxu0 0.0
        %1246 = vmatpush.msra.mxu0 0.0
        %1247 = vmatpush.msra.mxu0 %v1227
        %1248 = vmatmul.f32.gmra.mxu0 %v1230
        %v1249 = vpop.f32.mrf.mxu0
        %v1250 = vadd.f32 0.0, %v1249
        %1251 = vdwg.mxu0
        %v1252 = vadd.f32 %v1223, %v1250
        %s1253 = scalar_lea.vmem %s13, 32
        %v1254 = vld [vmem:[%s1253] sm:$0xf]
        %1255 = vrot.lane.b32.xlu0 %v1024, 114
        %v1256 = vpop.permute.xlu0 %1255
        %v1259 = vsel %vm1032, %v1254, 0
        %1261 = vmatpush.msra.mxu0 0.0
        %1262 = vmatpush.msra.mxu0 0.0
        %1263 = vmatpush.msra.mxu0 0.0
        %1264 = vmatpush.msra.mxu0 0.0
        %1265 = vmatpush.msra.mxu0 0.0
        %1266 = vmatpush.msra.mxu0 0.0
        %1267 = vmatpush.msra.mxu0 0.0
        %1268 = vmatpush.msra.mxu0 0.0
        %1269 = vmatpush.msra.mxu0 0.0
        %1270 = vmatpush.msra.mxu0 0.0
        %1271 = vmatpush.msra.mxu0 0.0
        %1272 = vmatpush.msra.mxu0 0.0
        %1273 = vmatpush.msra.mxu0 0.0
        %1274 = vmatpush.msra.mxu0 0.0
        %1275 = vmatpush.msra.mxu0 0.0
        %1276 = vmatpush.msra.mxu0 %v1256
        %1277 = vmatmul.f32.gmra.mxu0 %v1259
        %v1278 = vpop.f32.mrf.mxu0
        %v1279 = vadd.f32 0.0, %v1278
        %1280 = vdwg.mxu0
        %v1281 = vadd.f32 %v1252, %v1279
        %v1282 = vld [vmem:[%s15] sm:$0xf]
        %1284 = vset.pattern.permute.xlu0 0
        %1285 = vperm.xlu0 %1284, %v1282
        %v1286 = vpop.permute.xlu0 %1285
        %v1288 = vadd.f32 %v1281, %v1286
        %vm1289 = vcmp.ge.f32.partialorder %v1288, 0.0
        %v1290 = vmul.f32 %v1288, 0.2
        %v1291 = vsel %vm1289, %v1288, %v1290
        %v1293 = vperm.slane %v1014, 0
        %v1295 = vmul.f32 %v1291, %v1293
        %vm1296 = vcmp.ge.f32.partialorder %v1295, 0.0
        %v1297 = vmul.f32 %v1295, 0.2
        %v1298 = vsel %vm1296, %v1295, %v1297
        %1300 = vrot.lane.b32.xlu0 %v1298, 7
        %v1301 = vpop.permute.xlu0 %1300
        %v1303 = vsel %vm1021, 0.0, %v1301
        %v1304 = vsel %vm1023, %v1303, 0.0
        %v1305 = vld [vmem:[%s17] sm:$0xf]
        %s1306 = scalar_lea.vmem %s17, 4
        %v1307 = vld [vmem:[%s1306] sm:$0xf]
        %1309 = vrot.lane.b32.xlu0 %v1304, 127
        %v1310 = vpop.permute.xlu0 %1309
        %vm1311 = vcmask 31744
        %v1313 = vsel %vm1311, %v1307, 0
        %vm1315 = vcmask 1043456
        %v1316 = vsel %vm1315, %v1310, 0
        %1318 = vmatpush.msra.mxu0 0.0
        %1319 = vmatpush.msra.mxu0 0.0
        %1320 = vmatpush.msra.mxu0 0.0
        %1321 = vmatpush.msra.mxu0 0.0
        %1322 = vmatpush.msra.mxu0 0.0
        %1323 = vmatpush.msra.mxu0 0.0
        %1324 = vmatpush.msra.mxu0 0.0
        %1325 = vmatpush.msra.mxu0 0.0
        %1326 = vmatpush.msra.mxu0 0.0
        %1327 = vmatpush.msra.mxu0 0.0
        %1328 = vmatpush.msra.mxu0 0.0
        %1329 = vmatpush.msra.mxu0 0.0
        %1330 = vmatpush.msra.mxu0 0.0
        %1331 = vmatpush.msra.mxu0 0.0
        %1332 = vmatpush.msra.mxu0 0.0
        %1333 = vmatpush.msra.mxu0 %v1316
        %1334 = vmatmul.f32.gmra.mxu0 %v1313
        %v1335 = vpop.f32.mrf.mxu0
        %v1336 = vadd.f32 0.0, %v1335
        %1337 = vdwg.mxu0
        %v1339 = vsel %vm1311, %v1305, 0
        %v1341 = vsel %vm1315, %v1304, 0
        %1343 = vmatpush.msra.mxu0 0.0
        %1344 = vmatpush.msra.mxu0 0.0
        %1345 = vmatpush.msra.mxu0 0.0
        %1346 = vmatpush.msra.mxu0 0.0
        %1347 = vmatpush.msra.mxu0 0.0
        %1348 = vmatpush.msra.mxu0 0.0
        %1349 = vmatpush.msra.mxu0 0.0
        %1350 = vmatpush.msra.mxu0 0.0
        %1351 = vmatpush.msra.mxu0 0.0
        %1352 = vmatpush.msra.mxu0 0.0
        %1353 = vmatpush.msra.mxu0 0.0
        %1354 = vmatpush.msra.mxu0 0.0
        %1355 = vmatpush.msra.mxu0 0.0
        %1356 = vmatpush.msra.mxu0 0.0
        %1357 = vmatpush.msra.mxu0 0.0
        %1358 = vmatpush.msra.mxu0 %v1341
        %1359 = vmatmul.f32.gmra.mxu0 %v1339
        %v1360 = vpop.f32.mrf.mxu0
        %v1361 = vadd.f32 %v1336, %v1360
        %1362 = vdwg.mxu0
        %s1363 = scalar_lea.vmem %s17, 8
        %v1364 = vld [vmem:[%s1363] sm:$0xf]
        %1365 = vrot.lane.b32.xlu0 %v1304, 126
        %v1366 = vpop.permute.xlu0 %1365
        %v1368 = vsel %vm1311, %v1364, 0
        %v1370 = vsel %vm1315, %v1366, 0
        %1372 = vmatpush.msra.mxu0 0.0
        %1373 = vmatpush.msra.mxu0 0.0
        %1374 = vmatpush.msra.mxu0 0.0
        %1375 = vmatpush.msra.mxu0 0.0
        %1376 = vmatpush.msra.mxu0 0.0
        %1377 = vmatpush.msra.mxu0 0.0
        %1378 = vmatpush.msra.mxu0 0.0
        %1379 = vmatpush.msra.mxu0 0.0
        %1380 = vmatpush.msra.mxu0 0.0
        %1381 = vmatpush.msra.mxu0 0.0
        %1382 = vmatpush.msra.mxu0 0.0
        %1383 = vmatpush.msra.mxu0 0.0
        %1384 = vmatpush.msra.mxu0 0.0
        %1385 = vmatpush.msra.mxu0 0.0
        %1386 = vmatpush.msra.mxu0 0.0
        %1387 = vmatpush.msra.mxu0 %v1370
        %1388 = vmatmul.f32.gmra.mxu0 %v1368
        %v1389 = vpop.f32.mrf.mxu0
        %v1390 = vadd.f32 0.0, %v1389
        %1391 = vdwg.mxu0
        %v1392 = vadd.f32 %v1361, %v1390
        %s1393 = scalar_lea.vmem %s17, 12
        %v1394 = vld [vmem:[%s1393] sm:$0xf]
        %1395 = vrot.lane.b32.xlu0 %v1304, 122
        %v1396 = vpop.permute.xlu0 %1395
        %v1398 = vsel %vm1311, %v1394, 0
        %v1400 = vsel %vm1315, %v1396, 0
        %1402 = vmatpush.msra.mxu0 0.0
        %1403 = vmatpush.msra.mxu0 0.0
        %1404 = vmatpush.msra.mxu0 0.0
        %1405 = vmatpush.msra.mxu0 0.0
        %1406 = vmatpush.msra.mxu0 0.0
        %1407 = vmatpush.msra.mxu0 0.0
        %1408 = vmatpush.msra.mxu0 0.0
        %1409 = vmatpush.msra.mxu0 0.0
        %1410 = vmatpush.msra.mxu0 0.0
        %1411 = vmatpush.msra.mxu0 0.0
        %1412 = vmatpush.msra.mxu0 0.0
        %1413 = vmatpush.msra.mxu0 0.0
        %1414 = vmatpush.msra.mxu0 0.0
        %1415 = vmatpush.msra.mxu0 0.0
        %1416 = vmatpush.msra.mxu0 0.0
        %1417 = vmatpush.msra.mxu0 %v1400
        %1418 = vmatmul.f32.gmra.mxu0 %v1398
        %v1419 = vpop.f32.mrf.mxu0
        %v1420 = vadd.f32 0.0, %v1419
        %1421 = vdwg.mxu0
        %v1422 = vadd.f32 %v1392, %v1420
        %s1423 = scalar_lea.vmem %s17, 16
        %v1424 = vld [vmem:[%s1423] sm:$0xf]
        %1425 = vrot.lane.b32.xlu0 %v1304, 121
        %v1426 = vpop.permute.xlu0 %1425
        %v1428 = vsel %vm1311, %v1424, 0
        %v1430 = vsel %vm1315, %v1426, 0
        %1432 = vmatpush.msra.mxu0 0.0
        %1433 = vmatpush.msra.mxu0 0.0
        %1434 = vmatpush.msra.mxu0 0.0
        %1435 = vmatpush.msra.mxu0 0.0
        %1436 = vmatpush.msra.mxu0 0.0
        %1437 = vmatpush.msra.mxu0 0.0
        %1438 = vmatpush.msra.mxu0 0.0
        %1439 = vmatpush.msra.mxu0 0.0
        %1440 = vmatpush.msra.mxu0 0.0
        %1441 = vmatpush.msra.mxu0 0.0
        %1442 = vmatpush.msra.mxu0 0.0
        %1443 = vmatpush.msra.mxu0 0.0
        %1444 = vmatpush.msra.mxu0 0.0
        %1445 = vmatpush.msra.mxu0 0.0
        %1446 = vmatpush.msra.mxu0 0.0
        %1447 = vmatpush.msra.mxu0 %v1430
        %1448 = vmatmul.f32.gmra.mxu0 %v1428
        %v1449 = vpop.f32.mrf.mxu0
        %v1450 = vadd.f32 0.0, %v1449
        %1451 = vdwg.mxu0
        %v1452 = vadd.f32 %v1422, %v1450
        %s1453 = scalar_lea.vmem %s17, 20
        %v1454 = vld [vmem:[%s1453] sm:$0xf]
        %1455 = vrot.lane.b32.xlu0 %v1304, 120
        %v1456 = vpop.permute.xlu0 %1455
        %v1458 = vsel %vm1311, %v1454, 0
        %v1460 = vsel %vm1315, %v1456, 0
        %1462 = vmatpush.msra.mxu0 0.0
        %1463 = vmatpush.msra.mxu0 0.0
        %1464 = vmatpush.msra.mxu0 0.0
        %1465 = vmatpush.msra.mxu0 0.0
        %1466 = vmatpush.msra.mxu0 0.0
        %1467 = vmatpush.msra.mxu0 0.0
        %1468 = vmatpush.msra.mxu0 0.0
        %1469 = vmatpush.msra.mxu0 0.0
        %1470 = vmatpush.msra.mxu0 0.0
        %1471 = vmatpush.msra.mxu0 0.0
        %1472 = vmatpush.msra.mxu0 0.0
        %1473 = vmatpush.msra.mxu0 0.0
        %1474 = vmatpush.msra.mxu0 0.0
        %1475 = vmatpush.msra.mxu0 0.0
        %1476 = vmatpush.msra.mxu0 0.0
        %1477 = vmatpush.msra.mxu0 %v1460
        %1478 = vmatmul.f32.gmra.mxu0 %v1458
        %v1479 = vpop.f32.mrf.mxu0
        %v1480 = vadd.f32 0.0, %v1479
        %1481 = vdwg.mxu0
        %v1482 = vadd.f32 %v1452, %v1480
        %s1483 = scalar_lea.vmem %s17, 24
        %v1484 = vld [vmem:[%s1483] sm:$0xf]
        %1485 = vrot.lane.b32.xlu0 %v1304, 116
        %v1486 = vpop.permute.xlu0 %1485
        %v1488 = vsel %vm1311, %v1484, 0
        %v1490 = vsel %vm1315, %v1486, 0
        %1492 = vmatpush.msra.mxu0 0.0
        %1493 = vmatpush.msra.mxu0 0.0
        %1494 = vmatpush.msra.mxu0 0.0
        %1495 = vmatpush.msra.mxu0 0.0
        %1496 = vmatpush.msra.mxu0 0.0
        %1497 = vmatpush.msra.mxu0 0.0
        %1498 = vmatpush.msra.mxu0 0.0
        %1499 = vmatpush.msra.mxu0 0.0
        %1500 = vmatpush.msra.mxu0 0.0
        %1501 = vmatpush.msra.mxu0 0.0
        %1502 = vmatpush.msra.mxu0 0.0
        %1503 = vmatpush.msra.mxu0 0.0
        %1504 = vmatpush.msra.mxu0 0.0
        %1505 = vmatpush.msra.mxu0 0.0
        %1506 = vmatpush.msra.mxu0 0.0
        %1507 = vmatpush.msra.mxu0 %v1490
        %1508 = vmatmul.f32.gmra.mxu0 %v1488
        %v1509 = vpop.f32.mrf.mxu0
        %v1510 = vadd.f32 0.0, %v1509
        %1511 = vdwg.mxu0
        %v1512 = vadd.f32 %v1482, %v1510
        %s1513 = scalar_lea.vmem %s17, 28
        %v1514 = vld [vmem:[%s1513] sm:$0xf]
        %1515 = vrot.lane.b32.xlu0 %v1304, 115
        %v1516 = vpop.permute.xlu0 %1515
        %v1518 = vsel %vm1311, %v1514, 0
        %v1520 = vsel %vm1315, %v1516, 0
        %1522 = vmatpush.msra.mxu0 0.0
        %1523 = vmatpush.msra.mxu0 0.0
        %1524 = vmatpush.msra.mxu0 0.0
        %1525 = vmatpush.msra.mxu0 0.0
        %1526 = vmatpush.msra.mxu0 0.0
        %1527 = vmatpush.msra.mxu0 0.0
        %1528 = vmatpush.msra.mxu0 0.0
        %1529 = vmatpush.msra.mxu0 0.0
        %1530 = vmatpush.msra.mxu0 0.0
        %1531 = vmatpush.msra.mxu0 0.0
        %1532 = vmatpush.msra.mxu0 0.0
        %1533 = vmatpush.msra.mxu0 0.0
        %1534 = vmatpush.msra.mxu0 0.0
        %1535 = vmatpush.msra.mxu0 0.0
        %1536 = vmatpush.msra.mxu0 0.0
        %1537 = vmatpush.msra.mxu0 %v1520
        %1538 = vmatmul.f32.gmra.mxu0 %v1518
        %v1539 = vpop.f32.mrf.mxu0
        %v1540 = vadd.f32 0.0, %v1539
        %1541 = vdwg.mxu0
        %v1542 = vadd.f32 %v1512, %v1540
        %s1543 = scalar_lea.vmem %s17, 32
        %v1544 = vld [vmem:[%s1543] sm:$0xf]
        %1545 = vrot.lane.b32.xlu0 %v1304, 114
        %v1546 = vpop.permute.xlu0 %1545
        %v1548 = vsel %vm1311, %v1544, 0
        %v1550 = vsel %vm1315, %v1546, 0
        %1552 = vmatpush.msra.mxu0 0.0
        %1553 = vmatpush.msra.mxu0 0.0
        %1554 = vmatpush.msra.mxu0 0.0
        %1555 = vmatpush.msra.mxu0 0.0
        %1556 = vmatpush.msra.mxu0 0.0
        %1557 = vmatpush.msra.mxu0 0.0
        %1558 = vmatpush.msra.mxu0 0.0
        %1559 = vmatpush.msra.mxu0 0.0
        %1560 = vmatpush.msra.mxu0 0.0
        %1561 = vmatpush.msra.mxu0 0.0
        %1562 = vmatpush.msra.mxu0 0.0
        %1563 = vmatpush.msra.mxu0 0.0
        %1564 = vmatpush.msra.mxu0 0.0
        %1565 = vmatpush.msra.mxu0 0.0
        %1566 = vmatpush.msra.mxu0 0.0
        %1567 = vmatpush.msra.mxu0 %v1550
        %1568 = vmatmul.f32.gmra.mxu0 %v1548
        %v1569 = vpop.f32.mrf.mxu0
        %v1570 = vadd.f32 0.0, %v1569
        %1571 = vdwg.mxu0
        %v1572 = vadd.f32 %v1542, %v1570
        %v1573 = vld [vmem:[%s19] sm:$0xf]
        %1575 = vset.pattern.permute.xlu0 0
        %1576 = vperm.xlu0 %1575, %v1573
        %v1577 = vpop.permute.xlu0 %1576
        %v1579 = vadd.f32 %v1572, %v1577
        %v1580 = vmul.f32 %v1579, %v1293
        %vm1581 = vcmp.ge.f32.partialorder %v1580, 0.0
        %v1582 = vmul.f32 %v1580, 0.2
        %v1583 = vsel %vm1581, %v1580, %v1582
        %1585 = vrot.lane.b32.xlu0 %v1583, 7
        %v1586 = vpop.permute.xlu0 %1585
        %v1588 = vsel %vm1021, 0.0, %v1586
        %v1589 = vsel %vm1023, %v1588, 0.0
        %v1590 = vld [vmem:[%s21] sm:$0xf]
        %s1591 = scalar_lea.vmem %s21, 4
        %v1592 = vld [vmem:[%s1591] sm:$0xf]
        %1594 = vrot.lane.b32.xlu0 %v1589, 127
        %v1595 = vpop.permute.xlu0 %1594
        %v1597 = vsel %vm1311, %v1592, 0
        %v1599 = vsel %vm1315, %v1595, 0
        %1601 = vmatpush.msra.mxu0 0.0
        %1602 = vmatpush.msra.mxu0 0.0
        %1603 = vmatpush.msra.mxu0 0.0
        %1604 = vmatpush.msra.mxu0 0.0
        %1605 = vmatpush.msra.mxu0 0.0
        %1606 = vmatpush.msra.mxu0 0.0
        %1607 = vmatpush.msra.mxu0 0.0
        %1608 = vmatpush.msra.mxu0 0.0
        %1609 = vmatpush.msra.mxu0 0.0
        %1610 = vmatpush.msra.mxu0 0.0
        %1611 = vmatpush.msra.mxu0 0.0
        %1612 = vmatpush.msra.mxu0 0.0
        %1613 = vmatpush.msra.mxu0 0.0
        %1614 = vmatpush.msra.mxu0 0.0
        %1615 = vmatpush.msra.mxu0 0.0
        %1616 = vmatpush.msra.mxu0 %v1599
        %1617 = vmatmul.f32.gmra.mxu0 %v1597
        %v1618 = vpop.f32.mrf.mxu0
        %v1619 = vadd.f32 0.0, %v1618
        %1620 = vdwg.mxu0
        %v1622 = vsel %vm1311, %v1590, 0
        %v1624 = vsel %vm1315, %v1589, 0
        %1626 = vmatpush.msra.mxu0 0.0
        %1627 = vmatpush.msra.mxu0 0.0
        %1628 = vmatpush.msra.mxu0 0.0
        %1629 = vmatpush.msra.mxu0 0.0
        %1630 = vmatpush.msra.mxu0 0.0
        %1631 = vmatpush.msra.mxu0 0.0
        %1632 = vmatpush.msra.mxu0 0.0
        %1633 = vmatpush.msra.mxu0 0.0
        %1634 = vmatpush.msra.mxu0 0.0
        %1635 = vmatpush.msra.mxu0 0.0
        %1636 = vmatpush.msra.mxu0 0.0
        %1637 = vmatpush.msra.mxu0 0.0
        %1638 = vmatpush.msra.mxu0 0.0
        %1639 = vmatpush.msra.mxu0 0.0
        %1640 = vmatpush.msra.mxu0 0.0
        %1641 = vmatpush.msra.mxu0 %v1624
        %1642 = vmatmul.f32.gmra.mxu0 %v1622
        %v1643 = vpop.f32.mrf.mxu0
        %v1644 = vadd.f32 %v1619, %v1643
        %1645 = vdwg.mxu0
        %s1646 = scalar_lea.vmem %s21, 8
        %v1647 = vld [vmem:[%s1646] sm:$0xf]
        %1648 = vrot.lane.b32.xlu0 %v1589, 126
        %v1649 = vpop.permute.xlu0 %1648
        %v1651 = vsel %vm1311, %v1647, 0
        %v1653 = vsel %vm1315, %v1649, 0
        %1655 = vmatpush.msra.mxu0 0.0
        %1656 = vmatpush.msra.mxu0 0.0
        %1657 = vmatpush.msra.mxu0 0.0
        %1658 = vmatpush.msra.mxu0 0.0
        %1659 = vmatpush.msra.mxu0 0.0
        %1660 = vmatpush.msra.mxu0 0.0
        %1661 = vmatpush.msra.mxu0 0.0
        %1662 = vmatpush.msra.mxu0 0.0
        %1663 = vmatpush.msra.mxu0 0.0
        %1664 = vmatpush.msra.mxu0 0.0
        %1665 = vmatpush.msra.mxu0 0.0
        %1666 = vmatpush.msra.mxu0 0.0
        %1667 = vmatpush.msra.mxu0 0.0
        %1668 = vmatpush.msra.mxu0 0.0
        %1669 = vmatpush.msra.mxu0 0.0
        %1670 = vmatpush.msra.mxu0 %v1653
        %1671 = vmatmul.f32.gmra.mxu0 %v1651
        %v1672 = vpop.f32.mrf.mxu0
        %v1673 = vadd.f32 0.0, %v1672
        %1674 = vdwg.mxu0
        %v1675 = vadd.f32 %v1644, %v1673
        %s1676 = scalar_lea.vmem %s21, 12
        %v1677 = vld [vmem:[%s1676] sm:$0xf]
        %1678 = vrot.lane.b32.xlu0 %v1589, 122
        %v1679 = vpop.permute.xlu0 %1678
        %v1681 = vsel %vm1311, %v1677, 0
        %v1683 = vsel %vm1315, %v1679, 0
        %1685 = vmatpush.msra.mxu0 0.0
        %1686 = vmatpush.msra.mxu0 0.0
        %1687 = vmatpush.msra.mxu0 0.0
        %1688 = vmatpush.msra.mxu0 0.0
        %1689 = vmatpush.msra.mxu0 0.0
        %1690 = vmatpush.msra.mxu0 0.0
        %1691 = vmatpush.msra.mxu0 0.0
        %1692 = vmatpush.msra.mxu0 0.0
        %1693 = vmatpush.msra.mxu0 0.0
        %1694 = vmatpush.msra.mxu0 0.0
        %1695 = vmatpush.msra.mxu0 0.0
        %1696 = vmatpush.msra.mxu0 0.0
        %1697 = vmatpush.msra.mxu0 0.0
        %1698 = vmatpush.msra.mxu0 0.0
        %1699 = vmatpush.msra.mxu0 0.0
        %1700 = vmatpush.msra.mxu0 %v1683
        %1701 = vmatmul.f32.gmra.mxu0 %v1681
        %v1702 = vpop.f32.mrf.mxu0
        %v1703 = vadd.f32 0.0, %v1702
        %1704 = vdwg.mxu0
        %v1705 = vadd.f32 %v1675, %v1703
        %s1706 = scalar_lea.vmem %s21, 16
        %v1707 = vld [vmem:[%s1706] sm:$0xf]
        %1708 = vrot.lane.b32.xlu0 %v1589, 121
        %v1709 = vpop.permute.xlu0 %1708
        %v1711 = vsel %vm1311, %v1707, 0
        %v1713 = vsel %vm1315, %v1709, 0
        %1715 = vmatpush.msra.mxu0 0.0
        %1716 = vmatpush.msra.mxu0 0.0
        %1717 = vmatpush.msra.mxu0 0.0
        %1718 = vmatpush.msra.mxu0 0.0
        %1719 = vmatpush.msra.mxu0 0.0
        %1720 = vmatpush.msra.mxu0 0.0
        %1721 = vmatpush.msra.mxu0 0.0
        %1722 = vmatpush.msra.mxu0 0.0
        %1723 = vmatpush.msra.mxu0 0.0
        %1724 = vmatpush.msra.mxu0 0.0
        %1725 = vmatpush.msra.mxu0 0.0
        %1726 = vmatpush.msra.mxu0 0.0
        %1727 = vmatpush.msra.mxu0 0.0
        %1728 = vmatpush.msra.mxu0 0.0
        %1729 = vmatpush.msra.mxu0 0.0
        %1730 = vmatpush.msra.mxu0 %v1713
        %1731 = vmatmul.f32.gmra.mxu0 %v1711
        %v1732 = vpop.f32.mrf.mxu0
        %v1733 = vadd.f32 0.0, %v1732
        %1734 = vdwg.mxu0
        %v1735 = vadd.f32 %v1705, %v1733
        %s1736 = scalar_lea.vmem %s21, 20
        %v1737 = vld [vmem:[%s1736] sm:$0xf]
        %1738 = vrot.lane.b32.xlu0 %v1589, 120
        %v1739 = vpop.permute.xlu0 %1738
        %v1741 = vsel %vm1311, %v1737, 0
        %v1743 = vsel %vm1315, %v1739, 0
        %1745 = vmatpush.msra.mxu0 0.0
        %1746 = vmatpush.msra.mxu0 0.0
        %1747 = vmatpush.msra.mxu0 0.0
        %1748 = vmatpush.msra.mxu0 0.0
        %1749 = vmatpush.msra.mxu0 0.0
        %1750 = vmatpush.msra.mxu0 0.0
        %1751 = vmatpush.msra.mxu0 0.0
        %1752 = vmatpush.msra.mxu0 0.0
        %1753 = vmatpush.msra.mxu0 0.0
        %1754 = vmatpush.msra.mxu0 0.0
        %1755 = vmatpush.msra.mxu0 0.0
        %1756 = vmatpush.msra.mxu0 0.0
        %1757 = vmatpush.msra.mxu0 0.0
        %1758 = vmatpush.msra.mxu0 0.0
        %1759 = vmatpush.msra.mxu0 0.0
        %1760 = vmatpush.msra.mxu0 %v1743
        %1761 = vmatmul.f32.gmra.mxu0 %v1741
        %v1762 = vpop.f32.mrf.mxu0
        %v1763 = vadd.f32 0.0, %v1762
        %1764 = vdwg.mxu0
        %v1765 = vadd.f32 %v1735, %v1763
        %s1766 = scalar_lea.vmem %s21, 24
        %v1767 = vld [vmem:[%s1766] sm:$0xf]
        %1768 = vrot.lane.b32.xlu0 %v1589, 116
        %v1769 = vpop.permute.xlu0 %1768
        %v1771 = vsel %vm1311, %v1767, 0
        %v1773 = vsel %vm1315, %v1769, 0
        %1775 = vmatpush.msra.mxu0 0.0
        %1776 = vmatpush.msra.mxu0 0.0
        %1777 = vmatpush.msra.mxu0 0.0
        %1778 = vmatpush.msra.mxu0 0.0
        %1779 = vmatpush.msra.mxu0 0.0
        %1780 = vmatpush.msra.mxu0 0.0
        %1781 = vmatpush.msra.mxu0 0.0
        %1782 = vmatpush.msra.mxu0 0.0
        %1783 = vmatpush.msra.mxu0 0.0
        %1784 = vmatpush.msra.mxu0 0.0
        %1785 = vmatpush.msra.mxu0 0.0
        %1786 = vmatpush.msra.mxu0 0.0
        %1787 = vmatpush.msra.mxu0 0.0
        %1788 = vmatpush.msra.mxu0 0.0
        %1789 = vmatpush.msra.mxu0 0.0
        %1790 = vmatpush.msra.mxu0 %v1773
        %1791 = vmatmul.f32.gmra.mxu0 %v1771
        %v1792 = vpop.f32.mrf.mxu0
        %v1793 = vadd.f32 0.0, %v1792
        %1794 = vdwg.mxu0
        %v1795 = vadd.f32 %v1765, %v1793
        %s1796 = scalar_lea.vmem %s21, 28
        %v1797 = vld [vmem:[%s1796] sm:$0xf]
        %1798 = vrot.lane.b32.xlu0 %v1589, 115
        %v1799 = vpop.permute.xlu0 %1798
        %v1801 = vsel %vm1311, %v1797, 0
        %v1803 = vsel %vm1315, %v1799, 0
        %1805 = vmatpush.msra.mxu0 0.0
        %1806 = vmatpush.msra.mxu0 0.0
        %1807 = vmatpush.msra.mxu0 0.0
        %1808 = vmatpush.msra.mxu0 0.0
        %1809 = vmatpush.msra.mxu0 0.0
        %1810 = vmatpush.msra.mxu0 0.0
        %1811 = vmatpush.msra.mxu0 0.0
        %1812 = vmatpush.msra.mxu0 0.0
        %1813 = vmatpush.msra.mxu0 0.0
        %1814 = vmatpush.msra.mxu0 0.0
        %1815 = vmatpush.msra.mxu0 0.0
        %1816 = vmatpush.msra.mxu0 0.0
        %1817 = vmatpush.msra.mxu0 0.0
        %1818 = vmatpush.msra.mxu0 0.0
        %1819 = vmatpush.msra.mxu0 0.0
        %1820 = vmatpush.msra.mxu0 %v1803
        %1821 = vmatmul.f32.gmra.mxu0 %v1801
        %v1822 = vpop.f32.mrf.mxu0
        %v1823 = vadd.f32 0.0, %v1822
        %1824 = vdwg.mxu0
        %v1825 = vadd.f32 %v1795, %v1823
        %s1826 = scalar_lea.vmem %s21, 32
        %v1827 = vld [vmem:[%s1826] sm:$0xf]
        %1828 = vrot.lane.b32.xlu0 %v1589, 114
        %v1829 = vpop.permute.xlu0 %1828
        %v1831 = vsel %vm1311, %v1827, 0
        %v1833 = vsel %vm1315, %v1829, 0
        %1835 = vmatpush.msra.mxu0 0.0
        %1836 = vmatpush.msra.mxu0 0.0
        %1837 = vmatpush.msra.mxu0 0.0
        %1838 = vmatpush.msra.mxu0 0.0
        %1839 = vmatpush.msra.mxu0 0.0
        %1840 = vmatpush.msra.mxu0 0.0
        %1841 = vmatpush.msra.mxu0 0.0
        %1842 = vmatpush.msra.mxu0 0.0
        %1843 = vmatpush.msra.mxu0 0.0
        %1844 = vmatpush.msra.mxu0 0.0
        %1845 = vmatpush.msra.mxu0 0.0
        %1846 = vmatpush.msra.mxu0 0.0
        %1847 = vmatpush.msra.mxu0 0.0
        %1848 = vmatpush.msra.mxu0 0.0
        %1849 = vmatpush.msra.mxu0 0.0
        %1850 = vmatpush.msra.mxu0 %v1833
        %1851 = vmatmul.f32.gmra.mxu0 %v1831
        %v1852 = vpop.f32.mrf.mxu0
        %v1853 = vadd.f32 0.0, %v1852
        %1854 = vdwg.mxu0
        %v1855 = vadd.f32 %v1825, %v1853
        %v1856 = vld [vmem:[%s23] sm:$0xf]
        %1858 = vset.pattern.permute.xlu0 0
        %1859 = vperm.xlu0 %1858, %v1856
        %v1860 = vpop.permute.xlu0 %1859
        %v1862 = vadd.f32 %v1855, %v1860
        %v1863 = vmul.f32 %v1862, %v1293
        %v1864 = vadd.f32 %v1295, %v1863
        %v1865 = vmul.f32 %v1864, 0.70710677
        %v1866 = vld [vmem:[%s25] sm:$0xff]
        %v1867 = vld [vmem:[%s25 + $0x8] sm:$0xff]
        %v1868 = vld [vmem:[%s25 + $0x10] sm:$0xff]
        %v1869 = vld [vmem:[%s25 + $0x18] sm:$0xff]
        %v1870 = vld [vmem:[%s25 + $0x20] sm:$0xf]
        %vm1871 = vcmask 293888
        %v1873 = vsel %vm1871, %v1865, 0
        %v1876 = vsel %vm1315, %v1870, 0
        %1878 = vmatpush.msra.mxu0 0.0
        %1879 = vmatpush.msra.mxu0 0.0
        %1880 = vmatpush.msra.mxu0 0.0
        %1881 = vmatpush.msra.mxu0 0.0
        %1882 = vmatpush.msra.mxu0 0.0
        %1883 = vmatpush.msra.mxu0 0.0
        %1884 = vmatpush.msra.mxu0 0.0
        %1885 = vmatpush.msra.mxu0 0.0
        %1886 = vmatpush.msra.mxu0 0.0
        %1887 = vmatpush.msra.mxu0 0.0
        %1888 = vmatpush.msra.mxu0 0.0
        %1889 = vmatpush.msra.mxu0 %v1876
        %1890 = vmatpush.msra.mxu0 %v1869
        %1891 = vmatpush.msra.mxu0 %v1868
        %1892 = vmatpush.msra.mxu0 %v1867
        %1893 = vmatpush.msra.mxu0 %v1866
        %1894 = vmatmul.f32.gmra.mxu0 %v1873
        %v1895 = vpop.f32.mrf.mxu0
        %v1896 = vadd.f32 0.0, %v1895
        %1897 = vdwg.mxu0
        %1899 = vrot.lane.b32.xlu0 %v1896, 9
        %v1900 = vpop.permute.xlu0 %1899
        %vm1902 = vcmask 72704
        %v1903 = vsel %vm1902, 0.0, %v1900
        %vm1904 = vcmask 596992
        %v1905 = vsel %vm1904, %v1903, 0.0
        %1907 = vrot.lane.b32.xlu0 %v1011, 9
        %v1908 = vpop.permute.xlu0 %1907
        %v1910 = vsel %vm1902, 0.0, %v1908
        %v1911 = vsel %vm1904, %v1910, 0.0
        %v1912 = vld [vmem:[%s27] sm:$0xf]
        %v1913 = vld [vmem:[%s29] sm:$0xf]
        %v1915 = vsel %vm1032, %v1913, 0
        %1917 = vmatpush.msra.mxu0 0.0
        %1918 = vmatpush.msra.mxu0 0.0
        %1919 = vmatpush.msra.mxu0 0.0
        %1920 = vmatpush.msra.mxu0 0.0
        %1921 = vmatpush.msra.mxu0 0.0
        %1922 = vmatpush.msra.mxu0 0.0
        %1923 = vmatpush.msra.mxu0 0.0
        %1924 = vmatpush.msra.mxu0 0.0
        %1925 = vmatpush.msra.mxu0 0.0
        %1926 = vmatpush.msra.mxu0 0.0
        %1927 = vmatpush.msra.mxu0 0.0
        %1928 = vmatpush.msra.mxu0 0.0
        %1929 = vmatpush.msra.mxu0 0.0
        %1930 = vmatpush.msra.mxu0 0.0
        %1931 = vmatpush.msra.mxu0 0.0
        %1932 = vmatpush.msra.mxu0 %v1911
        %1933 = vmatmul.f32.gmra.mxu0 %v1915
        %v1934 = vpop.f32.mrf.mxu0
        %v1935 = vadd.f32 0.0, %v1934
        %1936 = vdwg.mxu0
        %v1938 = vsel %vm1311, %v1912, 0
        %v1941 = vsel %vm1315, %v1905, 0
        %1943 = vmatpush.msra.mxu0 0.0
        %1944 = vmatpush.msra.mxu0 0.0
        %1945 = vmatpush.msra.mxu0 0.0
        %1946 = vmatpush.msra.mxu0 0.0
        %1947 = vmatpush.msra.mxu0 0.0
        %1948 = vmatpush.msra.mxu0 0.0
        %1949 = vmatpush.msra.mxu0 0.0
        %1950 = vmatpush.msra.mxu0 0.0
        %1951 = vmatpush.msra.mxu0 0.0
        %1952 = vmatpush.msra.mxu0 0.0
        %1953 = vmatpush.msra.mxu0 0.0
        %1954 = vmatpush.msra.mxu0 0.0
        %1955 = vmatpush.msra.mxu0 0.0
        %1956 = vmatpush.msra.mxu0 0.0
        %1957 = vmatpush.msra.mxu0 0.0
        %1958 = vmatpush.msra.mxu0 %v1941
        %1959 = vmatmul.f32.gmra.mxu0 %v1938
        %v1960 = vpop.f32.mrf.mxu0
        %v1961 = vadd.f32 %v1935, %v1960
        %1962 = vdwg.mxu0
        %s1963 = scalar_lea.vmem %s27, 4
        %v1964 = vld [vmem:[%s1963] sm:$0xf]
        %1965 = vrot.lane.b32.xlu0 %v1905, 127
        %v1966 = vpop.permute.xlu0 %1965
        %v1968 = vsel %vm1311, %v1964, 0
        %v1970 = vsel %vm1315, %v1966, 0
        %1972 = vmatpush.msra.mxu0 0.0
        %1973 = vmatpush.msra.mxu0 0.0
        %1974 = vmatpush.msra.mxu0 0.0
        %1975 = vmatpush.msra.mxu0 0.0
        %1976 = vmatpush.msra.mxu0 0.0
        %1977 = vmatpush.msra.mxu0 0.0
        %1978 = vmatpush.msra.mxu0 0.0
        %1979 = vmatpush.msra.mxu0 0.0
        %1980 = vmatpush.msra.mxu0 0.0
        %1981 = vmatpush.msra.mxu0 0.0
        %1982 = vmatpush.msra.mxu0 0.0
        %1983 = vmatpush.msra.mxu0 0.0
        %1984 = vmatpush.msra.mxu0 0.0
        %1985 = vmatpush.msra.mxu0 0.0
        %1986 = vmatpush.msra.mxu0 0.0
        %1987 = vmatpush.msra.mxu0 %v1970
        %1988 = vmatmul.f32.gmra.mxu0 %v1968
        %v1989 = vpop.f32.mrf.mxu0
        %v1990 = vadd.f32 0.0, %v1989
        %1991 = vdwg.mxu0
        %v1992 = vadd.f32 %v1961, %v1990
        %s1993 = scalar_lea.vmem %s29, 4
        %v1994 = vld [vmem:[%s1993] sm:$0xf]
        %1996 = vrot.lane.b32.xlu0 %v1911, 127
        %v1997 = vpop.permute.xlu0 %1996
        %v2000 = vsel %vm1032, %v1994, 0
        %2002 = vmatpush.msra.mxu0 0.0
        %2003 = vmatpush.msra.mxu0 0.0
        %2004 = vmatpush.msra.mxu0 0.0
        %2005 = vmatpush.msra.mxu0 0.0
        %2006 = vmatpush.msra.mxu0 0.0
        %2007 = vmatpush.msra.mxu0 0.0
        %2008 = vmatpush.msra.mxu0 0.0
        %2009 = vmatpush.msra.mxu0 0.0
        %2010 = vmatpush.msra.mxu0 0.0
        %2011 = vmatpush.msra.mxu0 0.0
        %2012 = vmatpush.msra.mxu0 0.0
        %2013 = vmatpush.msra.mxu0 0.0
        %2014 = vmatpush.msra.mxu0 0.0
        %2015 = vmatpush.msra.mxu0 0.0
        %2016 = vmatpush.msra.mxu0 0.0
        %2017 = vmatpush.msra.mxu0 %v1997
        %2018 = vmatmul.f32.gmra.mxu0 %v2000
        %v2019 = vpop.f32.mrf.mxu0
        %v2020 = vadd.f32 0.0, %v2019
        %2021 = vdwg.mxu0
        %v2022 = vadd.f32 %v1992, %v2020
        %s2023 = scalar_lea.vmem %s27, 8
        %v2024 = vld [vmem:[%s2023] sm:$0xf]
        %2025 = vrot.lane.b32.xlu0 %v1905, 126
        %v2026 = vpop.permute.xlu0 %2025
        %v2028 = vsel %vm1311, %v2024, 0
        %v2030 = vsel %vm1315, %v2026, 0
        %2032 = vmatpush.msra.mxu0 0.0
        %2033 = vmatpush.msra.mxu0 0.0
        %2034 = vmatpush.msra.mxu0 0.0
        %2035 = vmatpush.msra.mxu0 0.0
        %2036 = vmatpush.msra.mxu0 0.0
        %2037 = vmatpush.msra.mxu0 0.0
        %2038 = vmatpush.msra.mxu0 0.0
        %2039 = vmatpush.msra.mxu0 0.0
        %2040 = vmatpush.msra.mxu0 0.0
        %2041 = vmatpush.msra.mxu0 0.0
        %2042 = vmatpush.msra.mxu0 0.0
        %2043 = vmatpush.msra.mxu0 0.0
        %2044 = vmatpush.msra.mxu0 0.0
        %2045 = vmatpush.msra.mxu0 0.0
        %2046 = vmatpush.msra.mxu0 0.0
        %2047 = vmatpush.msra.mxu0 %v2030
        %2048 = vmatmul.f32.gmra.mxu0 %v2028
        %v2049 = vpop.f32.mrf.mxu0
        %v2050 = vadd.f32 0.0, %v2049
        %2051 = vdwg.mxu0
        %v2052 = vadd.f32 %v2022, %v2050
        %s2053 = scalar_lea.vmem %s29, 8
        %v2054 = vld [vmem:[%s2053] sm:$0xf]
        %2055 = vrot.lane.b32.xlu0 %v1911, 126
        %v2056 = vpop.permute.xlu0 %2055
        %v2059 = vsel %vm1032, %v2054, 0
        %2061 = vmatpush.msra.mxu0 0.0
        %2062 = vmatpush.msra.mxu0 0.0
        %2063 = vmatpush.msra.mxu0 0.0
        %2064 = vmatpush.msra.mxu0 0.0
        %2065 = vmatpush.msra.mxu0 0.0
        %2066 = vmatpush.msra.mxu0 0.0
        %2067 = vmatpush.msra.mxu0 0.0
        %2068 = vmatpush.msra.mxu0 0.0
        %2069 = vmatpush.msra.mxu0 0.0
        %2070 = vmatpush.msra.mxu0 0.0
        %2071 = vmatpush.msra.mxu0 0.0
        %2072 = vmatpush.msra.mxu0 0.0
        %2073 = vmatpush.msra.mxu0 0.0
        %2074 = vmatpush.msra.mxu0 0.0
        %2075 = vmatpush.msra.mxu0 0.0
        %2076 = vmatpush.msra.mxu0 %v2056
        %2077 = vmatmul.f32.gmra.mxu0 %v2059
        %v2078 = vpop.f32.mrf.mxu0
        %v2079 = vadd.f32 0.0, %v2078
        %2080 = vdwg.mxu0
        %v2081 = vadd.f32 %v2052, %v2079
        %s2082 = scalar_lea.vmem %s27, 12
        %v2083 = vld [vmem:[%s2082] sm:$0xf]
        %2084 = vrot.lane.b32.xlu0 %v1905, 120
        %v2085 = vpop.permute.xlu0 %2084
        %v2087 = vsel %vm1311, %v2083, 0
        %v2089 = vsel %vm1315, %v2085, 0
        %2091 = vmatpush.msra.mxu0 0.0
        %2092 = vmatpush.msra.mxu0 0.0
        %2093 = vmatpush.msra.mxu0 0.0
        %2094 = vmatpush.msra.mxu0 0.0
        %2095 = vmatpush.msra.mxu0 0.0
        %2096 = vmatpush.msra.mxu0 0.0
        %2097 = vmatpush.msra.mxu0 0.0
        %2098 = vmatpush.msra.mxu0 0.0
        %2099 = vmatpush.msra.mxu0 0.0
        %2100 = vmatpush.msra.mxu0 0.0
        %2101 = vmatpush.msra.mxu0 0.0
        %2102 = vmatpush.msra.mxu0 0.0
        %2103 = vmatpush.msra.mxu0 0.0
        %2104 = vmatpush.msra.mxu0 0.0
        %2105 = vmatpush.msra.mxu0 0.0
        %2106 = vmatpush.msra.mxu0 %v2089
        %2107 = vmatmul.f32.gmra.mxu0 %v2087
        %v2108 = vpop.f32.mrf.mxu0
        %v2109 = vadd.f32 0.0, %v2108
        %2110 = vdwg.mxu0
        %v2111 = vadd.f32 %v2081, %v2109
        %s2112 = scalar_lea.vmem %s29, 12
        %v2113 = vld [vmem:[%s2112] sm:$0xf]
        %2114 = vrot.lane.b32.xlu0 %v1911, 120
        %v2115 = vpop.permute.xlu0 %2114
        %v2118 = vsel %vm1032, %v2113, 0
        %2120 = vmatpush.msra.mxu0 0.0
        %2121 = vmatpush.msra.mxu0 0.0
        %2122 = vmatpush.msra.mxu0 0.0
        %2123 = vmatpush.msra.mxu0 0.0
        %2124 = vmatpush.msra.mxu0 0.0
        %2125 = vmatpush.msra.mxu0 0.0
        %2126 = vmatpush.msra.mxu0 0.0
        %2127 = vmatpush.msra.mxu0 0.0
        %2128 = vmatpush.msra.mxu0 0.0
        %2129 = vmatpush.msra.mxu0 0.0
        %2130 = vmatpush.msra.mxu0 0.0
        %2131 = vmatpush.msra.mxu0 0.0
        %2132 = vmatpush.msra.mxu0 0.0
        %2133 = vmatpush.msra.mxu0 0.0
        %2134 = vmatpush.msra.mxu0 0.0
        %2135 = vmatpush.msra.mxu0 %v2115
        %2136 = vmatmul.f32.gmra.mxu0 %v2118
        %v2137 = vpop.f32.mrf.mxu0
        %v2138 = vadd.f32 0.0, %v2137
        %2139 = vdwg.mxu0
        %v2140 = vadd.f32 %v2111, %v2138
        %s2141 = scalar_lea.vmem %s27, 16
        %v2142 = vld [vmem:[%s2141] sm:$0xf]
        %2143 = vrot.lane.b32.xlu0 %v1905, 119
        %v2144 = vpop.permute.xlu0 %2143
        %v2146 = vsel %vm1311, %v2142, 0
        %v2148 = vsel %vm1315, %v2144, 0
        %2150 = vmatpush.msra.mxu0 0.0
        %2151 = vmatpush.msra.mxu0 0.0
        %2152 = vmatpush.msra.mxu0 0.0
        %2153 = vmatpush.msra.mxu0 0.0
        %2154 = vmatpush.msra.mxu0 0.0
        %2155 = vmatpush.msra.mxu0 0.0
        %2156 = vmatpush.msra.mxu0 0.0
        %2157 = vmatpush.msra.mxu0 0.0
        %2158 = vmatpush.msra.mxu0 0.0
        %2159 = vmatpush.msra.mxu0 0.0
        %2160 = vmatpush.msra.mxu0 0.0
        %2161 = vmatpush.msra.mxu0 0.0
        %2162 = vmatpush.msra.mxu0 0.0
        %2163 = vmatpush.msra.mxu0 0.0
        %2164 = vmatpush.msra.mxu0 0.0
        %2165 = vmatpush.msra.mxu0 %v2148
        %2166 = vmatmul.f32.gmra.mxu0 %v2146
        %v2167 = vpop.f32.mrf.mxu0
        %v2168 = vadd.f32 0.0, %v2167
        %2169 = vdwg.mxu0
        %v2170 = vadd.f32 %v2140, %v2168
        %s2171 = scalar_lea.vmem %s29, 16
        %v2172 = vld [vmem:[%s2171] sm:$0xf]
        %2173 = vrot.lane.b32.xlu0 %v1911, 119
        %v2174 = vpop.permute.xlu0 %2173
        %v2177 = vsel %vm1032, %v2172, 0
        %2179 = vmatpush.msra.mxu0 0.0
        %2180 = vmatpush.msra.mxu0 0.0
        %2181 = vmatpush.msra.mxu0 0.0
        %2182 = vmatpush.msra.mxu0 0.0
        %2183 = vmatpush.msra.mxu0 0.0
        %2184 = vmatpush.msra.mxu0 0.0
        %2185 = vmatpush.msra.mxu0 0.0
        %2186 = vmatpush.msra.mxu0 0.0
        %2187 = vmatpush.msra.mxu0 0.0
        %2188 = vmatpush.msra.mxu0 0.0
        %2189 = vmatpush.msra.mxu0 0.0
        %2190 = vmatpush.msra.mxu0 0.0
        %2191 = vmatpush.msra.mxu0 0.0
        %2192 = vmatpush.msra.mxu0 0.0
        %2193 = vmatpush.msra.mxu0 0.0
        %2194 = vmatpush.msra.mxu0 %v2174
        %2195 = vmatmul.f32.gmra.mxu0 %v2177
        %v2196 = vpop.f32.mrf.mxu0
        %v2197 = vadd.f32 0.0, %v2196
        %2198 = vdwg.mxu0
        %v2199 = vadd.f32 %v2170, %v2197
        %s2200 = scalar_lea.vmem %s27, 20
        %v2201 = vld [vmem:[%s2200] sm:$0xf]
        %2202 = vrot.lane.b32.xlu0 %v1905, 118
        %v2203 = vpop.permute.xlu0 %2202
        %v2205 = vsel %vm1311, %v2201, 0
        %v2207 = vsel %vm1315, %v2203, 0
        %2209 = vmatpush.msra.mxu0 0.0
        %2210 = vmatpush.msra.mxu0 0.0
        %2211 = vmatpush.msra.mxu0 0.0
        %2212 = vmatpush.msra.mxu0 0.0
        %2213 = vmatpush.msra.mxu0 0.0
        %2214 = vmatpush.msra.mxu0 0.0
        %2215 = vmatpush.msra.mxu0 0.0
        %2216 = vmatpush.msra.mxu0 0.0
        %2217 = vmatpush.msra.mxu0 0.0
        %2218 = vmatpush.msra.mxu0 0.0
        %2219 = vmatpush.msra.mxu0 0.0
        %2220 = vmatpush.msra.mxu0 0.0
        %2221 = vmatpush.msra.mxu0 0.0
        %2222 = vmatpush.msra.mxu0 0.0
        %2223 = vmatpush.msra.mxu0 0.0
        %2224 = vmatpush.msra.mxu0 %v2207
        %2225 = vmatmul.f32.gmra.mxu0 %v2205
        %v2226 = vpop.f32.mrf.mxu0
        %v2227 = vadd.f32 0.0, %v2226
        %2228 = vdwg.mxu0
        %v2229 = vadd.f32 %v2199, %v2227
        %s2230 = scalar_lea.vmem %s29, 20
        %v2231 = vld [vmem:[%s2230] sm:$0xf]
        %2232 = vrot.lane.b32.xlu0 %v1911, 118
        %v2233 = vpop.permute.xlu0 %2232
        %v2236 = vsel %vm1032, %v2231, 0
        %2238 = vmatpush.msra.mxu0 0.0
        %2239 = vmatpush.msra.mxu0 0.0
        %2240 = vmatpush.msra.mxu0 0.0
        %2241 = vmatpush.msra.mxu0 0.0
        %2242 = vmatpush.msra.mxu0 0.0
        %2243 = vmatpush.msra.mxu0 0.0
        %2244 = vmatpush.msra.mxu0 0.0
        %2245 = vmatpush.msra.mxu0 0.0
        %2246 = vmatpush.msra.mxu0 0.0
        %2247 = vmatpush.msra.mxu0 0.0
        %2248 = vmatpush.msra.mxu0 0.0
        %2249 = vmatpush.msra.mxu0 0.0
        %2250 = vmatpush.msra.mxu0 0.0
        %2251 = vmatpush.msra.mxu0 0.0
        %2252 = vmatpush.msra.mxu0 0.0
        %2253 = vmatpush.msra.mxu0 %v2233
        %2254 = vmatmul.f32.gmra.mxu0 %v2236
        %v2255 = vpop.f32.mrf.mxu0
        %v2256 = vadd.f32 0.0, %v2255
        %2257 = vdwg.mxu0
        %v2258 = vadd.f32 %v2229, %v2256
        %s2259 = scalar_lea.vmem %s27, 24
        %v2260 = vld [vmem:[%s2259] sm:$0xf]
        %2261 = vrot.lane.b32.xlu0 %v1905, 112
        %v2262 = vpop.permute.xlu0 %2261
        %v2264 = vsel %vm1311, %v2260, 0
        %v2266 = vsel %vm1315, %v2262, 0
        %2268 = vmatpush.msra.mxu0 0.0
        %2269 = vmatpush.msra.mxu0 0.0
        %2270 = vmatpush.msra.mxu0 0.0
        %2271 = vmatpush.msra.mxu0 0.0
        %2272 = vmatpush.msra.mxu0 0.0
        %2273 = vmatpush.msra.mxu0 0.0
        %2274 = vmatpush.msra.mxu0 0.0
        %2275 = vmatpush.msra.mxu0 0.0
        %2276 = vmatpush.msra.mxu0 0.0
        %2277 = vmatpush.msra.mxu0 0.0
        %2278 = vmatpush.msra.mxu0 0.0
        %2279 = vmatpush.msra.mxu0 0.0
        %2280 = vmatpush.msra.mxu0 0.0
        %2281 = vmatpush.msra.mxu0 0.0
        %2282 = vmatpush.msra.mxu0 0.0
        %2283 = vmatpush.msra.mxu0 %v2266
        %2284 = vmatmul.f32.gmra.mxu0 %v2264
        %v2285 = vpop.f32.mrf.mxu0
        %v2286 = vadd.f32 0.0, %v2285
        %2287 = vdwg.mxu0
        %v2288 = vadd.f32 %v2258, %v2286
        %s2289 = scalar_lea.vmem %s29, 24
        %v2290 = vld [vmem:[%s2289] sm:$0xf]
        %2291 = vrot.lane.b32.xlu0 %v1911, 112
        %v2292 = vpop.permute.xlu0 %2291
        %v2295 = vsel %vm1032, %v2290, 0
        %2297 = vmatpush.msra.mxu0 0.0
        %2298 = vmatpush.msra.mxu0 0.0
        %2299 = vmatpush.msra.mxu0 0.0
        %2300 = vmatpush.msra.mxu0 0.0
        %2301 = vmatpush.msra.mxu0 0.0
        %2302 = vmatpush.msra.mxu0 0.0
        %2303 = vmatpush.msra.mxu0 0.0
        %2304 = vmatpush.msra.mxu0 0.0
        %2305 = vmatpush.msra.mxu0 0.0
        %2306 = vmatpush.msra.mxu0 0.0
        %2307 = vmatpush.msra.mxu0 0.0
        %2308 = vmatpush.msra.mxu0 0.0
        %2309 = vmatpush.msra.mxu0 0.0
        %2310 = vmatpush.msra.mxu0 0.0
        %2311 = vmatpush.msra.mxu0 0.0
        %2312 = vmatpush.msra.mxu0 %v2292
        %2313 = vmatmul.f32.gmra.mxu0 %v2295
        %v2314 = vpop.f32.mrf.mxu0
        %v2315 = vadd.f32 0.0, %v2314
        %2316 = vdwg.mxu0
        %v2317 = vadd.f32 %v2288, %v2315
        %s2318 = scalar_lea.vmem %s27, 28
        %v2319 = vld [vmem:[%s2318] sm:$0xf]
        %2320 = vrot.lane.b32.xlu0 %v1905, 111
        %v2321 = vpop.permute.xlu0 %2320
        %v2323 = vsel %vm1311, %v2319, 0
        %v2325 = vsel %vm1315, %v2321, 0
        %2327 = vmatpush.msra.mxu0 0.0
        %2328 = vmatpush.msra.mxu0 0.0
        %2329 = vmatpush.msra.mxu0 0.0
        %2330 = vmatpush.msra.mxu0 0.0
        %2331 = vmatpush.msra.mxu0 0.0
        %2332 = vmatpush.msra.mxu0 0.0
        %2333 = vmatpush.msra.mxu0 0.0
        %2334 = vmatpush.msra.mxu0 0.0
        %2335 = vmatpush.msra.mxu0 0.0
        %2336 = vmatpush.msra.mxu0 0.0
        %2337 = vmatpush.msra.mxu0 0.0
        %2338 = vmatpush.msra.mxu0 0.0
        %2339 = vmatpush.msra.mxu0 0.0
        %2340 = vmatpush.msra.mxu0 0.0
        %2341 = vmatpush.msra.mxu0 0.0
        %2342 = vmatpush.msra.mxu0 %v2325
        %2343 = vmatmul.f32.gmra.mxu0 %v2323
        %v2344 = vpop.f32.mrf.mxu0
        %v2345 = vadd.f32 0.0, %v2344
        %2346 = vdwg.mxu0
        %v2347 = vadd.f32 %v2317, %v2345
        %s2348 = scalar_lea.vmem %s29, 28
        %v2349 = vld [vmem:[%s2348] sm:$0xf]
        %2350 = vrot.lane.b32.xlu0 %v1911, 111
        %v2351 = vpop.permute.xlu0 %2350
        %v2354 = vsel %vm1032, %v2349, 0
        %2356 = vmatpush.msra.mxu0 0.0
        %2357 = vmatpush.msra.mxu0 0.0
        %2358 = vmatpush.msra.mxu0 0.0
        %2359 = vmatpush.msra.mxu0 0.0
        %2360 = vmatpush.msra.mxu0 0.0
        %2361 = vmatpush.msra.mxu0 0.0
        %2362 = vmatpush.msra.mxu0 0.0
        %2363 = vmatpush.msra.mxu0 0.0
        %2364 = vmatpush.msra.mxu0 0.0
        %2365 = vmatpush.msra.mxu0 0.0
        %2366 = vmatpush.msra.mxu0 0.0
        %2367 = vmatpush.msra.mxu0 0.0
        %2368 = vmatpush.msra.mxu0 0.0
        %2369 = vmatpush.msra.mxu0 0.0
        %2370 = vmatpush.msra.mxu0 0.0
        %2371 = vmatpush.msra.mxu0 %v2351
        %2372 = vmatmul.f32.gmra.mxu0 %v2354
        %v2373 = vpop.f32.mrf.mxu0
        %v2374 = vadd.f32 0.0, %v2373
        %2375 = vdwg.mxu0
        %v2376 = vadd.f32 %v2347, %v2374
        %s2377 = scalar_lea.vmem %s27, 32
        %v2378 = vld [vmem:[%s2377] sm:$0xf]
        %2379 = vrot.lane.b32.xlu0 %v1905, 110
        %v2380 = vpop.permute.xlu0 %2379
        %v2382 = vsel %vm1311, %v2378, 0
        %v2384 = vsel %vm1315, %v2380, 0
        %2386 = vmatpush.msra.mxu0 0.0
        %2387 = vmatpush.msra.mxu0 0.0
        %2388 = vmatpush.msra.mxu0 0.0
        %2389 = vmatpush.msra.mxu0 0.0
        %2390 = vmatpush.msra.mxu0 0.0
        %2391 = vmatpush.msra.mxu0 0.0
        %2392 = vmatpush.msra.mxu0 0.0
        %2393 = vmatpush.msra.mxu0 0.0
        %2394 = vmatpush.msra.mxu0 0.0
        %2395 = vmatpush.msra.mxu0 0.0
        %2396 = vmatpush.msra.mxu0 0.0
        %2397 = vmatpush.msra.mxu0 0.0
        %2398 = vmatpush.msra.mxu0 0.0
        %2399 = vmatpush.msra.mxu0 0.0
        %2400 = vmatpush.msra.mxu0 0.0
        %2401 = vmatpush.msra.mxu0 %v2384
        %2402 = vmatmul.f32.gmra.mxu0 %v2382
        %v2403 = vpop.f32.mrf.mxu0
        %v2404 = vadd.f32 0.0, %v2403
        %2405 = vdwg.mxu0
        %v2406 = vadd.f32 %v2376, %v2404
        %s2407 = scalar_lea.vmem %s29, 32
        %v2408 = vld [vmem:[%s2407] sm:$0xf]
        %2409 = vrot.lane.b32.xlu0 %v1911, 110
        %v2410 = vpop.permute.xlu0 %2409
        %v2413 = vsel %vm1032, %v2408, 0
        %2415 = vmatpush.msra.mxu0 0.0
        %2416 = vmatpush.msra.mxu0 0.0
        %2417 = vmatpush.msra.mxu0 0.0
        %2418 = vmatpush.msra.mxu0 0.0
        %2419 = vmatpush.msra.mxu0 0.0
        %2420 = vmatpush.msra.mxu0 0.0
        %2421 = vmatpush.msra.mxu0 0.0
        %2422 = vmatpush.msra.mxu0 0.0
        %2423 = vmatpush.msra.mxu0 0.0
        %2424 = vmatpush.msra.mxu0 0.0
        %2425 = vmatpush.msra.mxu0 0.0
        %2426 = vmatpush.msra.mxu0 0.0
        %2427 = vmatpush.msra.mxu0 0.0
        %2428 = vmatpush.msra.mxu0 0.0
        %2429 = vmatpush.msra.mxu0 0.0
        %2430 = vmatpush.msra.mxu0 %v2410
        %2431 = vmatmul.f32.gmra.mxu0 %v2413
        %v2432 = vpop.f32.mrf.mxu0
        %v2433 = vadd.f32 0.0, %v2432
        %2434 = vdwg.mxu0
        %v2435 = vadd.f32 %v2406, %v2433
        %v2436 = vld [vmem:[%s31] sm:$0xf]
        %2438 = vset.pattern.permute.xlu0 0
        %2439 = vperm.xlu0 %2438, %v2436
        %v2440 = vpop.permute.xlu0 %2439
        %v2442 = vadd.f32 %v2435, %v2440
        %vm2443 = vcmp.ge.f32.partialorder %v2442, 0.0
        %v2444 = vmul.f32 %v2442, 0.2
        %v2445 = vsel %vm2443, %v2442, %v2444
        %v2447 = vperm.slane %v1015, 0
        %v2449 = vmul.f32 %v2445, %v2447
        %vm2450 = vcmp.ge.f32.partialorder %v2449, 0.0
        %v2451 = vmul.f32 %v2449, 0.2
        %v2452 = vsel %vm2450, %v2449, %v2451
        %2454 = vrot.lane.b32.xlu0 %v2452, 9
        %v2455 = vpop.permute.xlu0 %2454
        %v2457 = vsel %vm1902, 0.0, %v2455
        %v2458 = vsel %vm1904, %v2457, 0.0
        %v2459 = vld [vmem:[%s33] sm:$0xf]
        %s2460 = scalar_lea.vmem %s33, 4
        %v2461 = vld [vmem:[%s2460] sm:$0xf]
        %2463 = vrot.lane.b32.xlu0 %v2458, 127
        %v2464 = vpop.permute.xlu0 %2463
        %v2466 = vsel %vm1311, %v2461, 0
        %v2468 = vsel %vm1315, %v2464, 0
        %2470 = vmatpush.msra.mxu0 0.0
        %2471 = vmatpush.msra.mxu0 0.0
        %2472 = vmatpush.msra.mxu0 0.0
        %2473 = vmatpush.msra.mxu0 0.0
        %2474 = vmatpush.msra.mxu0 0.0
        %2475 = vmatpush.msra.mxu0 0.0
        %2476 = vmatpush.msra.mxu0 0.0
        %2477 = vmatpush.msra.mxu0 0.0
        %2478 = vmatpush.msra.mxu0 0.0
        %2479 = vmatpush.msra.mxu0 0.0
        %2480 = vmatpush.msra.mxu0 0.0
        %2481 = vmatpush.msra.mxu0 0.0
        %2482 = vmatpush.msra.mxu0 0.0
        %2483 = vmatpush.msra.mxu0 0.0
        %2484 = vmatpush.msra.mxu0 0.0
        %2485 = vmatpush.msra.mxu0 %v2468
        %2486 = vmatmul.f32.gmra.mxu0 %v2466
        %v2487 = vpop.f32.mrf.mxu0
        %v2488 = vadd.f32 0.0, %v2487
        %2489 = vdwg.mxu0
        %v2491 = vsel %vm1311, %v2459, 0
        %v2493 = vsel %vm1315, %v2458, 0
        %2495 = vmatpush.msra.mxu0 0.0
        %2496 = vmatpush.msra.mxu0 0.0
        %2497 = vmatpush.msra.mxu0 0.0
        %2498 = vmatpush.msra.mxu0 0.0
        %2499 = vmatpush.msra.mxu0 0.0
        %2500 = vmatpush.msra.mxu0 0.0
        %2501 = vmatpush.msra.mxu0 0.0
        %2502 = vmatpush.msra.mxu0 0.0
        %2503 = vmatpush.msra.mxu0 0.0
        %2504 = vmatpush.msra.mxu0 0.0
        %2505 = vmatpush.msra.mxu0 0.0
        %2506 = vmatpush.msra.mxu0 0.0
        %2507 = vmatpush.msra.mxu0 0.0
        %2508 = vmatpush.msra.mxu0 0.0
        %2509 = vmatpush.msra.mxu0 0.0
        %2510 = vmatpush.msra.mxu0 %v2493
        %2511 = vmatmul.f32.gmra.mxu0 %v2491
        %v2512 = vpop.f32.mrf.mxu0
        %v2513 = vadd.f32 %v2488, %v2512
        %2514 = vdwg.mxu0
        %s2515 = scalar_lea.vmem %s33, 8
        %v2516 = vld [vmem:[%s2515] sm:$0xf]
        %2517 = vrot.lane.b32.xlu0 %v2458, 126
        %v2518 = vpop.permute.xlu0 %2517
        %v2520 = vsel %vm1311, %v2516, 0
        %v2522 = vsel %vm1315, %v2518, 0
        %2524 = vmatpush.msra.mxu0 0.0
        %2525 = vmatpush.msra.mxu0 0.0
        %2526 = vmatpush.msra.mxu0 0.0
        %2527 = vmatpush.msra.mxu0 0.0
        %2528 = vmatpush.msra.mxu0 0.0
        %2529 = vmatpush.msra.mxu0 0.0
        %2530 = vmatpush.msra.mxu0 0.0
        %2531 = vmatpush.msra.mxu0 0.0
        %2532 = vmatpush.msra.mxu0 0.0
        %2533 = vmatpush.msra.mxu0 0.0
        %2534 = vmatpush.msra.mxu0 0.0
        %2535 = vmatpush.msra.mxu0 0.0
        %2536 = vmatpush.msra.mxu0 0.0
        %2537 = vmatpush.msra.mxu0 0.0
        %2538 = vmatpush.msra.mxu0 0.0
        %2539 = vmatpush.msra.mxu0 %v2522
        %2540 = vmatmul.f32.gmra.mxu0 %v2520
        %v2541 = vpop.f32.mrf.mxu0
        %v2542 = vadd.f32 0.0, %v2541
        %2543 = vdwg.mxu0
        %v2544 = vadd.f32 %v2513, %v2542
        %s2545 = scalar_lea.vmem %s33, 12
        %v2546 = vld [vmem:[%s2545] sm:$0xf]
        %2547 = vrot.lane.b32.xlu0 %v2458, 120
        %v2548 = vpop.permute.xlu0 %2547
        %v2550 = vsel %vm1311, %v2546, 0
        %v2552 = vsel %vm1315, %v2548, 0
        %2554 = vmatpush.msra.mxu0 0.0
        %2555 = vmatpush.msra.mxu0 0.0
        %2556 = vmatpush.msra.mxu0 0.0
        %2557 = vmatpush.msra.mxu0 0.0
        %2558 = vmatpush.msra.mxu0 0.0
        %2559 = vmatpush.msra.mxu0 0.0
        %2560 = vmatpush.msra.mxu0 0.0
        %2561 = vmatpush.msra.mxu0 0.0
        %2562 = vmatpush.msra.mxu0 0.0
        %2563 = vmatpush.msra.mxu0 0.0
        %2564 = vmatpush.msra.mxu0 0.0
        %2565 = vmatpush.msra.mxu0 0.0
        %2566 = vmatpush.msra.mxu0 0.0
        %2567 = vmatpush.msra.mxu0 0.0
        %2568 = vmatpush.msra.mxu0 0.0
        %2569 = vmatpush.msra.mxu0 %v2552
        %2570 = vmatmul.f32.gmra.mxu0 %v2550
        %v2571 = vpop.f32.mrf.mxu0
        %v2572 = vadd.f32 0.0, %v2571
        %2573 = vdwg.mxu0
        %v2574 = vadd.f32 %v2544, %v2572
        %s2575 = scalar_lea.vmem %s33, 16
        %v2576 = vld [vmem:[%s2575] sm:$0xf]
        %2577 = vrot.lane.b32.xlu0 %v2458, 119
        %v2578 = vpop.permute.xlu0 %2577
        %v2580 = vsel %vm1311, %v2576, 0
        %v2582 = vsel %vm1315, %v2578, 0
        %2584 = vmatpush.msra.mxu0 0.0
        %2585 = vmatpush.msra.mxu0 0.0
        %2586 = vmatpush.msra.mxu0 0.0
        %2587 = vmatpush.msra.mxu0 0.0
        %2588 = vmatpush.msra.mxu0 0.0
        %2589 = vmatpush.msra.mxu0 0.0
        %2590 = vmatpush.msra.mxu0 0.0
        %2591 = vmatpush.msra.mxu0 0.0
        %2592 = vmatpush.msra.mxu0 0.0
        %2593 = vmatpush.msra.mxu0 0.0
        %2594 = vmatpush.msra.mxu0 0.0
        %2595 = vmatpush.msra.mxu0 0.0
        %2596 = vmatpush.msra.mxu0 0.0
        %2597 = vmatpush.msra.mxu0 0.0
        %2598 = vmatpush.msra.mxu0 0.0
        %2599 = vmatpush.msra.mxu0 %v2582
        %2600 = vmatmul.f32.gmra.mxu0 %v2580
        %v2601 = vpop.f32.mrf.mxu0
        %v2602 = vadd.f32 0.0, %v2601
        %2603 = vdwg.mxu0
        %v2604 = vadd.f32 %v2574, %v2602
        %s2605 = scalar_lea.vmem %s33, 20
        %v2606 = vld [vmem:[%s2605] sm:$0xf]
        %2607 = vrot.lane.b32.xlu0 %v2458, 118
        %v2608 = vpop.permute.xlu0 %2607
        %v2610 = vsel %vm1311, %v2606, 0
        %v2612 = vsel %vm1315, %v2608, 0
        %2614 = vmatpush.msra.mxu0 0.0
        %2615 = vmatpush.msra.mxu0 0.0
        %2616 = vmatpush.msra.mxu0 0.0
        %2617 = vmatpush.msra.mxu0 0.0
        %2618 = vmatpush.msra.mxu0 0.0
        %2619 = vmatpush.msra.mxu0 0.0
        %2620 = vmatpush.msra.mxu0 0.0
        %2621 = vmatpush.msra.mxu0 0.0
        %2622 = vmatpush.msra.mxu0 0.0
        %2623 = vmatpush.msra.mxu0 0.0
        %2624 = vmatpush.msra.mxu0 0.0
        %2625 = vmatpush.msra.mxu0 0.0
        %2626 = vmatpush.msra.mxu0 0.0
        %2627 = vmatpush.msra.mxu0 0.0
        %2628 = vmatpush.msra.mxu0 0.0
        %2629 = vmatpush.msra.mxu0 %v2612
        %2630 = vmatmul.f32.gmra.mxu0 %v2610
        %v2631 = vpop.f32.mrf.mxu0
        %v2632 = vadd.f32 0.0, %v2631
        %2633 = vdwg.mxu0
        %v2634 = vadd.f32 %v2604, %v2632
        %s2635 = scalar_lea.vmem %s33, 24
        %v2636 = vld [vmem:[%s2635] sm:$0xf]
        %2637 = vrot.lane.b32.xlu0 %v2458, 112
        %v2638 = vpop.permute.xlu0 %2637
        %v2640 = vsel %vm1311, %v2636, 0
        %v2642 = vsel %vm1315, %v2638, 0
        %2644 = vmatpush.msra.mxu0 0.0
        %2645 = vmatpush.msra.mxu0 0.0
        %2646 = vmatpush.msra.mxu0 0.0
        %2647 = vmatpush.msra.mxu0 0.0
        %2648 = vmatpush.msra.mxu0 0.0
        %2649 = vmatpush.msra.mxu0 0.0
        %2650 = vmatpush.msra.mxu0 0.0
        %2651 = vmatpush.msra.mxu0 0.0
        %2652 = vmatpush.msra.mxu0 0.0
        %2653 = vmatpush.msra.mxu0 0.0
        %2654 = vmatpush.msra.mxu0 0.0
        %2655 = vmatpush.msra.mxu0 0.0
        %2656 = vmatpush.msra.mxu0 0.0
        %2657 = vmatpush.msra.mxu0 0.0
        %2658 = vmatpush.msra.mxu0 0.0
        %2659 = vmatpush.msra.mxu0 %v2642
        %2660 = vmatmul.f32.gmra.mxu0 %v2640
        %v2661 = vpop.f32.mrf.mxu0
        %v2662 = vadd.f32 0.0, %v2661
        %2663 = vdwg.mxu0
        %v2664 = vadd.f32 %v2634, %v2662
        %s2665 = scalar_lea.vmem %s33, 28
        %v2666 = vld [vmem:[%s2665] sm:$0xf]
        %2667 = vrot.lane.b32.xlu0 %v2458, 111
        %v2668 = vpop.permute.xlu0 %2667
        %v2670 = vsel %vm1311, %v2666, 0
        %v2672 = vsel %vm1315, %v2668, 0
        %2674 = vmatpush.msra.mxu0 0.0
        %2675 = vmatpush.msra.mxu0 0.0
        %2676 = vmatpush.msra.mxu0 0.0
        %2677 = vmatpush.msra.mxu0 0.0
        %2678 = vmatpush.msra.mxu0 0.0
        %2679 = vmatpush.msra.mxu0 0.0
        %2680 = vmatpush.msra.mxu0 0.0
        %2681 = vmatpush.msra.mxu0 0.0
        %2682 = vmatpush.msra.mxu0 0.0
        %2683 = vmatpush.msra.mxu0 0.0
        %2684 = vmatpush.msra.mxu0 0.0
        %2685 = vmatpush.msra.mxu0 0.0
        %2686 = vmatpush.msra.mxu0 0.0
        %2687 = vmatpush.msra.mxu0 0.0
        %2688 = vmatpush.msra.mxu0 0.0
        %2689 = vmatpush.msra.mxu0 %v2672
        %2690 = vmatmul.f32.gmra.mxu0 %v2670
        %v2691 = vpop.f32.mrf.mxu0
        %v2692 = vadd.f32 0.0, %v2691
        %2693 = vdwg.mxu0
        %v2694 = vadd.f32 %v2664, %v2692
        %s2695 = scalar_lea.vmem %s33, 32
        %v2696 = vld [vmem:[%s2695] sm:$0xf]
        %2697 = vrot.lane.b32.xlu0 %v2458, 110
        %v2698 = vpop.permute.xlu0 %2697
        %v2700 = vsel %vm1311, %v2696, 0
        %v2702 = vsel %vm1315, %v2698, 0
        %2704 = vmatpush.msra.mxu0 0.0
        %2705 = vmatpush.msra.mxu0 0.0
        %2706 = vmatpush.msra.mxu0 0.0
        %2707 = vmatpush.msra.mxu0 0.0
        %2708 = vmatpush.msra.mxu0 0.0
        %2709 = vmatpush.msra.mxu0 0.0
        %2710 = vmatpush.msra.mxu0 0.0
        %2711 = vmatpush.msra.mxu0 0.0
        %2712 = vmatpush.msra.mxu0 0.0
        %2713 = vmatpush.msra.mxu0 0.0
        %2714 = vmatpush.msra.mxu0 0.0
        %2715 = vmatpush.msra.mxu0 0.0
        %2716 = vmatpush.msra.mxu0 0.0
        %2717 = vmatpush.msra.mxu0 0.0
        %2718 = vmatpush.msra.mxu0 0.0
        %2719 = vmatpush.msra.mxu0 %v2702
        %2720 = vmatmul.f32.gmra.mxu0 %v2700
        %v2721 = vpop.f32.mrf.mxu0
        %v2722 = vadd.f32 0.0, %v2721
        %2723 = vdwg.mxu0
        %v2724 = vadd.f32 %v2694, %v2722
        %v2725 = vld [vmem:[%s35] sm:$0xf]
        %2727 = vset.pattern.permute.xlu0 0
        %2728 = vperm.xlu0 %2727, %v2725
        %v2729 = vpop.permute.xlu0 %2728
        %v2731 = vadd.f32 %v2724, %v2729
        %v2732 = vmul.f32 %v2731, %v2447
        %vm2733 = vcmp.ge.f32.partialorder %v2732, 0.0
        %v2734 = vmul.f32 %v2732, 0.2
        %v2735 = vsel %vm2733, %v2732, %v2734
        %2737 = vrot.lane.b32.xlu0 %v2735, 9
        %v2738 = vpop.permute.xlu0 %2737
        %v2740 = vsel %vm1902, 0.0, %v2738
        %v2741 = vsel %vm1904, %v2740, 0.0
        %v2742 = vld [vmem:[%s37] sm:$0xf]
        %s2743 = scalar_lea.vmem %s37, 4
        %v2744 = vld [vmem:[%s2743] sm:$0xf]
        %2746 = vrot.lane.b32.xlu0 %v2741, 127
        %v2747 = vpop.permute.xlu0 %2746
        %v2749 = vsel %vm1311, %v2744, 0
        %v2751 = vsel %vm1315, %v2747, 0
        %2753 = vmatpush.msra.mxu0 0.0
        %2754 = vmatpush.msra.mxu0 0.0
        %2755 = vmatpush.msra.mxu0 0.0
        %2756 = vmatpush.msra.mxu0 0.0
        %2757 = vmatpush.msra.mxu0 0.0
        %2758 = vmatpush.msra.mxu0 0.0
        %2759 = vmatpush.msra.mxu0 0.0
        %2760 = vmatpush.msra.mxu0 0.0
        %2761 = vmatpush.msra.mxu0 0.0
        %2762 = vmatpush.msra.mxu0 0.0
        %2763 = vmatpush.msra.mxu0 0.0
        %2764 = vmatpush.msra.mxu0 0.0
        %2765 = vmatpush.msra.mxu0 0.0
        %2766 = vmatpush.msra.mxu0 0.0
        %2767 = vmatpush.msra.mxu0 0.0
        %2768 = vmatpush.msra.mxu0 %v2751
        %2769 = vmatmul.f32.gmra.mxu0 %v2749
        %v2770 = vpop.f32.mrf.mxu0
        %v2771 = vadd.f32 0.0, %v2770
        %2772 = vdwg.mxu0
        %v2774 = vsel %vm1311, %v2742, 0
        %v2776 = vsel %vm1315, %v2741, 0
        %2778 = vmatpush.msra.mxu0 0.0
        %2779 = vmatpush.msra.mxu0 0.0
        %2780 = vmatpush.msra.mxu0 0.0
        %2781 = vmatpush.msra.mxu0 0.0
        %2782 = vmatpush.msra.mxu0 0.0
        %2783 = vmatpush.msra.mxu0 0.0
        %2784 = vmatpush.msra.mxu0 0.0
        %2785 = vmatpush.msra.mxu0 0.0
        %2786 = vmatpush.msra.mxu0 0.0
        %2787 = vmatpush.msra.mxu0 0.0
        %2788 = vmatpush.msra.mxu0 0.0
        %2789 = vmatpush.msra.mxu0 0.0
        %2790 = vmatpush.msra.mxu0 0.0
        %2791 = vmatpush.msra.mxu0 0.0
        %2792 = vmatpush.msra.mxu0 0.0
        %2793 = vmatpush.msra.mxu0 %v2776
        %2794 = vmatmul.f32.gmra.mxu0 %v2774
        %v2795 = vpop.f32.mrf.mxu0
        %v2796 = vadd.f32 %v2771, %v2795
        %2797 = vdwg.mxu0
        %s2798 = scalar_lea.vmem %s37, 8
        %v2799 = vld [vmem:[%s2798] sm:$0xf]
        %2800 = vrot.lane.b32.xlu0 %v2741, 126
        %v2801 = vpop.permute.xlu0 %2800
        %v2803 = vsel %vm1311, %v2799, 0
        %v2805 = vsel %vm1315, %v2801, 0
        %2807 = vmatpush.msra.mxu0 0.0
        %2808 = vmatpush.msra.mxu0 0.0
        %2809 = vmatpush.msra.mxu0 0.0
        %2810 = vmatpush.msra.mxu0 0.0
        %2811 = vmatpush.msra.mxu0 0.0
        %2812 = vmatpush.msra.mxu0 0.0
        %2813 = vmatpush.msra.mxu0 0.0
        %2814 = vmatpush.msra.mxu0 0.0
        %2815 = vmatpush.msra.mxu0 0.0
        %2816 = vmatpush.msra.mxu0 0.0
        %2817 = vmatpush.msra.mxu0 0.0
        %2818 = vmatpush.msra.mxu0 0.0
        %2819 = vmatpush.msra.mxu0 0.0
        %2820 = vmatpush.msra.mxu0 0.0
        %2821 = vmatpush.msra.mxu0 0.0
        %2822 = vmatpush.msra.mxu0 %v2805
        %2823 = vmatmul.f32.gmra.mxu0 %v2803
        %v2824 = vpop.f32.mrf.mxu0
        %v2825 = vadd.f32 0.0, %v2824
        %2826 = vdwg.mxu0
        %v2827 = vadd.f32 %v2796, %v2825
        %s2828 = scalar_lea.vmem %s37, 12
        %v2829 = vld [vmem:[%s2828] sm:$0xf]
        %2830 = vrot.lane.b32.xlu0 %v2741, 120
        %v2831 = vpop.permute.xlu0 %2830
        %v2833 = vsel %vm1311, %v2829, 0
        %v2835 = vsel %vm1315, %v2831, 0
        %2837 = vmatpush.msra.mxu0 0.0
        %2838 = vmatpush.msra.mxu0 0.0
        %2839 = vmatpush.msra.mxu0 0.0
        %2840 = vmatpush.msra.mxu0 0.0
        %2841 = vmatpush.msra.mxu0 0.0
        %2842 = vmatpush.msra.mxu0 0.0
        %2843 = vmatpush.msra.mxu0 0.0
        %2844 = vmatpush.msra.mxu0 0.0
        %2845 = vmatpush.msra.mxu0 0.0
        %2846 = vmatpush.msra.mxu0 0.0
        %2847 = vmatpush.msra.mxu0 0.0
        %2848 = vmatpush.msra.mxu0 0.0
        %2849 = vmatpush.msra.mxu0 0.0
        %2850 = vmatpush.msra.mxu0 0.0
        %2851 = vmatpush.msra.mxu0 0.0
        %2852 = vmatpush.msra.mxu0 %v2835
        %2853 = vmatmul.f32.gmra.mxu0 %v2833
        %v2854 = vpop.f32.mrf.mxu0
        %v2855 = vadd.f32 0.0, %v2854
        %2856 = vdwg.mxu0
        %v2857 = vadd.f32 %v2827, %v2855
        %s2858 = scalar_lea.vmem %s37, 16
        %v2859 = vld [vmem:[%s2858] sm:$0xf]
        %2860 = vrot.lane.b32.xlu0 %v2741, 119
        %v2861 = vpop.permute.xlu0 %2860
        %v2863 = vsel %vm1311, %v2859, 0
        %v2865 = vsel %vm1315, %v2861, 0
        %2867 = vmatpush.msra.mxu0 0.0
        %2868 = vmatpush.msra.mxu0 0.0
        %2869 = vmatpush.msra.mxu0 0.0
        %2870 = vmatpush.msra.mxu0 0.0
        %2871 = vmatpush.msra.mxu0 0.0
        %2872 = vmatpush.msra.mxu0 0.0
        %2873 = vmatpush.msra.mxu0 0.0
        %2874 = vmatpush.msra.mxu0 0.0
        %2875 = vmatpush.msra.mxu0 0.0
        %2876 = vmatpush.msra.mxu0 0.0
        %2877 = vmatpush.msra.mxu0 0.0
        %2878 = vmatpush.msra.mxu0 0.0
        %2879 = vmatpush.msra.mxu0 0.0
        %2880 = vmatpush.msra.mxu0 0.0
        %2881 = vmatpush.msra.mxu0 0.0
        %2882 = vmatpush.msra.mxu0 %v2865
        %2883 = vmatmul.f32.gmra.mxu0 %v2863
        %v2884 = vpop.f32.mrf.mxu0
        %v2885 = vadd.f32 0.0, %v2884
        %2886 = vdwg.mxu0
        %v2887 = vadd.f32 %v2857, %v2885
        %s2888 = scalar_lea.vmem %s37, 20
        %v2889 = vld [vmem:[%s2888] sm:$0xf]
        %2890 = vrot.lane.b32.xlu0 %v2741, 118
        %v2891 = vpop.permute.xlu0 %2890
        %v2893 = vsel %vm1311, %v2889, 0
        %v2895 = vsel %vm1315, %v2891, 0
        %2897 = vmatpush.msra.mxu0 0.0
        %2898 = vmatpush.msra.mxu0 0.0
        %2899 = vmatpush.msra.mxu0 0.0
        %2900 = vmatpush.msra.mxu0 0.0
        %2901 = vmatpush.msra.mxu0 0.0
        %2902 = vmatpush.msra.mxu0 0.0
        %2903 = vmatpush.msra.mxu0 0.0
        %2904 = vmatpush.msra.mxu0 0.0
        %2905 = vmatpush.msra.mxu0 0.0
        %2906 = vmatpush.msra.mxu0 0.0
        %2907 = vmatpush.msra.mxu0 0.0
        %2908 = vmatpush.msra.mxu0 0.0
        %2909 = vmatpush.msra.mxu0 0.0
        %2910 = vmatpush.msra.mxu0 0.0
        %2911 = vmatpush.msra.mxu0 0.0
        %2912 = vmatpush.msra.mxu0 %v2895
        %2913 = vmatmul.f32.gmra.mxu0 %v2893
        %v2914 = vpop.f32.mrf.mxu0
        %v2915 = vadd.f32 0.0, %v2914
        %2916 = vdwg.mxu0
        %v2917 = vadd.f32 %v2887, %v2915
        %s2918 = scalar_lea.vmem %s37, 24
        %v2919 = vld [vmem:[%s2918] sm:$0xf]
        %2920 = vrot.lane.b32.xlu0 %v2741, 112
        %v2921 = vpop.permute.xlu0 %2920
        %v2923 = vsel %vm1311, %v2919, 0
        %v2925 = vsel %vm1315, %v2921, 0
        %2927 = vmatpush.msra.mxu0 0.0
        %2928 = vmatpush.msra.mxu0 0.0
        %2929 = vmatpush.msra.mxu0 0.0
        %2930 = vmatpush.msra.mxu0 0.0
        %2931 = vmatpush.msra.mxu0 0.0
        %2932 = vmatpush.msra.mxu0 0.0
        %2933 = vmatpush.msra.mxu0 0.0
        %2934 = vmatpush.msra.mxu0 0.0
        %2935 = vmatpush.msra.mxu0 0.0
        %2936 = vmatpush.msra.mxu0 0.0
        %2937 = vmatpush.msra.mxu0 0.0
        %2938 = vmatpush.msra.mxu0 0.0
        %2939 = vmatpush.msra.mxu0 0.0
        %2940 = vmatpush.msra.mxu0 0.0
        %2941 = vmatpush.msra.mxu0 0.0
        %2942 = vmatpush.msra.mxu0 %v2925
        %2943 = vmatmul.f32.gmra.mxu0 %v2923
        %v2944 = vpop.f32.mrf.mxu0
        %v2945 = vadd.f32 0.0, %v2944
        %2946 = vdwg.mxu0
        %v2947 = vadd.f32 %v2917, %v2945
        %s2948 = scalar_lea.vmem %s37, 28
        %v2949 = vld [vmem:[%s2948] sm:$0xf]
        %2950 = vrot.lane.b32.xlu0 %v2741, 111
        %v2951 = vpop.permute.xlu0 %2950
        %v2953 = vsel %vm1311, %v2949, 0
        %v2955 = vsel %vm1315, %v2951, 0
        %2957 = vmatpush.msra.mxu0 0.0
        %2958 = vmatpush.msra.mxu0 0.0
        %2959 = vmatpush.msra.mxu0 0.0
        %2960 = vmatpush.msra.mxu0 0.0
        %2961 = vmatpush.msra.mxu0 0.0
        %2962 = vmatpush.msra.mxu0 0.0
        %2963 = vmatpush.msra.mxu0 0.0
        %2964 = vmatpush.msra.mxu0 0.0
        %2965 = vmatpush.msra.mxu0 0.0
        %2966 = vmatpush.msra.mxu0 0.0
        %2967 = vmatpush.msra.mxu0 0.0
        %2968 = vmatpush.msra.mxu0 0.0
        %2969 = vmatpush.msra.mxu0 0.0
        %2970 = vmatpush.msra.mxu0 0.0
        %2971 = vmatpush.msra.mxu0 0.0
        %2972 = vmatpush.msra.mxu0 %v2955
        %2973 = vmatmul.f32.gmra.mxu0 %v2953
        %v2974 = vpop.f32.mrf.mxu0
        %v2975 = vadd.f32 0.0, %v2974
        %2976 = vdwg.mxu0
        %v2977 = vadd.f32 %v2947, %v2975
        %s2978 = scalar_lea.vmem %s37, 32
        %v2979 = vld [vmem:[%s2978] sm:$0xf]
        %2980 = vrot.lane.b32.xlu0 %v2741, 110
        %v2981 = vpop.permute.xlu0 %2980
        %v2983 = vsel %vm1311, %v2979, 0
        %v2985 = vsel %vm1315, %v2981, 0
        %2987 = vmatpush.msra.mxu0 0.0
        %2988 = vmatpush.msra.mxu0 0.0
        %2989 = vmatpush.msra.mxu0 0.0
        %2990 = vmatpush.msra.mxu0 0.0
        %2991 = vmatpush.msra.mxu0 0.0
        %2992 = vmatpush.msra.mxu0 0.0
        %2993 = vmatpush.msra.mxu0 0.0
        %2994 = vmatpush.msra.mxu0 0.0
        %2995 = vmatpush.msra.mxu0 0.0
        %2996 = vmatpush.msra.mxu0 0.0
        %2997 = vmatpush.msra.mxu0 0.0
        %2998 = vmatpush.msra.mxu0 0.0
        %2999 = vmatpush.msra.mxu0 0.0
        %3000 = vmatpush.msra.mxu0 0.0
        %3001 = vmatpush.msra.mxu0 0.0
        %3002 = vmatpush.msra.mxu0 %v2985
        %3003 = vmatmul.f32.gmra.mxu0 %v2983
        %v3004 = vpop.f32.mrf.mxu0
        %v3005 = vadd.f32 0.0, %v3004
        %3006 = vdwg.mxu0
        %v3007 = vadd.f32 %v2977, %v3005
        %v3008 = vld [vmem:[%s39] sm:$0xf]
        %3010 = vset.pattern.permute.xlu0 0
        %3011 = vperm.xlu0 %3010, %v3008
        %v3012 = vpop.permute.xlu0 %3011
        %v3014 = vadd.f32 %v3007, %v3012
        %v3015 = vmul.f32 %v3014, %v2447
        %v3016 = vadd.f32 %v2449, %v3015
        %v3017 = vmul.f32 %v3016, 0.70710677
        %v3018 = vld [vmem:[%s41] sm:$0xff]
        %v3019 = vld [vmem:[%s41 + $0x8] sm:$0xff]
        %v3020 = vld [vmem:[%s41 + $0x10] sm:$0xff]
        %v3021 = vld [vmem:[%s41 + $0x18] sm:$0xff]
        %v3022 = vld [vmem:[%s41 + $0x20] sm:$0xff]
        %v3023 = vld [vmem:[%s41 + $0x28] sm:$0xff]
        %v3024 = vld [vmem:[%s41 + $0x30] sm:$0xff]
        %v3025 = vld [vmem:[%s41 + $0x38] sm:$0xff]
        %v3026 = vld [vmem:[%s41 + $0x40] sm:$0xff]
        %v3027 = vld [vmem:[%s41 + $0x48] sm:$0xff]
        %v3028 = vld [vmem:[%s41 + $0x50] sm:$0xff]
        %v3029 = vld [vmem:[%s41 + $0x58] sm:$0xff]
        %v3030 = vld [vmem:[%s41 + $0x60] sm:$0xff]
        %v3031 = vld [vmem:[%s41 + $0x68] sm:$0xff]
        %v3032 = vld [vmem:[%s41 + $0x70] sm:$0xff]
        %v3033 = vld [vmem:[%s41 + $0x78] sm:$0xff]
        %vm3034 = vcmask 523264
        %v3036 = vsel %vm3034, %v3017, 0
        %3038 = vmatpush.msra.mxu0 0.0
        %3039 = vmatpush.msra.mxu0 0.0
        %3040 = vmatpush.msra.mxu0 0.0
        %3041 = vmatpush.msra.mxu0 0.0
        %3042 = vmatpush.msra.mxu0 0.0
        %3043 = vmatpush.msra.mxu0 0.0
        %3044 = vmatpush.msra.mxu0 0.0
        %3045 = vmatpush.msra.mxu0 0.0
        %3046 = vmatpush.msra.mxu0 %v3032
        %3047 = vmatpush.msra.mxu0 %v3030
        %3048 = vmatpush.msra.mxu0 %v3028
        %3049 = vmatpush.msra.mxu0 %v3026
        %3050 = vmatpush.msra.mxu0 %v3024
        %3051 = vmatpush.msra.mxu0 %v3022
        %3052 = vmatpush.msra.mxu0 %v3020
        %3053 = vmatpush.msra.mxu0 %v3018
        %3054 = vmatmul.f32.gmra.mxu0 %v3036
        %v3055 = vpop.f32.mrf.mxu0
        %v3056 = vadd.f32 0.0, %v3055
        %3057 = vdwg.mxu0
        %3058 = vmatpush.msra.mxu0 0.0
        %3059 = vmatpush.msra.mxu0 0.0
        %3060 = vmatpush.msra.mxu0 0.0
        %3061 = vmatpush.msra.mxu0 0.0
        %3062 = vmatpush.msra.mxu0 0.0
        %3063 = vmatpush.msra.mxu0 0.0
        %3064 = vmatpush.msra.mxu0 0.0
        %3065 = vmatpush.msra.mxu0 0.0
        %3066 = vmatpush.msra.mxu0 %v3033
        %3067 = vmatpush.msra.mxu0 %v3031
        %3068 = vmatpush.msra.mxu0 %v3029
        %3069 = vmatpush.msra.mxu0 %v3027
        %3070 = vmatpush.msra.mxu0 %v3025
        %3071 = vmatpush.msra.mxu0 %v3023
        %3072 = vmatpush.msra.mxu0 %v3021
        %3073 = vmatpush.msra.mxu0 %v3019
        %3074 = vmatmul.f32.gmra.mxu0 %v3036
        %v3075 = vpop.f32.mrf.mxu0
        %v3076 = vadd.f32 0.0, %v3075
        %3077 = vdwg.mxu0
        %3080 = vrot.lane.b32.xlu0 %v3056, 13
        %v3081 = vpop.permute.xlu0 %3080
        %3082 = vrot.lane.b32.xlu0 %v3076, 13
        %v3083 = vpop.permute.xlu0 %3082
        %vm3084 = vcmask 105472
        %v3085 = vsel %vm3084, %v3081, %v3083
        %v3088 = vsel %vm3084, 0.0, %v3081
        %vm3089 = vcmask 236544
        %v3090 = vsel %vm3089, %v3085, 0.0
        %3093 = vrot.lane.b32.xlu0 %v1012, 13
        %v3094 = vpop.permute.xlu0 %3093
        %3095 = vrot.lane.b32.xlu0 %v1013, 13
        %v3096 = vpop.permute.xlu0 %3095
        %v3097 = vsel %vm3084, %v3094, %v3096
        %v3100 = vsel %vm3084, 0.0, %v3094
        %v3101 = vsel %vm3089, %v3097, 0.0
        %v3102 = vld [vmem:[%s43] sm:$0xf]
        %v3103 = vld [vmem:[%s45] sm:$0xf]
        %v3105 = vsel %vm1032, %v3103, 0
        %3107 = vmatpush.msra.mxu0 0.0
        %3108 = vmatpush.msra.mxu0 0.0
        %3109 = vmatpush.msra.mxu0 0.0
        %3110 = vmatpush.msra.mxu0 0.0
        %3111 = vmatpush.msra.mxu0 0.0
        %3112 = vmatpush.msra.mxu0 0.0
        %3113 = vmatpush.msra.mxu0 0.0
        %3114 = vmatpush.msra.mxu0 0.0
        %3115 = vmatpush.msra.mxu0 0.0
        %3116 = vmatpush.msra.mxu0 0.0
        %3117 = vmatpush.msra.mxu0 0.0
        %3118 = vmatpush.msra.mxu0 0.0
        %3119 = vmatpush.msra.mxu0 0.0
        %3120 = vmatpush.msra.mxu0 0.0
        %3121 = vmatpush.msra.mxu0 0.0
        %3122 = vmatpush.msra.mxu0 %v3100
        %3123 = vmatmul.f32.gmra.mxu0 %v3105
        %v3124 = vpop.f32.mrf.mxu0
        %v3125 = vadd.f32 0.0, %v3124
        %3126 = vdwg.mxu0
        %3127 = vmatpush.msra.mxu0 0.0
        %3128 = vmatpush.msra.mxu0 0.0
        %3129 = vmatpush.msra.mxu0 0.0
        %3130 = vmatpush.msra.mxu0 0.0
        %3131 = vmatpush.msra.mxu0 0.0
        %3132 = vmatpush.msra.mxu0 0.0
        %3133 = vmatpush.msra.mxu0 0.0
        %3134 = vmatpush.msra.mxu0 0.0
        %3135 = vmatpush.msra.mxu0 0.0
        %3136 = vmatpush.msra.mxu0 0.0
        %3137 = vmatpush.msra.mxu0 0.0
        %3138 = vmatpush.msra.mxu0 0.0
        %3139 = vmatpush.msra.mxu0 0.0
        %3140 = vmatpush.msra.mxu0 0.0
        %3141 = vmatpush.msra.mxu0 0.0
        %3142 = vmatpush.msra.mxu0 %v3101
        %3143 = vmatmul.f32.gmra.mxu0 %v3105
        %v3144 = vpop.f32.mrf.mxu0
        %v3145 = vadd.f32 0.0, %v3144
        %3146 = vdwg.mxu0
        %v3148 = vsel %vm1311, %v3102, 0
        %v3151 = vsel %vm1315, %v3088, 0
        %v3154 = vsel %vm1315, %v3090, 0
        %3156 = vmatpush.msra.mxu0 0.0
        %3157 = vmatpush.msra.mxu0 0.0
        %3158 = vmatpush.msra.mxu0 0.0
        %3159 = vmatpush.msra.mxu0 0.0
        %3160 = vmatpush.msra.mxu0 0.0
        %3161 = vmatpush.msra.mxu0 0.0
        %3162 = vmatpush.msra.mxu0 0.0
        %3163 = vmatpush.msra.mxu0 0.0
        %3164 = vmatpush.msra.mxu0 0.0
        %3165 = vmatpush.msra.mxu0 0.0
        %3166 = vmatpush.msra.mxu0 0.0
        %3167 = vmatpush.msra.mxu0 0.0
        %3168 = vmatpush.msra.mxu0 0.0
        %3169 = vmatpush.msra.mxu0 0.0
        %3170 = vmatpush.msra.mxu0 0.0
        %3171 = vmatpush.msra.mxu0 %v3151
        %3172 = vmatmul.f32.gmra.mxu0 %v3148
        %v3173 = vpop.f32.mrf.mxu0
        %v3174 = vadd.f32 %v3125, %v3173
        %3175 = vdwg.mxu0
        %3176 = vmatpush.msra.mxu0 0.0
        %3177 = vmatpush.msra.mxu0 0.0
        %3178 = vmatpush.msra.mxu0 0.0
        %3179 = vmatpush.msra.mxu0 0.0
        %3180 = vmatpush.msra.mxu0 0.0
        %3181 = vmatpush.msra.mxu0 0.0
        %3182 = vmatpush.msra.mxu0 0.0
        %3183 = vmatpush.msra.mxu0 0.0
        %3184 = vmatpush.msra.mxu0 0.0
        %3185 = vmatpush.msra.mxu0 0.0
        %3186 = vmatpush.msra.mxu0 0.0
        %3187 = vmatpush.msra.mxu0 0.0
        %3188 = vmatpush.msra.mxu0 0.0
        %3189 = vmatpush.msra.mxu0 0.0
        %3190 = vmatpush.msra.mxu0 0.0
        %3191 = vmatpush.msra.mxu0 %v3154
        %3192 = vmatmul.f32.gmra.mxu0 %v3148
        %v3193 = vpop.f32.mrf.mxu0
        %v3194 = vadd.f32 %v3145, %v3193
        %3195 = vdwg.mxu0
        %s3196 = scalar_lea.vmem %s43, 4
        %v3197 = vld [vmem:[%s3196] sm:$0xf]
        %3198 = vrot.lane.b32.xlu0 %v3088, 127
        %v3199 = vpop.permute.xlu0 %3198
        %3200 = vrot.lane.b32.xlu0 %v3090, 127
        %v3201 = vpop.permute.xlu0 %3200
        %vm3202 = vcmask 1039360
        %v3203 = vsel %vm3202, %v3199, %v3201
        %v3205 = vsel %vm1311, %v3197, 0
        %v3207 = vsel %vm1315, %v3203, 0
        %v3209 = vsel %vm1315, %v3201, 0
        %3211 = vmatpush.msra.mxu0 0.0
        %3212 = vmatpush.msra.mxu0 0.0
        %3213 = vmatpush.msra.mxu0 0.0
        %3214 = vmatpush.msra.mxu0 0.0
        %3215 = vmatpush.msra.mxu0 0.0
        %3216 = vmatpush.msra.mxu0 0.0
        %3217 = vmatpush.msra.mxu0 0.0
        %3218 = vmatpush.msra.mxu0 0.0
        %3219 = vmatpush.msra.mxu0 0.0
        %3220 = vmatpush.msra.mxu0 0.0
        %3221 = vmatpush.msra.mxu0 0.0
        %3222 = vmatpush.msra.mxu0 0.0
        %3223 = vmatpush.msra.mxu0 0.0
        %3224 = vmatpush.msra.mxu0 0.0
        %3225 = vmatpush.msra.mxu0 0.0
        %3226 = vmatpush.msra.mxu0 %v3207
        %3227 = vmatmul.f32.gmra.mxu0 %v3205
        %v3228 = vpop.f32.mrf.mxu0
        %v3229 = vadd.f32 0.0, %v3228
        %3230 = vdwg.mxu0
        %3231 = vmatpush.msra.mxu0 0.0
        %3232 = vmatpush.msra.mxu0 0.0
        %3233 = vmatpush.msra.mxu0 0.0
        %3234 = vmatpush.msra.mxu0 0.0
        %3235 = vmatpush.msra.mxu0 0.0
        %3236 = vmatpush.msra.mxu0 0.0
        %3237 = vmatpush.msra.mxu0 0.0
        %3238 = vmatpush.msra.mxu0 0.0
        %3239 = vmatpush.msra.mxu0 0.0
        %3240 = vmatpush.msra.mxu0 0.0
        %3241 = vmatpush.msra.mxu0 0.0
        %3242 = vmatpush.msra.mxu0 0.0
        %3243 = vmatpush.msra.mxu0 0.0
        %3244 = vmatpush.msra.mxu0 0.0
        %3245 = vmatpush.msra.mxu0 0.0
        %3246 = vmatpush.msra.mxu0 %v3209
        %3247 = vmatmul.f32.gmra.mxu0 %v3205
        %v3248 = vpop.f32.mrf.mxu0
        %v3249 = vadd.f32 0.0, %v3248
        %3250 = vdwg.mxu0
        %v3251 = vadd.f32 %v3174, %v3229
        %v3252 = vadd.f32 %v3194, %v3249
        %s3253 = scalar_lea.vmem %s45, 4
        %v3254 = vld [vmem:[%s3253] sm:$0xf]
        %3257 = vrot.lane.b32.xlu0 %v3100, 127
        %v3258 = vpop.permute.xlu0 %3257
        %3259 = vrot.lane.b32.xlu0 %v3101, 127
        %v3260 = vpop.permute.xlu0 %3259
        %v3261 = vsel %vm3202, %v3258, %v3260
        %v3265 = vsel %vm1032, %v3254, 0
        %3267 = vmatpush.msra.mxu0 0.0
        %3268 = vmatpush.msra.mxu0 0.0
        %3269 = vmatpush.msra.mxu0 0.0
        %3270 = vmatpush.msra.mxu0 0.0
        %3271 = vmatpush.msra.mxu0 0.0
        %3272 = vmatpush.msra.mxu0 0.0
        %3273 = vmatpush.msra.mxu0 0.0
        %3274 = vmatpush.msra.mxu0 0.0
        %3275 = vmatpush.msra.mxu0 0.0
        %3276 = vmatpush.msra.mxu0 0.0
        %3277 = vmatpush.msra.mxu0 0.0
        %3278 = vmatpush.msra.mxu0 0.0
        %3279 = vmatpush.msra.mxu0 0.0
        %3280 = vmatpush.msra.mxu0 0.0
        %3281 = vmatpush.msra.mxu0 0.0
        %3282 = vmatpush.msra.mxu0 %v3261
        %3283 = vmatmul.f32.gmra.mxu0 %v3265
        %v3284 = vpop.f32.mrf.mxu0
        %v3285 = vadd.f32 0.0, %v3284
        %3286 = vdwg.mxu0
        %3287 = vmatpush.msra.mxu0 0.0
        %3288 = vmatpush.msra.mxu0 0.0
        %3289 = vmatpush.msra.mxu0 0.0
        %3290 = vmatpush.msra.mxu0 0.0
        %3291 = vmatpush.msra.mxu0 0.0
        %3292 = vmatpush.msra.mxu0 0.0
        %3293 = vmatpush.msra.mxu0 0.0
        %3294 = vmatpush.msra.mxu0 0.0
        %3295 = vmatpush.msra.mxu0 0.0
        %3296 = vmatpush.msra.mxu0 0.0
        %3297 = vmatpush.msra.mxu0 0.0
        %3298 = vmatpush.msra.mxu0 0.0
        %3299 = vmatpush.msra.mxu0 0.0
        %3300 = vmatpush.msra.mxu0 0.0
        %3301 = vmatpush.msra.mxu0 0.0
        %3302 = vmatpush.msra.mxu0 %v3260
        %3303 = vmatmul.f32.gmra.mxu0 %v3265
        %v3304 = vpop.f32.mrf.mxu0
        %v3305 = vadd.f32 0.0, %v3304
        %3306 = vdwg.mxu0
        %v3307 = vadd.f32 %v3251, %v3285
        %v3308 = vadd.f32 %v3252, %v3305
        %s3309 = scalar_lea.vmem %s43, 8
        %v3310 = vld [vmem:[%s3309] sm:$0xf]
        %3311 = vrot.lane.b32.xlu0 %v3088, 126
        %v3312 = vpop.permute.xlu0 %3311
        %3313 = vrot.lane.b32.xlu0 %v3090, 126
        %v3314 = vpop.permute.xlu0 %3313
        %vm3315 = vcmask 1031168
        %v3316 = vsel %vm3315, %v3312, %v3314
        %v3318 = vsel %vm1311, %v3310, 0
        %v3320 = vsel %vm1315, %v3316, 0
        %v3322 = vsel %vm1315, %v3314, 0
        %3324 = vmatpush.msra.mxu0 0.0
        %3325 = vmatpush.msra.mxu0 0.0
        %3326 = vmatpush.msra.mxu0 0.0
        %3327 = vmatpush.msra.mxu0 0.0
        %3328 = vmatpush.msra.mxu0 0.0
        %3329 = vmatpush.msra.mxu0 0.0
        %3330 = vmatpush.msra.mxu0 0.0
        %3331 = vmatpush.msra.mxu0 0.0
        %3332 = vmatpush.msra.mxu0 0.0
        %3333 = vmatpush.msra.mxu0 0.0
        %3334 = vmatpush.msra.mxu0 0.0
        %3335 = vmatpush.msra.mxu0 0.0
        %3336 = vmatpush.msra.mxu0 0.0
        %3337 = vmatpush.msra.mxu0 0.0
        %3338 = vmatpush.msra.mxu0 0.0
        %3339 = vmatpush.msra.mxu0 %v3320
        %3340 = vmatmul.f32.gmra.mxu0 %v3318
        %v3341 = vpop.f32.mrf.mxu0
        %v3342 = vadd.f32 0.0, %v3341
        %3343 = vdwg.mxu0
        %3344 = vmatpush.msra.mxu0 0.0
        %3345 = vmatpush.msra.mxu0 0.0
        %3346 = vmatpush.msra.mxu0 0.0
        %3347 = vmatpush.msra.mxu0 0.0
        %3348 = vmatpush.msra.mxu0 0.0
        %3349 = vmatpush.msra.mxu0 0.0
        %3350 = vmatpush.msra.mxu0 0.0
        %3351 = vmatpush.msra.mxu0 0.0
        %3352 = vmatpush.msra.mxu0 0.0
        %3353 = vmatpush.msra.mxu0 0.0
        %3354 = vmatpush.msra.mxu0 0.0
        %3355 = vmatpush.msra.mxu0 0.0
        %3356 = vmatpush.msra.mxu0 0.0
        %3357 = vmatpush.msra.mxu0 0.0
        %3358 = vmatpush.msra.mxu0 0.0
        %3359 = vmatpush.msra.mxu0 %v3322
        %3360 = vmatmul.f32.gmra.mxu0 %v3318
        %v3361 = vpop.f32.mrf.mxu0
        %v3362 = vadd.f32 0.0, %v3361
        %3363 = vdwg.mxu0
        %v3364 = vadd.f32 %v3307, %v3342
        %v3365 = vadd.f32 %v3308, %v3362
        %s3366 = scalar_lea.vmem %s45, 8
        %v3367 = vld [vmem:[%s3366] sm:$0xf]
        %3368 = vrot.lane.b32.xlu0 %v3100, 126
        %v3369 = vpop.permute.xlu0 %3368
        %3370 = vrot.lane.b32.xlu0 %v3101, 126
        %v3371 = vpop.permute.xlu0 %3370
        %v3372 = vsel %vm3315, %v3369, %v3371
        %v3376 = vsel %vm1032, %v3367, 0
        %3378 = vmatpush.msra.mxu0 0.0
        %3379 = vmatpush.msra.mxu0 0.0
        %3380 = vmatpush.msra.mxu0 0.0
        %3381 = vmatpush.msra.mxu0 0.0
        %3382 = vmatpush.msra.mxu0 0.0
        %3383 = vmatpush.msra.mxu0 0.0
        %3384 = vmatpush.msra.mxu0 0.0
        %3385 = vmatpush.msra.mxu0 0.0
        %3386 = vmatpush.msra.mxu0 0.0
        %3387 = vmatpush.msra.mxu0 0.0
        %3388 = vmatpush.msra.mxu0 0.0
        %3389 = vmatpush.msra.mxu0 0.0
        %3390 = vmatpush.msra.mxu0 0.0
        %3391 = vmatpush.msra.mxu0 0.0
        %3392 = vmatpush.msra.mxu0 0.0
        %3393 = vmatpush.msra.mxu0 %v3372
        %3394 = vmatmul.f32.gmra.mxu0 %v3376
        %v3395 = vpop.f32.mrf.mxu0
        %v3396 = vadd.f32 0.0, %v3395
        %3397 = vdwg.mxu0
        %3398 = vmatpush.msra.mxu0 0.0
        %3399 = vmatpush.msra.mxu0 0.0
        %3400 = vmatpush.msra.mxu0 0.0
        %3401 = vmatpush.msra.mxu0 0.0
        %3402 = vmatpush.msra.mxu0 0.0
        %3403 = vmatpush.msra.mxu0 0.0
        %3404 = vmatpush.msra.mxu0 0.0
        %3405 = vmatpush.msra.mxu0 0.0
        %3406 = vmatpush.msra.mxu0 0.0
        %3407 = vmatpush.msra.mxu0 0.0
        %3408 = vmatpush.msra.mxu0 0.0
        %3409 = vmatpush.msra.mxu0 0.0
        %3410 = vmatpush.msra.mxu0 0.0
        %3411 = vmatpush.msra.mxu0 0.0
        %3412 = vmatpush.msra.mxu0 0.0
        %3413 = vmatpush.msra.mxu0 %v3371
        %3414 = vmatmul.f32.gmra.mxu0 %v3376
        %v3415 = vpop.f32.mrf.mxu0
        %v3416 = vadd.f32 0.0, %v3415
        %3417 = vdwg.mxu0
        %v3418 = vadd.f32 %v3364, %v3396
        %v3419 = vadd.f32 %v3365, %v3416
        %s3420 = scalar_lea.vmem %s43, 12
        %v3421 = vld [vmem:[%s3420] sm:$0xf]
        %3422 = vrot.lane.b32.xlu0 %v3088, 116
        %v3423 = vpop.permute.xlu0 %3422
        %3424 = vrot.lane.b32.xlu0 %v3090, 116
        %v3425 = vpop.permute.xlu0 %3424
        %vm3426 = vcmask 949248
        %v3427 = vsel %vm3426, %v3423, %v3425
        %v3429 = vsel %vm1311, %v3421, 0
        %v3431 = vsel %vm1315, %v3427, 0
        %v3433 = vsel %vm1315, %v3425, 0
        %3435 = vmatpush.msra.mxu0 0.0
        %3436 = vmatpush.msra.mxu0 0.0
        %3437 = vmatpush.msra.mxu0 0.0
        %3438 = vmatpush.msra.mxu0 0.0
        %3439 = vmatpush.msra.mxu0 0.0
        %3440 = vmatpush.msra.mxu0 0.0
        %3441 = vmatpush.msra.mxu0 0.0
        %3442 = vmatpush.msra.mxu0 0.0
        %3443 = vmatpush.msra.mxu0 0.0
        %3444 = vmatpush.msra.mxu0 0.0
        %3445 = vmatpush.msra.mxu0 0.0
        %3446 = vmatpush.msra.mxu0 0.0
        %3447 = vmatpush.msra.mxu0 0.0
        %3448 = vmatpush.msra.mxu0 0.0
        %3449 = vmatpush.msra.mxu0 0.0
        %3450 = vmatpush.msra.mxu0 %v3431
        %3451 = vmatmul.f32.gmra.mxu0 %v3429
        %v3452 = vpop.f32.mrf.mxu0
        %v3453 = vadd.f32 0.0, %v3452
        %3454 = vdwg.mxu0
        %3455 = vmatpush.msra.mxu0 0.0
        %3456 = vmatpush.msra.mxu0 0.0
        %3457 = vmatpush.msra.mxu0 0.0
        %3458 = vmatpush.msra.mxu0 0.0
        %3459 = vmatpush.msra.mxu0 0.0
        %3460 = vmatpush.msra.mxu0 0.0
        %3461 = vmatpush.msra.mxu0 0.0
        %3462 = vmatpush.msra.mxu0 0.0
        %3463 = vmatpush.msra.mxu0 0.0
        %3464 = vmatpush.msra.mxu0 0.0
        %3465 = vmatpush.msra.mxu0 0.0
        %3466 = vmatpush.msra.mxu0 0.0
        %3467 = vmatpush.msra.mxu0 0.0
        %3468 = vmatpush.msra.mxu0 0.0
        %3469 = vmatpush.msra.mxu0 0.0
        %3470 = vmatpush.msra.mxu0 %v3433
        %3471 = vmatmul.f32.gmra.mxu0 %v3429
        %v3472 = vpop.f32.mrf.mxu0
        %v3473 = vadd.f32 0.0, %v3472
        %3474 = vdwg.mxu0
        %v3475 = vadd.f32 %v3418, %v3453
        %v3476 = vadd.f32 %v3419, %v3473
        %s3477 = scalar_lea.vmem %s45, 12
        %v3478 = vld [vmem:[%s3477] sm:$0xf]
        %3479 = vrot.lane.b32.xlu0 %v3100, 116
        %v3480 = vpop.permute.xlu0 %3479
        %3481 = vrot.lane.b32.xlu0 %v3101, 116
        %v3482 = vpop.permute.xlu0 %3481
        %v3483 = vsel %vm3426, %v3480, %v3482
        %v3487 = vsel %vm1032, %v3478, 0
        %3489 = vmatpush.msra.mxu0 0.0
        %3490 = vmatpush.msra.mxu0 0.0
        %3491 = vmatpush.msra.mxu0 0.0
        %3492 = vmatpush.msra.mxu0 0.0
        %3493 = vmatpush.msra.mxu0 0.0
        %3494 = vmatpush.msra.mxu0 0.0
        %3495 = vmatpush.msra.mxu0 0.0
        %3496 = vmatpush.msra.mxu0 0.0
        %3497 = vmatpush.msra.mxu0 0.0
        %3498 = vmatpush.msra.mxu0 0.0
        %3499 = vmatpush.msra.mxu0 0.0
        %3500 = vmatpush.msra.mxu0 0.0
        %3501 = vmatpush.msra.mxu0 0.0
        %3502 = vmatpush.msra.mxu0 0.0
        %3503 = vmatpush.msra.mxu0 0.0
        %3504 = vmatpush.msra.mxu0 %v3483
        %3505 = vmatmul.f32.gmra.mxu0 %v3487
        %v3506 = vpop.f32.mrf.mxu0
        %v3507 = vadd.f32 0.0, %v3506
        %3508 = vdwg.mxu0
        %3509 = vmatpush.msra.mxu0 0.0
        %3510 = vmatpush.msra.mxu0 0.0
        %3511 = vmatpush.msra.mxu0 0.0
        %3512 = vmatpush.msra.mxu0 0.0
        %3513 = vmatpush.msra.mxu0 0.0
        %3514 = vmatpush.msra.mxu0 0.0
        %3515 = vmatpush.msra.mxu0 0.0
        %3516 = vmatpush.msra.mxu0 0.0
        %3517 = vmatpush.msra.mxu0 0.0
        %3518 = vmatpush.msra.mxu0 0.0
        %3519 = vmatpush.msra.mxu0 0.0
        %3520 = vmatpush.msra.mxu0 0.0
        %3521 = vmatpush.msra.mxu0 0.0
        %3522 = vmatpush.msra.mxu0 0.0
        %3523 = vmatpush.msra.mxu0 0.0
        %3524 = vmatpush.msra.mxu0 %v3482
        %3525 = vmatmul.f32.gmra.mxu0 %v3487
        %v3526 = vpop.f32.mrf.mxu0
        %v3527 = vadd.f32 0.0, %v3526
        %3528 = vdwg.mxu0
        %v3529 = vadd.f32 %v3475, %v3507
        %v3530 = vadd.f32 %v3476, %v3527
        %s3531 = scalar_lea.vmem %s43, 16
        %v3532 = vld [vmem:[%s3531] sm:$0xf]
        %3533 = vrot.lane.b32.xlu0 %v3088, 115
        %v3534 = vpop.permute.xlu0 %3533
        %3535 = vrot.lane.b32.xlu0 %v3090, 115
        %v3536 = vpop.permute.xlu0 %3535
        %vm3537 = vcmask 941056
        %v3538 = vsel %vm3537, %v3534, %v3536
        %v3540 = vsel %vm1311, %v3532, 0
        %v3542 = vsel %vm1315, %v3538, 0
        %v3544 = vsel %vm1315, %v3536, 0
        %3546 = vmatpush.msra.mxu0 0.0
        %3547 = vmatpush.msra.mxu0 0.0
        %3548 = vmatpush.msra.mxu0 0.0
        %3549 = vmatpush.msra.mxu0 0.0
        %3550 = vmatpush.msra.mxu0 0.0
        %3551 = vmatpush.msra.mxu0 0.0
        %3552 = vmatpush.msra.mxu0 0.0
        %3553 = vmatpush.msra.mxu0 0.0
        %3554 = vmatpush.msra.mxu0 0.0
        %3555 = vmatpush.msra.mxu0 0.0
        %3556 = vmatpush.msra.mxu0 0.0
        %3557 = vmatpush.msra.mxu0 0.0
        %3558 = vmatpush.msra.mxu0 0.0
        %3559 = vmatpush.msra.mxu0 0.0
        %3560 = vmatpush.msra.mxu0 0.0
        %3561 = vmatpush.msra.mxu0 %v3542
        %3562 = vmatmul.f32.gmra.mxu0 %v3540
        %v3563 = vpop.f32.mrf.mxu0
        %v3564 = vadd.f32 0.0, %v3563
        %3565 = vdwg.mxu0
        %3566 = vmatpush.msra.mxu0 0.0
        %3567 = vmatpush.msra.mxu0 0.0
        %3568 = vmatpush.msra.mxu0 0.0
        %3569 = vmatpush.msra.mxu0 0.0
        %3570 = vmatpush.msra.mxu0 0.0
        %3571 = vmatpush.msra.mxu0 0.0
        %3572 = vmatpush.msra.mxu0 0.0
        %3573 = vmatpush.msra.mxu0 0.0
        %3574 = vmatpush.msra.mxu0 0.0
        %3575 = vmatpush.msra.mxu0 0.0
        %3576 = vmatpush.msra.mxu0 0.0
        %3577 = vmatpush.msra.mxu0 0.0
        %3578 = vmatpush.msra.mxu0 0.0
        %3579 = vmatpush.msra.mxu0 0.0
        %3580 = vmatpush.msra.mxu0 0.0
        %3581 = vmatpush.msra.mxu0 %v3544
        %3582 = vmatmul.f32.gmra.mxu0 %v3540
        %v3583 = vpop.f32.mrf.mxu0
        %v3584 = vadd.f32 0.0, %v3583
        %3585 = vdwg.mxu0
        %v3586 = vadd.f32 %v3529, %v3564
        %v3587 = vadd.f32 %v3530, %v3584
        %s3588 = scalar_lea.vmem %s45, 16
        %v3589 = vld [vmem:[%s3588] sm:$0xf]
        %3590 = vrot.lane.b32.xlu0 %v3100, 115
        %v3591 = vpop.permute.xlu0 %3590
        %3592 = vrot.lane.b32.xlu0 %v3101, 115
        %v3593 = vpop.permute.xlu0 %3592
        %v3594 = vsel %vm3537, %v3591, %v3593
        %v3598 = vsel %vm1032, %v3589, 0
        %3600 = vmatpush.msra.mxu0 0.0
        %3601 = vmatpush.msra.mxu0 0.0
        %3602 = vmatpush.msra.mxu0 0.0
        %3603 = vmatpush.msra.mxu0 0.0
        %3604 = vmatpush.msra.mxu0 0.0
        %3605 = vmatpush.msra.mxu0 0.0
        %3606 = vmatpush.msra.mxu0 0.0
        %3607 = vmatpush.msra.mxu0 0.0
        %3608 = vmatpush.msra.mxu0 0.0
        %3609 = vmatpush.msra.mxu0 0.0
        %3610 = vmatpush.msra.mxu0 0.0
        %3611 = vmatpush.msra.mxu0 0.0
        %3612 = vmatpush.msra.mxu0 0.0
        %3613 = vmatpush.msra.mxu0 0.0
        %3614 = vmatpush.msra.mxu0 0.0
        %3615 = vmatpush.msra.mxu0 %v3594
        %3616 = vmatmul.f32.gmra.mxu0 %v3598
        %v3617 = vpop.f32.mrf.mxu0
        %v3618 = vadd.f32 0.0, %v3617
        %3619 = vdwg.mxu0
        %3620 = vmatpush.msra.mxu0 0.0
        %3621 = vmatpush.msra.mxu0 0.0
        %3622 = vmatpush.msra.mxu0 0.0
        %3623 = vmatpush.msra.mxu0 0.0
        %3624 = vmatpush.msra.mxu0 0.0
        %3625 = vmatpush.msra.mxu0 0.0
        %3626 = vmatpush.msra.mxu0 0.0
        %3627 = vmatpush.msra.mxu0 0.0
        %3628 = vmatpush.msra.mxu0 0.0
        %3629 = vmatpush.msra.mxu0 0.0
        %3630 = vmatpush.msra.mxu0 0.0
        %3631 = vmatpush.msra.mxu0 0.0
        %3632 = vmatpush.msra.mxu0 0.0
        %3633 = vmatpush.msra.mxu0 0.0
        %3634 = vmatpush.msra.mxu0 0.0
        %3635 = vmatpush.msra.mxu0 %v3593
        %3636 = vmatmul.f32.gmra.mxu0 %v3598
        %v3637 = vpop.f32.mrf.mxu0
        %v3638 = vadd.f32 0.0, %v3637
        %3639 = vdwg.mxu0
        %v3640 = vadd.f32 %v3586, %v3618
        %v3641 = vadd.f32 %v3587, %v3638
        %s3642 = scalar_lea.vmem %s43, 20
        %v3643 = vld [vmem:[%s3642] sm:$0xf]
        %3644 = vrot.lane.b32.xlu0 %v3088, 114
        %v3645 = vpop.permute.xlu0 %3644
        %3646 = vrot.lane.b32.xlu0 %v3090, 114
        %v3647 = vpop.permute.xlu0 %3646
        %vm3648 = vcmask 932864
        %v3649 = vsel %vm3648, %v3645, %v3647
        %v3651 = vsel %vm1311, %v3643, 0
        %v3653 = vsel %vm1315, %v3649, 0
        %v3655 = vsel %vm1315, %v3647, 0
        %3657 = vmatpush.msra.mxu0 0.0
        %3658 = vmatpush.msra.mxu0 0.0
        %3659 = vmatpush.msra.mxu0 0.0
        %3660 = vmatpush.msra.mxu0 0.0
        %3661 = vmatpush.msra.mxu0 0.0
        %3662 = vmatpush.msra.mxu0 0.0
        %3663 = vmatpush.msra.mxu0 0.0
        %3664 = vmatpush.msra.mxu0 0.0
        %3665 = vmatpush.msra.mxu0 0.0
        %3666 = vmatpush.msra.mxu0 0.0
        %3667 = vmatpush.msra.mxu0 0.0
        %3668 = vmatpush.msra.mxu0 0.0
        %3669 = vmatpush.msra.mxu0 0.0
        %3670 = vmatpush.msra.mxu0 0.0
        %3671 = vmatpush.msra.mxu0 0.0
        %3672 = vmatpush.msra.mxu0 %v3653
        %3673 = vmatmul.f32.gmra.mxu0 %v3651
        %v3674 = vpop.f32.mrf.mxu0
        %v3675 = vadd.f32 0.0, %v3674
        %3676 = vdwg.mxu0
        %3677 = vmatpush.msra.mxu0 0.0
        %3678 = vmatpush.msra.mxu0 0.0
        %3679 = vmatpush.msra.mxu0 0.0
        %3680 = vmatpush.msra.mxu0 0.0
        %3681 = vmatpush.msra.mxu0 0.0
        %3682 = vmatpush.msra.mxu0 0.0
        %3683 = vmatpush.msra.mxu0 0.0
        %3684 = vmatpush.msra.mxu0 0.0
        %3685 = vmatpush.msra.mxu0 0.0
        %3686 = vmatpush.msra.mxu0 0.0
        %3687 = vmatpush.msra.mxu0 0.0
        %3688 = vmatpush.msra.mxu0 0.0
        %3689 = vmatpush.msra.mxu0 0.0
        %3690 = vmatpush.msra.mxu0 0.0
        %3691 = vmatpush.msra.mxu0 0.0
        %3692 = vmatpush.msra.mxu0 %v3655
        %3693 = vmatmul.f32.gmra.mxu0 %v3651
        %v3694 = vpop.f32.mrf.mxu0
        %v3695 = vadd.f32 0.0, %v3694
        %3696 = vdwg.mxu0
        %v3697 = vadd.f32 %v3640, %v3675
        %v3698 = vadd.f32 %v3641, %v3695
        %s3699 = scalar_lea.vmem %s45, 20
        %v3700 = vld [vmem:[%s3699] sm:$0xf]
        %3701 = vrot.lane.b32.xlu0 %v3100, 114
        %v3702 = vpop.permute.xlu0 %3701
        %3703 = vrot.lane.b32.xlu0 %v3101, 114
        %v3704 = vpop.permute.xlu0 %3703
        %v3705 = vsel %vm3648, %v3702, %v3704
        %v3709 = vsel %vm1032, %v3700, 0
        %3711 = vmatpush.msra.mxu0 0.0
        %3712 = vmatpush.msra.mxu0 0.0
        %3713 = vmatpush.msra.mxu0 0.0
        %3714 = vmatpush.msra.mxu0 0.0
        %3715 = vmatpush.msra.mxu0 0.0
        %3716 = vmatpush.msra.mxu0 0.0
        %3717 = vmatpush.msra.mxu0 0.0
        %3718 = vmatpush.msra.mxu0 0.0
        %3719 = vmatpush.msra.mxu0 0.0
        %3720 = vmatpush.msra.mxu0 0.0
        %3721 = vmatpush.msra.mxu0 0.0
        %3722 = vmatpush.msra.mxu0 0.0
        %3723 = vmatpush.msra.mxu0 0.0
        %3724 = vmatpush.msra.mxu0 0.0
        %3725 = vmatpush.msra.mxu0 0.0
        %3726 = vmatpush.msra.mxu0 %v3705
        %3727 = vmatmul.f32.gmra.mxu0 %v3709
        %v3728 = vpop.f32.mrf.mxu0
        %v3729 = vadd.f32 0.0, %v3728
        %3730 = vdwg.mxu0
        %3731 = vmatpush.msra.mxu0 0.0
        %3732 = vmatpush.msra.mxu0 0.0
        %3733 = vmatpush.msra.mxu0 0.0
        %3734 = vmatpush.msra.mxu0 0.0
        %3735 = vmatpush.msra.mxu0 0.0
        %3736 = vmatpush.msra.mxu0 0.0
        %3737 = vmatpush.msra.mxu0 0.0
        %3738 = vmatpush.msra.mxu0 0.0
        %3739 = vmatpush.msra.mxu0 0.0
        %3740 = vmatpush.msra.mxu0 0.0
        %3741 = vmatpush.msra.mxu0 0.0
        %3742 = vmatpush.msra.mxu0 0.0
        %3743 = vmatpush.msra.mxu0 0.0
        %3744 = vmatpush.msra.mxu0 0.0
        %3745 = vmatpush.msra.mxu0 0.0
        %3746 = vmatpush.msra.mxu0 %v3704
        %3747 = vmatmul.f32.gmra.mxu0 %v3709
        %v3748 = vpop.f32.mrf.mxu0
        %v3749 = vadd.f32 0.0, %v3748
        %3750 = vdwg.mxu0
        %v3751 = vadd.f32 %v3697, %v3729
        %v3752 = vadd.f32 %v3698, %v3749
        %s3753 = scalar_lea.vmem %s43, 24
        %v3754 = vld [vmem:[%s3753] sm:$0xf]
        %3755 = vrot.lane.b32.xlu0 %v3088, 104
        %v3756 = vpop.permute.xlu0 %3755
        %3757 = vrot.lane.b32.xlu0 %v3090, 104
        %v3758 = vpop.permute.xlu0 %3757
        %vm3759 = vcmask 850944
        %v3760 = vsel %vm3759, %v3756, %v3758
        %v3762 = vsel %vm1311, %v3754, 0
        %v3764 = vsel %vm1315, %v3760, 0
        %v3766 = vsel %vm1315, %v3758, 0
        %3768 = vmatpush.msra.mxu0 0.0
        %3769 = vmatpush.msra.mxu0 0.0
        %3770 = vmatpush.msra.mxu0 0.0
        %3771 = vmatpush.msra.mxu0 0.0
        %3772 = vmatpush.msra.mxu0 0.0
        %3773 = vmatpush.msra.mxu0 0.0
        %3774 = vmatpush.msra.mxu0 0.0
        %3775 = vmatpush.msra.mxu0 0.0
        %3776 = vmatpush.msra.mxu0 0.0
        %3777 = vmatpush.msra.mxu0 0.0
        %3778 = vmatpush.msra.mxu0 0.0
        %3779 = vmatpush.msra.mxu0 0.0
        %3780 = vmatpush.msra.mxu0 0.0
        %3781 = vmatpush.msra.mxu0 0.0
        %3782 = vmatpush.msra.mxu0 0.0
        %3783 = vmatpush.msra.mxu0 %v3764
        %3784 = vmatmul.f32.gmra.mxu0 %v3762
        %v3785 = vpop.f32.mrf.mxu0
        %v3786 = vadd.f32 0.0, %v3785
        %3787 = vdwg.mxu0
        %3788 = vmatpush.msra.mxu0 0.0
        %3789 = vmatpush.msra.mxu0 0.0
        %3790 = vmatpush.msra.mxu0 0.0
        %3791 = vmatpush.msra.mxu0 0.0
        %3792 = vmatpush.msra.mxu0 0.0
        %3793 = vmatpush.msra.mxu0 0.0
        %3794 = vmatpush.msra.mxu0 0.0
        %3795 = vmatpush.msra.mxu0 0.0
        %3796 = vmatpush.msra.mxu0 0.0
        %3797 = vmatpush.msra.mxu0 0.0
        %3798 = vmatpush.msra.mxu0 0.0
        %3799 = vmatpush.msra.mxu0 0.0
        %3800 = vmatpush.msra.mxu0 0.0
        %3801 = vmatpush.msra.mxu0 0.0
        %3802 = vmatpush.msra.mxu0 0.0
        %3803 = vmatpush.msra.mxu0 %v3766
        %3804 = vmatmul.f32.gmra.mxu0 %v3762
        %v3805 = vpop.f32.mrf.mxu0
        %v3806 = vadd.f32 0.0, %v3805
        %3807 = vdwg.mxu0
        %v3808 = vadd.f32 %v3751, %v3786
        %v3809 = vadd.f32 %v3752, %v3806
        %s3810 = scalar_lea.vmem %s45, 24
        %v3811 = vld [vmem:[%s3810] sm:$0xf]
        %3812 = vrot.lane.b32.xlu0 %v3100, 104
        %v3813 = vpop.permute.xlu0 %3812
        %3814 = vrot.lane.b32.xlu0 %v3101, 104
        %v3815 = vpop.permute.xlu0 %3814
        %v3816 = vsel %vm3759, %v3813, %v3815
        %v3820 = vsel %vm1032, %v3811, 0
        %3822 = vmatpush.msra.mxu0 0.0
        %3823 = vmatpush.msra.mxu0 0.0
        %3824 = vmatpush.msra.mxu0 0.0
        %3825 = vmatpush.msra.mxu0 0.0
        %3826 = vmatpush.msra.mxu0 0.0
        %3827 = vmatpush.msra.mxu0 0.0
        %3828 = vmatpush.msra.mxu0 0.0
        %3829 = vmatpush.msra.mxu0 0.0
        %3830 = vmatpush.msra.mxu0 0.0
        %3831 = vmatpush.msra.mxu0 0.0
        %3832 = vmatpush.msra.mxu0 0.0
        %3833 = vmatpush.msra.mxu0 0.0
        %3834 = vmatpush.msra.mxu0 0.0
        %3835 = vmatpush.msra.mxu0 0.0
        %3836 = vmatpush.msra.mxu0 0.0
        %3837 = vmatpush.msra.mxu0 %v3816
        %3838 = vmatmul.f32.gmra.mxu0 %v3820
        %v3839 = vpop.f32.mrf.mxu0
        %v3840 = vadd.f32 0.0, %v3839
        %3841 = vdwg.mxu0
        %3842 = vmatpush.msra.mxu0 0.0
        %3843 = vmatpush.msra.mxu0 0.0
        %3844 = vmatpush.msra.mxu0 0.0
        %3845 = vmatpush.msra.mxu0 0.0
        %3846 = vmatpush.msra.mxu0 0.0
        %3847 = vmatpush.msra.mxu0 0.0
        %3848 = vmatpush.msra.mxu0 0.0
        %3849 = vmatpush.msra.mxu0 0.0
        %3850 = vmatpush.msra.mxu0 0.0
        %3851 = vmatpush.msra.mxu0 0.0
        %3852 = vmatpush.msra.mxu0 0.0
        %3853 = vmatpush.msra.mxu0 0.0
        %3854 = vmatpush.msra.mxu0 0.0
        %3855 = vmatpush.msra.mxu0 0.0
        %3856 = vmatpush.msra.mxu0 0.0
        %3857 = vmatpush.msra.mxu0 %v3815
        %3858 = vmatmul.f32.gmra.mxu0 %v3820
        %v3859 = vpop.f32.mrf.mxu0
        %v3860 = vadd.f32 0.0, %v3859
        %3861 = vdwg.mxu0
        %v3862 = vadd.f32 %v3808, %v3840
        %v3863 = vadd.f32 %v3809, %v3860
        %s3864 = scalar_lea.vmem %s43, 28
        %v3865 = vld [vmem:[%s3864] sm:$0xf]
        %3866 = vrot.lane.b32.xlu0 %v3088, 103
        %v3867 = vpop.permute.xlu0 %3866
        %3868 = vrot.lane.b32.xlu0 %v3090, 103
        %v3869 = vpop.permute.xlu0 %3868
        %vm3870 = vcmask 842752
        %v3871 = vsel %vm3870, %v3867, %v3869
        %v3873 = vsel %vm1311, %v3865, 0
        %v3875 = vsel %vm1315, %v3871, 0
        %v3877 = vsel %vm1315, %v3869, 0
        %3879 = vmatpush.msra.mxu0 0.0
        %3880 = vmatpush.msra.mxu0 0.0
        %3881 = vmatpush.msra.mxu0 0.0
        %3882 = vmatpush.msra.mxu0 0.0
        %3883 = vmatpush.msra.mxu0 0.0
        %3884 = vmatpush.msra.mxu0 0.0
        %3885 = vmatpush.msra.mxu0 0.0
        %3886 = vmatpush.msra.mxu0 0.0
        %3887 = vmatpush.msra.mxu0 0.0
        %3888 = vmatpush.msra.mxu0 0.0
        %3889 = vmatpush.msra.mxu0 0.0
        %3890 = vmatpush.msra.mxu0 0.0
        %3891 = vmatpush.msra.mxu0 0.0
        %3892 = vmatpush.msra.mxu0 0.0
        %3893 = vmatpush.msra.mxu0 0.0
        %3894 = vmatpush.msra.mxu0 %v3875
        %3895 = vmatmul.f32.gmra.mxu0 %v3873
        %v3896 = vpop.f32.mrf.mxu0
        %v3897 = vadd.f32 0.0, %v3896
        %3898 = vdwg.mxu0
        %3899 = vmatpush.msra.mxu0 0.0
        %3900 = vmatpush.msra.mxu0 0.0
        %3901 = vmatpush.msra.mxu0 0.0
        %3902 = vmatpush.msra.mxu0 0.0
        %3903 = vmatpush.msra.mxu0 0.0
        %3904 = vmatpush.msra.mxu0 0.0
        %3905 = vmatpush.msra.mxu0 0.0
        %3906 = vmatpush.msra.mxu0 0.0
        %3907 = vmatpush.msra.mxu0 0.0
        %3908 = vmatpush.msra.mxu0 0.0
        %3909 = vmatpush.msra.mxu0 0.0
        %3910 = vmatpush.msra.mxu0 0.0
        %3911 = vmatpush.msra.mxu0 0.0
        %3912 = vmatpush.msra.mxu0 0.0
        %3913 = vmatpush.msra.mxu0 0.0
        %3914 = vmatpush.msra.mxu0 %v3877
        %3915 = vmatmul.f32.gmra.mxu0 %v3873
        %v3916 = vpop.f32.mrf.mxu0
        %v3917 = vadd.f32 0.0, %v3916
        %3918 = vdwg.mxu0
        %v3919 = vadd.f32 %v3862, %v3897
        %v3920 = vadd.f32 %v3863, %v3917
        %s3921 = scalar_lea.vmem %s45, 28
        %v3922 = vld [vmem:[%s3921] sm:$0xf]
        %3923 = vrot.lane.b32.xlu0 %v3100, 103
        %v3924 = vpop.permute.xlu0 %3923
        %3925 = vrot.lane.b32.xlu0 %v3101, 103
        %v3926 = vpop.permute.xlu0 %3925
        %v3927 = vsel %vm3870, %v3924, %v3926
        %v3931 = vsel %vm1032, %v3922, 0
        %3933 = vmatpush.msra.mxu0 0.0
        %3934 = vmatpush.msra.mxu0 0.0
        %3935 = vmatpush.msra.mxu0 0.0
        %3936 = vmatpush.msra.mxu0 0.0
        %3937 = vmatpush.msra.mxu0 0.0
        %3938 = vmatpush.msra.mxu0 0.0
        %3939 = vmatpush.msra.mxu0 0.0
        %3940 = vmatpush.msra.mxu0 0.0
        %3941 = vmatpush.msra.mxu0 0.0
        %3942 = vmatpush.msra.mxu0 0.0
        %3943 = vmatpush.msra.mxu0 0.0
        %3944 = vmatpush.msra.mxu0 0.0
        %3945 = vmatpush.msra.mxu0 0.0
        %3946 = vmatpush.msra.mxu0 0.0
        %3947 = vmatpush.msra.mxu0 0.0
        %3948 = vmatpush.msra.mxu0 %v3927
        %3949 = vmatmul.f32.gmra.mxu0 %v3931
        %v3950 = vpop.f32.mrf.mxu0
        %v3951 = vadd.f32 0.0, %v3950
        %3952 = vdwg.mxu0
        %3953 = vmatpush.msra.mxu0 0.0
        %3954 = vmatpush.msra.mxu0 0.0
        %3955 = vmatpush.msra.mxu0 0.0
        %3956 = vmatpush.msra.mxu0 0.0
        %3957 = vmatpush.msra.mxu0 0.0
        %3958 = vmatpush.msra.mxu0 0.0
        %3959 = vmatpush.msra.mxu0 0.0
        %3960 = vmatpush.msra.mxu0 0.0
        %3961 = vmatpush.msra.mxu0 0.0
        %3962 = vmatpush.msra.mxu0 0.0
        %3963 = vmatpush.msra.mxu0 0.0
        %3964 = vmatpush.msra.mxu0 0.0
        %3965 = vmatpush.msra.mxu0 0.0
        %3966 = vmatpush.msra.mxu0 0.0
        %3967 = vmatpush.msra.mxu0 0.0
        %3968 = vmatpush.msra.mxu0 %v3926
        %3969 = vmatmul.f32.gmra.mxu0 %v3931
        %v3970 = vpop.f32.mrf.mxu0
        %v3971 = vadd.f32 0.0, %v3970
        %3972 = vdwg.mxu0
        %v3973 = vadd.f32 %v3919, %v3951
        %v3974 = vadd.f32 %v3920, %v3971
        %s3975 = scalar_lea.vmem %s43, 32
        %v3976 = vld [vmem:[%s3975] sm:$0xf]
        %3977 = vrot.lane.b32.xlu0 %v3088, 102
        %v3978 = vpop.permute.xlu0 %3977
        %3979 = vrot.lane.b32.xlu0 %v3090, 102
        %v3980 = vpop.permute.xlu0 %3979
        %vm3981 = vcmask 834560
        %v3982 = vsel %vm3981, %v3978, %v3980
        %v3984 = vsel %vm1311, %v3976, 0
        %v3986 = vsel %vm1315, %v3982, 0
        %v3988 = vsel %vm1315, %v3980, 0
        %3990 = vmatpush.msra.mxu0 0.0
        %3991 = vmatpush.msra.mxu0 0.0
        %3992 = vmatpush.msra.mxu0 0.0
        %3993 = vmatpush.msra.mxu0 0.0
        %3994 = vmatpush.msra.mxu0 0.0
        %3995 = vmatpush.msra.mxu0 0.0
        %3996 = vmatpush.msra.mxu0 0.0
        %3997 = vmatpush.msra.mxu0 0.0
        %3998 = vmatpush.msra.mxu0 0.0
        %3999 = vmatpush.msra.mxu0 0.0
        %4000 = vmatpush.msra.mxu0 0.0
        %4001 = vmatpush.msra.mxu0 0.0
        %4002 = vmatpush.msra.mxu0 0.0
        %4003 = vmatpush.msra.mxu0 0.0
        %4004 = vmatpush.msra.mxu0 0.0
        %4005 = vmatpush.msra.mxu0 %v3986
        %4006 = vmatmul.f32.gmra.mxu0 %v3984
        %v4007 = vpop.f32.mrf.mxu0
        %v4008 = vadd.f32 0.0, %v4007
        %4009 = vdwg.mxu0
        %4010 = vmatpush.msra.mxu0 0.0
        %4011 = vmatpush.msra.mxu0 0.0
        %4012 = vmatpush.msra.mxu0 0.0
        %4013 = vmatpush.msra.mxu0 0.0
        %4014 = vmatpush.msra.mxu0 0.0
        %4015 = vmatpush.msra.mxu0 0.0
        %4016 = vmatpush.msra.mxu0 0.0
        %4017 = vmatpush.msra.mxu0 0.0
        %4018 = vmatpush.msra.mxu0 0.0
        %4019 = vmatpush.msra.mxu0 0.0
        %4020 = vmatpush.msra.mxu0 0.0
        %4021 = vmatpush.msra.mxu0 0.0
        %4022 = vmatpush.msra.mxu0 0.0
        %4023 = vmatpush.msra.mxu0 0.0
        %4024 = vmatpush.msra.mxu0 0.0
        %4025 = vmatpush.msra.mxu0 %v3988
        %4026 = vmatmul.f32.gmra.mxu0 %v3984
        %v4027 = vpop.f32.mrf.mxu0
        %v4028 = vadd.f32 0.0, %v4027
        %4029 = vdwg.mxu0
        %v4030 = vadd.f32 %v3973, %v4008
        %v4031 = vadd.f32 %v3974, %v4028
        %s4032 = scalar_lea.vmem %s45, 32
        %v4033 = vld [vmem:[%s4032] sm:$0xf]
        %4034 = vrot.lane.b32.xlu0 %v3100, 102
        %v4035 = vpop.permute.xlu0 %4034
        %4036 = vrot.lane.b32.xlu0 %v3101, 102
        %v4037 = vpop.permute.xlu0 %4036
        %v4038 = vsel %vm3981, %v4035, %v4037
        %v4042 = vsel %vm1032, %v4033, 0
        %4044 = vmatpush.msra.mxu0 0.0
        %4045 = vmatpush.msra.mxu0 0.0
        %4046 = vmatpush.msra.mxu0 0.0
        %4047 = vmatpush.msra.mxu0 0.0
        %4048 = vmatpush.msra.mxu0 0.0
        %4049 = vmatpush.msra.mxu0 0.0
        %4050 = vmatpush.msra.mxu0 0.0
        %4051 = vmatpush.msra.mxu0 0.0
        %4052 = vmatpush.msra.mxu0 0.0
        %4053 = vmatpush.msra.mxu0 0.0
        %4054 = vmatpush.msra.mxu0 0.0
        %4055 = vmatpush.msra.mxu0 0.0
        %4056 = vmatpush.msra.mxu0 0.0
        %4057 = vmatpush.msra.mxu0 0.0
        %4058 = vmatpush.msra.mxu0 0.0
        %4059 = vmatpush.msra.mxu0 %v4038
        %4060 = vmatmul.f32.gmra.mxu0 %v4042
        %v4061 = vpop.f32.mrf.mxu0
        %v4062 = vadd.f32 0.0, %v4061
        %4063 = vdwg.mxu0
        %4064 = vmatpush.msra.mxu0 0.0
        %4065 = vmatpush.msra.mxu0 0.0
        %4066 = vmatpush.msra.mxu0 0.0
        %4067 = vmatpush.msra.mxu0 0.0
        %4068 = vmatpush.msra.mxu0 0.0
        %4069 = vmatpush.msra.mxu0 0.0
        %4070 = vmatpush.msra.mxu0 0.0
        %4071 = vmatpush.msra.mxu0 0.0
        %4072 = vmatpush.msra.mxu0 0.0
        %4073 = vmatpush.msra.mxu0 0.0
        %4074 = vmatpush.msra.mxu0 0.0
        %4075 = vmatpush.msra.mxu0 0.0
        %4076 = vmatpush.msra.mxu0 0.0
        %4077 = vmatpush.msra.mxu0 0.0
        %4078 = vmatpush.msra.mxu0 0.0
        %4079 = vmatpush.msra.mxu0 %v4037
        %4080 = vmatmul.f32.gmra.mxu0 %v4042
        %v4081 = vpop.f32.mrf.mxu0
        %v4082 = vadd.f32 0.0, %v4081
        %4083 = vdwg.mxu0
        %v4084 = vadd.f32 %v4030, %v4062
        %v4085 = vadd.f32 %v4031, %v4082
        %v4086 = vld [vmem:[%s47] sm:$0xf]
        %4088 = vset.pattern.permute.xlu0 0
        %4089 = vperm.xlu0 %4088, %v4086
        %v4090 = vpop.permute.xlu0 %4089
        %v4092 = vadd.f32 %v4084, %v4090
        %v4093 = vadd.f32 %v4085, %v4090
        %vm4094 = vcmp.ge.f32.partialorder %v4092, 0.0
        %vm4095 = vcmp.ge.f32.partialorder %v4093, 0.0
        %v4096 = vmul.f32 %v4092, 0.2
        %v4097 = vmul.f32 %v4093, 0.2
        %v4098 = vsel %vm4094, %v4092, %v4096
        %v4099 = vsel %vm4095, %v4093, %v4097
        %v4101 = vperm.slane %v1016, 0
        %v4102 = vperm.slane %v1016, 1
        %v4105 = vmul.f32 %v4098, %v4101
        %v4106 = vmul.f32 %v4099, %v4102
        %vm4107 = vcmp.ge.f32.partialorder %v4105, 0.0
        %vm4108 = vcmp.ge.f32.partialorder %v4106, 0.0
        %v4109 = vmul.f32 %v4105, 0.2
        %v4110 = vmul.f32 %v4106, 0.2
        %v4111 = vsel %vm4107, %v4105, %v4109
        %v4112 = vsel %vm4108, %v4106, %v4110
        %4115 = vrot.lane.b32.xlu0 %v4111, 13
        %v4116 = vpop.permute.xlu0 %4115
        %4117 = vrot.lane.b32.xlu0 %v4112, 13
        %v4118 = vpop.permute.xlu0 %4117
        %v4119 = vsel %vm3084, %v4116, %v4118
        %v4122 = vsel %vm3084, 0.0, %v4116
        %v4123 = vsel %vm3089, %v4119, 0.0
        %v4124 = vld [vmem:[%s49] sm:$0xf]
        %s4125 = scalar_lea.vmem %s49, 4
        %v4126 = vld [vmem:[%s4125] sm:$0xf]
        %4129 = vrot.lane.b32.xlu0 %v4122, 127
        %v4130 = vpop.permute.xlu0 %4129
        %4131 = vrot.lane.b32.xlu0 %v4123, 127
        %v4132 = vpop.permute.xlu0 %4131
        %v4133 = vsel %vm3202, %v4130, %v4132
        %v4135 = vsel %vm1311, %v4126, 0
        %v4137 = vsel %vm1315, %v4133, 0
        %v4139 = vsel %vm1315, %v4132, 0
        %4141 = vmatpush.msra.mxu0 0.0
        %4142 = vmatpush.msra.mxu0 0.0
        %4143 = vmatpush.msra.mxu0 0.0
        %4144 = vmatpush.msra.mxu0 0.0
        %4145 = vmatpush.msra.mxu0 0.0
        %4146 = vmatpush.msra.mxu0 0.0
        %4147 = vmatpush.msra.mxu0 0.0
        %4148 = vmatpush.msra.mxu0 0.0
        %4149 = vmatpush.msra.mxu0 0.0
        %4150 = vmatpush.msra.mxu0 0.0
        %4151 = vmatpush.msra.mxu0 0.0
        %4152 = vmatpush.msra.mxu0 0.0
        %4153 = vmatpush.msra.mxu0 0.0
        %4154 = vmatpush.msra.mxu0 0.0
        %4155 = vmatpush.msra.mxu0 0.0
        %4156 = vmatpush.msra.mxu0 %v4137
        %4157 = vmatmul.f32.gmra.mxu0 %v4135
        %v4158 = vpop.f32.mrf.mxu0
        %v4159 = vadd.f32 0.0, %v4158
        %4160 = vdwg.mxu0
        %4161 = vmatpush.msra.mxu0 0.0
        %4162 = vmatpush.msra.mxu0 0.0
        %4163 = vmatpush.msra.mxu0 0.0
        %4164 = vmatpush.msra.mxu0 0.0
        %4165 = vmatpush.msra.mxu0 0.0
        %4166 = vmatpush.msra.mxu0 0.0
        %4167 = vmatpush.msra.mxu0 0.0
        %4168 = vmatpush.msra.mxu0 0.0
        %4169 = vmatpush.msra.mxu0 0.0
        %4170 = vmatpush.msra.mxu0 0.0
        %4171 = vmatpush.msra.mxu0 0.0
        %4172 = vmatpush.msra.mxu0 0.0
        %4173 = vmatpush.msra.mxu0 0.0
        %4174 = vmatpush.msra.mxu0 0.0
        %4175 = vmatpush.msra.mxu0 0.0
        %4176 = vmatpush.msra.mxu0 %v4139
        %4177 = vmatmul.f32.gmra.mxu0 %v4135
        %v4178 = vpop.f32.mrf.mxu0
        %v4179 = vadd.f32 0.0, %v4178
        %4180 = vdwg.mxu0
        %v4182 = vsel %vm1311, %v4124, 0
        %v4184 = vsel %vm1315, %v4122, 0
        %v4186 = vsel %vm1315, %v4123, 0
        %4188 = vmatpush.msra.mxu0 0.0
        %4189 = vmatpush.msra.mxu0 0.0
        %4190 = vmatpush.msra.mxu0 0.0
        %4191 = vmatpush.msra.mxu0 0.0
        %4192 = vmatpush.msra.mxu0 0.0
        %4193 = vmatpush.msra.mxu0 0.0
        %4194 = vmatpush.msra.mxu0 0.0
        %4195 = vmatpush.msra.mxu0 0.0
        %4196 = vmatpush.msra.mxu0 0.0
        %4197 = vmatpush.msra.mxu0 0.0
        %4198 = vmatpush.msra.mxu0 0.0
        %4199 = vmatpush.msra.mxu0 0.0
        %4200 = vmatpush.msra.mxu0 0.0
        %4201 = vmatpush.msra.mxu0 0.0
        %4202 = vmatpush.msra.mxu0 0.0
        %4203 = vmatpush.msra.mxu0 %v4184
        %4204 = vmatmul.f32.gmra.mxu0 %v4182
        %v4205 = vpop.f32.mrf.mxu0
        %v4206 = vadd.f32 %v4159, %v4205
        %4207 = vdwg.mxu0
        %4208 = vmatpush.msra.mxu0 0.0
        %4209 = vmatpush.msra.mxu0 0.0
        %4210 = vmatpush.msra.mxu0 0.0
        %4211 = vmatpush.msra.mxu0 0.0
        %4212 = vmatpush.msra.mxu0 0.0
        %4213 = vmatpush.msra.mxu0 0.0
        %4214 = vmatpush.msra.mxu0 0.0
        %4215 = vmatpush.msra.mxu0 0.0
        %4216 = vmatpush.msra.mxu0 0.0
        %4217 = vmatpush.msra.mxu0 0.0
        %4218 = vmatpush.msra.mxu0 0.0
        %4219 = vmatpush.msra.mxu0 0.0
        %4220 = vmatpush.msra.mxu0 0.0
        %4221 = vmatpush.msra.mxu0 0.0
        %4222 = vmatpush.msra.mxu0 0.0
        %4223 = vmatpush.msra.mxu0 %v4186
        %4224 = vmatmul.f32.gmra.mxu0 %v4182
        %v4225 = vpop.f32.mrf.mxu0
        %v4226 = vadd.f32 %v4179, %v4225
        %4227 = vdwg.mxu0
        %s4228 = scalar_lea.vmem %s49, 8
        %v4229 = vld [vmem:[%s4228] sm:$0xf]
        %4230 = vrot.lane.b32.xlu0 %v4122, 126
        %v4231 = vpop.permute.xlu0 %4230
        %4232 = vrot.lane.b32.xlu0 %v4123, 126
        %v4233 = vpop.permute.xlu0 %4232
        %v4234 = vsel %vm3315, %v4231, %v4233
        %v4236 = vsel %vm1311, %v4229, 0
        %v4238 = vsel %vm1315, %v4234, 0
        %v4240 = vsel %vm1315, %v4233, 0
        %4242 = vmatpush.msra.mxu0 0.0
        %4243 = vmatpush.msra.mxu0 0.0
        %4244 = vmatpush.msra.mxu0 0.0
        %4245 = vmatpush.msra.mxu0 0.0
        %4246 = vmatpush.msra.mxu0 0.0
        %4247 = vmatpush.msra.mxu0 0.0
        %4248 = vmatpush.msra.mxu0 0.0
        %4249 = vmatpush.msra.mxu0 0.0
        %4250 = vmatpush.msra.mxu0 0.0
        %4251 = vmatpush.msra.mxu0 0.0
        %4252 = vmatpush.msra.mxu0 0.0
        %4253 = vmatpush.msra.mxu0 0.0
        %4254 = vmatpush.msra.mxu0 0.0
        %4255 = vmatpush.msra.mxu0 0.0
        %4256 = vmatpush.msra.mxu0 0.0
        %4257 = vmatpush.msra.mxu0 %v4238
        %4258 = vmatmul.f32.gmra.mxu0 %v4236
        %v4259 = vpop.f32.mrf.mxu0
        %v4260 = vadd.f32 0.0, %v4259
        %4261 = vdwg.mxu0
        %4262 = vmatpush.msra.mxu0 0.0
        %4263 = vmatpush.msra.mxu0 0.0
        %4264 = vmatpush.msra.mxu0 0.0
        %4265 = vmatpush.msra.mxu0 0.0
        %4266 = vmatpush.msra.mxu0 0.0
        %4267 = vmatpush.msra.mxu0 0.0
        %4268 = vmatpush.msra.mxu0 0.0
        %4269 = vmatpush.msra.mxu0 0.0
        %4270 = vmatpush.msra.mxu0 0.0
        %4271 = vmatpush.msra.mxu0 0.0
        %4272 = vmatpush.msra.mxu0 0.0
        %4273 = vmatpush.msra.mxu0 0.0
        %4274 = vmatpush.msra.mxu0 0.0
        %4275 = vmatpush.msra.mxu0 0.0
        %4276 = vmatpush.msra.mxu0 0.0
        %4277 = vmatpush.msra.mxu0 %v4240
        %4278 = vmatmul.f32.gmra.mxu0 %v4236
        %v4279 = vpop.f32.mrf.mxu0
        %v4280 = vadd.f32 0.0, %v4279
        %4281 = vdwg.mxu0
        %v4282 = vadd.f32 %v4206, %v4260
        %v4283 = vadd.f32 %v4226, %v4280
        %s4284 = scalar_lea.vmem %s49, 12
        %v4285 = vld [vmem:[%s4284] sm:$0xf]
        %4286 = vrot.lane.b32.xlu0 %v4122, 116
        %v4287 = vpop.permute.xlu0 %4286
        %4288 = vrot.lane.b32.xlu0 %v4123, 116
        %v4289 = vpop.permute.xlu0 %4288
        %v4290 = vsel %vm3426, %v4287, %v4289
        %v4292 = vsel %vm1311, %v4285, 0
        %v4294 = vsel %vm1315, %v4290, 0
        %v4296 = vsel %vm1315, %v4289, 0
        %4298 = vmatpush.msra.mxu0 0.0
        %4299 = vmatpush.msra.mxu0 0.0
        %4300 = vmatpush.msra.mxu0 0.0
        %4301 = vmatpush.msra.mxu0 0.0
        %4302 = vmatpush.msra.mxu0 0.0
        %4303 = vmatpush.msra.mxu0 0.0
        %4304 = vmatpush.msra.mxu0 0.0
        %4305 = vmatpush.msra.mxu0 0.0
        %4306 = vmatpush.msra.mxu0 0.0
        %4307 = vmatpush.msra.mxu0 0.0
        %4308 = vmatpush.msra.mxu0 0.0
        %4309 = vmatpush.msra.mxu0 0.0
        %4310 = vmatpush.msra.mxu0 0.0
        %4311 = vmatpush.msra.mxu0 0.0
        %4312 = vmatpush.msra.mxu0 0.0
        %4313 = vmatpush.msra.mxu0 %v4294
        %4314 = vmatmul.f32.gmra.mxu0 %v4292
        %v4315 = vpop.f32.mrf.mxu0
        %v4316 = vadd.f32 0.0, %v4315
        %4317 = vdwg.mxu0
        %4318 = vmatpush.msra.mxu0 0.0
        %4319 = vmatpush.msra.mxu0 0.0
        %4320 = vmatpush.msra.mxu0 0.0
        %4321 = vmatpush.msra.mxu0 0.0
        %4322 = vmatpush.msra.mxu0 0.0
        %4323 = vmatpush.msra.mxu0 0.0
        %4324 = vmatpush.msra.mxu0 0.0
        %4325 = vmatpush.msra.mxu0 0.0
        %4326 = vmatpush.msra.mxu0 0.0
        %4327 = vmatpush.msra.mxu0 0.0
        %4328 = vmatpush.msra.mxu0 0.0
        %4329 = vmatpush.msra.mxu0 0.0
        %4330 = vmatpush.msra.mxu0 0.0
        %4331 = vmatpush.msra.mxu0 0.0
        %4332 = vmatpush.msra.mxu0 0.0
        %4333 = vmatpush.msra.mxu0 %v4296
        %4334 = vmatmul.f32.gmra.mxu0 %v4292
        %v4335 = vpop.f32.mrf.mxu0
        %v4336 = vadd.f32 0.0, %v4335
        %4337 = vdwg.mxu0
        %v4338 = vadd.f32 %v4282, %v4316
        %v4339 = vadd.f32 %v4283, %v4336
        %s4340 = scalar_lea.vmem %s49, 16
        %v4341 = vld [vmem:[%s4340] sm:$0xf]
        %4342 = vrot.lane.b32.xlu0 %v4122, 115
        %v4343 = vpop.permute.xlu0 %4342
        %4344 = vrot.lane.b32.xlu0 %v4123, 115
        %v4345 = vpop.permute.xlu0 %4344
        %v4346 = vsel %vm3537, %v4343, %v4345
        %v4348 = vsel %vm1311, %v4341, 0
        %v4350 = vsel %vm1315, %v4346, 0
        %v4352 = vsel %vm1315, %v4345, 0
        %4354 = vmatpush.msra.mxu0 0.0
        %4355 = vmatpush.msra.mxu0 0.0
        %4356 = vmatpush.msra.mxu0 0.0
        %4357 = vmatpush.msra.mxu0 0.0
        %4358 = vmatpush.msra.mxu0 0.0
        %4359 = vmatpush.msra.mxu0 0.0
        %4360 = vmatpush.msra.mxu0 0.0
        %4361 = vmatpush.msra.mxu0 0.0
        %4362 = vmatpush.msra.mxu0 0.0
        %4363 = vmatpush.msra.mxu0 0.0
        %4364 = vmatpush.msra.mxu0 0.0
        %4365 = vmatpush.msra.mxu0 0.0
        %4366 = vmatpush.msra.mxu0 0.0
        %4367 = vmatpush.msra.mxu0 0.0
        %4368 = vmatpush.msra.mxu0 0.0
        %4369 = vmatpush.msra.mxu0 %v4350
        %4370 = vmatmul.f32.gmra.mxu0 %v4348
        %v4371 = vpop.f32.mrf.mxu0
        %v4372 = vadd.f32 0.0, %v4371
        %4373 = vdwg.mxu0
        %4374 = vmatpush.msra.mxu0 0.0
        %4375 = vmatpush.msra.mxu0 0.0
        %4376 = vmatpush.msra.mxu0 0.0
        %4377 = vmatpush.msra.mxu0 0.0
        %4378 = vmatpush.msra.mxu0 0.0
        %4379 = vmatpush.msra.mxu0 0.0
        %4380 = vmatpush.msra.mxu0 0.0
        %4381 = vmatpush.msra.mxu0 0.0
        %4382 = vmatpush.msra.mxu0 0.0
        %4383 = vmatpush.msra.mxu0 0.0
        %4384 = vmatpush.msra.mxu0 0.0
        %4385 = vmatpush.msra.mxu0 0.0
        %4386 = vmatpush.msra.mxu0 0.0
        %4387 = vmatpush.msra.mxu0 0.0
        %4388 = vmatpush.msra.mxu0 0.0
        %4389 = vmatpush.msra.mxu0 %v4352
        %4390 = vmatmul.f32.gmra.mxu0 %v4348
        %v4391 = vpop.f32.mrf.mxu0
        %v4392 = vadd.f32 0.0, %v4391
        %4393 = vdwg.mxu0
        %v4394 = vadd.f32 %v4338, %v4372
        %v4395 = vadd.f32 %v4339, %v4392
        %s4396 = scalar_lea.vmem %s49, 20
        %v4397 = vld [vmem:[%s4396] sm:$0xf]
        %4398 = vrot.lane.b32.xlu0 %v4122, 114
        %v4399 = vpop.permute.xlu0 %4398
        %4400 = vrot.lane.b32.xlu0 %v4123, 114
        %v4401 = vpop.permute.xlu0 %4400
        %v4402 = vsel %vm3648, %v4399, %v4401
        %v4404 = vsel %vm1311, %v4397, 0
        %v4406 = vsel %vm1315, %v4402, 0
        %v4408 = vsel %vm1315, %v4401, 0
        %4410 = vmatpush.msra.mxu0 0.0
        %4411 = vmatpush.msra.mxu0 0.0
        %4412 = vmatpush.msra.mxu0 0.0
        %4413 = vmatpush.msra.mxu0 0.0
        %4414 = vmatpush.msra.mxu0 0.0
        %4415 = vmatpush.msra.mxu0 0.0
        %4416 = vmatpush.msra.mxu0 0.0
        %4417 = vmatpush.msra.mxu0 0.0
        %4418 = vmatpush.msra.mxu0 0.0
        %4419 = vmatpush.msra.mxu0 0.0
        %4420 = vmatpush.msra.mxu0 0.0
        %4421 = vmatpush.msra.mxu0 0.0
        %4422 = vmatpush.msra.mxu0 0.0
        %4423 = vmatpush.msra.mxu0 0.0
        %4424 = vmatpush.msra.mxu0 0.0
        %4425 = vmatpush.msra.mxu0 %v4406
        %4426 = vmatmul.f32.gmra.mxu0 %v4404
        %v4427 = vpop.f32.mrf.mxu0
        %v4428 = vadd.f32 0.0, %v4427
        %4429 = vdwg.mxu0
        %4430 = vmatpush.msra.mxu0 0.0
        %4431 = vmatpush.msra.mxu0 0.0
        %4432 = vmatpush.msra.mxu0 0.0
        %4433 = vmatpush.msra.mxu0 0.0
        %4434 = vmatpush.msra.mxu0 0.0
        %4435 = vmatpush.msra.mxu0 0.0
        %4436 = vmatpush.msra.mxu0 0.0
        %4437 = vmatpush.msra.mxu0 0.0
        %4438 = vmatpush.msra.mxu0 0.0
        %4439 = vmatpush.msra.mxu0 0.0
        %4440 = vmatpush.msra.mxu0 0.0
        %4441 = vmatpush.msra.mxu0 0.0
        %4442 = vmatpush.msra.mxu0 0.0
        %4443 = vmatpush.msra.mxu0 0.0
        %4444 = vmatpush.msra.mxu0 0.0
        %4445 = vmatpush.msra.mxu0 %v4408
        %4446 = vmatmul.f32.gmra.mxu0 %v4404
        %v4447 = vpop.f32.mrf.mxu0
        %v4448 = vadd.f32 0.0, %v4447
        %4449 = vdwg.mxu0
        %v4450 = vadd.f32 %v4394, %v4428
        %v4451 = vadd.f32 %v4395, %v4448
        %s4452 = scalar_lea.vmem %s49, 24
        %v4453 = vld [vmem:[%s4452] sm:$0xf]
        %4454 = vrot.lane.b32.xlu0 %v4122, 104
        %v4455 = vpop.permute.xlu0 %4454
        %4456 = vrot.lane.b32.xlu0 %v4123, 104
        %v4457 = vpop.permute.xlu0 %4456
        %v4458 = vsel %vm3759, %v4455, %v4457
        %v4460 = vsel %vm1311, %v4453, 0
        %v4462 = vsel %vm1315, %v4458, 0
        %v4464 = vsel %vm1315, %v4457, 0
        %4466 = vmatpush.msra.mxu0 0.0
        %4467 = vmatpush.msra.mxu0 0.0
        %4468 = vmatpush.msra.mxu0 0.0
        %4469 = vmatpush.msra.mxu0 0.0
        %4470 = vmatpush.msra.mxu0 0.0
        %4471 = vmatpush.msra.mxu0 0.0
        %4472 = vmatpush.msra.mxu0 0.0
        %4473 = vmatpush.msra.mxu0 0.0
        %4474 = vmatpush.msra.mxu0 0.0
        %4475 = vmatpush.msra.mxu0 0.0
        %4476 = vmatpush.msra.mxu0 0.0
        %4477 = vmatpush.msra.mxu0 0.0
        %4478 = vmatpush.msra.mxu0 0.0
        %4479 = vmatpush.msra.mxu0 0.0
        %4480 = vmatpush.msra.mxu0 0.0
        %4481 = vmatpush.msra.mxu0 %v4462
        %4482 = vmatmul.f32.gmra.mxu0 %v4460
        %v4483 = vpop.f32.mrf.mxu0
        %v4484 = vadd.f32 0.0, %v4483
        %4485 = vdwg.mxu0
        %4486 = vmatpush.msra.mxu0 0.0
        %4487 = vmatpush.msra.mxu0 0.0
        %4488 = vmatpush.msra.mxu0 0.0
        %4489 = vmatpush.msra.mxu0 0.0
        %4490 = vmatpush.msra.mxu0 0.0
        %4491 = vmatpush.msra.mxu0 0.0
        %4492 = vmatpush.msra.mxu0 0.0
        %4493 = vmatpush.msra.mxu0 0.0
        %4494 = vmatpush.msra.mxu0 0.0
        %4495 = vmatpush.msra.mxu0 0.0
        %4496 = vmatpush.msra.mxu0 0.0
        %4497 = vmatpush.msra.mxu0 0.0
        %4498 = vmatpush.msra.mxu0 0.0
        %4499 = vmatpush.msra.mxu0 0.0
        %4500 = vmatpush.msra.mxu0 0.0
        %4501 = vmatpush.msra.mxu0 %v4464
        %4502 = vmatmul.f32.gmra.mxu0 %v4460
        %v4503 = vpop.f32.mrf.mxu0
        %v4504 = vadd.f32 0.0, %v4503
        %4505 = vdwg.mxu0
        %v4506 = vadd.f32 %v4450, %v4484
        %v4507 = vadd.f32 %v4451, %v4504
        %s4508 = scalar_lea.vmem %s49, 28
        %v4509 = vld [vmem:[%s4508] sm:$0xf]
        %4510 = vrot.lane.b32.xlu0 %v4122, 103
        %v4511 = vpop.permute.xlu0 %4510
        %4512 = vrot.lane.b32.xlu0 %v4123, 103
        %v4513 = vpop.permute.xlu0 %4512
        %v4514 = vsel %vm3870, %v4511, %v4513
        %v4516 = vsel %vm1311, %v4509, 0
        %v4518 = vsel %vm1315, %v4514, 0
        %v4520 = vsel %vm1315, %v4513, 0
        %4522 = vmatpush.msra.mxu0 0.0
        %4523 = vmatpush.msra.mxu0 0.0
        %4524 = vmatpush.msra.mxu0 0.0
        %4525 = vmatpush.msra.mxu0 0.0
        %4526 = vmatpush.msra.mxu0 0.0
        %4527 = vmatpush.msra.mxu0 0.0
        %4528 = vmatpush.msra.mxu0 0.0
        %4529 = vmatpush.msra.mxu0 0.0
        %4530 = vmatpush.msra.mxu0 0.0
        %4531 = vmatpush.msra.mxu0 0.0
        %4532 = vmatpush.msra.mxu0 0.0
        %4533 = vmatpush.msra.mxu0 0.0
        %4534 = vmatpush.msra.mxu0 0.0
        %4535 = vmatpush.msra.mxu0 0.0
        %4536 = vmatpush.msra.mxu0 0.0
        %4537 = vmatpush.msra.mxu0 %v4518
        %4538 = vmatmul.f32.gmra.mxu0 %v4516
        %v4539 = vpop.f32.mrf.mxu0
        %v4540 = vadd.f32 0.0, %v4539
        %4541 = vdwg.mxu0
        %4542 = vmatpush.msra.mxu0 0.0
        %4543 = vmatpush.msra.mxu0 0.0
        %4544 = vmatpush.msra.mxu0 0.0
        %4545 = vmatpush.msra.mxu0 0.0
        %4546 = vmatpush.msra.mxu0 0.0
        %4547 = vmatpush.msra.mxu0 0.0
        %4548 = vmatpush.msra.mxu0 0.0
        %4549 = vmatpush.msra.mxu0 0.0
        %4550 = vmatpush.msra.mxu0 0.0
        %4551 = vmatpush.msra.mxu0 0.0
        %4552 = vmatpush.msra.mxu0 0.0
        %4553 = vmatpush.msra.mxu0 0.0
        %4554 = vmatpush.msra.mxu0 0.0
        %4555 = vmatpush.msra.mxu0 0.0
        %4556 = vmatpush.msra.mxu0 0.0
        %4557 = vmatpush.msra.mxu0 %v4520
        %4558 = vmatmul.f32.gmra.mxu0 %v4516
        %v4559 = vpop.f32.mrf.mxu0
        %v4560 = vadd.f32 0.0, %v4559
        %4561 = vdwg.mxu0
        %v4562 = vadd.f32 %v4506, %v4540
        %v4563 = vadd.f32 %v4507, %v4560
        %s4564 = scalar_lea.vmem %s49, 32
        %v4565 = vld [vmem:[%s4564] sm:$0xf]
        %4566 = vrot.lane.b32.xlu0 %v4122, 102
        %v4567 = vpop.permute.xlu0 %4566
        %4568 = vrot.lane.b32.xlu0 %v4123, 102
        %v4569 = vpop.permute.xlu0 %4568
        %v4570 = vsel %vm3981, %v4567, %v4569
        %v4572 = vsel %vm1311, %v4565, 0
        %v4574 = vsel %vm1315, %v4570, 0
        %v4576 = vsel %vm1315, %v4569, 0
        %4578 = vmatpush.msra.mxu0 0.0
        %4579 = vmatpush.msra.mxu0 0.0
        %4580 = vmatpush.msra.mxu0 0.0
        %4581 = vmatpush.msra.mxu0 0.0
        %4582 = vmatpush.msra.mxu0 0.0
        %4583 = vmatpush.msra.mxu0 0.0
        %4584 = vmatpush.msra.mxu0 0.0
        %4585 = vmatpush.msra.mxu0 0.0
        %4586 = vmatpush.msra.mxu0 0.0
        %4587 = vmatpush.msra.mxu0 0.0
        %4588 = vmatpush.msra.mxu0 0.0
        %4589 = vmatpush.msra.mxu0 0.0
        %4590 = vmatpush.msra.mxu0 0.0
        %4591 = vmatpush.msra.mxu0 0.0
        %4592 = vmatpush.msra.mxu0 0.0
        %4593 = vmatpush.msra.mxu0 %v4574
        %4594 = vmatmul.f32.gmra.mxu0 %v4572
        %v4595 = vpop.f32.mrf.mxu0
        %v4596 = vadd.f32 0.0, %v4595
        %4597 = vdwg.mxu0
        %4598 = vmatpush.msra.mxu0 0.0
        %4599 = vmatpush.msra.mxu0 0.0
        %4600 = vmatpush.msra.mxu0 0.0
        %4601 = vmatpush.msra.mxu0 0.0
        %4602 = vmatpush.msra.mxu0 0.0
        %4603 = vmatpush.msra.mxu0 0.0
        %4604 = vmatpush.msra.mxu0 0.0
        %4605 = vmatpush.msra.mxu0 0.0
        %4606 = vmatpush.msra.mxu0 0.0
        %4607 = vmatpush.msra.mxu0 0.0
        %4608 = vmatpush.msra.mxu0 0.0
        %4609 = vmatpush.msra.mxu0 0.0
        %4610 = vmatpush.msra.mxu0 0.0
        %4611 = vmatpush.msra.mxu0 0.0
        %4612 = vmatpush.msra.mxu0 0.0
        %4613 = vmatpush.msra.mxu0 %v4576
        %4614 = vmatmul.f32.gmra.mxu0 %v4572
        %v4615 = vpop.f32.mrf.mxu0
        %v4616 = vadd.f32 0.0, %v4615
        %4617 = vdwg.mxu0
        %v4618 = vadd.f32 %v4562, %v4596
        %v4619 = vadd.f32 %v4563, %v4616
        %v4620 = vld [vmem:[%s51] sm:$0xf]
        %4622 = vset.pattern.permute.xlu0 0
        %4623 = vperm.xlu0 %4622, %v4620
        %v4624 = vpop.permute.xlu0 %4623
        %v4626 = vadd.f32 %v4618, %v4624
        %v4627 = vadd.f32 %v4619, %v4624
        %v4628 = vmul.f32 %v4626, %v4101
        %v4629 = vmul.f32 %v4627, %v4102
        %vm4630 = vcmp.ge.f32.partialorder %v4628, 0.0
        %vm4631 = vcmp.ge.f32.partialorder %v4629, 0.0
        %v4632 = vmul.f32 %v4628, 0.2
        %v4633 = vmul.f32 %v4629, 0.2
        %v4634 = vsel %vm4630, %v4628, %v4632
        %v4635 = vsel %vm4631, %v4629, %v4633
        %4638 = vrot.lane.b32.xlu0 %v4634, 13
        %v4639 = vpop.permute.xlu0 %4638
        %4640 = vrot.lane.b32.xlu0 %v4635, 13
        %v4641 = vpop.permute.xlu0 %4640
        %v4642 = vsel %vm3084, %v4639, %v4641
        %v4645 = vsel %vm3084, 0.0, %v4639
        %v4646 = vsel %vm3089, %v4642, 0.0
        %v4647 = vld [vmem:[%s53] sm:$0xf]
        %s4648 = scalar_lea.vmem %s53, 4
        %v4649 = vld [vmem:[%s4648] sm:$0xf]
        %4652 = vrot.lane.b32.xlu0 %v4645, 127
        %v4653 = vpop.permute.xlu0 %4652
        %4654 = vrot.lane.b32.xlu0 %v4646, 127
        %v4655 = vpop.permute.xlu0 %4654
        %v4656 = vsel %vm3202, %v4653, %v4655
        %v4658 = vsel %vm1311, %v4649, 0
        %v4660 = vsel %vm1315, %v4656, 0
        %v4662 = vsel %vm1315, %v4655, 0
        %4664 = vmatpush.msra.mxu0 0.0
        %4665 = vmatpush.msra.mxu0 0.0
        %4666 = vmatpush.msra.mxu0 0.0
        %4667 = vmatpush.msra.mxu0 0.0
        %4668 = vmatpush.msra.mxu0 0.0
        %4669 = vmatpush.msra.mxu0 0.0
        %4670 = vmatpush.msra.mxu0 0.0
        %4671 = vmatpush.msra.mxu0 0.0
        %4672 = vmatpush.msra.mxu0 0.0
        %4673 = vmatpush.msra.mxu0 0.0
        %4674 = vmatpush.msra.mxu0 0.0
        %4675 = vmatpush.msra.mxu0 0.0
        %4676 = vmatpush.msra.mxu0 0.0
        %4677 = vmatpush.msra.mxu0 0.0
        %4678 = vmatpush.msra.mxu0 0.0
        %4679 = vmatpush.msra.mxu0 %v4660
        %4680 = vmatmul.f32.gmra.mxu0 %v4658
        %v4681 = vpop.f32.mrf.mxu0
        %v4682 = vadd.f32 0.0, %v4681
        %4683 = vdwg.mxu0
        %4684 = vmatpush.msra.mxu0 0.0
        %4685 = vmatpush.msra.mxu0 0.0
        %4686 = vmatpush.msra.mxu0 0.0
        %4687 = vmatpush.msra.mxu0 0.0
        %4688 = vmatpush.msra.mxu0 0.0
        %4689 = vmatpush.msra.mxu0 0.0
        %4690 = vmatpush.msra.mxu0 0.0
        %4691 = vmatpush.msra.mxu0 0.0
        %4692 = vmatpush.msra.mxu0 0.0
        %4693 = vmatpush.msra.mxu0 0.0
        %4694 = vmatpush.msra.mxu0 0.0
        %4695 = vmatpush.msra.mxu0 0.0
        %4696 = vmatpush.msra.mxu0 0.0
        %4697 = vmatpush.msra.mxu0 0.0
        %4698 = vmatpush.msra.mxu0 0.0
        %4699 = vmatpush.msra.mxu0 %v4662
        %4700 = vmatmul.f32.gmra.mxu0 %v4658
        %v4701 = vpop.f32.mrf.mxu0
        %v4702 = vadd.f32 0.0, %v4701
        %4703 = vdwg.mxu0
        %v4705 = vsel %vm1311, %v4647, 0
        %v4707 = vsel %vm1315, %v4645, 0
        %v4709 = vsel %vm1315, %v4646, 0
        %4711 = vmatpush.msra.mxu0 0.0
        %4712 = vmatpush.msra.mxu0 0.0
        %4713 = vmatpush.msra.mxu0 0.0
        %4714 = vmatpush.msra.mxu0 0.0
        %4715 = vmatpush.msra.mxu0 0.0
        %4716 = vmatpush.msra.mxu0 0.0
        %4717 = vmatpush.msra.mxu0 0.0
        %4718 = vmatpush.msra.mxu0 0.0
        %4719 = vmatpush.msra.mxu0 0.0
        %4720 = vmatpush.msra.mxu0 0.0
        %4721 = vmatpush.msra.mxu0 0.0
        %4722 = vmatpush.msra.mxu0 0.0
        %4723 = vmatpush.msra.mxu0 0.0
        %4724 = vmatpush.msra.mxu0 0.0
        %4725 = vmatpush.msra.mxu0 0.0
        %4726 = vmatpush.msra.mxu0 %v4707
        %4727 = vmatmul.f32.gmra.mxu0 %v4705
        %v4728 = vpop.f32.mrf.mxu0
        %v4729 = vadd.f32 %v4682, %v4728
        %4730 = vdwg.mxu0
        %4731 = vmatpush.msra.mxu0 0.0
        %4732 = vmatpush.msra.mxu0 0.0
        %4733 = vmatpush.msra.mxu0 0.0
        %4734 = vmatpush.msra.mxu0 0.0
        %4735 = vmatpush.msra.mxu0 0.0
        %4736 = vmatpush.msra.mxu0 0.0
        %4737 = vmatpush.msra.mxu0 0.0
        %4738 = vmatpush.msra.mxu0 0.0
        %4739 = vmatpush.msra.mxu0 0.0
        %4740 = vmatpush.msra.mxu0 0.0
        %4741 = vmatpush.msra.mxu0 0.0
        %4742 = vmatpush.msra.mxu0 0.0
        %4743 = vmatpush.msra.mxu0 0.0
        %4744 = vmatpush.msra.mxu0 0.0
        %4745 = vmatpush.msra.mxu0 0.0
        %4746 = vmatpush.msra.mxu0 %v4709
        %4747 = vmatmul.f32.gmra.mxu0 %v4705
        %v4748 = vpop.f32.mrf.mxu0
        %v4749 = vadd.f32 %v4702, %v4748
        %4750 = vdwg.mxu0
        %s4751 = scalar_lea.vmem %s53, 8
        %v4752 = vld [vmem:[%s4751] sm:$0xf]
        %4753 = vrot.lane.b32.xlu0 %v4645, 126
        %v4754 = vpop.permute.xlu0 %4753
        %4755 = vrot.lane.b32.xlu0 %v4646, 126
        %v4756 = vpop.permute.xlu0 %4755
        %v4757 = vsel %vm3315, %v4754, %v4756
        %v4759 = vsel %vm1311, %v4752, 0
        %v4761 = vsel %vm1315, %v4757, 0
        %v4763 = vsel %vm1315, %v4756, 0
        %4765 = vmatpush.msra.mxu0 0.0
        %4766 = vmatpush.msra.mxu0 0.0
        %4767 = vmatpush.msra.mxu0 0.0
        %4768 = vmatpush.msra.mxu0 0.0
        %4769 = vmatpush.msra.mxu0 0.0
        %4770 = vmatpush.msra.mxu0 0.0
        %4771 = vmatpush.msra.mxu0 0.0
        %4772 = vmatpush.msra.mxu0 0.0
        %4773 = vmatpush.msra.mxu0 0.0
        %4774 = vmatpush.msra.mxu0 0.0
        %4775 = vmatpush.msra.mxu0 0.0
        %4776 = vmatpush.msra.mxu0 0.0
        %4777 = vmatpush.msra.mxu0 0.0
        %4778 = vmatpush.msra.mxu0 0.0
        %4779 = vmatpush.msra.mxu0 0.0
        %4780 = vmatpush.msra.mxu0 %v4761
        %4781 = vmatmul.f32.gmra.mxu0 %v4759
        %v4782 = vpop.f32.mrf.mxu0
        %v4783 = vadd.f32 0.0, %v4782
        %4784 = vdwg.mxu0
        %4785 = vmatpush.msra.mxu0 0.0
        %4786 = vmatpush.msra.mxu0 0.0
        %4787 = vmatpush.msra.mxu0 0.0
        %4788 = vmatpush.msra.mxu0 0.0
        %4789 = vmatpush.msra.mxu0 0.0
        %4790 = vmatpush.msra.mxu0 0.0
        %4791 = vmatpush.msra.mxu0 0.0
        %4792 = vmatpush.msra.mxu0 0.0
        %4793 = vmatpush.msra.mxu0 0.0
        %4794 = vmatpush.msra.mxu0 0.0
        %4795 = vmatpush.msra.mxu0 0.0
        %4796 = vmatpush.msra.mxu0 0.0
        %4797 = vmatpush.msra.mxu0 0.0
        %4798 = vmatpush.msra.mxu0 0.0
        %4799 = vmatpush.msra.mxu0 0.0
        %4800 = vmatpush.msra.mxu0 %v4763
        %4801 = vmatmul.f32.gmra.mxu0 %v4759
        %v4802 = vpop.f32.mrf.mxu0
        %v4803 = vadd.f32 0.0, %v4802
        %4804 = vdwg.mxu0
        %v4805 = vadd.f32 %v4729, %v4783
        %v4806 = vadd.f32 %v4749, %v4803
        %s4807 = scalar_lea.vmem %s53, 12
        %v4808 = vld [vmem:[%s4807] sm:$0xf]
        %4809 = vrot.lane.b32.xlu0 %v4645, 116
        %v4810 = vpop.permute.xlu0 %4809
        %4811 = vrot.lane.b32.xlu0 %v4646, 116
        %v4812 = vpop.permute.xlu0 %4811
        %v4813 = vsel %vm3426, %v4810, %v4812
        %v4815 = vsel %vm1311, %v4808, 0
        %v4817 = vsel %vm1315, %v4813, 0
        %v4819 = vsel %vm1315, %v4812, 0
        %4821 = vmatpush.msra.mxu0 0.0
        %4822 = vmatpush.msra.mxu0 0.0
        %4823 = vmatpush.msra.mxu0 0.0
        %4824 = vmatpush.msra.mxu0 0.0
        %4825 = vmatpush.msra.mxu0 0.0
        %4826 = vmatpush.msra.mxu0 0.0
        %4827 = vmatpush.msra.mxu0 0.0
        %4828 = vmatpush.msra.mxu0 0.0
        %4829 = vmatpush.msra.mxu0 0.0
        %4830 = vmatpush.msra.mxu0 0.0
        %4831 = vmatpush.msra.mxu0 0.0
        %4832 = vmatpush.msra.mxu0 0.0
        %4833 = vmatpush.msra.mxu0 0.0
        %4834 = vmatpush.msra.mxu0 0.0
        %4835 = vmatpush.msra.mxu0 0.0
        %4836 = vmatpush.msra.mxu0 %v4817
        %4837 = vmatmul.f32.gmra.mxu0 %v4815
        %v4838 = vpop.f32.mrf.mxu0
        %v4839 = vadd.f32 0.0, %v4838
        %4840 = vdwg.mxu0
        %4841 = vmatpush.msra.mxu0 0.0
        %4842 = vmatpush.msra.mxu0 0.0
        %4843 = vmatpush.msra.mxu0 0.0
        %4844 = vmatpush.msra.mxu0 0.0
        %4845 = vmatpush.msra.mxu0 0.0
        %4846 = vmatpush.msra.mxu0 0.0
        %4847 = vmatpush.msra.mxu0 0.0
        %4848 = vmatpush.msra.mxu0 0.0
        %4849 = vmatpush.msra.mxu0 0.0
        %4850 = vmatpush.msra.mxu0 0.0
        %4851 = vmatpush.msra.mxu0 0.0
        %4852 = vmatpush.msra.mxu0 0.0
        %4853 = vmatpush.msra.mxu0 0.0
        %4854 = vmatpush.msra.mxu0 0.0
        %4855 = vmatpush.msra.mxu0 0.0
        %4856 = vmatpush.msra.mxu0 %v4819
        %4857 = vmatmul.f32.gmra.mxu0 %v4815
        %v4858 = vpop.f32.mrf.mxu0
        %v4859 = vadd.f32 0.0, %v4858
        %4860 = vdwg.mxu0
        %v4861 = vadd.f32 %v4805, %v4839
        %v4862 = vadd.f32 %v4806, %v4859
        %s4863 = scalar_lea.vmem %s53, 16
        %v4864 = vld [vmem:[%s4863] sm:$0xf]
        %4865 = vrot.lane.b32.xlu0 %v4645, 115
        %v4866 = vpop.permute.xlu0 %4865
        %4867 = vrot.lane.b32.xlu0 %v4646, 115
        %v4868 = vpop.permute.xlu0 %4867
        %v4869 = vsel %vm3537, %v4866, %v4868
        %v4871 = vsel %vm1311, %v4864, 0
        %v4873 = vsel %vm1315, %v4869, 0
        %v4875 = vsel %vm1315, %v4868, 0
        %4877 = vmatpush.msra.mxu0 0.0
        %4878 = vmatpush.msra.mxu0 0.0
        %4879 = vmatpush.msra.mxu0 0.0
        %4880 = vmatpush.msra.mxu0 0.0
        %4881 = vmatpush.msra.mxu0 0.0
        %4882 = vmatpush.msra.mxu0 0.0
        %4883 = vmatpush.msra.mxu0 0.0
        %4884 = vmatpush.msra.mxu0 0.0
        %4885 = vmatpush.msra.mxu0 0.0
        %4886 = vmatpush.msra.mxu0 0.0
        %4887 = vmatpush.msra.mxu0 0.0
        %4888 = vmatpush.msra.mxu0 0.0
        %4889 = vmatpush.msra.mxu0 0.0
        %4890 = vmatpush.msra.mxu0 0.0
        %4891 = vmatpush.msra.mxu0 0.0
        %4892 = vmatpush.msra.mxu0 %v4873
        %4893 = vmatmul.f32.gmra.mxu0 %v4871
        %v4894 = vpop.f32.mrf.mxu0
        %v4895 = vadd.f32 0.0, %v4894
        %4896 = vdwg.mxu0
        %4897 = vmatpush.msra.mxu0 0.0
        %4898 = vmatpush.msra.mxu0 0.0
        %4899 = vmatpush.msra.mxu0 0.0
        %4900 = vmatpush.msra.mxu0 0.0
        %4901 = vmatpush.msra.mxu0 0.0
        %4902 = vmatpush.msra.mxu0 0.0
        %4903 = vmatpush.msra.mxu0 0.0
        %4904 = vmatpush.msra.mxu0 0.0
        %4905 = vmatpush.msra.mxu0 0.0
        %4906 = vmatpush.msra.mxu0 0.0
        %4907 = vmatpush.msra.mxu0 0.0
        %4908 = vmatpush.msra.mxu0 0.0
        %4909 = vmatpush.msra.mxu0 0.0
        %4910 = vmatpush.msra.mxu0 0.0
        %4911 = vmatpush.msra.mxu0 0.0
        %4912 = vmatpush.msra.mxu0 %v4875
        %4913 = vmatmul.f32.gmra.mxu0 %v4871
        %v4914 = vpop.f32.mrf.mxu0
        %v4915 = vadd.f32 0.0, %v4914
        %4916 = vdwg.mxu0
        %v4917 = vadd.f32 %v4861, %v4895
        %v4918 = vadd.f32 %v4862, %v4915
        %s4919 = scalar_lea.vmem %s53, 20
        %v4920 = vld [vmem:[%s4919] sm:$0xf]
        %4921 = vrot.lane.b32.xlu0 %v4645, 114
        %v4922 = vpop.permute.xlu0 %4921
        %4923 = vrot.lane.b32.xlu0 %v4646, 114
        %v4924 = vpop.permute.xlu0 %4923
        %v4925 = vsel %vm3648, %v4922, %v4924
        %v4927 = vsel %vm1311, %v4920, 0
        %v4929 = vsel %vm1315, %v4925, 0
        %v4931 = vsel %vm1315, %v4924, 0
        %4933 = vmatpush.msra.mxu0 0.0
        %4934 = vmatpush.msra.mxu0 0.0
        %4935 = vmatpush.msra.mxu0 0.0
        %4936 = vmatpush.msra.mxu0 0.0
        %4937 = vmatpush.msra.mxu0 0.0
        %4938 = vmatpush.msra.mxu0 0.0
        %4939 = vmatpush.msra.mxu0 0.0
        %4940 = vmatpush.msra.mxu0 0.0
        %4941 = vmatpush.msra.mxu0 0.0
        %4942 = vmatpush.msra.mxu0 0.0
        %4943 = vmatpush.msra.mxu0 0.0
        %4944 = vmatpush.msra.mxu0 0.0
        %4945 = vmatpush.msra.mxu0 0.0
        %4946 = vmatpush.msra.mxu0 0.0
        %4947 = vmatpush.msra.mxu0 0.0
        %4948 = vmatpush.msra.mxu0 %v4929
        %4949 = vmatmul.f32.gmra.mxu0 %v4927
        %v4950 = vpop.f32.mrf.mxu0
        %v4951 = vadd.f32 0.0, %v4950
        %4952 = vdwg.mxu0
        %4953 = vmatpush.msra.mxu0 0.0
        %4954 = vmatpush.msra.mxu0 0.0
        %4955 = vmatpush.msra.mxu0 0.0
        %4956 = vmatpush.msra.mxu0 0.0
        %4957 = vmatpush.msra.mxu0 0.0
        %4958 = vmatpush.msra.mxu0 0.0
        %4959 = vmatpush.msra.mxu0 0.0
        %4960 = vmatpush.msra.mxu0 0.0
        %4961 = vmatpush.msra.mxu0 0.0
        %4962 = vmatpush.msra.mxu0 0.0
        %4963 = vmatpush.msra.mxu0 0.0
        %4964 = vmatpush.msra.mxu0 0.0
        %4965 = vmatpush.msra.mxu0 0.0
        %4966 = vmatpush.msra.mxu0 0.0
        %4967 = vmatpush.msra.mxu0 0.0
        %4968 = vmatpush.msra.mxu0 %v4931
        %4969 = vmatmul.f32.gmra.mxu0 %v4927
        %v4970 = vpop.f32.mrf.mxu0
        %v4971 = vadd.f32 0.0, %v4970
        %4972 = vdwg.mxu0
        %v4973 = vadd.f32 %v4917, %v4951
        %v4974 = vadd.f32 %v4918, %v4971
        %s4975 = scalar_lea.vmem %s53, 24
        %v4976 = vld [vmem:[%s4975] sm:$0xf]
        %4977 = vrot.lane.b32.xlu0 %v4645, 104
        %v4978 = vpop.permute.xlu0 %4977
        %4979 = vrot.lane.b32.xlu0 %v4646, 104
        %v4980 = vpop.permute.xlu0 %4979
        %v4981 = vsel %vm3759, %v4978, %v4980
        %v4983 = vsel %vm1311, %v4976, 0
        %v4985 = vsel %vm1315, %v4981, 0
        %v4987 = vsel %vm1315, %v4980, 0
        %4989 = vmatpush.msra.mxu0 0.0
        %4990 = vmatpush.msra.mxu0 0.0
        %4991 = vmatpush.msra.mxu0 0.0
        %4992 = vmatpush.msra.mxu0 0.0
        %4993 = vmatpush.msra.mxu0 0.0
        %4994 = vmatpush.msra.mxu0 0.0
        %4995 = vmatpush.msra.mxu0 0.0
        %4996 = vmatpush.msra.mxu0 0.0
        %4997 = vmatpush.msra.mxu0 0.0
        %4998 = vmatpush.msra.mxu0 0.0
        %4999 = vmatpush.msra.mxu0 0.0
        %5000 = vmatpush.msra.mxu0 0.0
        %5001 = vmatpush.msra.mxu0 0.0
        %5002 = vmatpush.msra.mxu0 0.0
        %5003 = vmatpush.msra.mxu0 0.0
        %5004 = vmatpush.msra.mxu0 %v4985
        %5005 = vmatmul.f32.gmra.mxu0 %v4983
        %v5006 = vpop.f32.mrf.mxu0
        %v5007 = vadd.f32 0.0, %v5006
        %5008 = vdwg.mxu0
        %5009 = vmatpush.msra.mxu0 0.0
        %5010 = vmatpush.msra.mxu0 0.0
        %5011 = vmatpush.msra.mxu0 0.0
        %5012 = vmatpush.msra.mxu0 0.0
        %5013 = vmatpush.msra.mxu0 0.0
        %5014 = vmatpush.msra.mxu0 0.0
        %5015 = vmatpush.msra.mxu0 0.0
        %5016 = vmatpush.msra.mxu0 0.0
        %5017 = vmatpush.msra.mxu0 0.0
        %5018 = vmatpush.msra.mxu0 0.0
        %5019 = vmatpush.msra.mxu0 0.0
        %5020 = vmatpush.msra.mxu0 0.0
        %5021 = vmatpush.msra.mxu0 0.0
        %5022 = vmatpush.msra.mxu0 0.0
        %5023 = vmatpush.msra.mxu0 0.0
        %5024 = vmatpush.msra.mxu0 %v4987
        %5025 = vmatmul.f32.gmra.mxu0 %v4983
        %v5026 = vpop.f32.mrf.mxu0
        %v5027 = vadd.f32 0.0, %v5026
        %5028 = vdwg.mxu0
        %v5029 = vadd.f32 %v4973, %v5007
        %v5030 = vadd.f32 %v4974, %v5027
        %s5031 = scalar_lea.vmem %s53, 28
        %v5032 = vld [vmem:[%s5031] sm:$0xf]
        %5033 = vrot.lane.b32.xlu0 %v4645, 103
        %v5034 = vpop.permute.xlu0 %5033
        %5035 = vrot.lane.b32.xlu0 %v4646, 103
        %v5036 = vpop.permute.xlu0 %5035
        %v5037 = vsel %vm3870, %v5034, %v5036
        %v5039 = vsel %vm1311, %v5032, 0
        %v5041 = vsel %vm1315, %v5037, 0
        %v5043 = vsel %vm1315, %v5036, 0
        %5045 = vmatpush.msra.mxu0 0.0
        %5046 = vmatpush.msra.mxu0 0.0
        %5047 = vmatpush.msra.mxu0 0.0
        %5048 = vmatpush.msra.mxu0 0.0
        %5049 = vmatpush.msra.mxu0 0.0
        %5050 = vmatpush.msra.mxu0 0.0
        %5051 = vmatpush.msra.mxu0 0.0
        %5052 = vmatpush.msra.mxu0 0.0
        %5053 = vmatpush.msra.mxu0 0.0
        %5054 = vmatpush.msra.mxu0 0.0
        %5055 = vmatpush.msra.mxu0 0.0
        %5056 = vmatpush.msra.mxu0 0.0
        %5057 = vmatpush.msra.mxu0 0.0
        %5058 = vmatpush.msra.mxu0 0.0
        %5059 = vmatpush.msra.mxu0 0.0
        %5060 = vmatpush.msra.mxu0 %v5041
        %5061 = vmatmul.f32.gmra.mxu0 %v5039
        %v5062 = vpop.f32.mrf.mxu0
        %v5063 = vadd.f32 0.0, %v5062
        %5064 = vdwg.mxu0
        %5065 = vmatpush.msra.mxu0 0.0
        %5066 = vmatpush.msra.mxu0 0.0
        %5067 = vmatpush.msra.mxu0 0.0
        %5068 = vmatpush.msra.mxu0 0.0
        %5069 = vmatpush.msra.mxu0 0.0
        %5070 = vmatpush.msra.mxu0 0.0
        %5071 = vmatpush.msra.mxu0 0.0
        %5072 = vmatpush.msra.mxu0 0.0
        %5073 = vmatpush.msra.mxu0 0.0
        %5074 = vmatpush.msra.mxu0 0.0
        %5075 = vmatpush.msra.mxu0 0.0
        %5076 = vmatpush.msra.mxu0 0.0
        %5077 = vmatpush.msra.mxu0 0.0
        %5078 = vmatpush.msra.mxu0 0.0
        %5079 = vmatpush.msra.mxu0 0.0
        %5080 = vmatpush.msra.mxu0 %v5043
        %5081 = vmatmul.f32.gmra.mxu0 %v5039
        %v5082 = vpop.f32.mrf.mxu0
        %v5083 = vadd.f32 0.0, %v5082
        %5084 = vdwg.mxu0
        %v5085 = vadd.f32 %v5029, %v5063
        %v5086 = vadd.f32 %v5030, %v5083
        %s5087 = scalar_lea.vmem %s53, 32
        %v5088 = vld [vmem:[%s5087] sm:$0xf]
        %5089 = vrot.lane.b32.xlu0 %v4645, 102
        %v5090 = vpop.permute.xlu0 %5089
        %5091 = vrot.lane.b32.xlu0 %v4646, 102
        %v5092 = vpop.permute.xlu0 %5091
        %v5093 = vsel %vm3981, %v5090, %v5092
        %v5095 = vsel %vm1311, %v5088, 0
        %v5097 = vsel %vm1315, %v5093, 0
        %v5099 = vsel %vm1315, %v5092, 0
        %5101 = vmatpush.msra.mxu0 0.0
        %5102 = vmatpush.msra.mxu0 0.0
        %5103 = vmatpush.msra.mxu0 0.0
        %5104 = vmatpush.msra.mxu0 0.0
        %5105 = vmatpush.msra.mxu0 0.0
        %5106 = vmatpush.msra.mxu0 0.0
        %5107 = vmatpush.msra.mxu0 0.0
        %5108 = vmatpush.msra.mxu0 0.0
        %5109 = vmatpush.msra.mxu0 0.0
        %5110 = vmatpush.msra.mxu0 0.0
        %5111 = vmatpush.msra.mxu0 0.0
        %5112 = vmatpush.msra.mxu0 0.0
        %5113 = vmatpush.msra.mxu0 0.0
        %5114 = vmatpush.msra.mxu0 0.0
        %5115 = vmatpush.msra.mxu0 0.0
        %5116 = vmatpush.msra.mxu0 %v5097
        %5117 = vmatmul.f32.gmra.mxu0 %v5095
        %v5118 = vpop.f32.mrf.mxu0
        %v5119 = vadd.f32 0.0, %v5118
        %5120 = vdwg.mxu0
        %5121 = vmatpush.msra.mxu0 0.0
        %5122 = vmatpush.msra.mxu0 0.0
        %5123 = vmatpush.msra.mxu0 0.0
        %5124 = vmatpush.msra.mxu0 0.0
        %5125 = vmatpush.msra.mxu0 0.0
        %5126 = vmatpush.msra.mxu0 0.0
        %5127 = vmatpush.msra.mxu0 0.0
        %5128 = vmatpush.msra.mxu0 0.0
        %5129 = vmatpush.msra.mxu0 0.0
        %5130 = vmatpush.msra.mxu0 0.0
        %5131 = vmatpush.msra.mxu0 0.0
        %5132 = vmatpush.msra.mxu0 0.0
        %5133 = vmatpush.msra.mxu0 0.0
        %5134 = vmatpush.msra.mxu0 0.0
        %5135 = vmatpush.msra.mxu0 0.0
        %5136 = vmatpush.msra.mxu0 %v5099
        %5137 = vmatmul.f32.gmra.mxu0 %v5095
        %v5138 = vpop.f32.mrf.mxu0
        %v5139 = vadd.f32 0.0, %v5138
        %5140 = vdwg.mxu0
        %v5141 = vadd.f32 %v5085, %v5119
        %v5142 = vadd.f32 %v5086, %v5139
        %v5143 = vld [vmem:[%s55] sm:$0xf]
        %5145 = vset.pattern.permute.xlu0 0
        %5146 = vperm.xlu0 %5145, %v5143
        %v5147 = vpop.permute.xlu0 %5146
        %v5149 = vadd.f32 %v5141, %v5147
        %v5150 = vadd.f32 %v5142, %v5147
        %v5151 = vmul.f32 %v5149, %v4101
        %v5152 = vmul.f32 %v5150, %v4102
        %v5153 = vadd.f32 %v4105, %v5151
        %v5154 = vadd.f32 %v4106, %v5152
        %v5155 = vmul.f32 %v5153, 0.70710677
        %v5156 = vmul.f32 %v5154, 0.70710677
        %v5157 = vld [vmem:[%s57] sm:$0xff]
        %v5158 = vld [vmem:[%s57 + $0x8] sm:$0x3]
        %v5159 = vld [vmem:[%s59] sm:$0xff]
        %v5160 = vld [vmem:[%s59 + $0x8] sm:$0x3]
        %5162 = vset.pattern.permute.xlu0 0
        %5163 = vperm.xlu0 %5162, %v5159
        %v5164 = vpop.permute.xlu0 %5163
        %5167 = vset.pattern.permute.xlu0 0
        %5168 = vperm.xlu0 %5167, %v5160
        %v5169 = vpop.permute.xlu0 %5168
        %v5172 = vsel %vm1311, %v5157, 0
        %v5175 = vsel %vm1311, %v5158, 0
        %v5178 = vsel %vm1315, %v5155, 0
        %v5181 = vsel %vm1315, %v5156, 0
        %5183 = vmatpush.msra.mxu0 0.0
        %5184 = vmatpush.msra.mxu0 0.0
        %5185 = vmatpush.msra.mxu0 0.0
        %5186 = vmatpush.msra.mxu0 0.0
        %5187 = vmatpush.msra.mxu0 0.0
        %5188 = vmatpush.msra.mxu0 0.0
        %5189 = vmatpush.msra.mxu0 0.0
        %5190 = vmatpush.msra.mxu0 0.0
        %5191 = vmatpush.msra.mxu0 0.0
        %5192 = vmatpush.msra.mxu0 0.0
        %5193 = vmatpush.msra.mxu0 0.0
        %5194 = vmatpush.msra.mxu0 0.0
        %5195 = vmatpush.msra.mxu0 0.0
        %5196 = vmatpush.msra.mxu0 0.0
        %5197 = vmatpush.msra.mxu0 0.0
        %5198 = vmatpush.msra.mxu0 %v5178
        %5199 = vmatmul.f32.gmra.mxu0 %v5172
        %v5200 = vpop.f32.mrf.mxu0
        %v5201 = vadd.f32 %v5164, %v5200
        %5202 = vmatmul.f32.gmra.mxu0 %v5175
        %v5203 = vpop.f32.mrf.mxu0
        %v5204 = vadd.f32 %v5169, %v5203
        %5205 = vdwg.mxu0
        %5206 = vmatpush.msra.mxu0 0.0
        %5207 = vmatpush.msra.mxu0 0.0
        %5208 = vmatpush.msra.mxu0 0.0
        %5209 = vmatpush.msra.mxu0 0.0
        %5210 = vmatpush.msra.mxu0 0.0
        %5211 = vmatpush.msra.mxu0 0.0
        %5212 = vmatpush.msra.mxu0 0.0
        %5213 = vmatpush.msra.mxu0 0.0
        %5214 = vmatpush.msra.mxu0 0.0
        %5215 = vmatpush.msra.mxu0 0.0
        %5216 = vmatpush.msra.mxu0 0.0
        %5217 = vmatpush.msra.mxu0 0.0
        %5218 = vmatpush.msra.mxu0 0.0
        %5219 = vmatpush.msra.mxu0 0.0
        %5220 = vmatpush.msra.mxu0 0.0
        %5221 = vmatpush.msra.mxu0 %v5181
        %5222 = vmatmul.f32.gmra.mxu0 %v5172
        %v5223 = vpop.f32.mrf.mxu0
        %v5224 = vadd.f32 %v5164, %v5223
        %5225 = vmatmul.f32.gmra.mxu0 %v5175
        %v5226 = vpop.f32.mrf.mxu0
        %v5227 = vadd.f32 %v5169, %v5226
        %5228 = vdwg.mxu0
        %v5229 = vld [vmem:[#allocation2] sm:$0xff]
        %v5230 = vld [vmem:[#allocation2 + $0x8] sm:$0xff]
        %v5231 = vld [vmem:[#allocation2 + $0x10] sm:$0xff]
        %v5232 = vld [vmem:[#allocation2 + $0x18] sm:$0xff]
        %v5233 = vld [vmem:[#allocation2 + $0x20] sm:$0xff]
        %v5234 = vld [vmem:[#allocation2 + $0x28] sm:$0xff]
        %v5235 = vld [vmem:[#allocation2 + $0x30] sm:$0xff]
        %v5236 = vld [vmem:[#allocation2 + $0x38] sm:$0xff]
        %v5237 = vld [vmem:[#allocation2 + $0x40] sm:$0xff]
        %v5238 = vld [vmem:[#allocation2 + $0x48] sm:$0xff]
        %v5239 = vld [vmem:[#allocation2 + $0x50] sm:$0xff]
        %v5240 = vld [vmem:[#allocation2 + $0x58] sm:$0xff]
        %v5241 = vld [vmem:[#allocation2 + $0x60] sm:$0xff]
        %v5242 = vld [vmem:[#allocation2 + $0x68] sm:$0xff]
        %v5243 = vld [vmem:[#allocation2 + $0x70] sm:$0xff]
        %v5244 = vld [vmem:[#allocation2 + $0x78] sm:$0xff]
        %v5245 = vld [vmem:[#allocation2 + $0x80] sm:$0xff]
        %v5246 = vld [vmem:[#allocation2 + $0x88] sm:$0xff]
        %v5247 = vld [vmem:[#allocation2 + $0x90] sm:$0xff]
        %v5248 = vld [vmem:[#allocation2 + $0x98] sm:$0xff]
        %v5249 = vld [vmem:[#allocation2 + $0xa0] sm:$0xff]
        %v5250 = vld [vmem:[#allocation2 + $0xa8] sm:$0xff]
        %v5251 = vld [vmem:[#allocation2 + $0xb0] sm:$0xff]
        %v5252 = vld [vmem:[#allocation2 + $0xb8] sm:$0xff]
        %v5253 = vld [vmem:[#allocation2 + $0xc0] sm:$0xff]
        %v5254 = vld [vmem:[#allocation2 + $0xc8] sm:$0xff]
        %v5255 = vld [vmem:[#allocation2 + $0xd0] sm:$0xff]
        %v5256 = vld [vmem:[#allocation2 + $0xd8] sm:$0xff]
        %v5257 = vld [vmem:[#allocation2 + $0xe0] sm:$0xff]
        %v5258 = vld [vmem:[#allocation2 + $0xe8] sm:$0xff]
        %v5259 = vld [vmem:[#allocation2 + $0xf0] sm:$0xff]
        %v5260 = vld [vmem:[#allocation2 + $0xf8] sm:$0xff]
        %v5261 = vld [vmem:[#allocation2 + $0x100] sm:$0xff]
        %v5262 = vld [vmem:[#allocation2 + $0x108] sm:$0xff]
        %v5263 = vld [vmem:[#allocation2 + $0x110] sm:$0xff]
        %v5264 = vld [vmem:[#allocation2 + $0x118] sm:$0xff]
        %v5265 = vld [vmem:[#allocation2 + $0x120] sm:$0xff]
        %v5266 = vld [vmem:[#allocation2 + $0x128] sm:$0xff]
        %v5267 = vld [vmem:[#allocation2 + $0x130] sm:$0xff]
        %v5268 = vld [vmem:[#allocation2 + $0x138] sm:$0xff]
        %v5269 = vld [vmem:[#allocation2 + $0x140] sm:$0xff]
        %v5270 = vld [vmem:[#allocation2 + $0x148] sm:$0xff]
        %v5271 = vld [vmem:[#allocation2 + $0x150] sm:$0xff]
        %v5272 = vld [vmem:[#allocation2 + $0x158] sm:$0xff]
        %v5273 = vld [vmem:[#allocation2 + $0x160] sm:$0xff]
        %v5274 = vld [vmem:[#allocation2 + $0x168] sm:$0xff]
        %v5275 = vld [vmem:[#allocation2 + $0x170] sm:$0xff]
        %v5276 = vld [vmem:[#allocation2 + $0x178] sm:$0xff]
        %v5277 = vld [vmem:[#allocation2 + $0x180] sm:$0xff]
        %v5278 = vld [vmem:[#allocation2 + $0x188] sm:$0xff]
        %v5279 = vld [vmem:[#allocation2 + $0x190] sm:$0xff]
        %v5280 = vld [vmem:[#allocation2 + $0x198] sm:$0xff]
        %v5281 = vld [vmem:[#allocation2 + $0x1a0] sm:$0xff]
        %v5282 = vld [vmem:[#allocation2 + $0x1a8] sm:$0xff]
        %v5283 = vld [vmem:[#allocation2 + $0x1b0] sm:$0xff]
        %v5284 = vld [vmem:[#allocation2 + $0x1b8] sm:$0xff]
        %v5285 = vld [vmem:[#allocation2 + $0x1c0] sm:$0xff]
        %v5286 = vld [vmem:[#allocation2 + $0x1c8] sm:$0xff]
        %v5287 = vld [vmem:[#allocation2 + $0x1d0] sm:$0xff]
        %v5288 = vld [vmem:[#allocation2 + $0x1d8] sm:$0xff]
        %v5289 = vld [vmem:[#allocation2 + $0x1e0] sm:$0xff]
        %v5290 = vld [vmem:[#allocation2 + $0x1e8] sm:$0xff]
        %v5291 = vld [vmem:[#allocation2 + $0x1f0] sm:$0xff]
        %v5292 = vld [vmem:[#allocation2 + $0x1f8] sm:$0xff]
        %v5293 = vld [vmem:[#allocation2 + $0x200] sm:$0xff]
        %v5294 = vld [vmem:[#allocation2 + $0x208] sm:$0xff]
        %v5295 = vld [vmem:[#allocation2 + $0x210] sm:$0xff]
        %v5296 = vld [vmem:[#allocation2 + $0x218] sm:$0xff]
        %v5297 = vld [vmem:[#allocation2 + $0x220] sm:$0xff]
        %v5298 = vld [vmem:[#allocation2 + $0x228] sm:$0xff]
        %v5299 = vld [vmem:[#allocation2 + $0x230] sm:$0xff]
        %v5300 = vld [vmem:[#allocation2 + $0x238] sm:$0xff]
        %v5301 = vld [vmem:[#allocation2 + $0x240] sm:$0xff]
        %v5302 = vld [vmem:[#allocation2 + $0x248] sm:$0xff]
        %v5303 = vld [vmem:[#allocation2 + $0x250] sm:$0xff]
        %v5304 = vld [vmem:[#allocation2 + $0x258] sm:$0xff]
        %v5305 = vld [vmem:[#allocation2 + $0x260] sm:$0xff]
        %v5306 = vld [vmem:[#allocation2 + $0x268] sm:$0xff]
        %v5307 = vld [vmem:[#allocation2 + $0x270] sm:$0xff]
        %v5308 = vld [vmem:[#allocation2 + $0x278] sm:$0xff]
        %v5309 = vld [vmem:[#allocation2 + $0x280] sm:$0xff]
        %v5310 = vld [vmem:[#allocation2 + $0x288] sm:$0xff]
        %v5311 = vld [vmem:[#allocation2 + $0x290] sm:$0xff]
        %v5312 = vld [vmem:[#allocation2 + $0x298] sm:$0xff]
        %v5313 = vld [vmem:[#allocation2 + $0x2a0] sm:$0xff]
        %v5314 = vld [vmem:[#allocation2 + $0x2a8] sm:$0xff]
        %v5315 = vld [vmem:[#allocation2 + $0x2b0] sm:$0xff]
        %v5316 = vld [vmem:[#allocation2 + $0x2b8] sm:$0xff]
        %v5317 = vld [vmem:[#allocation2 + $0x2c0] sm:$0xff]
        %v5318 = vld [vmem:[#allocation2 + $0x2c8] sm:$0xff]
        %v5319 = vld [vmem:[#allocation2 + $0x2d0] sm:$0xff]
        %v5320 = vld [vmem:[#allocation2 + $0x2d8] sm:$0xff]
        %v5321 = vld [vmem:[#allocation2 + $0x2e0] sm:$0xff]
        %v5322 = vld [vmem:[#allocation2 + $0x2e8] sm:$0xff]
        %v5323 = vld [vmem:[#allocation2 + $0x2f0] sm:$0xff]
        %v5324 = vld [vmem:[#allocation2 + $0x2f8] sm:$0xff]
        %v5325 = vld [vmem:[#allocation2 + $0x300] sm:$0xff]
        %v5326 = vld [vmem:[#allocation2 + $0x308] sm:$0xff]
        %v5327 = vld [vmem:[#allocation2 + $0x310] sm:$0xff]
        %v5328 = vld [vmem:[#allocation2 + $0x318] sm:$0xff]
        %v5329 = vld [vmem:[#allocation2 + $0x320] sm:$0xff]
        %v5330 = vld [vmem:[#allocation2 + $0x328] sm:$0xff]
        %v5331 = vld [vmem:[#allocation2 + $0x330] sm:$0xff]
        %v5332 = vld [vmem:[#allocation2 + $0x338] sm:$0xff]
        %v5333 = vld [vmem:[#allocation2 + $0x340] sm:$0xff]
        %v5334 = vld [vmem:[#allocation2 + $0x348] sm:$0xff]
        %v5335 = vld [vmem:[#allocation2 + $0x350] sm:$0xff]
        %v5336 = vld [vmem:[#allocation2 + $0x358] sm:$0xff]
        %v5337 = vld [vmem:[#allocation2 + $0x360] sm:$0xff]
        %v5338 = vld [vmem:[#allocation2 + $0x368] sm:$0xff]
        %v5339 = vld [vmem:[#allocation2 + $0x370] sm:$0xff]
        %v5340 = vld [vmem:[#allocation2 + $0x378] sm:$0xff]
        %v5341 = vld [vmem:[#allocation2 + $0x380] sm:$0xff]
        %v5342 = vld [vmem:[#allocation2 + $0x388] sm:$0xff]
        %v5343 = vld [vmem:[#allocation2 + $0x390] sm:$0xff]
        %v5344 = vld [vmem:[#allocation2 + $0x398] sm:$0xff]
        %v5345 = vld [vmem:[#allocation2 + $0x3a0] sm:$0xff]
        %v5346 = vld [vmem:[#allocation2 + $0x3a8] sm:$0xff]
        %v5347 = vld [vmem:[#allocation2 + $0x3b0] sm:$0xff]
        %v5348 = vld [vmem:[#allocation2 + $0x3b8] sm:$0xff]
        %v5349 = vld [vmem:[#allocation2 + $0x3c0] sm:$0xff]
        %v5350 = vld [vmem:[#allocation2 + $0x3c8] sm:$0xff]
        %v5351 = vld [vmem:[#allocation2 + $0x3d0] sm:$0xff]
        %v5352 = vld [vmem:[#allocation2 + $0x3d8] sm:$0xff]
        %v5353 = vld [vmem:[#allocation2 + $0x3e0] sm:$0xff]
        %v5354 = vld [vmem:[#allocation2 + $0x3e8] sm:$0xff]
        %v5355 = vld [vmem:[#allocation2 + $0x3f0] sm:$0xff]
        %v5356 = vld [vmem:[#allocation2 + $0x3f8] sm:$0xff]
        %v5357 = vld [vmem:[#allocation2 + $0x400] sm:$0xff]
        %v5358 = vld [vmem:[#allocation2 + $0x408] sm:$0xff]
        %v5359 = vld [vmem:[#allocation2 + $0x410] sm:$0xff]
        %v5360 = vld [vmem:[#allocation2 + $0x418] sm:$0xff]
        %v5361 = vld [vmem:[#allocation2 + $0x420] sm:$0xff]
        %v5362 = vld [vmem:[#allocation2 + $0x428] sm:$0xff]
        %v5363 = vld [vmem:[#allocation2 + $0x430] sm:$0xff]
        %v5364 = vld [vmem:[#allocation2 + $0x438] sm:$0xff]
        %v5365 = vld [vmem:[#allocation2 + $0x440] sm:$0xff]
        %v5366 = vld [vmem:[#allocation2 + $0x448] sm:$0xff]
        %v5367 = vld [vmem:[#allocation2 + $0x450] sm:$0xff]
        %v5368 = vld [vmem:[#allocation2 + $0x458] sm:$0xff]
        %v5369 = vld [vmem:[#allocation2 + $0x460] sm:$0xff]
        %v5370 = vld [vmem:[#allocation2 + $0x468] sm:$0xff]
        %v5371 = vld [vmem:[#allocation2 + $0x470] sm:$0xff]
        %v5372 = vld [vmem:[#allocation2 + $0x478] sm:$0xff]
        %v5373 = vld [vmem:[#allocation2 + $0x480] sm:$0xff]
        %v5374 = vld [vmem:[#allocation2 + $0x488] sm:$0xff]
        %v5375 = vld [vmem:[#allocation2 + $0x490] sm:$0xff]
        %v5376 = vld [vmem:[#allocation2 + $0x498] sm:$0xff]
        %v5377 = vld [vmem:[#allocation2 + $0x4a0] sm:$0xff]
        %v5378 = vld [vmem:[#allocation2 + $0x4a8] sm:$0xff]
        %v5379 = vld [vmem:[#allocation2 + $0x4b0] sm:$0xff]
        %v5380 = vld [vmem:[#allocation2 + $0x4b8] sm:$0xff]
        %v5381 = vld [vmem:[#allocation2 + $0x4c0] sm:$0xff]
        %v5382 = vld [vmem:[#allocation2 + $0x4c8] sm:$0xff]
        %v5383 = vld [vmem:[#allocation2 + $0x4d0] sm:$0xff]
        %v5384 = vld [vmem:[#allocation2 + $0x4d8] sm:$0xff]
        %v5385 = vld [vmem:[#allocation2 + $0x4e0] sm:$0xff]
        %v5386 = vld [vmem:[#allocation2 + $0x4e8] sm:$0xff]
        %v5387 = vld [vmem:[#allocation2 + $0x4f0] sm:$0xff]
        %v5388 = vld [vmem:[#allocation2 + $0x4f8] sm:$0xff]
        %v5389 = vld [vmem:[#allocation2 + $0x500] sm:$0xff]
        %v5390 = vld [vmem:[#allocation2 + $0x508] sm:$0xff]
        %v5391 = vld [vmem:[#allocation2 + $0x510] sm:$0xff]
        %v5392 = vld [vmem:[#allocation2 + $0x518] sm:$0xff]
        %v5393 = vld [vmem:[#allocation2 + $0x520] sm:$0xff]
        %v5394 = vld [vmem:[#allocation2 + $0x528] sm:$0xff]
        %v5395 = vld [vmem:[#allocation2 + $0x530] sm:$0xff]
        %v5396 = vld [vmem:[#allocation2 + $0x538] sm:$0xff]
        %v5397 = vld [vmem:[#allocation2 + $0x540] sm:$0xff]
        %v5398 = vld [vmem:[#allocation2 + $0x548] sm:$0xff]
        %v5399 = vld [vmem:[#allocation2 + $0x550] sm:$0xff]
        %v5400 = vld [vmem:[#allocation2 + $0x558] sm:$0xff]
        %v5401 = vld [vmem:[#allocation2 + $0x560] sm:$0xff]
        %v5402 = vld [vmem:[#allocation2 + $0x568] sm:$0xff]
        %v5403 = vld [vmem:[#allocation2 + $0x570] sm:$0xff]
        %v5404 = vld [vmem:[#allocation2 + $0x578] sm:$0xff]
        %v5405 = vld [vmem:[#allocation2 + $0x580] sm:$0xff]
        %v5406 = vld [vmem:[#allocation2 + $0x588] sm:$0xff]
        %v5407 = vld [vmem:[#allocation2 + $0x590] sm:$0xff]
        %v5408 = vld [vmem:[#allocation2 + $0x598] sm:$0xff]
        %v5409 = vld [vmem:[#allocation2 + $0x5a0] sm:$0xff]
        %v5410 = vld [vmem:[#allocation2 + $0x5a8] sm:$0xff]
        %v5411 = vld [vmem:[#allocation2 + $0x5b0] sm:$0xff]
        %v5412 = vld [vmem:[#allocation2 + $0x5b8] sm:$0xff]
        %v5413 = vld [vmem:[#allocation2 + $0x5c0] sm:$0xff]
        %v5414 = vld [vmem:[#allocation2 + $0x5c8] sm:$0xff]
        %v5415 = vld [vmem:[#allocation2 + $0x5d0] sm:$0xff]
        %v5416 = vld [vmem:[#allocation2 + $0x5d8] sm:$0xff]
        %v5417 = vld [vmem:[#allocation2 + $0x5e0] sm:$0xff]
        %v5418 = vld [vmem:[#allocation2 + $0x5e8] sm:$0xff]
        %v5419 = vld [vmem:[#allocation2 + $0x5f0] sm:$0xff]
        %v5420 = vld [vmem:[#allocation2 + $0x5f8] sm:$0xff]
        %v5421 = vld [vmem:[#allocation2 + $0x600] sm:$0xff]
        %v5422 = vld [vmem:[#allocation2 + $0x608] sm:$0xff]
        %v5423 = vld [vmem:[#allocation2 + $0x610] sm:$0xff]
        %v5424 = vld [vmem:[#allocation2 + $0x618] sm:$0xff]
        %v5425 = vld [vmem:[#allocation2 + $0x620] sm:$0xff]
        %v5426 = vld [vmem:[#allocation2 + $0x628] sm:$0xff]
        %v5427 = vld [vmem:[#allocation2 + $0x630] sm:$0xff]
        %v5428 = vld [vmem:[#allocation2 + $0x638] sm:$0xff]
        %v5429 = vld [vmem:[#allocation2 + $0x640] sm:$0xff]
        %v5430 = vld [vmem:[#allocation2 + $0x648] sm:$0xff]
        %v5431 = vld [vmem:[#allocation2 + $0x650] sm:$0xff]
        %v5432 = vld [vmem:[#allocation2 + $0x658] sm:$0xff]
        %v5433 = vld [vmem:[#allocation2 + $0x660] sm:$0xff]
        %v5434 = vld [vmem:[#allocation2 + $0x668] sm:$0xff]
        %v5435 = vld [vmem:[#allocation2 + $0x670] sm:$0xff]
        %v5436 = vld [vmem:[#allocation2 + $0x678] sm:$0xff]
        %v5437 = vld [vmem:[#allocation2 + $0x680] sm:$0xff]
        %v5438 = vld [vmem:[#allocation2 + $0x688] sm:$0xff]
        %v5439 = vld [vmem:[#allocation2 + $0x690] sm:$0xff]
        %v5440 = vld [vmem:[#allocation2 + $0x698] sm:$0xff]
        %v5441 = vld [vmem:[#allocation2 + $0x6a0] sm:$0xff]
        %v5442 = vld [vmem:[#allocation2 + $0x6a8] sm:$0xff]
        %v5443 = vld [vmem:[#allocation2 + $0x6b0] sm:$0xff]
        %v5444 = vld [vmem:[#allocation2 + $0x6b8] sm:$0xff]
        %v5445 = vld [vmem:[#allocation2 + $0x6c0] sm:$0xff]
        %v5446 = vld [vmem:[#allocation2 + $0x6c8] sm:$0xff]
        %v5447 = vld [vmem:[#allocation2 + $0x6d0] sm:$0xff]
        %v5448 = vld [vmem:[#allocation2 + $0x6d8] sm:$0xff]
        %v5449 = vld [vmem:[#allocation2 + $0x6e0] sm:$0xff]
        %v5450 = vld [vmem:[#allocation2 + $0x6e8] sm:$0xff]
        %v5451 = vld [vmem:[#allocation2 + $0x6f0] sm:$0xff]
        %v5452 = vld [vmem:[#allocation2 + $0x6f8] sm:$0xff]
        %v5453 = vld [vmem:[#allocation2 + $0x700] sm:$0xff]
        %v5454 = vld [vmem:[#allocation2 + $0x708] sm:$0xff]
        %v5455 = vld [vmem:[#allocation2 + $0x710] sm:$0xff]
        %v5456 = vld [vmem:[#allocation2 + $0x718] sm:$0xff]
        %v5457 = vld [vmem:[#allocation2 + $0x720] sm:$0xff]
        %v5458 = vld [vmem:[#allocation2 + $0x728] sm:$0xff]
        %v5459 = vld [vmem:[#allocation2 + $0x730] sm:$0xff]
        %v5460 = vld [vmem:[#allocation2 + $0x738] sm:$0xff]
        %v5461 = vld [vmem:[#allocation2 + $0x740] sm:$0xff]
        %v5462 = vld [vmem:[#allocation2 + $0x748] sm:$0xff]
        %vm5463 = vcmask 130048
        %v5465 = vsel %vm5463, %v5224, 0
        %v5468 = vsel %vm5463, %v5227, 0
        %5470 = vmatpush.msra.mxu0 %v5424
        %5471 = vmatpush.msra.mxu0 %v5411
        %5472 = vmatpush.msra.mxu0 %v5398
        %5473 = vmatpush.msra.mxu0 %v5385
        %5474 = vmatpush.msra.mxu0 %v5372
        %5475 = vmatpush.msra.mxu0 %v5359
        %5476 = vmatpush.msra.mxu0 %v5346
        %5477 = vmatpush.msra.mxu0 %v5333
        %5478 = vmatpush.msra.mxu0 %v5320
        %5479 = vmatpush.msra.mxu0 %v5307
        %5480 = vmatpush.msra.mxu0 %v5294
        %5481 = vmatpush.msra.mxu0 %v5281
        %5482 = vmatpush.msra.mxu0 %v5268
        %5483 = vmatpush.msra.mxu0 %v5255
        %5484 = vmatpush.msra.mxu0 %v5242
        %5485 = vmatpush.msra.mxu0 %v5229
        %5486 = vmatmul.f32.gmra.mxu0 %v5201
        %v5487 = vpop.f32.mrf.mxu0
        %v5488 = vadd.f32 0.0, %v5487
        %5489 = vmatmul.f32.gmra.mxu0 %v5204
        %v5490 = vpop.f32.mrf.mxu0
        %v5491 = vadd.f32 0.0, %v5490
        %5492 = vdwg.mxu0
        %5493 = vmatpush.msra.mxu0 0.0
        %5494 = vmatpush.msra.mxu0 0.0
        %5495 = vmatpush.msra.mxu0 0.0
        %5496 = vmatpush.msra.mxu0 0.0
        %5497 = vmatpush.msra.mxu0 0.0
        %5498 = vmatpush.msra.mxu0 0.0
        %5499 = vmatpush.msra.mxu0 0.0
        %5500 = vmatpush.msra.mxu0 0.0
        %5501 = vmatpush.msra.mxu0 0.0
        %5502 = vmatpush.msra.mxu0 0.0
        %5503 = vmatpush.msra.mxu0 0.0
        %5504 = vmatpush.msra.mxu0 0.0
        %5505 = vmatpush.msra.mxu0 0.0
        %5506 = vmatpush.msra.mxu0 0.0
        %5507 = vmatpush.msra.mxu0 %v5450
        %5508 = vmatpush.msra.mxu0 %v5437
        %5509 = vmatmul.f32.gmra.mxu0 %v5465
        %v5510 = vpop.f32.mrf.mxu0
        %v5511 = vadd.f32 %v5488, %v5510
        %5512 = vmatmul.f32.gmra.mxu0 %v5468
        %v5513 = vpop.f32.mrf.mxu0
        %v5514 = vadd.f32 %v5491, %v5513
        %5515 = vdwg.mxu0
        %5516 = vmatpush.msra.mxu0 %v5425
        %5517 = vmatpush.msra.mxu0 %v5412
        %5518 = vmatpush.msra.mxu0 %v5399
        %5519 = vmatpush.msra.mxu0 %v5386
        %5520 = vmatpush.msra.mxu0 %v5373
        %5521 = vmatpush.msra.mxu0 %v5360
        %5522 = vmatpush.msra.mxu0 %v5347
        %5523 = vmatpush.msra.mxu0 %v5334
        %5524 = vmatpush.msra.mxu0 %v5321
        %5525 = vmatpush.msra.mxu0 %v5308
        %5526 = vmatpush.msra.mxu0 %v5295
        %5527 = vmatpush.msra.mxu0 %v5282
        %5528 = vmatpush.msra.mxu0 %v5269
        %5529 = vmatpush.msra.mxu0 %v5256
        %5530 = vmatpush.msra.mxu0 %v5243
        %5531 = vmatpush.msra.mxu0 %v5230
        %5532 = vmatmul.f32.gmra.mxu0 %v5201
        %v5533 = vpop.f32.mrf.mxu0
        %v5534 = vadd.f32 0.0, %v5533
        %5535 = vmatmul.f32.gmra.mxu0 %v5204
        %v5536 = vpop.f32.mrf.mxu0
        %v5537 = vadd.f32 0.0, %v5536
        %5538 = vdwg.mxu0
        %5539 = vmatpush.msra.mxu0 0.0
        %5540 = vmatpush.msra.mxu0 0.0
        %5541 = vmatpush.msra.mxu0 0.0
        %5542 = vmatpush.msra.mxu0 0.0
        %5543 = vmatpush.msra.mxu0 0.0
        %5544 = vmatpush.msra.mxu0 0.0
        %5545 = vmatpush.msra.mxu0 0.0
        %5546 = vmatpush.msra.mxu0 0.0
        %5547 = vmatpush.msra.mxu0 0.0
        %5548 = vmatpush.msra.mxu0 0.0
        %5549 = vmatpush.msra.mxu0 0.0
        %5550 = vmatpush.msra.mxu0 0.0
        %5551 = vmatpush.msra.mxu0 0.0
        %5552 = vmatpush.msra.mxu0 0.0
        %5553 = vmatpush.msra.mxu0 %v5451
        %5554 = vmatpush.msra.mxu0 %v5438
        %5555 = vmatmul.f32.gmra.mxu0 %v5465
        %v5556 = vpop.f32.mrf.mxu0
        %v5557 = vadd.f32 %v5534, %v5556
        %5558 = vmatmul.f32.gmra.mxu0 %v5468
        %v5559 = vpop.f32.mrf.mxu0
        %v5560 = vadd.f32 %v5537, %v5559
        %5561 = vdwg.mxu0
        %5562 = vmatpush.msra.mxu0 %v5426
        %5563 = vmatpush.msra.mxu0 %v5413
        %5564 = vmatpush.msra.mxu0 %v5400
        %5565 = vmatpush.msra.mxu0 %v5387
        %5566 = vmatpush.msra.mxu0 %v5374
        %5567 = vmatpush.msra.mxu0 %v5361
        %5568 = vmatpush.msra.mxu0 %v5348
        %5569 = vmatpush.msra.mxu0 %v5335
        %5570 = vmatpush.msra.mxu0 %v5322
        %5571 = vmatpush.msra.mxu0 %v5309
        %5572 = vmatpush.msra.mxu0 %v5296
        %5573 = vmatpush.msra.mxu0 %v5283
        %5574 = vmatpush.msra.mxu0 %v5270
        %5575 = vmatpush.msra.mxu0 %v5257
        %5576 = vmatpush.msra.mxu0 %v5244
        %5577 = vmatpush.msra.mxu0 %v5231
        %5578 = vmatmul.f32.gmra.mxu0 %v5201
        %v5579 = vpop.f32.mrf.mxu0
        %v5580 = vadd.f32 0.0, %v5579
        %5581 = vmatmul.f32.gmra.mxu0 %v5204
        %v5582 = vpop.f32.mrf.mxu0
        %v5583 = vadd.f32 0.0, %v5582
        %5584 = vdwg.mxu0
        %5585 = vmatpush.msra.mxu0 0.0
        %5586 = vmatpush.msra.mxu0 0.0
        %5587 = vmatpush.msra.mxu0 0.0
        %5588 = vmatpush.msra.mxu0 0.0
        %5589 = vmatpush.msra.mxu0 0.0
        %5590 = vmatpush.msra.mxu0 0.0
        %5591 = vmatpush.msra.mxu0 0.0
        %5592 = vmatpush.msra.mxu0 0.0
        %5593 = vmatpush.msra.mxu0 0.0
        %5594 = vmatpush.msra.mxu0 0.0
        %5595 = vmatpush.msra.mxu0 0.0
        %5596 = vmatpush.msra.mxu0 0.0
        %5597 = vmatpush.msra.mxu0 0.0
        %5598 = vmatpush.msra.mxu0 0.0
        %5599 = vmatpush.msra.mxu0 %v5452
        %5600 = vmatpush.msra.mxu0 %v5439
        %5601 = vmatmul.f32.gmra.mxu0 %v5465
        %v5602 = vpop.f32.mrf.mxu0
        %v5603 = vadd.f32 %v5580, %v5602
        %5604 = vmatmul.f32.gmra.mxu0 %v5468
        %v5605 = vpop.f32.mrf.mxu0
        %v5606 = vadd.f32 %v5583, %v5605
        %5607 = vdwg.mxu0
        %5608 = vmatpush.msra.mxu0 %v5427
        %5609 = vmatpush.msra.mxu0 %v5414
        %5610 = vmatpush.msra.mxu0 %v5401
        %5611 = vmatpush.msra.mxu0 %v5388
        %5612 = vmatpush.msra.mxu0 %v5375
        %5613 = vmatpush.msra.mxu0 %v5362
        %5614 = vmatpush.msra.mxu0 %v5349
        %5615 = vmatpush.msra.mxu0 %v5336
        %5616 = vmatpush.msra.mxu0 %v5323
        %5617 = vmatpush.msra.mxu0 %v5310
        %5618 = vmatpush.msra.mxu0 %v5297
        %5619 = vmatpush.msra.mxu0 %v5284
        %5620 = vmatpush.msra.mxu0 %v5271
        %5621 = vmatpush.msra.mxu0 %v5258
        %5622 = vmatpush.msra.mxu0 %v5245
        %5623 = vmatpush.msra.mxu0 %v5232
        %5624 = vmatmul.f32.gmra.mxu0 %v5201
        %v5625 = vpop.f32.mrf.mxu0
        %v5626 = vadd.f32 0.0, %v5625
        %5627 = vmatmul.f32.gmra.mxu0 %v5204
        %v5628 = vpop.f32.mrf.mxu0
        %v5629 = vadd.f32 0.0, %v5628
        %5630 = vdwg.mxu0
        %5631 = vmatpush.msra.mxu0 0.0
        %5632 = vmatpush.msra.mxu0 0.0
        %5633 = vmatpush.msra.mxu0 0.0
        %5634 = vmatpush.msra.mxu0 0.0
        %5635 = vmatpush.msra.mxu0 0.0
        %5636 = vmatpush.msra.mxu0 0.0
        %5637 = vmatpush.msra.mxu0 0.0
        %5638 = vmatpush.msra.mxu0 0.0
        %5639 = vmatpush.msra.mxu0 0.0
        %5640 = vmatpush.msra.mxu0 0.0
        %5641 = vmatpush.msra.mxu0 0.0
        %5642 = vmatpush.msra.mxu0 0.0
        %5643 = vmatpush.msra.mxu0 0.0
        %5644 = vmatpush.msra.mxu0 0.0
        %5645 = vmatpush.msra.mxu0 %v5453
        %5646 = vmatpush.msra.mxu0 %v5440
        %5647 = vmatmul.f32.gmra.mxu0 %v5465
        %v5648 = vpop.f32.mrf.mxu0
        %v5649 = vadd.f32 %v5626, %v5648
        %5650 = vmatmul.f32.gmra.mxu0 %v5468
        %v5651 = vpop.f32.mrf.mxu0
        %v5652 = vadd.f32 %v5629, %v5651
        %5653 = vdwg.mxu0
        %5654 = vmatpush.msra.mxu0 %v5428
        %5655 = vmatpush.msra.mxu0 %v5415
        %5656 = vmatpush.msra.mxu0 %v5402
        %5657 = vmatpush.msra.mxu0 %v5389
        %5658 = vmatpush.msra.mxu0 %v5376
        %5659 = vmatpush.msra.mxu0 %v5363
        %5660 = vmatpush.msra.mxu0 %v5350
        %5661 = vmatpush.msra.mxu0 %v5337
        %5662 = vmatpush.msra.mxu0 %v5324
        %5663 = vmatpush.msra.mxu0 %v5311
        %5664 = vmatpush.msra.mxu0 %v5298
        %5665 = vmatpush.msra.mxu0 %v5285
        %5666 = vmatpush.msra.mxu0 %v5272
        %5667 = vmatpush.msra.mxu0 %v5259
        %5668 = vmatpush.msra.mxu0 %v5246
        %5669 = vmatpush.msra.mxu0 %v5233
        %5670 = vmatmul.f32.gmra.mxu0 %v5201
        %v5671 = vpop.f32.mrf.mxu0
        %v5672 = vadd.f32 0.0, %v5671
        %5673 = vmatmul.f32.gmra.mxu0 %v5204
        %v5674 = vpop.f32.mrf.mxu0
        %v5675 = vadd.f32 0.0, %v5674
        %5676 = vdwg.mxu0
        %5677 = vmatpush.msra.mxu0 0.0
        %5678 = vmatpush.msra.mxu0 0.0
        %5679 = vmatpush.msra.mxu0 0.0
        %5680 = vmatpush.msra.mxu0 0.0
        %5681 = vmatpush.msra.mxu0 0.0
        %5682 = vmatpush.msra.mxu0 0.0
        %5683 = vmatpush.msra.mxu0 0.0
        %5684 = vmatpush.msra.mxu0 0.0
        %5685 = vmatpush.msra.mxu0 0.0
        %5686 = vmatpush.msra.mxu0 0.0
        %5687 = vmatpush.msra.mxu0 0.0
        %5688 = vmatpush.msra.mxu0 0.0
        %5689 = vmatpush.msra.mxu0 0.0
        %5690 = vmatpush.msra.mxu0 0.0
        %5691 = vmatpush.msra.mxu0 %v5454
        %5692 = vmatpush.msra.mxu0 %v5441
        %5693 = vmatmul.f32.gmra.mxu0 %v5465
        %v5694 = vpop.f32.mrf.mxu0
        %v5695 = vadd.f32 %v5672, %v5694
        %5696 = vmatmul.f32.gmra.mxu0 %v5468
        %v5697 = vpop.f32.mrf.mxu0
        %v5698 = vadd.f32 %v5675, %v5697
        %5699 = vdwg.mxu0
        %5700 = vmatpush.msra.mxu0 %v5429
        %5701 = vmatpush.msra.mxu0 %v5416
        %5702 = vmatpush.msra.mxu0 %v5403
        %5703 = vmatpush.msra.mxu0 %v5390
        %5704 = vmatpush.msra.mxu0 %v5377
        %5705 = vmatpush.msra.mxu0 %v5364
        %5706 = vmatpush.msra.mxu0 %v5351
        %5707 = vmatpush.msra.mxu0 %v5338
        %5708 = vmatpush.msra.mxu0 %v5325
        %5709 = vmatpush.msra.mxu0 %v5312
        %5710 = vmatpush.msra.mxu0 %v5299
        %5711 = vmatpush.msra.mxu0 %v5286
        %5712 = vmatpush.msra.mxu0 %v5273
        %5713 = vmatpush.msra.mxu0 %v5260
        %5714 = vmatpush.msra.mxu0 %v5247
        %5715 = vmatpush.msra.mxu0 %v5234
        %5716 = vmatmul.f32.gmra.mxu0 %v5201
        %v5717 = vpop.f32.mrf.mxu0
        %v5718 = vadd.f32 0.0, %v5717
        %5719 = vmatmul.f32.gmra.mxu0 %v5204
        %v5720 = vpop.f32.mrf.mxu0
        %v5721 = vadd.f32 0.0, %v5720
        %5722 = vdwg.mxu0
        %5723 = vmatpush.msra.mxu0 0.0
        %5724 = vmatpush.msra.mxu0 0.0
        %5725 = vmatpush.msra.mxu0 0.0
        %5726 = vmatpush.msra.mxu0 0.0
        %5727 = vmatpush.msra.mxu0 0.0
        %5728 = vmatpush.msra.mxu0 0.0
        %5729 = vmatpush.msra.mxu0 0.0
        %5730 = vmatpush.msra.mxu0 0.0
        %5731 = vmatpush.msra.mxu0 0.0
        %5732 = vmatpush.msra.mxu0 0.0
        %5733 = vmatpush.msra.mxu0 0.0
        %5734 = vmatpush.msra.mxu0 0.0
        %5735 = vmatpush.msra.mxu0 0.0
        %5736 = vmatpush.msra.mxu0 0.0
        %5737 = vmatpush.msra.mxu0 %v5455
        %5738 = vmatpush.msra.mxu0 %v5442
        %5739 = vmatmul.f32.gmra.mxu0 %v5465
        %v5740 = vpop.f32.mrf.mxu0
        %v5741 = vadd.f32 %v5718, %v5740
        %5742 = vmatmul.f32.gmra.mxu0 %v5468
        %v5743 = vpop.f32.mrf.mxu0
        %v5744 = vadd.f32 %v5721, %v5743
        %5745 = vdwg.mxu0
        %5746 = vmatpush.msra.mxu0 %v5430
        %5747 = vmatpush.msra.mxu0 %v5417
        %5748 = vmatpush.msra.mxu0 %v5404
        %5749 = vmatpush.msra.mxu0 %v5391
        %5750 = vmatpush.msra.mxu0 %v5378
        %5751 = vmatpush.msra.mxu0 %v5365
        %5752 = vmatpush.msra.mxu0 %v5352
        %5753 = vmatpush.msra.mxu0 %v5339
        %5754 = vmatpush.msra.mxu0 %v5326
        %5755 = vmatpush.msra.mxu0 %v5313
        %5756 = vmatpush.msra.mxu0 %v5300
        %5757 = vmatpush.msra.mxu0 %v5287
        %5758 = vmatpush.msra.mxu0 %v5274
        %5759 = vmatpush.msra.mxu0 %v5261
        %5760 = vmatpush.msra.mxu0 %v5248
        %5761 = vmatpush.msra.mxu0 %v5235
        %5762 = vmatmul.f32.gmra.mxu0 %v5201
        %v5763 = vpop.f32.mrf.mxu0
        %v5764 = vadd.f32 0.0, %v5763
        %5765 = vmatmul.f32.gmra.mxu0 %v5204
        %v5766 = vpop.f32.mrf.mxu0
        %v5767 = vadd.f32 0.0, %v5766
        %5768 = vdwg.mxu0
        %5769 = vmatpush.msra.mxu0 0.0
        %5770 = vmatpush.msra.mxu0 0.0
        %5771 = vmatpush.msra.mxu0 0.0
        %5772 = vmatpush.msra.mxu0 0.0
        %5773 = vmatpush.msra.mxu0 0.0
        %5774 = vmatpush.msra.mxu0 0.0
        %5775 = vmatpush.msra.mxu0 0.0
        %5776 = vmatpush.msra.mxu0 0.0
        %5777 = vmatpush.msra.mxu0 0.0
        %5778 = vmatpush.msra.mxu0 0.0
        %5779 = vmatpush.msra.mxu0 0.0
        %5780 = vmatpush.msra.mxu0 0.0
        %5781 = vmatpush.msra.mxu0 0.0
        %5782 = vmatpush.msra.mxu0 0.0
        %5783 = vmatpush.msra.mxu0 %v5456
        %5784 = vmatpush.msra.mxu0 %v5443
        %5785 = vmatmul.f32.gmra.mxu0 %v5465
        %v5786 = vpop.f32.mrf.mxu0
        %v5787 = vadd.f32 %v5764, %v5786
        %5788 = vmatmul.f32.gmra.mxu0 %v5468
        %v5789 = vpop.f32.mrf.mxu0
        %v5790 = vadd.f32 %v5767, %v5789
        %5791 = vdwg.mxu0
        %5792 = vmatpush.msra.mxu0 %v5431
        %5793 = vmatpush.msra.mxu0 %v5418
        %5794 = vmatpush.msra.mxu0 %v5405
        %5795 = vmatpush.msra.mxu0 %v5392
        %5796 = vmatpush.msra.mxu0 %v5379
        %5797 = vmatpush.msra.mxu0 %v5366
        %5798 = vmatpush.msra.mxu0 %v5353
        %5799 = vmatpush.msra.mxu0 %v5340
        %5800 = vmatpush.msra.mxu0 %v5327
        %5801 = vmatpush.msra.mxu0 %v5314
        %5802 = vmatpush.msra.mxu0 %v5301
        %5803 = vmatpush.msra.mxu0 %v5288
        %5804 = vmatpush.msra.mxu0 %v5275
        %5805 = vmatpush.msra.mxu0 %v5262
        %5806 = vmatpush.msra.mxu0 %v5249
        %5807 = vmatpush.msra.mxu0 %v5236
        %5808 = vmatmul.f32.gmra.mxu0 %v5201
        %v5809 = vpop.f32.mrf.mxu0
        %v5810 = vadd.f32 0.0, %v5809
        %5811 = vmatmul.f32.gmra.mxu0 %v5204
        %v5812 = vpop.f32.mrf.mxu0
        %v5813 = vadd.f32 0.0, %v5812
        %5814 = vdwg.mxu0
        %5815 = vmatpush.msra.mxu0 0.0
        %5816 = vmatpush.msra.mxu0 0.0
        %5817 = vmatpush.msra.mxu0 0.0
        %5818 = vmatpush.msra.mxu0 0.0
        %5819 = vmatpush.msra.mxu0 0.0
        %5820 = vmatpush.msra.mxu0 0.0
        %5821 = vmatpush.msra.mxu0 0.0
        %5822 = vmatpush.msra.mxu0 0.0
        %5823 = vmatpush.msra.mxu0 0.0
        %5824 = vmatpush.msra.mxu0 0.0
        %5825 = vmatpush.msra.mxu0 0.0
        %5826 = vmatpush.msra.mxu0 0.0
        %5827 = vmatpush.msra.mxu0 0.0
        %5828 = vmatpush.msra.mxu0 0.0
        %5829 = vmatpush.msra.mxu0 %v5457
        %5830 = vmatpush.msra.mxu0 %v5444
        %5831 = vmatmul.f32.gmra.mxu0 %v5465
        %v5832 = vpop.f32.mrf.mxu0
        %v5833 = vadd.f32 %v5810, %v5832
        %5834 = vmatmul.f32.gmra.mxu0 %v5468
        %v5835 = vpop.f32.mrf.mxu0
        %v5836 = vadd.f32 %v5813, %v5835
        %5837 = vdwg.mxu0
        %5838 = vmatpush.msra.mxu0 %v5432
        %5839 = vmatpush.msra.mxu0 %v5419
        %5840 = vmatpush.msra.mxu0 %v5406
        %5841 = vmatpush.msra.mxu0 %v5393
        %5842 = vmatpush.msra.mxu0 %v5380
        %5843 = vmatpush.msra.mxu0 %v5367
        %5844 = vmatpush.msra.mxu0 %v5354
        %5845 = vmatpush.msra.mxu0 %v5341
        %5846 = vmatpush.msra.mxu0 %v5328
        %5847 = vmatpush.msra.mxu0 %v5315
        %5848 = vmatpush.msra.mxu0 %v5302
        %5849 = vmatpush.msra.mxu0 %v5289
        %5850 = vmatpush.msra.mxu0 %v5276
        %5851 = vmatpush.msra.mxu0 %v5263
        %5852 = vmatpush.msra.mxu0 %v5250
        %5853 = vmatpush.msra.mxu0 %v5237
        %5854 = vmatmul.f32.gmra.mxu0 %v5201
        %v5855 = vpop.f32.mrf.mxu0
        %v5856 = vadd.f32 0.0, %v5855
        %5857 = vmatmul.f32.gmra.mxu0 %v5204
        %v5858 = vpop.f32.mrf.mxu0
        %v5859 = vadd.f32 0.0, %v5858
        %5860 = vdwg.mxu0
        %5861 = vmatpush.msra.mxu0 0.0
        %5862 = vmatpush.msra.mxu0 0.0
        %5863 = vmatpush.msra.mxu0 0.0
        %5864 = vmatpush.msra.mxu0 0.0
        %5865 = vmatpush.msra.mxu0 0.0
        %5866 = vmatpush.msra.mxu0 0.0
        %5867 = vmatpush.msra.mxu0 0.0
        %5868 = vmatpush.msra.mxu0 0.0
        %5869 = vmatpush.msra.mxu0 0.0
        %5870 = vmatpush.msra.mxu0 0.0
        %5871 = vmatpush.msra.mxu0 0.0
        %5872 = vmatpush.msra.mxu0 0.0
        %5873 = vmatpush.msra.mxu0 0.0
        %5874 = vmatpush.msra.mxu0 0.0
        %5875 = vmatpush.msra.mxu0 %v5458
        %5876 = vmatpush.msra.mxu0 %v5445
        %5877 = vmatmul.f32.gmra.mxu0 %v5465
        %v5878 = vpop.f32.mrf.mxu0
        %v5879 = vadd.f32 %v5856, %v5878
        %5880 = vmatmul.f32.gmra.mxu0 %v5468
        %v5881 = vpop.f32.mrf.mxu0
        %v5882 = vadd.f32 %v5859, %v5881
        %5883 = vdwg.mxu0
        %5884 = vmatpush.msra.mxu0 %v5433
        %5885 = vmatpush.msra.mxu0 %v5420
        %5886 = vmatpush.msra.mxu0 %v5407
        %5887 = vmatpush.msra.mxu0 %v5394
        %5888 = vmatpush.msra.mxu0 %v5381
        %5889 = vmatpush.msra.mxu0 %v5368
        %5890 = vmatpush.msra.mxu0 %v5355
        %5891 = vmatpush.msra.mxu0 %v5342
        %5892 = vmatpush.msra.mxu0 %v5329
        %5893 = vmatpush.msra.mxu0 %v5316
        %5894 = vmatpush.msra.mxu0 %v5303
        %5895 = vmatpush.msra.mxu0 %v5290
        %5896 = vmatpush.msra.mxu0 %v5277
        %5897 = vmatpush.msra.mxu0 %v5264
        %5898 = vmatpush.msra.mxu0 %v5251
        %5899 = vmatpush.msra.mxu0 %v5238
        %5900 = vmatmul.f32.gmra.mxu0 %v5201
        %v5901 = vpop.f32.mrf.mxu0
        %v5902 = vadd.f32 0.0, %v5901
        %5903 = vmatmul.f32.gmra.mxu0 %v5204
        %v5904 = vpop.f32.mrf.mxu0
        %v5905 = vadd.f32 0.0, %v5904
        %5906 = vdwg.mxu0
        %5907 = vmatpush.msra.mxu0 0.0
        %5908 = vmatpush.msra.mxu0 0.0
        %5909 = vmatpush.msra.mxu0 0.0
        %5910 = vmatpush.msra.mxu0 0.0
        %5911 = vmatpush.msra.mxu0 0.0
        %5912 = vmatpush.msra.mxu0 0.0
        %5913 = vmatpush.msra.mxu0 0.0
        %5914 = vmatpush.msra.mxu0 0.0
        %5915 = vmatpush.msra.mxu0 0.0
        %5916 = vmatpush.msra.mxu0 0.0
        %5917 = vmatpush.msra.mxu0 0.0
        %5918 = vmatpush.msra.mxu0 0.0
        %5919 = vmatpush.msra.mxu0 0.0
        %5920 = vmatpush.msra.mxu0 0.0
        %5921 = vmatpush.msra.mxu0 %v5459
        %5922 = vmatpush.msra.mxu0 %v5446
        %5923 = vmatmul.f32.gmra.mxu0 %v5465
        %v5924 = vpop.f32.mrf.mxu0
        %v5925 = vadd.f32 %v5902, %v5924
        %5926 = vmatmul.f32.gmra.mxu0 %v5468
        %v5927 = vpop.f32.mrf.mxu0
        %v5928 = vadd.f32 %v5905, %v5927
        %5929 = vdwg.mxu0
        %5930 = vmatpush.msra.mxu0 %v5434
        %5931 = vmatpush.msra.mxu0 %v5421
        %5932 = vmatpush.msra.mxu0 %v5408
        %5933 = vmatpush.msra.mxu0 %v5395
        %5934 = vmatpush.msra.mxu0 %v5382
        %5935 = vmatpush.msra.mxu0 %v5369
        %5936 = vmatpush.msra.mxu0 %v5356
        %5937 = vmatpush.msra.mxu0 %v5343
        %5938 = vmatpush.msra.mxu0 %v5330
        %5939 = vmatpush.msra.mxu0 %v5317
        %5940 = vmatpush.msra.mxu0 %v5304
        %5941 = vmatpush.msra.mxu0 %v5291
        %5942 = vmatpush.msra.mxu0 %v5278
        %5943 = vmatpush.msra.mxu0 %v5265
        %5944 = vmatpush.msra.mxu0 %v5252
        %5945 = vmatpush.msra.mxu0 %v5239
        %5946 = vmatmul.f32.gmra.mxu0 %v5201
        %v5947 = vpop.f32.mrf.mxu0
        %v5948 = vadd.f32 0.0, %v5947
        %5949 = vmatmul.f32.gmra.mxu0 %v5204
        %v5950 = vpop.f32.mrf.mxu0
        %v5951 = vadd.f32 0.0, %v5950
        %5952 = vdwg.mxu0
        %5953 = vmatpush.msra.mxu0 0.0
        %5954 = vmatpush.msra.mxu0 0.0
        %5955 = vmatpush.msra.mxu0 0.0
        %5956 = vmatpush.msra.mxu0 0.0
        %5957 = vmatpush.msra.mxu0 0.0
        %5958 = vmatpush.msra.mxu0 0.0
        %5959 = vmatpush.msra.mxu0 0.0
        %5960 = vmatpush.msra.mxu0 0.0
        %5961 = vmatpush.msra.mxu0 0.0
        %5962 = vmatpush.msra.mxu0 0.0
        %5963 = vmatpush.msra.mxu0 0.0
        %5964 = vmatpush.msra.mxu0 0.0
        %5965 = vmatpush.msra.mxu0 0.0
        %5966 = vmatpush.msra.mxu0 0.0
        %5967 = vmatpush.msra.mxu0 %v5460
        %5968 = vmatpush.msra.mxu0 %v5447
        %5969 = vmatmul.f32.gmra.mxu0 %v5465
        %v5970 = vpop.f32.mrf.mxu0
        %v5971 = vadd.f32 %v5948, %v5970
        %5972 = vmatmul.f32.gmra.mxu0 %v5468
        %v5973 = vpop.f32.mrf.mxu0
        %v5974 = vadd.f32 %v5951, %v5973
        %5975 = vdwg.mxu0
        %5976 = vmatpush.msra.mxu0 %v5435
        %5977 = vmatpush.msra.mxu0 %v5422
        %5978 = vmatpush.msra.mxu0 %v5409
        %5979 = vmatpush.msra.mxu0 %v5396
        %5980 = vmatpush.msra.mxu0 %v5383
        %5981 = vmatpush.msra.mxu0 %v5370
        %5982 = vmatpush.msra.mxu0 %v5357
        %5983 = vmatpush.msra.mxu0 %v5344
        %5984 = vmatpush.msra.mxu0 %v5331
        %5985 = vmatpush.msra.mxu0 %v5318
        %5986 = vmatpush.msra.mxu0 %v5305
        %5987 = vmatpush.msra.mxu0 %v5292
        %5988 = vmatpush.msra.mxu0 %v5279
        %5989 = vmatpush.msra.mxu0 %v5266
        %5990 = vmatpush.msra.mxu0 %v5253
        %5991 = vmatpush.msra.mxu0 %v5240
        %5992 = vmatmul.f32.gmra.mxu0 %v5201
        %v5993 = vpop.f32.mrf.mxu0
        %v5994 = vadd.f32 0.0, %v5993
        %5995 = vmatmul.f32.gmra.mxu0 %v5204
        %v5996 = vpop.f32.mrf.mxu0
        %v5997 = vadd.f32 0.0, %v5996
        %5998 = vdwg.mxu0
        %5999 = vmatpush.msra.mxu0 0.0
        %6000 = vmatpush.msra.mxu0 0.0
        %6001 = vmatpush.msra.mxu0 0.0
        %6002 = vmatpush.msra.mxu0 0.0
        %6003 = vmatpush.msra.mxu0 0.0
        %6004 = vmatpush.msra.mxu0 0.0
        %6005 = vmatpush.msra.mxu0 0.0
        %6006 = vmatpush.msra.mxu0 0.0
        %6007 = vmatpush.msra.mxu0 0.0
        %6008 = vmatpush.msra.mxu0 0.0
        %6009 = vmatpush.msra.mxu0 0.0
        %6010 = vmatpush.msra.mxu0 0.0
        %6011 = vmatpush.msra.mxu0 0.0
        %6012 = vmatpush.msra.mxu0 0.0
        %6013 = vmatpush.msra.mxu0 %v5461
        %6014 = vmatpush.msra.mxu0 %v5448
        %6015 = vmatmul.f32.gmra.mxu0 %v5465
        %v6016 = vpop.f32.mrf.mxu0
        %v6017 = vadd.f32 %v5994, %v6016
        %6018 = vmatmul.f32.gmra.mxu0 %v5468
        %v6019 = vpop.f32.mrf.mxu0
        %v6020 = vadd.f32 %v5997, %v6019
        %6021 = vdwg.mxu0
        %6022 = vmatpush.msra.mxu0 %v5436
        %6023 = vmatpush.msra.mxu0 %v5423
        %6024 = vmatpush.msra.mxu0 %v5410
        %6025 = vmatpush.msra.mxu0 %v5397
        %6026 = vmatpush.msra.mxu0 %v5384
        %6027 = vmatpush.msra.mxu0 %v5371
        %6028 = vmatpush.msra.mxu0 %v5358
        %6029 = vmatpush.msra.mxu0 %v5345
        %6030 = vmatpush.msra.mxu0 %v5332
        %6031 = vmatpush.msra.mxu0 %v5319
        %6032 = vmatpush.msra.mxu0 %v5306
        %6033 = vmatpush.msra.mxu0 %v5293
        %6034 = vmatpush.msra.mxu0 %v5280
        %6035 = vmatpush.msra.mxu0 %v5267
        %6036 = vmatpush.msra.mxu0 %v5254
        %6037 = vmatpush.msra.mxu0 %v5241
        %6038 = vmatmul.f32.gmra.mxu0 %v5201
        %v6039 = vpop.f32.mrf.mxu0
        %v6040 = vadd.f32 0.0, %v6039
        %6041 = vmatmul.f32.gmra.mxu0 %v5204
        %v6042 = vpop.f32.mrf.mxu0
        %v6043 = vadd.f32 0.0, %v6042
        %6044 = vdwg.mxu0
        %6045 = vmatpush.msra.mxu0 0.0
        %6046 = vmatpush.msra.mxu0 0.0
        %6047 = vmatpush.msra.mxu0 0.0
        %6048 = vmatpush.msra.mxu0 0.0
        %6049 = vmatpush.msra.mxu0 0.0
        %6050 = vmatpush.msra.mxu0 0.0
        %6051 = vmatpush.msra.mxu0 0.0
        %6052 = vmatpush.msra.mxu0 0.0
        %6053 = vmatpush.msra.mxu0 0.0
        %6054 = vmatpush.msra.mxu0 0.0
        %6055 = vmatpush.msra.mxu0 0.0
        %6056 = vmatpush.msra.mxu0 0.0
        %6057 = vmatpush.msra.mxu0 0.0
        %6058 = vmatpush.msra.mxu0 0.0
        %6059 = vmatpush.msra.mxu0 %v5462
        %6060 = vmatpush.msra.mxu0 %v5449
        %6061 = vmatmul.f32.gmra.mxu0 %v5465
        %v6062 = vpop.f32.mrf.mxu0
        %v6063 = vadd.f32 %v6040, %v6062
        %6064 = vmatmul.f32.gmra.mxu0 %v5468
        %v6065 = vpop.f32.mrf.mxu0
        %v6066 = vadd.f32 %v6043, %v6065
        %6067 = vdwg.mxu0
        %6068 = vst [vmem:[%s1009] sm:$0xff] %v5511
        %6069 = vst [vmem:[%s1009 + $0x8] sm:$0xff] %v5557
        %6070 = vst [vmem:[%s1009 + $0x10] sm:$0xff] %v5603
        %6071 = vst [vmem:[%s1009 + $0x18] sm:$0xff] %v5649
        %6072 = vst [vmem:[%s1009 + $0x20] sm:$0xff] %v5695
        %6073 = vst [vmem:[%s1009 + $0x28] sm:$0xff] %v5741
        %6074 = vst [vmem:[%s1009 + $0x30] sm:$0xff] %v5787
        %6075 = vst [vmem:[%s1009 + $0x38] sm:$0xff] %v5833
        %6076 = vst [vmem:[%s1009 + $0x40] sm:$0xff] %v5879
        %6077 = vst [vmem:[%s1009 + $0x48] sm:$0xff] %v5925
        %6078 = vst [vmem:[%s1009 + $0x50] sm:$0xff] %v5971
        %6079 = vst [vmem:[%s1009 + $0x58] sm:$0xff] %v6017
        %6080 = vst.msk [vmem:[%s1009 + $0x60] sm:$0xff] %vm3034, %v6063
        %6081 = vst [vmem:[%s1009 + $0x68] sm:$0x3] %v5514
        %6082 = vst [vmem:[%s1009 + $0x70] sm:$0x3] %v5560
        %6083 = vst [vmem:[%s1009 + $0x78] sm:$0x3] %v5606
        %6084 = vst [vmem:[%s1009 + $0x80] sm:$0x3] %v5652
        %6085 = vst [vmem:[%s1009 + $0x88] sm:$0x3] %v5698
        %6086 = vst [vmem:[%s1009 + $0x90] sm:$0x3] %v5744
        %6087 = vst [vmem:[%s1009 + $0x98] sm:$0x3] %v5790
        %6088 = vst [vmem:[%s1009 + $0xa0] sm:$0x3] %v5836
        %6089 = vst [vmem:[%s1009 + $0xa8] sm:$0x3] %v5882
        %6090 = vst [vmem:[%s1009 + $0xb0] sm:$0x3] %v5928
        %6091 = vst [vmem:[%s1009 + $0xb8] sm:$0x3] %v5974
        %6092 = vst [vmem:[%s1009 + $0xc0] sm:$0x3] %v6020
        %vm6093 = vcmask 517120
        %6094 = vst.msk [vmem:[%s1009 + $0xc8] sm:$0x3] %vm6093, %v6066
        %p6095 = scmp.lt.s32.totalorder %s75, 1
        %s6096 = scalar_select %p6095, %s75, 1
        %s6097 = smul.addr %s6096, 26
        %s6098 = smul.addr %s6097, 8
        %s6099 = scalar_lea.vmem %s63, %s6098
        // Predicated region
        $region149: #{forward.1} parent=143 // pred_check
          %p6100 = pneg %p759
        $region150: #{forward.1} parent=143 // pred_check_branch
          %6102 = sbr.rel (%p6100) target = $region152
        $region151: #{forward.1} parent=143 // pred_region
          _
        $region152: #{forward.1} parent=143 // pred_fallthru
          _
      $region144: #{forward.1} parent=5 // pred_fallthru
        _
      %p6103 = scmp.le.s32.totalorder 2, %s70
      // Predicated region
      $region153: #{forward.1} parent=5 // pred_check
        %p6104 = pneg %p6103
      $region154: #{forward.1} parent=5 // pred_check_branch
        %6106 = sbr.rel (%p6104) target = $region156
      $region155: #{forward.1} parent=5 // pred_region
        %s6107 = ssub.s32 %s70, 2
        // Predicated region
        $region157: #{forward.1} parent=155 // pred_check
          %p6108 = pneg %p765
        $region158: #{forward.1} parent=155 // pred_check_branch
          %6110 = sbr.rel (%p6108) target = $region160
        $region159: #{forward.1} parent=155 // pred_region
          %p6111 = scmp.lt.s32.totalorder %s76, 1
          %s6112 = scalar_select %p6111, %s76, 1
          %s6113 = smul.addr %s6112, 26
          %s6114 = smul.addr %s6113, 8
          %s6115 = scalar_lea.vmem %s63, %s6114
        $region160: #{forward.1} parent=155 // pred_fallthru
          _
      $region156: #{forward.1} parent=5 // pred_fallthru
        _
    $region6: #{forward.1} parent=1 // loop_footer
      %s74 = sadd.s32 1, %s70
    $region7: #{forward.1} parent=1 // loop_footer_branch
      %69 = sbr.rel target = $region3
    $region8: #{forward.1} parent=1 // loop_exit
      _
    %6116 = vsyncpa [#allocation3], 1
    %s6117 = scalar_lea.sflag [#allocation3], 1
    %6118 = vsyncpa %s6117, 1

</llo_original>
